<compile_context>
chip_gen: v7x
topology: tpu7x:2x2x1
jax: 0.10.0
libtpu: 0.0.40
codegen_flags: <defaults>
</compile_context>

<pallas_src>
import functools

import jax
import jax.numpy as jnp
import numpy as np
from jax import lax
from jax.experimental import pallas as pl
from jax.experimental.pallas import tpu as pltpu

# (Cin, Cout, stride) for conv1..conv6, kernel 3x3, padding 1.
LAYER_CONFIGS = [
    (1, 10, 1),
    (10, 32, 2),
    (32, 64, 2),
    (64, 128, 2),
    (128, 256, 2),
    (256, 256, 2),
]
BN_EPS = 1e-5

# Lane padding per (true) channel count.
CHAN_PAD = {1: 8, 10: 128, 32: 128, 64: 128, 128: 128, 256: 256}


def _round_up(v, m):
    return ((v + m - 1) // m) * m


# --------------------------------------------------------------------------- #
# Trace-time constants: tap-selection matrices + folded (conv*BNscale) weights
# --------------------------------------------------------------------------- #
def _make_tap_select(h, w, stride, n_in_rows):
    """0/1 matrix mapping a flattened (h*w, C) activation to its 9 (padded, strided) 3x3 tap
    windows, stacked tap-major along rows; each tap block is padded to a multiple of 8 rows."""
    ho = (h + 2 - 3) // stride + 1
    wo = (w + 2 - 3) // stride + 1
    m_out = ho * wo
    mb = _round_up(max(m_out, 1), 8)
    a = np.zeros((9 * mb, n_in_rows), np.float32)
    for kh in range(3):
        for kw in range(3):
            t = kh * 3 + kw
            for i in range(ho):
                for j in range(wo):
                    r = stride * i + kh - 1
                    c = stride * j + kw - 1
                    if 0 <= r < h and 0 <= c < w:
                        a[t * mb + i * wo + j, r * w + c] = 1.0
    return a, ho, wo, mb


def _fold_layer(w, b, gamma, beta, mean, var, cin_pad, cout_pad):
    """Fold BN(eval) into the conv: weights (tap-major, scaled, bf16) + f32 bias, channel-padded."""
    cout, cin = w.shape[0], w.shape[1]
    scale = gamma / jnp.sqrt(var + BN_EPS)                               # (cout,)
    w_taps = jnp.transpose(w, (2, 3, 1, 0)).reshape(9, cin, cout)        # t = kh*3 + kw
    w_taps = w_taps * scale[None, None, :]
    bias = ((b - mean) * scale + beta).reshape(1, cout)
    w_p = jnp.zeros((9, cin_pad, cout_pad), jnp.float32).at[:, :cin, :cout].set(w_taps)
    b_p = jnp.zeros((1, cout_pad), jnp.float32).at[:, :cout].set(bias)
    return w_p.astype(jnp.bfloat16), b_p


# --------------------------------------------------------------------------- #
# Fused Pallas kernel: the whole 6-layer network for one image per grid step
# --------------------------------------------------------------------------- #
def _fused_kernel(x_ref, *refs, mbs):
    *layer_refs, w6_ref, b6_ref, o_ref = refs

    def conv_layer(x_bf, a_ref, w_ref, b_ref, mb):
        # x_bf:  (M_in, Cin_pad) bf16 activation (flattened spatial rows, channels on lanes)
        # a_ref: (9*mb, M_in)    bf16 constant 0/1 tap-selection matrix (im2col via the MXU)
        # w_ref: (9, Cin_pad, Cout_pad) bf16 folded conv * BN-scale weights
        # b_ref: (1, Cout_pad)   f32 folded BN bias
        p = jnp.dot(a_ref[...], x_bf, preferred_element_type=jnp.float32)
        p = p.astype(jnp.bfloat16)          # exact: each patch row is a copy of an x row (or 0)
        cout_p = w_ref.shape[-1]
        acc = jnp.zeros((mb, cout_p), jnp.float32)
        for t in range(9):                  # unrolled: 9 aligned (mb,C)@(C,Cout) MXU dots
            acc = acc + jnp.dot(p[t * mb:(t + 1) * mb, :], w_ref[t],
                                preferred_element_type=jnp.float32)
        return jnp.maximum(acc + b_ref[...], 0.0)       # f32 (mb, Cout_pad)

    x = x_ref[0]                                         # (256, 8) bf16
    for li, mb in enumerate(mbs):                        # conv1..conv5 (generic path)
        a_ref = layer_refs[3 * li]
        w_ref = layer_refs[3 * li + 1]
        b_ref = layer_refs[3 * li + 2]
        y = conv_layer(x, a_ref, w_ref, b_ref, mb)
        x = y.astype(jnp.bfloat16)

    # conv6: 1x1 spatial input with padding=1 -> only the centre tap touches real data.
    y6 = jnp.dot(x[0:1, :], w6_ref[...], preferred_element_type=jnp.float32) + b6_ref[...]
    o_ref[0] = jnp.maximum(y6, 0.0)


# --------------------------------------------------------------------------- #
# Wrapper
# --------------------------------------------------------------------------- #
def coordinate_extractor_forward(x_nchw, params):
    """Forward pass. Input (N,1,16,16) NCHW, output (N,256,1,1) NCHW like the PyTorch module."""
    n, cin0, h, w = x_nchw.shape
    assert cin0 == 1, "CoordinateExtractor expects a single input channel"

    cin_pad0 = CHAN_PAD[1]
    # Flatten the input to (N, H*W, Cin_pad): spatial rows on sublanes, channels on lanes.
    x_flat = jnp.transpose(x_nchw, (0, 2, 3, 1)).reshape(n, h * w, 1)
    x_flat = jnp.pad(x_flat, ((0, 0), (0, 0), (0, cin_pad0 - 1))).astype(jnp.bfloat16)

    # Per-layer constants for conv1..conv5 (generic path): A, W, b.
    sel_consts = []
    mbs = []
    cur_h, cur_w, n_rows = h, w, h * w
    for li in range(5):
        cin, cout, stride = LAYER_CONFIGS[li]
        cin_p, cout_p = CHAN_PAD[cin], CHAN_PAD[cout]
        a_np, ho, wo, mb = _make_tap_select(cur_h, cur_w, stride, n_rows)
        w_p, b_p = _fold_layer(*params[li], cin_p, cout_p)
        sel_consts += [jnp.asarray(a_np, jnp.bfloat16), w_p, b_p]
        mbs.append(mb)
        cur_h, cur_w, n_rows = ho, wo, mb
    assert (cur_h, cur_w) == (1, 1), "conv6 specialisation assumes a 1x1 spatial input"

    # conv6: centre tap only (256 -> 256).
    w6, b6, g6, be6, m6, v6 = params[5]
    scale6 = g6 / jnp.sqrt(v6 + BN_EPS)
    w6_c = (jnp.transpose(w6, (2, 3, 1, 0))[1, 1] * scale6[None, :]).astype(jnp.bfloat16)
    b6_c = ((b6 - m6) * scale6 + be6).reshape(1, -1)          # f32 (1, 256)
    cout_last = w6.shape[0]

    ins = [x_flat] + sel_consts + [w6_c, b6_c]

    def _const_spec(arr):
        zeros = (0,) * arr.ndim
        return pl.BlockSpec(arr.shape, lambda i: zeros)       # whole array, resident in VMEM

    in_specs = [pl.BlockSpec((1, h * w, cin_pad0), lambda i: (i, 0, 0))]
    in_specs += [_const_spec(a) for a in ins[1:]]

    out = pl.pallas_call(
        functools.partial(_fused_kernel, mbs=tuple(mbs)),
        out_shape=jax.ShapeDtypeStruct((n, 1, cout_last), jnp.float32),
        grid=(n,),
        in_specs=in_specs,
        out_specs=pl.BlockSpec((1, 1, cout_last), lambda i: (i, 0, 0)),
        compiler_params=pltpu.CompilerParams(
            dimension_semantics=("parallel",),                # v7x: batch split across the 2 TCs
            vmem_limit_bytes=32 * 1024 * 1024,
        ),
    )(*ins)
    return out.reshape(n, cout_last, 1, 1)


# --------------------------------------------------------------------------- #
# Pure-JAX reference (lax.conv) for numerical validation.
# Matches the kernel numerics: bf16 MXU inputs (weights with BN-scale folded, activations),
# f32 accumulation / bias / ReLU.
# --------------------------------------------------------------------------- #
def _reference_forward(x_nchw, params):
    f32 = jnp.float32

    def rt(t):  # bf16 round-trip, mirrors the kernel's bf16 MXU inputs
        return t.astype(jnp.bfloat16).astype(f32)

    x = x_nchw.astype(f32)
    for (w, b, gamma, beta, rmean, rvar), (_cin, _cout, stride) in zip(params, LAYER_CONFIGS):
        scale = gamma / jnp.sqrt(rvar + BN_EPS)
        w_folded = rt(w * scale[:, None, None, None])
        bias = (b - rmean) * scale + beta
        y = lax.conv_general_dilated(
            rt(x), w_folded, window_strides=(stride, stride), padding=((1, 1), (1, 1)),
            dimension_numbers=("NCHW", "OIHW", "NCHW"),
            precision=lax.Precision.HIGHEST)
        x = jnp.maximum(y + bias[None, :, None, None], 0.0)
    return x


def init_params(key):
    """Deterministic synthetic parameters mirroring the PyTorch module shapes (BN in eval mode)."""
    params = []
    for cin, cout, _stride in LAYER_CONFIGS:
        key, k_w, k_b, k_g, k_be, k_m, k_v = jax.random.split(key, 7)
        fan_in = cin * 9
        w = jax.random.normal(k_w, (cout, cin, 3, 3), jnp.float32) / np.sqrt(fan_in)
        b = 0.01 * jax.random.normal(k_b, (cout,), jnp.float32)
        gamma = 1.0 + 0.1 * jax.random.normal(k_g, (cout,), jnp.float32)   # BN weight
        beta = 0.1 * jax.random.normal(k_be, (cout,), jnp.float32)         # BN bias
        running_mean = 0.1 * jax.random.normal(k_m, (cout,), jnp.float32)
        running_var = jax.random.uniform(k_v, (cout,), jnp.float32, 0.5, 1.5)
        params.append((w, b, gamma, beta, running_mean, running_var))
    return params


if __name__ == "__main__":
    key = jax.random.PRNGKey(0)
    key_x, key_p = jax.random.split(key)

    # Input matches Conv2d(1, ...): NCHW (2, 1, 16, 16)
    x = jax.random.normal(key_x, (2, 1, 16, 16), jnp.float32)
    params = init_params(key_p)

    fwd = jax.jit(functools.partial(coordinate_extractor_forward, params=params))
    out = fwd(x)
    jax.block_until_ready(out)

    ref = _reference_forward(x, params)
    assert out.shape == (2, 256, 1, 1), out.shape
    np.testing.assert_allclose(np.asarray(out), np.asarray(ref), rtol=2e-3, atol=2e-3)

    print("KERNEL_OK")
</pallas_src>

<mosaic_0001>
module attributes {stable_mosaic.version = 11 : i64} {
  func.func @_fused_kernel(%arg0: i32, %arg1: memref<1x256x8xbf16, #tpu.memory_space<vmem>>, %arg2: memref<2304x256xbf16, #tpu.memory_space<vmem>>, %arg3: memref<9x8x128xbf16, #tpu.memory_space<vmem>>, %arg4: memref<1x128xf32, #tpu.memory_space<vmem>>, %arg5: memref<576x256xbf16, #tpu.memory_space<vmem>>, %arg6: memref<9x128x128xbf16, #tpu.memory_space<vmem>>, %arg7: memref<1x128xf32, #tpu.memory_space<vmem>>, %arg8: memref<144x64xbf16, #tpu.memory_space<vmem>>, %arg9: memref<9x128x128xbf16, #tpu.memory_space<vmem>>, %arg10: memref<1x128xf32, #tpu.memory_space<vmem>>, %arg11: memref<72x16xbf16, #tpu.memory_space<vmem>>, %arg12: memref<9x128x128xbf16, #tpu.memory_space<vmem>>, %arg13: memref<1x128xf32, #tpu.memory_space<vmem>>, %arg14: memref<72x8xbf16, #tpu.memory_space<vmem>>, %arg15: memref<9x128x256xbf16, #tpu.memory_space<vmem>>, %arg16: memref<1x256xf32, #tpu.memory_space<vmem>>, %arg17: memref<256x256xbf16, #tpu.memory_space<vmem>>, %arg18: memref<1x256xf32, #tpu.memory_space<vmem>>, %arg19: memref<1x1x256xf32, #tpu.memory_space<vmem>>) attributes {dimension_semantics = [#tpu.dimension_semantics<parallel>], iteration_bounds = array<i64: 2>, scalar_prefetch = 0 : i64, scratch_operands = 0 : i64, tpu.core_type = #tpu.core_type<tc>, window_params = [{transform_indices = @transform_0, window_bounds = array<i64: 1, 256, 8>}, {pipeline_mode = #tpu.pipeline_mode<synchronous>, transform_indices = @transform_1, window_bounds = array<i64: 2304, 256>}, {pipeline_mode = #tpu.pipeline_mode<synchronous>, transform_indices = @transform_2, window_bounds = array<i64: 9, 8, 128>}, {pipeline_mode = #tpu.pipeline_mode<synchronous>, transform_indices = @transform_3, window_bounds = array<i64: 1, 128>}, {pipeline_mode = #tpu.pipeline_mode<synchronous>, transform_indices = @transform_4, window_bounds = array<i64: 576, 256>}, {pipeline_mode = #tpu.pipeline_mode<synchronous>, transform_indices = @transform_5, window_bounds = array<i64: 9, 128, 128>}, {pipeline_mode = #tpu.pipeline_mode<synchronous>, transform_indices = @transform_6, window_bounds = array<i64: 1, 128>}, {pipeline_mode = #tpu.pipeline_mode<synchronous>, transform_indices = @transform_7, window_bounds = array<i64: 144, 64>}, {pipeline_mode = #tpu.pipeline_mode<synchronous>, transform_indices = @transform_8, window_bounds = array<i64: 9, 128, 128>}, {pipeline_mode = #tpu.pipeline_mode<synchronous>, transform_indices = @transform_9, window_bounds = array<i64: 1, 128>}, {pipeline_mode = #tpu.pipeline_mode<synchronous>, transform_indices = @transform_10, window_bounds = array<i64: 72, 16>}, {pipeline_mode = #tpu.pipeline_mode<synchronous>, transform_indices = @transform_11, window_bounds = array<i64: 9, 128, 128>}, {pipeline_mode = #tpu.pipeline_mode<synchronous>, transform_indices = @transform_12, window_bounds = array<i64: 1, 128>}, {pipeline_mode = #tpu.pipeline_mode<synchronous>, transform_indices = @transform_13, window_bounds = array<i64: 72, 8>}, {pipeline_mode = #tpu.pipeline_mode<synchronous>, transform_indices = @transform_14, window_bounds = array<i64: 9, 128, 256>}, {pipeline_mode = #tpu.pipeline_mode<synchronous>, transform_indices = @transform_15, window_bounds = array<i64: 1, 256>}, {pipeline_mode = #tpu.pipeline_mode<synchronous>, transform_indices = @transform_16, window_bounds = array<i64: 256, 256>}, {pipeline_mode = #tpu.pipeline_mode<synchronous>, transform_indices = @transform_17, window_bounds = array<i64: 1, 256>}, {transform_indices = @transform_18, window_bounds = array<i64: 1, 1, 256>}]} {
    %c0 = arith.constant 0 : index
    %c0_0 = arith.constant 0 : index
    %c0_1 = arith.constant 0 : index
    %0 = vector.load %arg1[%c0, %c0_0, %c0_1] : memref<1x256x8xbf16, #tpu.memory_space<vmem>>, vector<1x256x8xbf16>
    %1 = vector.shape_cast %0 : vector<1x256x8xbf16> to vector<256x8xbf16>
    %c0_2 = arith.constant 0 : index
    %c0_3 = arith.constant 0 : index
    %2 = vector.load %arg2[%c0_2, %c0_3] : memref<2304x256xbf16, #tpu.memory_space<vmem>>, vector<2304x256xbf16>
    %cst = arith.constant dense<0.000000e+00> : vector<2304x8xf32>
    %3 = tpu.matmul %2, %1, %cst {dimension_numbers = #tpu.dot_dimension_numbers<[1], [0], [0], [1], [0, 0, 1, 1], [], []>} : vector<2304x256xbf16>, vector<256x8xbf16>, vector<2304x8xf32> -> vector<2304x8xf32>
    %4 = arith.truncf %3 : vector<2304x8xf32> to vector<2304x8xbf16>
    %cst_4 = arith.constant 0.000000e+00 : f32
    %5 = vector.broadcast %cst_4 : f32 to vector<256x128xf32>
    %6 = vector.extract_strided_slice %4 {offsets = [0, 0], sizes = [256, 8], strides = [1, 1]} : vector<2304x8xbf16> to vector<256x8xbf16>
    %c0_5 = arith.constant 0 : index
    %c0_6 = arith.constant 0 : index
    %c0_7 = arith.constant 0 : index
    %7 = vector.load %arg3[%c0_5, %c0_6, %c0_7] : memref<9x8x128xbf16, #tpu.memory_space<vmem>>, vector<1x8x128xbf16>
    %8 = vector.shape_cast %7 : vector<1x8x128xbf16> to vector<8x128xbf16>
    %cst_8 = arith.constant dense<0.000000e+00> : vector<256x128xf32>
    %9 = tpu.matmul %6, %8, %cst_8 {dimension_numbers = #tpu.dot_dimension_numbers<[1], [0], [0], [1], [0, 0, 1, 1], [], []>} : vector<256x8xbf16>, vector<8x128xbf16>, vector<256x128xf32> -> vector<256x128xf32>
    %10 = arith.addf %5, %9 : vector<256x128xf32>
    %11 = vector.extract_strided_slice %4 {offsets = [256, 0], sizes = [256, 8], strides = [1, 1]} : vector<2304x8xbf16> to vector<256x8xbf16>
    %c1 = arith.constant 1 : index
    %c0_9 = arith.constant 0 : index
    %c0_10 = arith.constant 0 : index
    %12 = vector.load %arg3[%c1, %c0_9, %c0_10] : memref<9x8x128xbf16, #tpu.memory_space<vmem>>, vector<1x8x128xbf16>
    %13 = vector.shape_cast %12 : vector<1x8x128xbf16> to vector<8x128xbf16>
    %cst_11 = arith.constant dense<0.000000e+00> : vector<256x128xf32>
    %14 = tpu.matmul %11, %13, %cst_11 {dimension_numbers = #tpu.dot_dimension_numbers<[1], [0], [0], [1], [0, 0, 1, 1], [], []>} : vector<256x8xbf16>, vector<8x128xbf16>, vector<256x128xf32> -> vector<256x128xf32>
    %15 = arith.addf %10, %14 : vector<256x128xf32>
    %16 = vector.extract_strided_slice %4 {offsets = [512, 0], sizes = [256, 8], strides = [1, 1]} : vector<2304x8xbf16> to vector<256x8xbf16>
    %c2 = arith.constant 2 : index
    %c0_12 = arith.constant 0 : index
    %c0_13 = arith.constant 0 : index
    %17 = vector.load %arg3[%c2, %c0_12, %c0_13] : memref<9x8x128xbf16, #tpu.memory_space<vmem>>, vector<1x8x128xbf16>
    %18 = vector.shape_cast %17 : vector<1x8x128xbf16> to vector<8x128xbf16>
    %cst_14 = arith.constant dense<0.000000e+00> : vector<256x128xf32>
    %19 = tpu.matmul %16, %18, %cst_14 {dimension_numbers = #tpu.dot_dimension_numbers<[1], [0], [0], [1], [0, 0, 1, 1], [], []>} : vector<256x8xbf16>, vector<8x128xbf16>, vector<256x128xf32> -> vector<256x128xf32>
    %20 = arith.addf %15, %19 : vector<256x128xf32>
    %21 = vector.extract_strided_slice %4 {offsets = [768, 0], sizes = [256, 8], strides = [1, 1]} : vector<2304x8xbf16> to vector<256x8xbf16>
    %c3 = arith.constant 3 : index
    %c0_15 = arith.constant 0 : index
    %c0_16 = arith.constant 0 : index
    %22 = vector.load %arg3[%c3, %c0_15, %c0_16] : memref<9x8x128xbf16, #tpu.memory_space<vmem>>, vector<1x8x128xbf16>
    %23 = vector.shape_cast %22 : vector<1x8x128xbf16> to vector<8x128xbf16>
    %cst_17 = arith.constant dense<0.000000e+00> : vector<256x128xf32>
    %24 = tpu.matmul %21, %23, %cst_17 {dimension_numbers = #tpu.dot_dimension_numbers<[1], [0], [0], [1], [0, 0, 1, 1], [], []>} : vector<256x8xbf16>, vector<8x128xbf16>, vector<256x128xf32> -> vector<256x128xf32>
    %25 = arith.addf %20, %24 : vector<256x128xf32>
    %26 = vector.extract_strided_slice %4 {offsets = [1024, 0], sizes = [256, 8], strides = [1, 1]} : vector<2304x8xbf16> to vector<256x8xbf16>
    %c4 = arith.constant 4 : index
    %c0_18 = arith.constant 0 : index
    %c0_19 = arith.constant 0 : index
    %27 = vector.load %arg3[%c4, %c0_18, %c0_19] : memref<9x8x128xbf16, #tpu.memory_space<vmem>>, vector<1x8x128xbf16>
    %28 = vector.shape_cast %27 : vector<1x8x128xbf16> to vector<8x128xbf16>
    %cst_20 = arith.constant dense<0.000000e+00> : vector<256x128xf32>
    %29 = tpu.matmul %26, %28, %cst_20 {dimension_numbers = #tpu.dot_dimension_numbers<[1], [0], [0], [1], [0, 0, 1, 1], [], []>} : vector<256x8xbf16>, vector<8x128xbf16>, vector<256x128xf32> -> vector<256x128xf32>
    %30 = arith.addf %25, %29 : vector<256x128xf32>
    %31 = vector.extract_strided_slice %4 {offsets = [1280, 0], sizes = [256, 8], strides = [1, 1]} : vector<2304x8xbf16> to vector<256x8xbf16>
    %c5 = arith.constant 5 : index
    %c0_21 = arith.constant 0 : index
    %c0_22 = arith.constant 0 : index
    %32 = vector.load %arg3[%c5, %c0_21, %c0_22] : memref<9x8x128xbf16, #tpu.memory_space<vmem>>, vector<1x8x128xbf16>
    %33 = vector.shape_cast %32 : vector<1x8x128xbf16> to vector<8x128xbf16>
    %cst_23 = arith.constant dense<0.000000e+00> : vector<256x128xf32>
    %34 = tpu.matmul %31, %33, %cst_23 {dimension_numbers = #tpu.dot_dimension_numbers<[1], [0], [0], [1], [0, 0, 1, 1], [], []>} : vector<256x8xbf16>, vector<8x128xbf16>, vector<256x128xf32> -> vector<256x128xf32>
    %35 = arith.addf %30, %34 : vector<256x128xf32>
    %36 = vector.extract_strided_slice %4 {offsets = [1536, 0], sizes = [256, 8], strides = [1, 1]} : vector<2304x8xbf16> to vector<256x8xbf16>
    %c6 = arith.constant 6 : index
    %c0_24 = arith.constant 0 : index
    %c0_25 = arith.constant 0 : index
    %37 = vector.load %arg3[%c6, %c0_24, %c0_25] : memref<9x8x128xbf16, #tpu.memory_space<vmem>>, vector<1x8x128xbf16>
    %38 = vector.shape_cast %37 : vector<1x8x128xbf16> to vector<8x128xbf16>
    %cst_26 = arith.constant dense<0.000000e+00> : vector<256x128xf32>
    %39 = tpu.matmul %36, %38, %cst_26 {dimension_numbers = #tpu.dot_dimension_numbers<[1], [0], [0], [1], [0, 0, 1, 1], [], []>} : vector<256x8xbf16>, vector<8x128xbf16>, vector<256x128xf32> -> vector<256x128xf32>
    %40 = arith.addf %35, %39 : vector<256x128xf32>
    %41 = vector.extract_strided_slice %4 {offsets = [1792, 0], sizes = [256, 8], strides = [1, 1]} : vector<2304x8xbf16> to vector<256x8xbf16>
    %c7 = arith.constant 7 : index
    %c0_27 = arith.constant 0 : index
    %c0_28 = arith.constant 0 : index
    %42 = vector.load %arg3[%c7, %c0_27, %c0_28] : memref<9x8x128xbf16, #tpu.memory_space<vmem>>, vector<1x8x128xbf16>
    %43 = vector.shape_cast %42 : vector<1x8x128xbf16> to vector<8x128xbf16>
    %cst_29 = arith.constant dense<0.000000e+00> : vector<256x128xf32>
    %44 = tpu.matmul %41, %43, %cst_29 {dimension_numbers = #tpu.dot_dimension_numbers<[1], [0], [0], [1], [0, 0, 1, 1], [], []>} : vector<256x8xbf16>, vector<8x128xbf16>, vector<256x128xf32> -> vector<256x128xf32>
    %45 = arith.addf %40, %44 : vector<256x128xf32>
    %46 = vector.extract_strided_slice %4 {offsets = [2048, 0], sizes = [256, 8], strides = [1, 1]} : vector<2304x8xbf16> to vector<256x8xbf16>
    %c8 = arith.constant 8 : index
    %c0_30 = arith.constant 0 : index
    %c0_31 = arith.constant 0 : index
    %47 = vector.load %arg3[%c8, %c0_30, %c0_31] : memref<9x8x128xbf16, #tpu.memory_space<vmem>>, vector<1x8x128xbf16>
    %48 = vector.shape_cast %47 : vector<1x8x128xbf16> to vector<8x128xbf16>
    %cst_32 = arith.constant dense<0.000000e+00> : vector<256x128xf32>
    %49 = tpu.matmul %46, %48, %cst_32 {dimension_numbers = #tpu.dot_dimension_numbers<[1], [0], [0], [1], [0, 0, 1, 1], [], []>} : vector<256x8xbf16>, vector<8x128xbf16>, vector<256x128xf32> -> vector<256x128xf32>
    %50 = arith.addf %45, %49 : vector<256x128xf32>
    %c0_33 = arith.constant 0 : index
    %c0_34 = arith.constant 0 : index
    %51 = vector.load %arg4[%c0_33, %c0_34] : memref<1x128xf32, #tpu.memory_space<vmem>>, vector<1x128xf32>
    %52 = vector.broadcast %51 : vector<1x128xf32> to vector<256x128xf32>
    %53 = arith.addf %50, %52 : vector<256x128xf32>
    %cst_35 = arith.constant 0.000000e+00 : f32
    %54 = vector.broadcast %cst_35 : f32 to vector<256x128xf32>
    %55 = arith.maximumf %53, %54 : vector<256x128xf32>
    %56 = arith.truncf %55 : vector<256x128xf32> to vector<256x128xbf16>
    %c0_36 = arith.constant 0 : index
    %c0_37 = arith.constant 0 : index
    %57 = vector.load %arg5[%c0_36, %c0_37] : memref<576x256xbf16, #tpu.memory_space<vmem>>, vector<576x256xbf16>
    %cst_38 = arith.constant dense<0.000000e+00> : vector<576x128xf32>
    %58 = tpu.matmul %57, %56, %cst_38 {dimension_numbers = #tpu.dot_dimension_numbers<[1], [0], [0], [1], [0, 0, 1, 1], [], []>} : vector<576x256xbf16>, vector<256x128xbf16>, vector<576x128xf32> -> vector<576x128xf32>
    %59 = arith.truncf %58 : vector<576x128xf32> to vector<576x128xbf16>
    %cst_39 = arith.constant 0.000000e+00 : f32
    %60 = vector.broadcast %cst_39 : f32 to vector<64x128xf32>
    %61 = vector.extract_strided_slice %59 {offsets = [0, 0], sizes = [64, 128], strides = [1, 1]} : vector<576x128xbf16> to vector<64x128xbf16>
    %c0_40 = arith.constant 0 : index
    %c0_41 = arith.constant 0 : index
    %c0_42 = arith.constant 0 : index
    %62 = vector.load %arg6[%c0_40, %c0_41, %c0_42] : memref<9x128x128xbf16, #tpu.memory_space<vmem>>, vector<1x128x128xbf16>
    %63 = vector.shape_cast %62 : vector<1x128x128xbf16> to vector<128x128xbf16>
    %cst_43 = arith.constant dense<0.000000e+00> : vector<64x128xf32>
    %64 = tpu.matmul %61, %63, %cst_43 {dimension_numbers = #tpu.dot_dimension_numbers<[1], [0], [0], [1], [0, 0, 1, 1], [], []>} : vector<64x128xbf16>, vector<128x128xbf16>, vector<64x128xf32> -> vector<64x128xf32>
    %65 = arith.addf %60, %64 : vector<64x128xf32>
    %66 = vector.extract_strided_slice %59 {offsets = [64, 0], sizes = [64, 128], strides = [1, 1]} : vector<576x128xbf16> to vector<64x128xbf16>
    %c1_44 = arith.constant 1 : index
    %c0_45 = arith.constant 0 : index
    %c0_46 = arith.constant 0 : index
    %67 = vector.load %arg6[%c1_44, %c0_45, %c0_46] : memref<9x128x128xbf16, #tpu.memory_space<vmem>>, vector<1x128x128xbf16>
    %68 = vector.shape_cast %67 : vector<1x128x128xbf16> to vector<128x128xbf16>
    %cst_47 = arith.constant dense<0.000000e+00> : vector<64x128xf32>
    %69 = tpu.matmul %66, %68, %cst_47 {dimension_numbers = #tpu.dot_dimension_numbers<[1], [0], [0], [1], [0, 0, 1, 1], [], []>} : vector<64x128xbf16>, vector<128x128xbf16>, vector<64x128xf32> -> vector<64x128xf32>
    %70 = arith.addf %65, %69 : vector<64x128xf32>
    %71 = vector.extract_strided_slice %59 {offsets = [128, 0], sizes = [64, 128], strides = [1, 1]} : vector<576x128xbf16> to vector<64x128xbf16>
    %c2_48 = arith.constant 2 : index
    %c0_49 = arith.constant 0 : index
    %c0_50 = arith.constant 0 : index
    %72 = vector.load %arg6[%c2_48, %c0_49, %c0_50] : memref<9x128x128xbf16, #tpu.memory_space<vmem>>, vector<1x128x128xbf16>
    %73 = vector.shape_cast %72 : vector<1x128x128xbf16> to vector<128x128xbf16>
    %cst_51 = arith.constant dense<0.000000e+00> : vector<64x128xf32>
    %74 = tpu.matmul %71, %73, %cst_51 {dimension_numbers = #tpu.dot_dimension_numbers<[1], [0], [0], [1], [0, 0, 1, 1], [], []>} : vector<64x128xbf16>, vector<128x128xbf16>, vector<64x128xf32> -> vector<64x128xf32>
    %75 = arith.addf %70, %74 : vector<64x128xf32>
    %76 = vector.extract_strided_slice %59 {offsets = [192, 0], sizes = [64, 128], strides = [1, 1]} : vector<576x128xbf16> to vector<64x128xbf16>
    %c3_52 = arith.constant 3 : index
    %c0_53 = arith.constant 0 : index
    %c0_54 = arith.constant 0 : index
    %77 = vector.load %arg6[%c3_52, %c0_53, %c0_54] : memref<9x128x128xbf16, #tpu.memory_space<vmem>>, vector<1x128x128xbf16>
    %78 = vector.shape_cast %77 : vector<1x128x128xbf16> to vector<128x128xbf16>
    %cst_55 = arith.constant dense<0.000000e+00> : vector<64x128xf32>
    %79 = tpu.matmul %76, %78, %cst_55 {dimension_numbers = #tpu.dot_dimension_numbers<[1], [0], [0], [1], [0, 0, 1, 1], [], []>} : vector<64x128xbf16>, vector<128x128xbf16>, vector<64x128xf32> -> vector<64x128xf32>
    %80 = arith.addf %75, %79 : vector<64x128xf32>
    %81 = vector.extract_strided_slice %59 {offsets = [256, 0], sizes = [64, 128], strides = [1, 1]} : vector<576x128xbf16> to vector<64x128xbf16>
    %c4_56 = arith.constant 4 : index
    %c0_57 = arith.constant 0 : index
    %c0_58 = arith.constant 0 : index
    %82 = vector.load %arg6[%c4_56, %c0_57, %c0_58] : memref<9x128x128xbf16, #tpu.memory_space<vmem>>, vector<1x128x128xbf16>
    %83 = vector.shape_cast %82 : vector<1x128x128xbf16> to vector<128x128xbf16>
    %cst_59 = arith.constant dense<0.000000e+00> : vector<64x128xf32>
    %84 = tpu.matmul %81, %83, %cst_59 {dimension_numbers = #tpu.dot_dimension_numbers<[1], [0], [0], [1], [0, 0, 1, 1], [], []>} : vector<64x128xbf16>, vector<128x128xbf16>, vector<64x128xf32> -> vector<64x128xf32>
    %85 = arith.addf %80, %84 : vector<64x128xf32>
    %86 = vector.extract_strided_slice %59 {offsets = [320, 0], sizes = [64, 128], strides = [1, 1]} : vector<576x128xbf16> to vector<64x128xbf16>
    %c5_60 = arith.constant 5 : index
    %c0_61 = arith.constant 0 : index
    %c0_62 = arith.constant 0 : index
    %87 = vector.load %arg6[%c5_60, %c0_61, %c0_62] : memref<9x128x128xbf16, #tpu.memory_space<vmem>>, vector<1x128x128xbf16>
    %88 = vector.shape_cast %87 : vector<1x128x128xbf16> to vector<128x128xbf16>
    %cst_63 = arith.constant dense<0.000000e+00> : vector<64x128xf32>
    %89 = tpu.matmul %86, %88, %cst_63 {dimension_numbers = #tpu.dot_dimension_numbers<[1], [0], [0], [1], [0, 0, 1, 1], [], []>} : vector<64x128xbf16>, vector<128x128xbf16>, vector<64x128xf32> -> vector<64x128xf32>
    %90 = arith.addf %85, %89 : vector<64x128xf32>
    %91 = vector.extract_strided_slice %59 {offsets = [384, 0], sizes = [64, 128], strides = [1, 1]} : vector<576x128xbf16> to vector<64x128xbf16>
    %c6_64 = arith.constant 6 : index
    %c0_65 = arith.constant 0 : index
    %c0_66 = arith.constant 0 : index
    %92 = vector.load %arg6[%c6_64, %c0_65, %c0_66] : memref<9x128x128xbf16, #tpu.memory_space<vmem>>, vector<1x128x128xbf16>
    %93 = vector.shape_cast %92 : vector<1x128x128xbf16> to vector<128x128xbf16>
    %cst_67 = arith.constant dense<0.000000e+00> : vector<64x128xf32>
    %94 = tpu.matmul %91, %93, %cst_67 {dimension_numbers = #tpu.dot_dimension_numbers<[1], [0], [0], [1], [0, 0, 1, 1], [], []>} : vector<64x128xbf16>, vector<128x128xbf16>, vector<64x128xf32> -> vector<64x128xf32>
    %95 = arith.addf %90, %94 : vector<64x128xf32>
    %96 = vector.extract_strided_slice %59 {offsets = [448, 0], sizes = [64, 128], strides = [1, 1]} : vector<576x128xbf16> to vector<64x128xbf16>
    %c7_68 = arith.constant 7 : index
    %c0_69 = arith.constant 0 : index
    %c0_70 = arith.constant 0 : index
    %97 = vector.load %arg6[%c7_68, %c0_69, %c0_70] : memref<9x128x128xbf16, #tpu.memory_space<vmem>>, vector<1x128x128xbf16>
    %98 = vector.shape_cast %97 : vector<1x128x128xbf16> to vector<128x128xbf16>
    %cst_71 = arith.constant dense<0.000000e+00> : vector<64x128xf32>
    %99 = tpu.matmul %96, %98, %cst_71 {dimension_numbers = #tpu.dot_dimension_numbers<[1], [0], [0], [1], [0, 0, 1, 1], [], []>} : vector<64x128xbf16>, vector<128x128xbf16>, vector<64x128xf32> -> vector<64x128xf32>
    %100 = arith.addf %95, %99 : vector<64x128xf32>
    %101 = vector.extract_strided_slice %59 {offsets = [512, 0], sizes = [64, 128], strides = [1, 1]} : vector<576x128xbf16> to vector<64x128xbf16>
    %c8_72 = arith.constant 8 : index
    %c0_73 = arith.constant 0 : index
    %c0_74 = arith.constant 0 : index
    %102 = vector.load %arg6[%c8_72, %c0_73, %c0_74] : memref<9x128x128xbf16, #tpu.memory_space<vmem>>, vector<1x128x128xbf16>
    %103 = vector.shape_cast %102 : vector<1x128x128xbf16> to vector<128x128xbf16>
    %cst_75 = arith.constant dense<0.000000e+00> : vector<64x128xf32>
    %104 = tpu.matmul %101, %103, %cst_75 {dimension_numbers = #tpu.dot_dimension_numbers<[1], [0], [0], [1], [0, 0, 1, 1], [], []>} : vector<64x128xbf16>, vector<128x128xbf16>, vector<64x128xf32> -> vector<64x128xf32>
    %105 = arith.addf %100, %104 : vector<64x128xf32>
    %c0_76 = arith.constant 0 : index
    %c0_77 = arith.constant 0 : index
    %106 = vector.load %arg7[%c0_76, %c0_77] : memref<1x128xf32, #tpu.memory_space<vmem>>, vector<1x128xf32>
    %107 = vector.broadcast %106 : vector<1x128xf32> to vector<64x128xf32>
    %108 = arith.addf %105, %107 : vector<64x128xf32>
    %cst_78 = arith.constant 0.000000e+00 : f32
    %109 = vector.broadcast %cst_78 : f32 to vector<64x128xf32>
    %110 = arith.maximumf %108, %109 : vector<64x128xf32>
    %111 = arith.truncf %110 : vector<64x128xf32> to vector<64x128xbf16>
    %c0_79 = arith.constant 0 : index
    %c0_80 = arith.constant 0 : index
    %112 = vector.load %arg8[%c0_79, %c0_80] : memref<144x64xbf16, #tpu.memory_space<vmem>>, vector<144x64xbf16>
    %cst_81 = arith.constant dense<0.000000e+00> : vector<144x128xf32>
    %113 = tpu.matmul %112, %111, %cst_81 {dimension_numbers = #tpu.dot_dimension_numbers<[1], [0], [0], [1], [0, 0, 1, 1], [], []>} : vector<144x64xbf16>, vector<64x128xbf16>, vector<144x128xf32> -> vector<144x128xf32>
    %114 = arith.truncf %113 : vector<144x128xf32> to vector<144x128xbf16>
    %cst_82 = arith.constant 0.000000e+00 : f32
    %115 = vector.broadcast %cst_82 : f32 to vector<16x128xf32>
    %116 = vector.extract_strided_slice %114 {offsets = [0, 0], sizes = [16, 128], strides = [1, 1]} : vector<144x128xbf16> to vector<16x128xbf16>
    %c0_83 = arith.constant 0 : index
    %c0_84 = arith.constant 0 : index
    %c0_85 = arith.constant 0 : index
    %117 = vector.load %arg9[%c0_83, %c0_84, %c0_85] : memref<9x128x128xbf16, #tpu.memory_space<vmem>>, vector<1x128x128xbf16>
    %118 = vector.shape_cast %117 : vector<1x128x128xbf16> to vector<128x128xbf16>
    %cst_86 = arith.constant dense<0.000000e+00> : vector<16x128xf32>
    %119 = tpu.matmul %116, %118, %cst_86 {dimension_numbers = #tpu.dot_dimension_numbers<[1], [0], [0], [1], [0, 0, 1, 1], [], []>} : vector<16x128xbf16>, vector<128x128xbf16>, vector<16x128xf32> -> vector<16x128xf32>
    %120 = arith.addf %115, %119 : vector<16x128xf32>
    %121 = vector.extract_strided_slice %114 {offsets = [16, 0], sizes = [16, 128], strides = [1, 1]} : vector<144x128xbf16> to vector<16x128xbf16>
    %c1_87 = arith.constant 1 : index
    %c0_88 = arith.constant 0 : index
    %c0_89 = arith.constant 0 : index
    %122 = vector.load %arg9[%c1_87, %c0_88, %c0_89] : memref<9x128x128xbf16, #tpu.memory_space<vmem>>, vector<1x128x128xbf16>
    %123 = vector.shape_cast %122 : vector<1x128x128xbf16> to vector<128x128xbf16>
    %cst_90 = arith.constant dense<0.000000e+00> : vector<16x128xf32>
    %124 = tpu.matmul %121, %123, %cst_90 {dimension_numbers = #tpu.dot_dimension_numbers<[1], [0], [0], [1], [0, 0, 1, 1], [], []>} : vector<16x128xbf16>, vector<128x128xbf16>, vector<16x128xf32> -> vector<16x128xf32>
    %125 = arith.addf %120, %124 : vector<16x128xf32>
    %126 = vector.extract_strided_slice %114 {offsets = [32, 0], sizes = [16, 128], strides = [1, 1]} : vector<144x128xbf16> to vector<16x128xbf16>
    %c2_91 = arith.constant 2 : index
    %c0_92 = arith.constant 0 : index
    %c0_93 = arith.constant 0 : index
    %127 = vector.load %arg9[%c2_91, %c0_92, %c0_93] : memref<9x128x128xbf16, #tpu.memory_space<vmem>>, vector<1x128x128xbf16>
    %128 = vector.shape_cast %127 : vector<1x128x128xbf16> to vector<128x128xbf16>
    %cst_94 = arith.constant dense<0.000000e+00> : vector<16x128xf32>
    %129 = tpu.matmul %126, %128, %cst_94 {dimension_numbers = #tpu.dot_dimension_numbers<[1], [0], [0], [1], [0, 0, 1, 1], [], []>} : vector<16x128xbf16>, vector<128x128xbf16>, vector<16x128xf32> -> vector<16x128xf32>
    %130 = arith.addf %125, %129 : vector<16x128xf32>
    %131 = vector.extract_strided_slice %114 {offsets = [48, 0], sizes = [16, 128], strides = [1, 1]} : vector<144x128xbf16> to vector<16x128xbf16>
    %c3_95 = arith.constant 3 : index
    %c0_96 = arith.constant 0 : index
    %c0_97 = arith.constant 0 : index
    %132 = vector.load %arg9[%c3_95, %c0_96, %c0_97] : memref<9x128x128xbf16, #tpu.memory_space<vmem>>, vector<1x128x128xbf16>
    %133 = vector.shape_cast %132 : vector<1x128x128xbf16> to vector<128x128xbf16>
    %cst_98 = arith.constant dense<0.000000e+00> : vector<16x128xf32>
    %134 = tpu.matmul %131, %133, %cst_98 {dimension_numbers = #tpu.dot_dimension_numbers<[1], [0], [0], [1], [0, 0, 1, 1], [], []>} : vector<16x128xbf16>, vector<128x128xbf16>, vector<16x128xf32> -> vector<16x128xf32>
    %135 = arith.addf %130, %134 : vector<16x128xf32>
    %136 = vector.extract_strided_slice %114 {offsets = [64, 0], sizes = [16, 128], strides = [1, 1]} : vector<144x128xbf16> to vector<16x128xbf16>
    %c4_99 = arith.constant 4 : index
    %c0_100 = arith.constant 0 : index
    %c0_101 = arith.constant 0 : index
    %137 = vector.load %arg9[%c4_99, %c0_100, %c0_101] : memref<9x128x128xbf16, #tpu.memory_space<vmem>>, vector<1x128x128xbf16>
    %138 = vector.shape_cast %137 : vector<1x128x128xbf16> to vector<128x128xbf16>
    %cst_102 = arith.constant dense<0.000000e+00> : vector<16x128xf32>
    %139 = tpu.matmul %136, %138, %cst_102 {dimension_numbers = #tpu.dot_dimension_numbers<[1], [0], [0], [1], [0, 0, 1, 1], [], []>} : vector<16x128xbf16>, vector<128x128xbf16>, vector<16x128xf32> -> vector<16x128xf32>
    %140 = arith.addf %135, %139 : vector<16x128xf32>
    %141 = vector.extract_strided_slice %114 {offsets = [80, 0], sizes = [16, 128], strides = [1, 1]} : vector<144x128xbf16> to vector<16x128xbf16>
    %c5_103 = arith.constant 5 : index
    %c0_104 = arith.constant 0 : index
    %c0_105 = arith.constant 0 : index
    %142 = vector.load %arg9[%c5_103, %c0_104, %c0_105] : memref<9x128x128xbf16, #tpu.memory_space<vmem>>, vector<1x128x128xbf16>
    %143 = vector.shape_cast %142 : vector<1x128x128xbf16> to vector<128x128xbf16>
    %cst_106 = arith.constant dense<0.000000e+00> : vector<16x128xf32>
    %144 = tpu.matmul %141, %143, %cst_106 {dimension_numbers = #tpu.dot_dimension_numbers<[1], [0], [0], [1], [0, 0, 1, 1], [], []>} : vector<16x128xbf16>, vector<128x128xbf16>, vector<16x128xf32> -> vector<16x128xf32>
    %145 = arith.addf %140, %144 : vector<16x128xf32>
    %146 = vector.extract_strided_slice %114 {offsets = [96, 0], sizes = [16, 128], strides = [1, 1]} : vector<144x128xbf16> to vector<16x128xbf16>
    %c6_107 = arith.constant 6 : index
    %c0_108 = arith.constant 0 : index
    %c0_109 = arith.constant 0 : index
    %147 = vector.load %arg9[%c6_107, %c0_108, %c0_109] : memref<9x128x128xbf16, #tpu.memory_space<vmem>>, vector<1x128x128xbf16>
    %148 = vector.shape_cast %147 : vector<1x128x128xbf16> to vector<128x128xbf16>
    %cst_110 = arith.constant dense<0.000000e+00> : vector<16x128xf32>
    %149 = tpu.matmul %146, %148, %cst_110 {dimension_numbers = #tpu.dot_dimension_numbers<[1], [0], [0], [1], [0, 0, 1, 1], [], []>} : vector<16x128xbf16>, vector<128x128xbf16>, vector<16x128xf32> -> vector<16x128xf32>
    %150 = arith.addf %145, %149 : vector<16x128xf32>
    %151 = vector.extract_strided_slice %114 {offsets = [112, 0], sizes = [16, 128], strides = [1, 1]} : vector<144x128xbf16> to vector<16x128xbf16>
    %c7_111 = arith.constant 7 : index
    %c0_112 = arith.constant 0 : index
    %c0_113 = arith.constant 0 : index
    %152 = vector.load %arg9[%c7_111, %c0_112, %c0_113] : memref<9x128x128xbf16, #tpu.memory_space<vmem>>, vector<1x128x128xbf16>
    %153 = vector.shape_cast %152 : vector<1x128x128xbf16> to vector<128x128xbf16>
    %cst_114 = arith.constant dense<0.000000e+00> : vector<16x128xf32>
    %154 = tpu.matmul %151, %153, %cst_114 {dimension_numbers = #tpu.dot_dimension_numbers<[1], [0], [0], [1], [0, 0, 1, 1], [], []>} : vector<16x128xbf16>, vector<128x128xbf16>, vector<16x128xf32> -> vector<16x128xf32>
    %155 = arith.addf %150, %154 : vector<16x128xf32>
    %156 = vector.extract_strided_slice %114 {offsets = [128, 0], sizes = [16, 128], strides = [1, 1]} : vector<144x128xbf16> to vector<16x128xbf16>
    %c8_115 = arith.constant 8 : index
    %c0_116 = arith.constant 0 : index
    %c0_117 = arith.constant 0 : index
    %157 = vector.load %arg9[%c8_115, %c0_116, %c0_117] : memref<9x128x128xbf16, #tpu.memory_space<vmem>>, vector<1x128x128xbf16>
    %158 = vector.shape_cast %157 : vector<1x128x128xbf16> to vector<128x128xbf16>
    %cst_118 = arith.constant dense<0.000000e+00> : vector<16x128xf32>
    %159 = tpu.matmul %156, %158, %cst_118 {dimension_numbers = #tpu.dot_dimension_numbers<[1], [0], [0], [1], [0, 0, 1, 1], [], []>} : vector<16x128xbf16>, vector<128x128xbf16>, vector<16x128xf32> -> vector<16x128xf32>
    %160 = arith.addf %155, %159 : vector<16x128xf32>
    %c0_119 = arith.constant 0 : index
    %c0_120 = arith.constant 0 : index
    %161 = vector.load %arg10[%c0_119, %c0_120] : memref<1x128xf32, #tpu.memory_space<vmem>>, vector<1x128xf32>
    %162 = vector.broadcast %161 : vector<1x128xf32> to vector<16x128xf32>
    %163 = arith.addf %160, %162 : vector<16x128xf32>
    %cst_121 = arith.constant 0.000000e+00 : f32
    %164 = vector.broadcast %cst_121 : f32 to vector<16x128xf32>
    %165 = arith.maximumf %163, %164 : vector<16x128xf32>
    %166 = arith.truncf %165 : vector<16x128xf32> to vector<16x128xbf16>
    %c0_122 = arith.constant 0 : index
    %c0_123 = arith.constant 0 : index
    %167 = vector.load %arg11[%c0_122, %c0_123] : memref<72x16xbf16, #tpu.memory_space<vmem>>, vector<72x16xbf16>
    %cst_124 = arith.constant dense<0.000000e+00> : vector<72x128xf32>
    %168 = tpu.matmul %167, %166, %cst_124 {dimension_numbers = #tpu.dot_dimension_numbers<[1], [0], [0], [1], [0, 0, 1, 1], [], []>} : vector<72x16xbf16>, vector<16x128xbf16>, vector<72x128xf32> -> vector<72x128xf32>
    %169 = arith.truncf %168 : vector<72x128xf32> to vector<72x128xbf16>
    %cst_125 = arith.constant 0.000000e+00 : f32
    %170 = vector.broadcast %cst_125 : f32 to vector<8x128xf32>
    %171 = vector.extract_strided_slice %169 {offsets = [0, 0], sizes = [8, 128], strides = [1, 1]} : vector<72x128xbf16> to vector<8x128xbf16>
    %c0_126 = arith.constant 0 : index
    %c0_127 = arith.constant 0 : index
    %c0_128 = arith.constant 0 : index
    %172 = vector.load %arg12[%c0_126, %c0_127, %c0_128] : memref<9x128x128xbf16, #tpu.memory_space<vmem>>, vector<1x128x128xbf16>
    %173 = vector.shape_cast %172 : vector<1x128x128xbf16> to vector<128x128xbf16>
    %cst_129 = arith.constant dense<0.000000e+00> : vector<8x128xf32>
    %174 = tpu.matmul %171, %173, %cst_129 {dimension_numbers = #tpu.dot_dimension_numbers<[1], [0], [0], [1], [0, 0, 1, 1], [], []>} : vector<8x128xbf16>, vector<128x128xbf16>, vector<8x128xf32> -> vector<8x128xf32>
    %175 = arith.addf %170, %174 : vector<8x128xf32>
    %176 = vector.extract_strided_slice %169 {offsets = [8, 0], sizes = [8, 128], strides = [1, 1]} : vector<72x128xbf16> to vector<8x128xbf16>
    %c1_130 = arith.constant 1 : index
    %c0_131 = arith.constant 0 : index
    %c0_132 = arith.constant 0 : index
    %177 = vector.load %arg12[%c1_130, %c0_131, %c0_132] : memref<9x128x128xbf16, #tpu.memory_space<vmem>>, vector<1x128x128xbf16>
    %178 = vector.shape_cast %177 : vector<1x128x128xbf16> to vector<128x128xbf16>
    %cst_133 = arith.constant dense<0.000000e+00> : vector<8x128xf32>
    %179 = tpu.matmul %176, %178, %cst_133 {dimension_numbers = #tpu.dot_dimension_numbers<[1], [0], [0], [1], [0, 0, 1, 1], [], []>} : vector<8x128xbf16>, vector<128x128xbf16>, vector<8x128xf32> -> vector<8x128xf32>
    %180 = arith.addf %175, %179 : vector<8x128xf32>
    %181 = vector.extract_strided_slice %169 {offsets = [16, 0], sizes = [8, 128], strides = [1, 1]} : vector<72x128xbf16> to vector<8x128xbf16>
    %c2_134 = arith.constant 2 : index
    %c0_135 = arith.constant 0 : index
    %c0_136 = arith.constant 0 : index
    %182 = vector.load %arg12[%c2_134, %c0_135, %c0_136] : memref<9x128x128xbf16, #tpu.memory_space<vmem>>, vector<1x128x128xbf16>
    %183 = vector.shape_cast %182 : vector<1x128x128xbf16> to vector<128x128xbf16>
    %cst_137 = arith.constant dense<0.000000e+00> : vector<8x128xf32>
    %184 = tpu.matmul %181, %183, %cst_137 {dimension_numbers = #tpu.dot_dimension_numbers<[1], [0], [0], [1], [0, 0, 1, 1], [], []>} : vector<8x128xbf16>, vector<128x128xbf16>, vector<8x128xf32> -> vector<8x128xf32>
    %185 = arith.addf %180, %184 : vector<8x128xf32>
    %186 = vector.extract_strided_slice %169 {offsets = [24, 0], sizes = [8, 128], strides = [1, 1]} : vector<72x128xbf16> to vector<8x128xbf16>
    %c3_138 = arith.constant 3 : index
    %c0_139 = arith.constant 0 : index
    %c0_140 = arith.constant 0 : index
    %187 = vector.load %arg12[%c3_138, %c0_139, %c0_140] : memref<9x128x128xbf16, #tpu.memory_space<vmem>>, vector<1x128x128xbf16>
    %188 = vector.shape_cast %187 : vector<1x128x128xbf16> to vector<128x128xbf16>
    %cst_141 = arith.constant dense<0.000000e+00> : vector<8x128xf32>
    %189 = tpu.matmul %186, %188, %cst_141 {dimension_numbers = #tpu.dot_dimension_numbers<[1], [0], [0], [1], [0, 0, 1, 1], [], []>} : vector<8x128xbf16>, vector<128x128xbf16>, vector<8x128xf32> -> vector<8x128xf32>
    %190 = arith.addf %185, %189 : vector<8x128xf32>
    %191 = vector.extract_strided_slice %169 {offsets = [32, 0], sizes = [8, 128], strides = [1, 1]} : vector<72x128xbf16> to vector<8x128xbf16>
    %c4_142 = arith.constant 4 : index
    %c0_143 = arith.constant 0 : index
    %c0_144 = arith.constant 0 : index
    %192 = vector.load %arg12[%c4_142, %c0_143, %c0_144] : memref<9x128x128xbf16, #tpu.memory_space<vmem>>, vector<1x128x128xbf16>
    %193 = vector.shape_cast %192 : vector<1x128x128xbf16> to vector<128x128xbf16>
    %cst_145 = arith.constant dense<0.000000e+00> : vector<8x128xf32>
    %194 = tpu.matmul %191, %193, %cst_145 {dimension_numbers = #tpu.dot_dimension_numbers<[1], [0], [0], [1], [0, 0, 1, 1], [], []>} : vector<8x128xbf16>, vector<128x128xbf16>, vector<8x128xf32> -> vector<8x128xf32>
    %195 = arith.addf %190, %194 : vector<8x128xf32>
    %196 = vector.extract_strided_slice %169 {offsets = [40, 0], sizes = [8, 128], strides = [1, 1]} : vector<72x128xbf16> to vector<8x128xbf16>
    %c5_146 = arith.constant 5 : index
    %c0_147 = arith.constant 0 : index
    %c0_148 = arith.constant 0 : index
    %197 = vector.load %arg12[%c5_146, %c0_147, %c0_148] : memref<9x128x128xbf16, #tpu.memory_space<vmem>>, vector<1x128x128xbf16>
    %198 = vector.shape_cast %197 : vector<1x128x128xbf16> to vector<128x128xbf16>
    %cst_149 = arith.constant dense<0.000000e+00> : vector<8x128xf32>
    %199 = tpu.matmul %196, %198, %cst_149 {dimension_numbers = #tpu.dot_dimension_numbers<[1], [0], [0], [1], [0, 0, 1, 1], [], []>} : vector<8x128xbf16>, vector<128x128xbf16>, vector<8x128xf32> -> vector<8x128xf32>
    %200 = arith.addf %195, %199 : vector<8x128xf32>
    %201 = vector.extract_strided_slice %169 {offsets = [48, 0], sizes = [8, 128], strides = [1, 1]} : vector<72x128xbf16> to vector<8x128xbf16>
    %c6_150 = arith.constant 6 : index
    %c0_151 = arith.constant 0 : index
    %c0_152 = arith.constant 0 : index
    %202 = vector.load %arg12[%c6_150, %c0_151, %c0_152] : memref<9x128x128xbf16, #tpu.memory_space<vmem>>, vector<1x128x128xbf16>
    %203 = vector.shape_cast %202 : vector<1x128x128xbf16> to vector<128x128xbf16>
    %cst_153 = arith.constant dense<0.000000e+00> : vector<8x128xf32>
    %204 = tpu.matmul %201, %203, %cst_153 {dimension_numbers = #tpu.dot_dimension_numbers<[1], [0], [0], [1], [0, 0, 1, 1], [], []>} : vector<8x128xbf16>, vector<128x128xbf16>, vector<8x128xf32> -> vector<8x128xf32>
    %205 = arith.addf %200, %204 : vector<8x128xf32>
    %206 = vector.extract_strided_slice %169 {offsets = [56, 0], sizes = [8, 128], strides = [1, 1]} : vector<72x128xbf16> to vector<8x128xbf16>
    %c7_154 = arith.constant 7 : index
    %c0_155 = arith.constant 0 : index
    %c0_156 = arith.constant 0 : index
    %207 = vector.load %arg12[%c7_154, %c0_155, %c0_156] : memref<9x128x128xbf16, #tpu.memory_space<vmem>>, vector<1x128x128xbf16>
    %208 = vector.shape_cast %207 : vector<1x128x128xbf16> to vector<128x128xbf16>
    %cst_157 = arith.constant dense<0.000000e+00> : vector<8x128xf32>
    %209 = tpu.matmul %206, %208, %cst_157 {dimension_numbers = #tpu.dot_dimension_numbers<[1], [0], [0], [1], [0, 0, 1, 1], [], []>} : vector<8x128xbf16>, vector<128x128xbf16>, vector<8x128xf32> -> vector<8x128xf32>
    %210 = arith.addf %205, %209 : vector<8x128xf32>
    %211 = vector.extract_strided_slice %169 {offsets = [64, 0], sizes = [8, 128], strides = [1, 1]} : vector<72x128xbf16> to vector<8x128xbf16>
    %c8_158 = arith.constant 8 : index
    %c0_159 = arith.constant 0 : index
    %c0_160 = arith.constant 0 : index
    %212 = vector.load %arg12[%c8_158, %c0_159, %c0_160] : memref<9x128x128xbf16, #tpu.memory_space<vmem>>, vector<1x128x128xbf16>
    %213 = vector.shape_cast %212 : vector<1x128x128xbf16> to vector<128x128xbf16>
    %cst_161 = arith.constant dense<0.000000e+00> : vector<8x128xf32>
    %214 = tpu.matmul %211, %213, %cst_161 {dimension_numbers = #tpu.dot_dimension_numbers<[1], [0], [0], [1], [0, 0, 1, 1], [], []>} : vector<8x128xbf16>, vector<128x128xbf16>, vector<8x128xf32> -> vector<8x128xf32>
    %215 = arith.addf %210, %214 : vector<8x128xf32>
    %c0_162 = arith.constant 0 : index
    %c0_163 = arith.constant 0 : index
    %216 = vector.load %arg13[%c0_162, %c0_163] : memref<1x128xf32, #tpu.memory_space<vmem>>, vector<1x128xf32>
    %217 = vector.broadcast %216 : vector<1x128xf32> to vector<8x128xf32>
    %218 = arith.addf %215, %217 : vector<8x128xf32>
    %cst_164 = arith.constant 0.000000e+00 : f32
    %219 = vector.broadcast %cst_164 : f32 to vector<8x128xf32>
    %220 = arith.maximumf %218, %219 : vector<8x128xf32>
    %221 = arith.truncf %220 : vector<8x128xf32> to vector<8x128xbf16>
    %c0_165 = arith.constant 0 : index
    %c0_166 = arith.constant 0 : index
    %222 = vector.load %arg14[%c0_165, %c0_166] : memref<72x8xbf16, #tpu.memory_space<vmem>>, vector<72x8xbf16>
    %cst_167 = arith.constant dense<0.000000e+00> : vector<72x128xf32>
    %223 = tpu.matmul %222, %221, %cst_167 {dimension_numbers = #tpu.dot_dimension_numbers<[1], [0], [0], [1], [0, 0, 1, 1], [], []>} : vector<72x8xbf16>, vector<8x128xbf16>, vector<72x128xf32> -> vector<72x128xf32>
    %224 = arith.truncf %223 : vector<72x128xf32> to vector<72x128xbf16>
    %cst_168 = arith.constant 0.000000e+00 : f32
    %225 = vector.broadcast %cst_168 : f32 to vector<8x256xf32>
    %226 = vector.extract_strided_slice %224 {offsets = [0, 0], sizes = [8, 128], strides = [1, 1]} : vector<72x128xbf16> to vector<8x128xbf16>
    %c0_169 = arith.constant 0 : index
    %c0_170 = arith.constant 0 : index
    %c0_171 = arith.constant 0 : index
    %227 = vector.load %arg15[%c0_169, %c0_170, %c0_171] : memref<9x128x256xbf16, #tpu.memory_space<vmem>>, vector<1x128x256xbf16>
    %228 = vector.shape_cast %227 : vector<1x128x256xbf16> to vector<128x256xbf16>
    %cst_172 = arith.constant dense<0.000000e+00> : vector<8x256xf32>
    %229 = tpu.matmul %226, %228, %cst_172 {dimension_numbers = #tpu.dot_dimension_numbers<[1], [0], [0], [1], [0, 0, 1, 1], [], []>} : vector<8x128xbf16>, vector<128x256xbf16>, vector<8x256xf32> -> vector<8x256xf32>
    %230 = arith.addf %225, %229 : vector<8x256xf32>
    %231 = vector.extract_strided_slice %224 {offsets = [8, 0], sizes = [8, 128], strides = [1, 1]} : vector<72x128xbf16> to vector<8x128xbf16>
    %c1_173 = arith.constant 1 : index
    %c0_174 = arith.constant 0 : index
    %c0_175 = arith.constant 0 : index
    %232 = vector.load %arg15[%c1_173, %c0_174, %c0_175] : memref<9x128x256xbf16, #tpu.memory_space<vmem>>, vector<1x128x256xbf16>
    %233 = vector.shape_cast %232 : vector<1x128x256xbf16> to vector<128x256xbf16>
    %cst_176 = arith.constant dense<0.000000e+00> : vector<8x256xf32>
    %234 = tpu.matmul %231, %233, %cst_176 {dimension_numbers = #tpu.dot_dimension_numbers<[1], [0], [0], [1], [0, 0, 1, 1], [], []>} : vector<8x128xbf16>, vector<128x256xbf16>, vector<8x256xf32> -> vector<8x256xf32>
    %235 = arith.addf %230, %234 : vector<8x256xf32>
    %236 = vector.extract_strided_slice %224 {offsets = [16, 0], sizes = [8, 128], strides = [1, 1]} : vector<72x128xbf16> to vector<8x128xbf16>
    %c2_177 = arith.constant 2 : index
    %c0_178 = arith.constant 0 : index
    %c0_179 = arith.constant 0 : index
    %237 = vector.load %arg15[%c2_177, %c0_178, %c0_179] : memref<9x128x256xbf16, #tpu.memory_space<vmem>>, vector<1x128x256xbf16>
    %238 = vector.shape_cast %237 : vector<1x128x256xbf16> to vector<128x256xbf16>
    %cst_180 = arith.constant dense<0.000000e+00> : vector<8x256xf32>
    %239 = tpu.matmul %236, %238, %cst_180 {dimension_numbers = #tpu.dot_dimension_numbers<[1], [0], [0], [1], [0, 0, 1, 1], [], []>} : vector<8x128xbf16>, vector<128x256xbf16>, vector<8x256xf32> -> vector<8x256xf32>
    %240 = arith.addf %235, %239 : vector<8x256xf32>
    %241 = vector.extract_strided_slice %224 {offsets = [24, 0], sizes = [8, 128], strides = [1, 1]} : vector<72x128xbf16> to vector<8x128xbf16>
    %c3_181 = arith.constant 3 : index
    %c0_182 = arith.constant 0 : index
    %c0_183 = arith.constant 0 : index
    %242 = vector.load %arg15[%c3_181, %c0_182, %c0_183] : memref<9x128x256xbf16, #tpu.memory_space<vmem>>, vector<1x128x256xbf16>
    %243 = vector.shape_cast %242 : vector<1x128x256xbf16> to vector<128x256xbf16>
    %cst_184 = arith.constant dense<0.000000e+00> : vector<8x256xf32>
    %244 = tpu.matmul %241, %243, %cst_184 {dimension_numbers = #tpu.dot_dimension_numbers<[1], [0], [0], [1], [0, 0, 1, 1], [], []>} : vector<8x128xbf16>, vector<128x256xbf16>, vector<8x256xf32> -> vector<8x256xf32>
    %245 = arith.addf %240, %244 : vector<8x256xf32>
    %246 = vector.extract_strided_slice %224 {offsets = [32, 0], sizes = [8, 128], strides = [1, 1]} : vector<72x128xbf16> to vector<8x128xbf16>
    %c4_185 = arith.constant 4 : index
    %c0_186 = arith.constant 0 : index
    %c0_187 = arith.constant 0 : index
    %247 = vector.load %arg15[%c4_185, %c0_186, %c0_187] : memref<9x128x256xbf16, #tpu.memory_space<vmem>>, vector<1x128x256xbf16>
    %248 = vector.shape_cast %247 : vector<1x128x256xbf16> to vector<128x256xbf16>
    %cst_188 = arith.constant dense<0.000000e+00> : vector<8x256xf32>
    %249 = tpu.matmul %246, %248, %cst_188 {dimension_numbers = #tpu.dot_dimension_numbers<[1], [0], [0], [1], [0, 0, 1, 1], [], []>} : vector<8x128xbf16>, vector<128x256xbf16>, vector<8x256xf32> -> vector<8x256xf32>
    %250 = arith.addf %245, %249 : vector<8x256xf32>
    %251 = vector.extract_strided_slice %224 {offsets = [40, 0], sizes = [8, 128], strides = [1, 1]} : vector<72x128xbf16> to vector<8x128xbf16>
    %c5_189 = arith.constant 5 : index
    %c0_190 = arith.constant 0 : index
    %c0_191 = arith.constant 0 : index
    %252 = vector.load %arg15[%c5_189, %c0_190, %c0_191] : memref<9x128x256xbf16, #tpu.memory_space<vmem>>, vector<1x128x256xbf16>
    %253 = vector.shape_cast %252 : vector<1x128x256xbf16> to vector<128x256xbf16>
    %cst_192 = arith.constant dense<0.000000e+00> : vector<8x256xf32>
    %254 = tpu.matmul %251, %253, %cst_192 {dimension_numbers = #tpu.dot_dimension_numbers<[1], [0], [0], [1], [0, 0, 1, 1], [], []>} : vector<8x128xbf16>, vector<128x256xbf16>, vector<8x256xf32> -> vector<8x256xf32>
    %255 = arith.addf %250, %254 : vector<8x256xf32>
    %256 = vector.extract_strided_slice %224 {offsets = [48, 0], sizes = [8, 128], strides = [1, 1]} : vector<72x128xbf16> to vector<8x128xbf16>
    %c6_193 = arith.constant 6 : index
    %c0_194 = arith.constant 0 : index
    %c0_195 = arith.constant 0 : index
    %257 = vector.load %arg15[%c6_193, %c0_194, %c0_195] : memref<9x128x256xbf16, #tpu.memory_space<vmem>>, vector<1x128x256xbf16>
    %258 = vector.shape_cast %257 : vector<1x128x256xbf16> to vector<128x256xbf16>
    %cst_196 = arith.constant dense<0.000000e+00> : vector<8x256xf32>
    %259 = tpu.matmul %256, %258, %cst_196 {dimension_numbers = #tpu.dot_dimension_numbers<[1], [0], [0], [1], [0, 0, 1, 1], [], []>} : vector<8x128xbf16>, vector<128x256xbf16>, vector<8x256xf32> -> vector<8x256xf32>
    %260 = arith.addf %255, %259 : vector<8x256xf32>
    %261 = vector.extract_strided_slice %224 {offsets = [56, 0], sizes = [8, 128], strides = [1, 1]} : vector<72x128xbf16> to vector<8x128xbf16>
    %c7_197 = arith.constant 7 : index
    %c0_198 = arith.constant 0 : index
    %c0_199 = arith.constant 0 : index
    %262 = vector.load %arg15[%c7_197, %c0_198, %c0_199] : memref<9x128x256xbf16, #tpu.memory_space<vmem>>, vector<1x128x256xbf16>
    %263 = vector.shape_cast %262 : vector<1x128x256xbf16> to vector<128x256xbf16>
    %cst_200 = arith.constant dense<0.000000e+00> : vector<8x256xf32>
    %264 = tpu.matmul %261, %263, %cst_200 {dimension_numbers = #tpu.dot_dimension_numbers<[1], [0], [0], [1], [0, 0, 1, 1], [], []>} : vector<8x128xbf16>, vector<128x256xbf16>, vector<8x256xf32> -> vector<8x256xf32>
    %265 = arith.addf %260, %264 : vector<8x256xf32>
    %266 = vector.extract_strided_slice %224 {offsets = [64, 0], sizes = [8, 128], strides = [1, 1]} : vector<72x128xbf16> to vector<8x128xbf16>
    %c8_201 = arith.constant 8 : index
    %c0_202 = arith.constant 0 : index
    %c0_203 = arith.constant 0 : index
    %267 = vector.load %arg15[%c8_201, %c0_202, %c0_203] : memref<9x128x256xbf16, #tpu.memory_space<vmem>>, vector<1x128x256xbf16>
    %268 = vector.shape_cast %267 : vector<1x128x256xbf16> to vector<128x256xbf16>
    %cst_204 = arith.constant dense<0.000000e+00> : vector<8x256xf32>
    %269 = tpu.matmul %266, %268, %cst_204 {dimension_numbers = #tpu.dot_dimension_numbers<[1], [0], [0], [1], [0, 0, 1, 1], [], []>} : vector<8x128xbf16>, vector<128x256xbf16>, vector<8x256xf32> -> vector<8x256xf32>
    %270 = arith.addf %265, %269 : vector<8x256xf32>
    %c0_205 = arith.constant 0 : index
    %c0_206 = arith.constant 0 : index
    %271 = vector.load %arg16[%c0_205, %c0_206] : memref<1x256xf32, #tpu.memory_space<vmem>>, vector<1x256xf32>
    %272 = vector.broadcast %271 : vector<1x256xf32> to vector<8x256xf32>
    %273 = arith.addf %270, %272 : vector<8x256xf32>
    %cst_207 = arith.constant 0.000000e+00 : f32
    %274 = vector.broadcast %cst_207 : f32 to vector<8x256xf32>
    %275 = arith.maximumf %273, %274 : vector<8x256xf32>
    %276 = arith.truncf %275 : vector<8x256xf32> to vector<8x256xbf16>
    %277 = vector.extract_strided_slice %276 {offsets = [0, 0], sizes = [1, 256], strides = [1, 1]} : vector<8x256xbf16> to vector<1x256xbf16>
    %c0_208 = arith.constant 0 : index
    %c0_209 = arith.constant 0 : index
    %278 = vector.load %arg17[%c0_208, %c0_209] : memref<256x256xbf16, #tpu.memory_space<vmem>>, vector<256x256xbf16>
    %cst_210 = arith.constant dense<0.000000e+00> : vector<1x256xf32>
    %279 = tpu.matmul %277, %278, %cst_210 {dimension_numbers = #tpu.dot_dimension_numbers<[1], [0], [0], [1], [0, 0, 1, 1], [], []>} : vector<1x256xbf16>, vector<256x256xbf16>, vector<1x256xf32> -> vector<1x256xf32>
    %c0_211 = arith.constant 0 : index
    %c0_212 = arith.constant 0 : index
    %280 = vector.load %arg18[%c0_211, %c0_212] : memref<1x256xf32, #tpu.memory_space<vmem>>, vector<1x256xf32>
    %281 = arith.addf %279, %280 : vector<1x256xf32>
    %cst_213 = arith.constant 0.000000e+00 : f32
    %282 = vector.broadcast %cst_213 : f32 to vector<1x256xf32>
    %283 = arith.maximumf %281, %282 : vector<1x256xf32>
    %c0_214 = arith.constant 0 : index
    %c0_215 = arith.constant 0 : index
    %c0_216 = arith.constant 0 : index
    %284 = vector.load %arg19[%c0_214, %c0_215, %c0_216] : memref<1x1x256xf32, #tpu.memory_space<vmem>>, vector<1x1x256xf32>
    %285 = vector.shape_cast %284 : vector<1x1x256xf32> to vector<1x256xf32>
    %286 = vector.shape_cast %283 : vector<1x256xf32> to vector<1x1x256xf32>
    tpu.vector_store %arg19[%c0_214, %c0_215, %c0_216], %286 {strides = array<i32>} : memref<1x1x256xf32, #tpu.memory_space<vmem>>, vector<1x1x256xf32>,
    return
  }
  func.func @transform_0(%arg0: i32) -> (i32, i32, i32) {
    %c0_i32 = arith.constant 0 : i32
    %c0_i32_0 = arith.constant 0 : i32
    %c0_i32_1 = arith.constant 0 : i32
    return %arg0, %c0_i32, %c0_i32_0 : i32, i32, i32
  }
  func.func @transform_1(%arg0: i32) -> (i32, i32) {
    %c0_i32 = arith.constant 0 : i32
    %c0_i32_0 = arith.constant 0 : i32
    %c0_i32_1 = arith.constant 0 : i32
    return %c0_i32, %c0_i32_0 : i32, i32
  }
  func.func @transform_2(%arg0: i32) -> (i32, i32, i32) {
    %c0_i32 = arith.constant 0 : i32
    %c0_i32_0 = arith.constant 0 : i32
    %c0_i32_1 = arith.constant 0 : i32
    %c0_i32_2 = arith.constant 0 : i32
    return %c0_i32, %c0_i32_0, %c0_i32_1 : i32, i32, i32
  }
  func.func @transform_3(%arg0: i32) -> (i32, i32) {
    %c0_i32 = arith.constant 0 : i32
    %c0_i32_0 = arith.constant 0 : i32
    %c0_i32_1 = arith.constant 0 : i32
    return %c0_i32, %c0_i32_0 : i32, i32
  }
  func.func @transform_4(%arg0: i32) -> (i32, i32) {
    %c0_i32 = arith.constant 0 : i32
    %c0_i32_0 = arith.constant 0 : i32
    %c0_i32_1 = arith.constant 0 : i32
    return %c0_i32, %c0_i32_0 : i32, i32
  }
  func.func @transform_5(%arg0: i32) -> (i32, i32, i32) {
    %c0_i32 = arith.constant 0 : i32
    %c0_i32_0 = arith.constant 0 : i32
    %c0_i32_1 = arith.constant 0 : i32
    %c0_i32_2 = arith.constant 0 : i32
    return %c0_i32, %c0_i32_0, %c0_i32_1 : i32, i32, i32
  }
  func.func @transform_6(%arg0: i32) -> (i32, i32) {
    %c0_i32 = arith.constant 0 : i32
    %c0_i32_0 = arith.constant 0 : i32
    %c0_i32_1 = arith.constant 0 : i32
    return %c0_i32, %c0_i32_0 : i32, i32
  }
  func.func @transform_7(%arg0: i32) -> (i32, i32) {
    %c0_i32 = arith.constant 0 : i32
    %c0_i32_0 = arith.constant 0 : i32
    %c0_i32_1 = arith.constant 0 : i32
    return %c0_i32, %c0_i32_0 : i32, i32
  }
  func.func @transform_8(%arg0: i32) -> (i32, i32, i32) {
    %c0_i32 = arith.constant 0 : i32
    %c0_i32_0 = arith.constant 0 : i32
    %c0_i32_1 = arith.constant 0 : i32
    %c0_i32_2 = arith.constant 0 : i32
    return %c0_i32, %c0_i32_0, %c0_i32_1 : i32, i32, i32
  }
  func.func @transform_9(%arg0: i32) -> (i32, i32) {
    %c0_i32 = arith.constant 0 : i32
    %c0_i32_0 = arith.constant 0 : i32
    %c0_i32_1 = arith.constant 0 : i32
    return %c0_i32, %c0_i32_0 : i32, i32
  }
  func.func @transform_10(%arg0: i32) -> (i32, i32) {
    %c0_i32 = arith.constant 0 : i32
    %c0_i32_0 = arith.constant 0 : i32
    %c0_i32_1 = arith.constant 0 : i32
    return %c0_i32, %c0_i32_0 : i32, i32
  }
  func.func @transform_11(%arg0: i32) -> (i32, i32, i32) {
    %c0_i32 = arith.constant 0 : i32
    %c0_i32_0 = arith.constant 0 : i32
    %c0_i32_1 = arith.constant 0 : i32
    %c0_i32_2 = arith.constant 0 : i32
    return %c0_i32, %c0_i32_0, %c0_i32_1 : i32, i32, i32
  }
  func.func @transform_12(%arg0: i32) -> (i32, i32) {
    %c0_i32 = arith.constant 0 : i32
    %c0_i32_0 = arith.constant 0 : i32
    %c0_i32_1 = arith.constant 0 : i32
    return %c0_i32, %c0_i32_0 : i32, i32
  }
  func.func @transform_13(%arg0: i32) -> (i32, i32) {
    %c0_i32 = arith.constant 0 : i32
    %c0_i32_0 = arith.constant 0 : i32
    %c0_i32_1 = arith.constant 0 : i32
    return %c0_i32, %c0_i32_0 : i32, i32
  }
  func.func @transform_14(%arg0: i32) -> (i32, i32, i32) {
    %c0_i32 = arith.constant 0 : i32
    %c0_i32_0 = arith.constant 0 : i32
    %c0_i32_1 = arith.constant 0 : i32
    %c0_i32_2 = arith.constant 0 : i32
    return %c0_i32, %c0_i32_0, %c0_i32_1 : i32, i32, i32
  }
  func.func @transform_15(%arg0: i32) -> (i32, i32) {
    %c0_i32 = arith.constant 0 : i32
    %c0_i32_0 = arith.constant 0 : i32
    %c0_i32_1 = arith.constant 0 : i32
    return %c0_i32, %c0_i32_0 : i32, i32
  }
  func.func @transform_16(%arg0: i32) -> (i32, i32) {
    %c0_i32 = arith.constant 0 : i32
    %c0_i32_0 = arith.constant 0 : i32
    %c0_i32_1 = arith.constant 0 : i32
    return %c0_i32, %c0_i32_0 : i32, i32
  }
  func.func @transform_17(%arg0: i32) -> (i32, i32) {
    %c0_i32 = arith.constant 0 : i32
    %c0_i32_0 = arith.constant 0 : i32
    %c0_i32_1 = arith.constant 0 : i32
    return %c0_i32, %c0_i32_0 : i32, i32
  }
  func.func @transform_18(%arg0: i32) -> (i32, i32, i32) {
    %c0_i32 = arith.constant 0 : i32
    %c0_i32_0 = arith.constant 0 : i32
    %c0_i32_1 = arith.constant 0 : i32
    return %arg0, %c0_i32, %c0_i32_0 : i32, i32, i32
  }
}

</mosaic_0001>

<llo_original>
// kernel: coordinate_extractor_forward.1
$region0: #{coordinate_extractor_forward.1}
  #allocation0 [shape = 'u32[]', space=smem, size = 0x4, offset = 0x4, fixed_abs, tag = 'smem constant byte address 0x4 - core index']
  #allocation1 [shape = 'u32[144,128]{1,0:T(1,128)}', space=vmem, size = 0x12000, scoped, tag = 'internal scratch']
  %s0 = inlined_call_operand.vmem [shape: bf16[2,256,8], index: 0, kind: input, shape index: {}]
  %s1 = inlined_call_operand.vmem [shape: bf16[2304,256], index: 1, kind: input, shape index: {}]
  %s2 = inlined_call_operand.vmem [shape: bf16[9,8,128], index: 2, kind: input, shape index: {}]
  %s3 = inlined_call_operand.vmem [shape: f32[1,128], index: 3, kind: input, shape index: {}]
  %s4 = inlined_call_operand.vmem [shape: bf16[576,256], index: 4, kind: input, shape index: {}]
  %s5 = inlined_call_operand.vmem [shape: bf16[9,128,128], index: 5, kind: input, shape index: {}]
  %s6 = inlined_call_operand.vmem [shape: f32[1,128], index: 6, kind: input, shape index: {}]
  %s7 = inlined_call_operand.vmem [shape: bf16[144,64], index: 7, kind: input, shape index: {}]
  %s8 = inlined_call_operand.vmem [shape: bf16[9,128,128], index: 8, kind: input, shape index: {}]
  %s9 = inlined_call_operand.vmem [shape: f32[1,128], index: 9, kind: input, shape index: {}]
  %s10 = inlined_call_operand.vmem [shape: bf16[72,16], index: 10, kind: input, shape index: {}]
  %s11 = inlined_call_operand.vmem [shape: bf16[9,128,128], index: 11, kind: input, shape index: {}]
  %s12 = inlined_call_operand.vmem [shape: f32[1,128], index: 12, kind: input, shape index: {}]
  %s13 = inlined_call_operand.vmem [shape: bf16[72,8], index: 13, kind: input, shape index: {}]
  %s14 = inlined_call_operand.vmem [shape: bf16[9,128,256], index: 14, kind: input, shape index: {}]
  %s15 = inlined_call_operand.vmem [shape: f32[1,256], index: 15, kind: input, shape index: {}]
  %s16 = inlined_call_operand.vmem [shape: bf16[256,256], index: 16, kind: input, shape index: {}]
  %s17 = inlined_call_operand.vmem [shape: f32[1,256], index: 17, kind: input, shape index: {}]
  %s18 = inlined_call_operand.hbm [shape: f32[2,1,256], index: 18, kind: output, shape index: {}]
  %s19 = sld [smem:[#allocation0]]
  $region105: #{coordinate_extractor_forward.1} parent=0
    _
  %s21 = ssub.s32 1, %s19
  %s22 = scalar_select 0, %s21, %s19
  $region1: #{coordinate_extractor_forward.1} parent=0
    #allocation2 [shape = 'u8[2048]{0}', space=vmem, size = 0x800, scoped, tag = 'output window, operand 0']
    #allocation3 [shape = 's32[2]{0}', space=sflag, size = 0x8, scoped, tag = 'scoped memory for coordinate_extractor_forward.1']
    %23 = vsyncpa [#allocation3], 0
    %s24 = scalar_lea.sflag [#allocation3], 1
    %25 = vsyncpa %s24, 0
    loop: start=0, step=1, limit=4
    $region2: #{coordinate_extractor_forward.1} parent=1 // loop_pre_header
      _
    $region3: #{coordinate_extractor_forward.1} parent=1 // loop_header
      %s27 = sphi 0, %s31
      %p28 = scmp.ge.s32.totalorder %s27, 4
      %s37 = sphi 0, %s39
      %s40 = sphi 0, %s37
      %s41 = sphi 0, %s40
      %s57 = sphi 0, %s41
      %s61 = sphi 0, %s61
      %s63 = sphi 0, %s61
      %s64 = sphi 0, %s63
      %s78 = sphi 0, %s64
      %s82 = sphi 0, %s82
      %s84 = sphi 0, %s82
      %s85 = sphi 0, %s84
      %s99 = sphi 0, %s85
      %s103 = sphi 0, %s103
      %s105 = sphi 0, %s103
      %s106 = sphi 0, %s105
      %s120 = sphi 0, %s106
      %s124 = sphi 0, %s124
      %s126 = sphi 0, %s124
      %s127 = sphi 0, %s126
      %s141 = sphi 0, %s127
      %s145 = sphi 0, %s145
      %s147 = sphi 0, %s145
      %s148 = sphi 0, %s147
      %s162 = sphi 0, %s148
      %s166 = sphi 0, %s166
      %s168 = sphi 0, %s166
      %s169 = sphi 0, %s168
      %s183 = sphi 0, %s169
      %s187 = sphi 0, %s187
      %s189 = sphi 0, %s187
      %s190 = sphi 0, %s189
      %s204 = sphi 0, %s190
      %s208 = sphi 0, %s208
      %s210 = sphi 0, %s208
      %s211 = sphi 0, %s210
      %s225 = sphi 0, %s211
      %s229 = sphi 0, %s229
      %s231 = sphi 0, %s229
      %s232 = sphi 0, %s231
      %s246 = sphi 0, %s232
      %s250 = sphi 0, %s250
      %s252 = sphi 0, %s250
      %s253 = sphi 0, %s252
      %s267 = sphi 0, %s253
      %s271 = sphi 0, %s271
      %s273 = sphi 0, %s271
      %s274 = sphi 0, %s273
      %s288 = sphi 0, %s274
      %s292 = sphi 0, %s292
      %s294 = sphi 0, %s292
      %s295 = sphi 0, %s294
      %s309 = sphi 0, %s295
      %s313 = sphi 0, %s313
      %s315 = sphi 0, %s313
      %s316 = sphi 0, %s315
      %s330 = sphi 0, %s316
      %s334 = sphi 0, %s334
      %s336 = sphi 0, %s334
      %s337 = sphi 0, %s336
      %s351 = sphi 0, %s337
      %s355 = sphi 0, %s355
      %s357 = sphi 0, %s355
      %s358 = sphi 0, %s357
      %s372 = sphi 0, %s358
      %s376 = sphi 0, %s376
      %s378 = sphi 0, %s376
      %s379 = sphi 0, %s378
      %s393 = sphi 0, %s379
      %s397 = sphi 0, %s397
      %s399 = sphi 0, %s397
      %s400 = sphi 0, %s399
      %s414 = sphi 0, %s400
      %s420 = sphi 0, %s422
      %s423 = sphi 0, %s420
      %s424 = sphi 0, %s423
      %s440 = sphi 0, %s424
    $region4: #{coordinate_extractor_forward.1} parent=1 // loop_header_branch
      %30 = sbr.rel (%p28) target = $region8
    $region5: #{coordinate_extractor_forward.1} parent=1 // loop_body
      %s32 = ssub.s32 %s27, 1
      %s33 = ssub.s32 %s27, 2
      %s34 = sadd.s32 %s27, 1
      %s35 = ssub.s32 %s27, %s34
      %p36 = scmp.eq.s32.totalorder %s35, 0
      %s38 = sadd.s32 %s37, 1
      %s39 = scalar_select %p36, %s37, %s38
      %p42 = pneg %p36
      %p43 = scmp.eq.s32.totalorder %s27, 1
      %p44 = por %p42, %p43
      %p45 = scmp.ne.s32.totalorder %s37, %s40
      %p46 = scmp.eq.s32.totalorder %s27, 0
      %p47 = por %p45, %p46
      %p48 = scmp.ne.s32.totalorder %s37, %s40
      %p49 = scmp.eq.s32.totalorder %s32, 1
      %p50 = por %p48, %p49
      %p51 = scmp.ne.s32.totalorder %s40, %s41
      %p52 = scmp.eq.s32.totalorder %s32, 0
      %p53 = por %p51, %p52
      %p54 = scmp.ne.s32.totalorder %s40, %s41
      %p55 = scmp.eq.s32.totalorder %s33, 1
      %p56 = por %p54, %p55
      %p58 = scmp.ne.s32.totalorder %s41, %s57
      %p59 = scmp.eq.s32.totalorder %s33, 0
      %p60 = por %p58, %p59
      %s62 = sadd.s32 %s61, 1
      %p65 = scmp.eq.s32.totalorder %s27, 1
      %p66 = scmp.ne.s32.totalorder %s61, %s63
      %p67 = scmp.eq.s32.totalorder %s27, 0
      %p68 = por %p66, %p67
      %p69 = scmp.ne.s32.totalorder %s61, %s63
      %p70 = scmp.eq.s32.totalorder %s32, 1
      %p71 = por %p69, %p70
      %p72 = scmp.ne.s32.totalorder %s63, %s64
      %p73 = scmp.eq.s32.totalorder %s32, 0
      %p74 = por %p72, %p73
      %p75 = scmp.ne.s32.totalorder %s63, %s64
      %p76 = scmp.eq.s32.totalorder %s33, 1
      %p77 = por %p75, %p76
      %p79 = scmp.ne.s32.totalorder %s64, %s78
      %p80 = scmp.eq.s32.totalorder %s33, 0
      %p81 = por %p79, %p80
      %s83 = sadd.s32 %s82, 1
      %p86 = scmp.eq.s32.totalorder %s27, 1
      %p87 = scmp.ne.s32.totalorder %s82, %s84
      %p88 = scmp.eq.s32.totalorder %s27, 0
      %p89 = por %p87, %p88
      %p90 = scmp.ne.s32.totalorder %s82, %s84
      %p91 = scmp.eq.s32.totalorder %s32, 1
      %p92 = por %p90, %p91
      %p93 = scmp.ne.s32.totalorder %s84, %s85
      %p94 = scmp.eq.s32.totalorder %s32, 0
      %p95 = por %p93, %p94
      %p96 = scmp.ne.s32.totalorder %s84, %s85
      %p97 = scmp.eq.s32.totalorder %s33, 1
      %p98 = por %p96, %p97
      %p100 = scmp.ne.s32.totalorder %s85, %s99
      %p101 = scmp.eq.s32.totalorder %s33, 0
      %p102 = por %p100, %p101
      %s104 = sadd.s32 %s103, 1
      %p107 = scmp.eq.s32.totalorder %s27, 1
      %p108 = scmp.ne.s32.totalorder %s103, %s105
      %p109 = scmp.eq.s32.totalorder %s27, 0
      %p110 = por %p108, %p109
      %p111 = scmp.ne.s32.totalorder %s103, %s105
      %p112 = scmp.eq.s32.totalorder %s32, 1
      %p113 = por %p111, %p112
      %p114 = scmp.ne.s32.totalorder %s105, %s106
      %p115 = scmp.eq.s32.totalorder %s32, 0
      %p116 = por %p114, %p115
      %p117 = scmp.ne.s32.totalorder %s105, %s106
      %p118 = scmp.eq.s32.totalorder %s33, 1
      %p119 = por %p117, %p118
      %p121 = scmp.ne.s32.totalorder %s106, %s120
      %p122 = scmp.eq.s32.totalorder %s33, 0
      %p123 = por %p121, %p122
      %s125 = sadd.s32 %s124, 1
      %p128 = scmp.eq.s32.totalorder %s27, 1
      %p129 = scmp.ne.s32.totalorder %s124, %s126
      %p130 = scmp.eq.s32.totalorder %s27, 0
      %p131 = por %p129, %p130
      %p132 = scmp.ne.s32.totalorder %s124, %s126
      %p133 = scmp.eq.s32.totalorder %s32, 1
      %p134 = por %p132, %p133
      %p135 = scmp.ne.s32.totalorder %s126, %s127
      %p136 = scmp.eq.s32.totalorder %s32, 0
      %p137 = por %p135, %p136
      %p138 = scmp.ne.s32.totalorder %s126, %s127
      %p139 = scmp.eq.s32.totalorder %s33, 1
      %p140 = por %p138, %p139
      %p142 = scmp.ne.s32.totalorder %s127, %s141
      %p143 = scmp.eq.s32.totalorder %s33, 0
      %p144 = por %p142, %p143
      %s146 = sadd.s32 %s145, 1
      %p149 = scmp.eq.s32.totalorder %s27, 1
      %p150 = scmp.ne.s32.totalorder %s145, %s147
      %p151 = scmp.eq.s32.totalorder %s27, 0
      %p152 = por %p150, %p151
      %p153 = scmp.ne.s32.totalorder %s145, %s147
      %p154 = scmp.eq.s32.totalorder %s32, 1
      %p155 = por %p153, %p154
      %p156 = scmp.ne.s32.totalorder %s147, %s148
      %p157 = scmp.eq.s32.totalorder %s32, 0
      %p158 = por %p156, %p157
      %p159 = scmp.ne.s32.totalorder %s147, %s148
      %p160 = scmp.eq.s32.totalorder %s33, 1
      %p161 = por %p159, %p160
      %p163 = scmp.ne.s32.totalorder %s148, %s162
      %p164 = scmp.eq.s32.totalorder %s33, 0
      %p165 = por %p163, %p164
      %s167 = sadd.s32 %s166, 1
      %p170 = scmp.eq.s32.totalorder %s27, 1
      %p171 = scmp.ne.s32.totalorder %s166, %s168
      %p172 = scmp.eq.s32.totalorder %s27, 0
      %p173 = por %p171, %p172
      %p174 = scmp.ne.s32.totalorder %s166, %s168
      %p175 = scmp.eq.s32.totalorder %s32, 1
      %p176 = por %p174, %p175
      %p177 = scmp.ne.s32.totalorder %s168, %s169
      %p178 = scmp.eq.s32.totalorder %s32, 0
      %p179 = por %p177, %p178
      %p180 = scmp.ne.s32.totalorder %s168, %s169
      %p181 = scmp.eq.s32.totalorder %s33, 1
      %p182 = por %p180, %p181
      %p184 = scmp.ne.s32.totalorder %s169, %s183
      %p185 = scmp.eq.s32.totalorder %s33, 0
      %p186 = por %p184, %p185
      %s188 = sadd.s32 %s187, 1
      %p191 = scmp.eq.s32.totalorder %s27, 1
      %p192 = scmp.ne.s32.totalorder %s187, %s189
      %p193 = scmp.eq.s32.totalorder %s27, 0
      %p194 = por %p192, %p193
      %p195 = scmp.ne.s32.totalorder %s187, %s189
      %p196 = scmp.eq.s32.totalorder %s32, 1
      %p197 = por %p195, %p196
      %p198 = scmp.ne.s32.totalorder %s189, %s190
      %p199 = scmp.eq.s32.totalorder %s32, 0
      %p200 = por %p198, %p199
      %p201 = scmp.ne.s32.totalorder %s189, %s190
      %p202 = scmp.eq.s32.totalorder %s33, 1
      %p203 = por %p201, %p202
      %p205 = scmp.ne.s32.totalorder %s190, %s204
      %p206 = scmp.eq.s32.totalorder %s33, 0
      %p207 = por %p205, %p206
      %s209 = sadd.s32 %s208, 1
      %p212 = scmp.eq.s32.totalorder %s27, 1
      %p213 = scmp.ne.s32.totalorder %s208, %s210
      %p214 = scmp.eq.s32.totalorder %s27, 0
      %p215 = por %p213, %p214
      %p216 = scmp.ne.s32.totalorder %s208, %s210
      %p217 = scmp.eq.s32.totalorder %s32, 1
      %p218 = por %p216, %p217
      %p219 = scmp.ne.s32.totalorder %s210, %s211
      %p220 = scmp.eq.s32.totalorder %s32, 0
      %p221 = por %p219, %p220
      %p222 = scmp.ne.s32.totalorder %s210, %s211
      %p223 = scmp.eq.s32.totalorder %s33, 1
      %p224 = por %p222, %p223
      %p226 = scmp.ne.s32.totalorder %s211, %s225
      %p227 = scmp.eq.s32.totalorder %s33, 0
      %p228 = por %p226, %p227
      %s230 = sadd.s32 %s229, 1
      %p233 = scmp.eq.s32.totalorder %s27, 1
      %p234 = scmp.ne.s32.totalorder %s229, %s231
      %p235 = scmp.eq.s32.totalorder %s27, 0
      %p236 = por %p234, %p235
      %p237 = scmp.ne.s32.totalorder %s229, %s231
      %p238 = scmp.eq.s32.totalorder %s32, 1
      %p239 = por %p237, %p238
      %p240 = scmp.ne.s32.totalorder %s231, %s232
      %p241 = scmp.eq.s32.totalorder %s32, 0
      %p242 = por %p240, %p241
      %p243 = scmp.ne.s32.totalorder %s231, %s232
      %p244 = scmp.eq.s32.totalorder %s33, 1
      %p245 = por %p243, %p244
      %p247 = scmp.ne.s32.totalorder %s232, %s246
      %p248 = scmp.eq.s32.totalorder %s33, 0
      %p249 = por %p247, %p248
      %s251 = sadd.s32 %s250, 1
      %p254 = scmp.eq.s32.totalorder %s27, 1
      %p255 = scmp.ne.s32.totalorder %s250, %s252
      %p256 = scmp.eq.s32.totalorder %s27, 0
      %p257 = por %p255, %p256
      %p258 = scmp.ne.s32.totalorder %s250, %s252
      %p259 = scmp.eq.s32.totalorder %s32, 1
      %p260 = por %p258, %p259
      %p261 = scmp.ne.s32.totalorder %s252, %s253
      %p262 = scmp.eq.s32.totalorder %s32, 0
      %p263 = por %p261, %p262
      %p264 = scmp.ne.s32.totalorder %s252, %s253
      %p265 = scmp.eq.s32.totalorder %s33, 1
      %p266 = por %p264, %p265
      %p268 = scmp.ne.s32.totalorder %s253, %s267
      %p269 = scmp.eq.s32.totalorder %s33, 0
      %p270 = por %p268, %p269
      %s272 = sadd.s32 %s271, 1
      %p275 = scmp.eq.s32.totalorder %s27, 1
      %p276 = scmp.ne.s32.totalorder %s271, %s273
      %p277 = scmp.eq.s32.totalorder %s27, 0
      %p278 = por %p276, %p277
      %p279 = scmp.ne.s32.totalorder %s271, %s273
      %p280 = scmp.eq.s32.totalorder %s32, 1
      %p281 = por %p279, %p280
      %p282 = scmp.ne.s32.totalorder %s273, %s274
      %p283 = scmp.eq.s32.totalorder %s32, 0
      %p284 = por %p282, %p283
      %p285 = scmp.ne.s32.totalorder %s273, %s274
      %p286 = scmp.eq.s32.totalorder %s33, 1
      %p287 = por %p285, %p286
      %p289 = scmp.ne.s32.totalorder %s274, %s288
      %p290 = scmp.eq.s32.totalorder %s33, 0
      %p291 = por %p289, %p290
      %s293 = sadd.s32 %s292, 1
      %p296 = scmp.eq.s32.totalorder %s27, 1
      %p297 = scmp.ne.s32.totalorder %s292, %s294
      %p298 = scmp.eq.s32.totalorder %s27, 0
      %p299 = por %p297, %p298
      %p300 = scmp.ne.s32.totalorder %s292, %s294
      %p301 = scmp.eq.s32.totalorder %s32, 1
      %p302 = por %p300, %p301
      %p303 = scmp.ne.s32.totalorder %s294, %s295
      %p304 = scmp.eq.s32.totalorder %s32, 0
      %p305 = por %p303, %p304
      %p306 = scmp.ne.s32.totalorder %s294, %s295
      %p307 = scmp.eq.s32.totalorder %s33, 1
      %p308 = por %p306, %p307
      %p310 = scmp.ne.s32.totalorder %s295, %s309
      %p311 = scmp.eq.s32.totalorder %s33, 0
      %p312 = por %p310, %p311
      %s314 = sadd.s32 %s313, 1
      %p317 = scmp.eq.s32.totalorder %s27, 1
      %p318 = scmp.ne.s32.totalorder %s313, %s315
      %p319 = scmp.eq.s32.totalorder %s27, 0
      %p320 = por %p318, %p319
      %p321 = scmp.ne.s32.totalorder %s313, %s315
      %p322 = scmp.eq.s32.totalorder %s32, 1
      %p323 = por %p321, %p322
      %p324 = scmp.ne.s32.totalorder %s315, %s316
      %p325 = scmp.eq.s32.totalorder %s32, 0
      %p326 = por %p324, %p325
      %p327 = scmp.ne.s32.totalorder %s315, %s316
      %p328 = scmp.eq.s32.totalorder %s33, 1
      %p329 = por %p327, %p328
      %p331 = scmp.ne.s32.totalorder %s316, %s330
      %p332 = scmp.eq.s32.totalorder %s33, 0
      %p333 = por %p331, %p332
      %s335 = sadd.s32 %s334, 1
      %p338 = scmp.eq.s32.totalorder %s27, 1
      %p339 = scmp.ne.s32.totalorder %s334, %s336
      %p340 = scmp.eq.s32.totalorder %s27, 0
      %p341 = por %p339, %p340
      %p342 = scmp.ne.s32.totalorder %s334, %s336
      %p343 = scmp.eq.s32.totalorder %s32, 1
      %p344 = por %p342, %p343
      %p345 = scmp.ne.s32.totalorder %s336, %s337
      %p346 = scmp.eq.s32.totalorder %s32, 0
      %p347 = por %p345, %p346
      %p348 = scmp.ne.s32.totalorder %s336, %s337
      %p349 = scmp.eq.s32.totalorder %s33, 1
      %p350 = por %p348, %p349
      %p352 = scmp.ne.s32.totalorder %s337, %s351
      %p353 = scmp.eq.s32.totalorder %s33, 0
      %p354 = por %p352, %p353
      %s356 = sadd.s32 %s355, 1
      %p359 = scmp.eq.s32.totalorder %s27, 1
      %p360 = scmp.ne.s32.totalorder %s355, %s357
      %p361 = scmp.eq.s32.totalorder %s27, 0
      %p362 = por %p360, %p361
      %p363 = scmp.ne.s32.totalorder %s355, %s357
      %p364 = scmp.eq.s32.totalorder %s32, 1
      %p365 = por %p363, %p364
      %p366 = scmp.ne.s32.totalorder %s357, %s358
      %p367 = scmp.eq.s32.totalorder %s32, 0
      %p368 = por %p366, %p367
      %p369 = scmp.ne.s32.totalorder %s357, %s358
      %p370 = scmp.eq.s32.totalorder %s33, 1
      %p371 = por %p369, %p370
      %p373 = scmp.ne.s32.totalorder %s358, %s372
      %p374 = scmp.eq.s32.totalorder %s33, 0
      %p375 = por %p373, %p374
      %s377 = sadd.s32 %s376, 1
      %p380 = scmp.eq.s32.totalorder %s27, 1
      %p381 = scmp.ne.s32.totalorder %s376, %s378
      %p382 = scmp.eq.s32.totalorder %s27, 0
      %p383 = por %p381, %p382
      %p384 = scmp.ne.s32.totalorder %s376, %s378
      %p385 = scmp.eq.s32.totalorder %s32, 1
      %p386 = por %p384, %p385
      %p387 = scmp.ne.s32.totalorder %s378, %s379
      %p388 = scmp.eq.s32.totalorder %s32, 0
      %p389 = por %p387, %p388
      %p390 = scmp.ne.s32.totalorder %s378, %s379
      %p391 = scmp.eq.s32.totalorder %s33, 1
      %p392 = por %p390, %p391
      %p394 = scmp.ne.s32.totalorder %s379, %s393
      %p395 = scmp.eq.s32.totalorder %s33, 0
      %p396 = por %p394, %p395
      %s398 = sadd.s32 %s397, 1
      %p401 = scmp.eq.s32.totalorder %s27, 1
      %p402 = scmp.ne.s32.totalorder %s397, %s399
      %p403 = scmp.eq.s32.totalorder %s27, 0
      %p404 = por %p402, %p403
      %p405 = scmp.ne.s32.totalorder %s397, %s399
      %p406 = scmp.eq.s32.totalorder %s32, 1
      %p407 = por %p405, %p406
      %p408 = scmp.ne.s32.totalorder %s399, %s400
      %p409 = scmp.eq.s32.totalorder %s32, 0
      %p410 = por %p408, %p409
      %p411 = scmp.ne.s32.totalorder %s399, %s400
      %p412 = scmp.eq.s32.totalorder %s33, 1
      %p413 = por %p411, %p412
      %p415 = scmp.ne.s32.totalorder %s400, %s414
      %p416 = scmp.eq.s32.totalorder %s33, 0
      %p417 = por %p415, %p416
      %s418 = ssub.s32 %s27, %s34
      %p419 = scmp.eq.s32.totalorder %s418, 0
      %s421 = sadd.s32 %s420, 1
      %s422 = scalar_select %p419, %s420, %s421
      %p425 = pneg %p419
      %p426 = scmp.eq.s32.totalorder %s27, 1
      %p427 = por %p425, %p426
      %p428 = scmp.ne.s32.totalorder %s420, %s423
      %p429 = scmp.eq.s32.totalorder %s27, 0
      %p430 = por %p428, %p429
      %p431 = scmp.ne.s32.totalorder %s420, %s423
      %p432 = scmp.eq.s32.totalorder %s32, 1
      %p433 = por %p431, %p432
      %p434 = scmp.ne.s32.totalorder %s423, %s424
      %p435 = scmp.eq.s32.totalorder %s32, 0
      %p436 = por %p434, %p435
      %p437 = scmp.ne.s32.totalorder %s423, %s424
      %p438 = scmp.eq.s32.totalorder %s33, 1
      %p439 = por %p437, %p438
      %p441 = scmp.ne.s32.totalorder %s424, %s440
      %p442 = scmp.eq.s32.totalorder %s33, 0
      %p443 = por %p441, %p442
      %p444 = scmp.le.s32.totalorder 1, %s27
      %p445 = scmp.lt.s32.totalorder %s27, 3
      %p446 = pnand %p444, %p445
      %p447 = pneg %p446
      // Predicated region
      $region9: #{coordinate_extractor_forward.1} parent=5 // pred_check
        _
      $region10: #{coordinate_extractor_forward.1} parent=5 // pred_check_branch
        %449 = sbr.rel (%p446) target = $region12
      $region11: #{coordinate_extractor_forward.1} parent=5 // pred_region
        %s450 = ssub.s32 %s27, 1
        // Predicated region
        $region13: #{coordinate_extractor_forward.1} parent=11 // pred_check
          %p451 = pneg %p74
        $region14: #{coordinate_extractor_forward.1} parent=11 // pred_check_branch
          %453 = sbr.rel (%p451) target = $region16
        $region15: #{coordinate_extractor_forward.1} parent=11 // pred_region
          _
        $region16: #{coordinate_extractor_forward.1} parent=11 // pred_fallthru
          _
        // Predicated region
        $region17: #{coordinate_extractor_forward.1} parent=11 // pred_check
          %p454 = pneg %p95
        $region18: #{coordinate_extractor_forward.1} parent=11 // pred_check_branch
          %456 = sbr.rel (%p454) target = $region20
        $region19: #{coordinate_extractor_forward.1} parent=11 // pred_region
          _
        $region20: #{coordinate_extractor_forward.1} parent=11 // pred_fallthru
          _
        // Predicated region
        $region21: #{coordinate_extractor_forward.1} parent=11 // pred_check
          %p457 = pneg %p116
        $region22: #{coordinate_extractor_forward.1} parent=11 // pred_check_branch
          %459 = sbr.rel (%p457) target = $region24
        $region23: #{coordinate_extractor_forward.1} parent=11 // pred_region
          _
        $region24: #{coordinate_extractor_forward.1} parent=11 // pred_fallthru
          _
        // Predicated region
        $region25: #{coordinate_extractor_forward.1} parent=11 // pred_check
          %p460 = pneg %p137
        $region26: #{coordinate_extractor_forward.1} parent=11 // pred_check_branch
          %462 = sbr.rel (%p460) target = $region28
        $region27: #{coordinate_extractor_forward.1} parent=11 // pred_region
          _
        $region28: #{coordinate_extractor_forward.1} parent=11 // pred_fallthru
          _
        // Predicated region
        $region29: #{coordinate_extractor_forward.1} parent=11 // pred_check
          %p463 = pneg %p158
        $region30: #{coordinate_extractor_forward.1} parent=11 // pred_check_branch
          %465 = sbr.rel (%p463) target = $region32
        $region31: #{coordinate_extractor_forward.1} parent=11 // pred_region
          _
        $region32: #{coordinate_extractor_forward.1} parent=11 // pred_fallthru
          _
        // Predicated region
        $region33: #{coordinate_extractor_forward.1} parent=11 // pred_check
          %p466 = pneg %p179
        $region34: #{coordinate_extractor_forward.1} parent=11 // pred_check_branch
          %468 = sbr.rel (%p466) target = $region36
        $region35: #{coordinate_extractor_forward.1} parent=11 // pred_region
          _
        $region36: #{coordinate_extractor_forward.1} parent=11 // pred_fallthru
          _
        // Predicated region
        $region37: #{coordinate_extractor_forward.1} parent=11 // pred_check
          %p469 = pneg %p200
        $region38: #{coordinate_extractor_forward.1} parent=11 // pred_check_branch
          %471 = sbr.rel (%p469) target = $region40
        $region39: #{coordinate_extractor_forward.1} parent=11 // pred_region
          _
        $region40: #{coordinate_extractor_forward.1} parent=11 // pred_fallthru
          _
        // Predicated region
        $region41: #{coordinate_extractor_forward.1} parent=11 // pred_check
          %p472 = pneg %p221
        $region42: #{coordinate_extractor_forward.1} parent=11 // pred_check_branch
          %474 = sbr.rel (%p472) target = $region44
        $region43: #{coordinate_extractor_forward.1} parent=11 // pred_region
          _
        $region44: #{coordinate_extractor_forward.1} parent=11 // pred_fallthru
          _
        // Predicated region
        $region45: #{coordinate_extractor_forward.1} parent=11 // pred_check
          %p475 = pneg %p242
        $region46: #{coordinate_extractor_forward.1} parent=11 // pred_check_branch
          %477 = sbr.rel (%p475) target = $region48
        $region47: #{coordinate_extractor_forward.1} parent=11 // pred_region
          _
        $region48: #{coordinate_extractor_forward.1} parent=11 // pred_fallthru
          _
        // Predicated region
        $region49: #{coordinate_extractor_forward.1} parent=11 // pred_check
          %p478 = pneg %p263
        $region50: #{coordinate_extractor_forward.1} parent=11 // pred_check_branch
          %480 = sbr.rel (%p478) target = $region52
        $region51: #{coordinate_extractor_forward.1} parent=11 // pred_region
          _
        $region52: #{coordinate_extractor_forward.1} parent=11 // pred_fallthru
          _
        // Predicated region
        $region53: #{coordinate_extractor_forward.1} parent=11 // pred_check
          %p481 = pneg %p284
        $region54: #{coordinate_extractor_forward.1} parent=11 // pred_check_branch
          %483 = sbr.rel (%p481) target = $region56
        $region55: #{coordinate_extractor_forward.1} parent=11 // pred_region
          _
        $region56: #{coordinate_extractor_forward.1} parent=11 // pred_fallthru
          _
        // Predicated region
        $region57: #{coordinate_extractor_forward.1} parent=11 // pred_check
          %p484 = pneg %p305
        $region58: #{coordinate_extractor_forward.1} parent=11 // pred_check_branch
          %486 = sbr.rel (%p484) target = $region60
        $region59: #{coordinate_extractor_forward.1} parent=11 // pred_region
          _
        $region60: #{coordinate_extractor_forward.1} parent=11 // pred_fallthru
          _
        // Predicated region
        $region61: #{coordinate_extractor_forward.1} parent=11 // pred_check
          %p487 = pneg %p326
        $region62: #{coordinate_extractor_forward.1} parent=11 // pred_check_branch
          %489 = sbr.rel (%p487) target = $region64
        $region63: #{coordinate_extractor_forward.1} parent=11 // pred_region
          _
        $region64: #{coordinate_extractor_forward.1} parent=11 // pred_fallthru
          _
        // Predicated region
        $region65: #{coordinate_extractor_forward.1} parent=11 // pred_check
          %p490 = pneg %p347
        $region66: #{coordinate_extractor_forward.1} parent=11 // pred_check_branch
          %492 = sbr.rel (%p490) target = $region68
        $region67: #{coordinate_extractor_forward.1} parent=11 // pred_region
          _
        $region68: #{coordinate_extractor_forward.1} parent=11 // pred_fallthru
          _
        // Predicated region
        $region69: #{coordinate_extractor_forward.1} parent=11 // pred_check
          %p493 = pneg %p368
        $region70: #{coordinate_extractor_forward.1} parent=11 // pred_check_branch
          %495 = sbr.rel (%p493) target = $region72
        $region71: #{coordinate_extractor_forward.1} parent=11 // pred_region
          _
        $region72: #{coordinate_extractor_forward.1} parent=11 // pred_fallthru
          _
        // Predicated region
        $region73: #{coordinate_extractor_forward.1} parent=11 // pred_check
          %p496 = pneg %p389
        $region74: #{coordinate_extractor_forward.1} parent=11 // pred_check_branch
          %498 = sbr.rel (%p496) target = $region76
        $region75: #{coordinate_extractor_forward.1} parent=11 // pred_region
          _
        $region76: #{coordinate_extractor_forward.1} parent=11 // pred_fallthru
          _
        // Predicated region
        $region77: #{coordinate_extractor_forward.1} parent=11 // pred_check
          %p499 = pneg %p410
        $region78: #{coordinate_extractor_forward.1} parent=11 // pred_check_branch
          %501 = sbr.rel (%p499) target = $region80
        $region79: #{coordinate_extractor_forward.1} parent=11 // pred_region
          _
        $region80: #{coordinate_extractor_forward.1} parent=11 // pred_fallthru
          _
      $region12: #{coordinate_extractor_forward.1} parent=5 // pred_fallthru
        _
      %p502 = scmp.lt.s32.totalorder %s27, 2
      // Predicated region
      $region81: #{coordinate_extractor_forward.1} parent=5 // pred_check
        %p503 = pneg %p502
      $region82: #{coordinate_extractor_forward.1} parent=5 // pred_check_branch
        %505 = sbr.rel (%p503) target = $region84
      $region83: #{coordinate_extractor_forward.1} parent=5 // pred_region
        // Predicated region
        $region85: #{coordinate_extractor_forward.1} parent=83 // pred_check
          %p506 = pneg %p47
        $region86: #{coordinate_extractor_forward.1} parent=83 // pred_check_branch
          %508 = sbr.rel (%p506) target = $region88
        $region87: #{coordinate_extractor_forward.1} parent=83 // pred_region
          %p509 = scmp.lt.s32.totalorder %s27, 1
          %s510 = scalar_select %p509, %s27, 1
          %s511 = smul.addr %s510, 32
          %s512 = smul.addr %s511, 4
          %s513 = scalar_lea.vmem %s0, %s512
        $region88: #{coordinate_extractor_forward.1} parent=83 // pred_fallthru
          _
      $region84: #{coordinate_extractor_forward.1} parent=5 // pred_fallthru
        _
      %p514 = scmp.le.s32.totalorder 1, %s27
      %p515 = scmp.lt.s32.totalorder %s27, 3
      %p516 = pnand %p514, %p515
      %p517 = pneg %p516
      // Predicated region
      $region89: #{coordinate_extractor_forward.1} parent=5 // pred_check
        _
      $region90: #{coordinate_extractor_forward.1} parent=5 // pred_check_branch
        %519 = sbr.rel (%p516) target = $region92
      $region91: #{coordinate_extractor_forward.1} parent=5 // pred_region
        %s520 = ssub.s32 %s27, 1
        %p521 = scmp.lt.s32.totalorder %s32, 1
        %s522 = scalar_select %p521, %s32, 1
        %s523 = smul.addr %s522, 32
        %s524 = smul.addr %s523, 4
        %s525 = scalar_lea.vmem %s0, %s524
        %p526 = pneg %p53
        %p527 = pneg %p50
        %p528 = pneg %p74
        %p529 = pneg %p71
        %p530 = pneg %p95
        %p531 = pneg %p92
        %p532 = pneg %p116
        %p533 = pneg %p113
        %p534 = pneg %p137
        %p535 = pneg %p134
        %p536 = pneg %p158
        %p537 = pneg %p155
        %p538 = pneg %p179
        %p539 = pneg %p176
        %p540 = pneg %p200
        %p541 = pneg %p197
        %p542 = pneg %p221
        %p543 = pneg %p218
        %p544 = pneg %p242
        %p545 = pneg %p239
        %p546 = pneg %p263
        %p547 = pneg %p260
        %p548 = pneg %p284
        %p549 = pneg %p281
        %p550 = pneg %p305
        %p551 = pneg %p302
        %p552 = pneg %p326
        %p553 = pneg %p323
        %p554 = pneg %p347
        %p555 = pneg %p344
        %p556 = pneg %p368
        %p557 = pneg %p365
        %p558 = pneg %p389
        %p559 = pneg %p386
        %p560 = pneg %p410
        %p561 = pneg %p407
        %p562 = pneg %p436
        %p563 = pneg %p433
        %s564 = sand.u32 %s423, 1
        %s565 = scalar_lea.sflag [#allocation3], %s564
        %s566 = sand.u32 %s423, 1
        %s567 = smul.addr %s566, 2
        %s568 = scalar_lea.vmem [#allocation2], %s567
        %p569 = scmp.lt.s32.totalorder %s32, 1
        %s570 = scalar_select %p569, %s32, 1
        %s571 = smul.addr %s570, 32
        %s572 = smul.addr %s571, 4
        %s573 = scalar_lea.vmem %s0, %s572
        %v575 = vld [vmem:[%s573] sm:$0xf]
        %v576 = vld [vmem:[%s573 + $0x4] sm:$0xf]
        %v577 = vld [vmem:[%s573 + $0x8] sm:$0xf]
        %v578 = vld [vmem:[%s573 + $0xc] sm:$0xf]
        %v579 = vld [vmem:[%s573 + $0x10] sm:$0xf]
        %v580 = vld [vmem:[%s573 + $0x14] sm:$0xf]
        %v581 = vld [vmem:[%s573 + $0x18] sm:$0xf]
        %v582 = vld [vmem:[%s573 + $0x1c] sm:$0xf]
        %v583 = vld [vmem:[%s573 + $0x20] sm:$0xf]
        %v584 = vld [vmem:[%s573 + $0x24] sm:$0xf]
        %v585 = vld [vmem:[%s573 + $0x28] sm:$0xf]
        %v586 = vld [vmem:[%s573 + $0x2c] sm:$0xf]
        %v587 = vld [vmem:[%s573 + $0x30] sm:$0xf]
        %v588 = vld [vmem:[%s573 + $0x34] sm:$0xf]
        %v589 = vld [vmem:[%s573 + $0x38] sm:$0xf]
        %v590 = vld [vmem:[%s573 + $0x3c] sm:$0xf]
        %v591 = vld [vmem:[%s573 + $0x40] sm:$0xf]
        %v592 = vld [vmem:[%s573 + $0x44] sm:$0xf]
        %v593 = vld [vmem:[%s573 + $0x48] sm:$0xf]
        %v594 = vld [vmem:[%s573 + $0x4c] sm:$0xf]
        %v595 = vld [vmem:[%s573 + $0x50] sm:$0xf]
        %v596 = vld [vmem:[%s573 + $0x54] sm:$0xf]
        %v597 = vld [vmem:[%s573 + $0x58] sm:$0xf]
        %v598 = vld [vmem:[%s573 + $0x5c] sm:$0xf]
        %v599 = vld [vmem:[%s573 + $0x60] sm:$0xf]
        %v600 = vld [vmem:[%s573 + $0x64] sm:$0xf]
        %v601 = vld [vmem:[%s573 + $0x68] sm:$0xf]
        %v602 = vld [vmem:[%s573 + $0x6c] sm:$0xf]
        %v603 = vld [vmem:[%s573 + $0x70] sm:$0xf]
        %v604 = vld [vmem:[%s573 + $0x74] sm:$0xf]
        %v605 = vld [vmem:[%s573 + $0x78] sm:$0xf]
        %v606 = vld [vmem:[%s573 + $0x7c] sm:$0xf]
        %v607 = vld [vmem:[%s1] sm:$0xff]
        %v608 = vld [vmem:[%s1 + $0x8] sm:$0xff]
        %v609 = vld [vmem:[%s1 + $0x10] sm:$0xff]
        %v610 = vld [vmem:[%s1 + $0x18] sm:$0xff]
        %v611 = vld [vmem:[%s1 + $0x20] sm:$0xff]
        %v612 = vld [vmem:[%s1 + $0x28] sm:$0xff]
        %v613 = vld [vmem:[%s1 + $0x30] sm:$0xff]
        %v614 = vld [vmem:[%s1 + $0x38] sm:$0xff]
        %v615 = vld [vmem:[%s1 + $0x40] sm:$0xff]
        %v616 = vld [vmem:[%s1 + $0x48] sm:$0xff]
        %v617 = vld [vmem:[%s1 + $0x50] sm:$0xff]
        %v618 = vld [vmem:[%s1 + $0x58] sm:$0xff]
        %v619 = vld [vmem:[%s1 + $0x60] sm:$0xff]
        %v620 = vld [vmem:[%s1 + $0x68] sm:$0xff]
        %v621 = vld [vmem:[%s1 + $0x70] sm:$0xff]
        %v622 = vld [vmem:[%s1 + $0x78] sm:$0xff]
        %v623 = vld [vmem:[%s1 + $0x80] sm:$0xff]
        %v624 = vld [vmem:[%s1 + $0x88] sm:$0xff]
        %v625 = vld [vmem:[%s1 + $0x90] sm:$0xff]
        %v626 = vld [vmem:[%s1 + $0x98] sm:$0xff]
        %v627 = vld [vmem:[%s1 + $0xa0] sm:$0xff]
        %v628 = vld [vmem:[%s1 + $0xa8] sm:$0xff]
        %v629 = vld [vmem:[%s1 + $0xb0] sm:$0xff]
        %v630 = vld [vmem:[%s1 + $0xb8] sm:$0xff]
        %v631 = vld [vmem:[%s1 + $0xc0] sm:$0xff]
        %v632 = vld [vmem:[%s1 + $0xc8] sm:$0xff]
        %v633 = vld [vmem:[%s1 + $0xd0] sm:$0xff]
        %v634 = vld [vmem:[%s1 + $0xd8] sm:$0xff]
        %v635 = vld [vmem:[%s1 + $0xe0] sm:$0xff]
        %v636 = vld [vmem:[%s1 + $0xe8] sm:$0xff]
        %v637 = vld [vmem:[%s1 + $0xf0] sm:$0xff]
        %v638 = vld [vmem:[%s1 + $0xf8] sm:$0xff]
        %v639 = vld [vmem:[%s1 + $0x100] sm:$0xff]
        %v640 = vld [vmem:[%s1 + $0x108] sm:$0xff]
        %v641 = vld [vmem:[%s1 + $0x110] sm:$0xff]
        %v642 = vld [vmem:[%s1 + $0x118] sm:$0xff]
        %v643 = vld [vmem:[%s1 + $0x120] sm:$0xff]
        %v644 = vld [vmem:[%s1 + $0x128] sm:$0xff]
        %v645 = vld [vmem:[%s1 + $0x130] sm:$0xff]
        %v646 = vld [vmem:[%s1 + $0x138] sm:$0xff]
        %v647 = vld [vmem:[%s1 + $0x140] sm:$0xff]
        %v648 = vld [vmem:[%s1 + $0x148] sm:$0xff]
        %v649 = vld [vmem:[%s1 + $0x150] sm:$0xff]
        %v650 = vld [vmem:[%s1 + $0x158] sm:$0xff]
        %v651 = vld [vmem:[%s1 + $0x160] sm:$0xff]
        %v652 = vld [vmem:[%s1 + $0x168] sm:$0xff]
        %v653 = vld [vmem:[%s1 + $0x170] sm:$0xff]
        %v654 = vld [vmem:[%s1 + $0x178] sm:$0xff]
        %v655 = vld [vmem:[%s1 + $0x180] sm:$0xff]
        %v656 = vld [vmem:[%s1 + $0x188] sm:$0xff]
        %v657 = vld [vmem:[%s1 + $0x190] sm:$0xff]
        %v658 = vld [vmem:[%s1 + $0x198] sm:$0xff]
        %v659 = vld [vmem:[%s1 + $0x1a0] sm:$0xff]
        %v660 = vld [vmem:[%s1 + $0x1a8] sm:$0xff]
        %v661 = vld [vmem:[%s1 + $0x1b0] sm:$0xff]
        %v662 = vld [vmem:[%s1 + $0x1b8] sm:$0xff]
        %v663 = vld [vmem:[%s1 + $0x1c0] sm:$0xff]
        %v664 = vld [vmem:[%s1 + $0x1c8] sm:$0xff]
        %v665 = vld [vmem:[%s1 + $0x1d0] sm:$0xff]
        %v666 = vld [vmem:[%s1 + $0x1d8] sm:$0xff]
        %v667 = vld [vmem:[%s1 + $0x1e0] sm:$0xff]
        %v668 = vld [vmem:[%s1 + $0x1e8] sm:$0xff]
        %v669 = vld [vmem:[%s1 + $0x1f0] sm:$0xff]
        %v670 = vld [vmem:[%s1 + $0x1f8] sm:$0xff]
        %v671 = vld [vmem:[%s1 + $0x200] sm:$0xff]
        %v672 = vld [vmem:[%s1 + $0x208] sm:$0xff]
        %v673 = vld [vmem:[%s1 + $0x210] sm:$0xff]
        %v674 = vld [vmem:[%s1 + $0x218] sm:$0xff]
        %v675 = vld [vmem:[%s1 + $0x220] sm:$0xff]
        %v676 = vld [vmem:[%s1 + $0x228] sm:$0xff]
        %v677 = vld [vmem:[%s1 + $0x230] sm:$0xff]
        %v678 = vld [vmem:[%s1 + $0x238] sm:$0xff]
        %v679 = vld [vmem:[%s1 + $0x240] sm:$0xff]
        %v680 = vld [vmem:[%s1 + $0x248] sm:$0xff]
        %v681 = vld [vmem:[%s1 + $0x250] sm:$0xff]
        %v682 = vld [vmem:[%s1 + $0x258] sm:$0xff]
        %v683 = vld [vmem:[%s1 + $0x260] sm:$0xff]
        %v684 = vld [vmem:[%s1 + $0x268] sm:$0xff]
        %v685 = vld [vmem:[%s1 + $0x270] sm:$0xff]
        %v686 = vld [vmem:[%s1 + $0x278] sm:$0xff]
        %v687 = vld [vmem:[%s1 + $0x280] sm:$0xff]
        %v688 = vld [vmem:[%s1 + $0x288] sm:$0xff]
        %v689 = vld [vmem:[%s1 + $0x290] sm:$0xff]
        %v690 = vld [vmem:[%s1 + $0x298] sm:$0xff]
        %v691 = vld [vmem:[%s1 + $0x2a0] sm:$0xff]
        %v692 = vld [vmem:[%s1 + $0x2a8] sm:$0xff]
        %v693 = vld [vmem:[%s1 + $0x2b0] sm:$0xff]
        %v694 = vld [vmem:[%s1 + $0x2b8] sm:$0xff]
        %v695 = vld [vmem:[%s1 + $0x2c0] sm:$0xff]
        %v696 = vld [vmem:[%s1 + $0x2c8] sm:$0xff]
        %v697 = vld [vmem:[%s1 + $0x2d0] sm:$0xff]
        %v698 = vld [vmem:[%s1 + $0x2d8] sm:$0xff]
        %v699 = vld [vmem:[%s1 + $0x2e0] sm:$0xff]
        %v700 = vld [vmem:[%s1 + $0x2e8] sm:$0xff]
        %v701 = vld [vmem:[%s1 + $0x2f0] sm:$0xff]
        %v702 = vld [vmem:[%s1 + $0x2f8] sm:$0xff]
        %v703 = vld [vmem:[%s1 + $0x300] sm:$0xff]
        %v704 = vld [vmem:[%s1 + $0x308] sm:$0xff]
        %v705 = vld [vmem:[%s1 + $0x310] sm:$0xff]
        %v706 = vld [vmem:[%s1 + $0x318] sm:$0xff]
        %v707 = vld [vmem:[%s1 + $0x320] sm:$0xff]
        %v708 = vld [vmem:[%s1 + $0x328] sm:$0xff]
        %v709 = vld [vmem:[%s1 + $0x330] sm:$0xff]
        %v710 = vld [vmem:[%s1 + $0x338] sm:$0xff]
        %v711 = vld [vmem:[%s1 + $0x340] sm:$0xff]
        %v712 = vld [vmem:[%s1 + $0x348] sm:$0xff]
        %v713 = vld [vmem:[%s1 + $0x350] sm:$0xff]
        %v714 = vld [vmem:[%s1 + $0x358] sm:$0xff]
        %v715 = vld [vmem:[%s1 + $0x360] sm:$0xff]
        %v716 = vld [vmem:[%s1 + $0x368] sm:$0xff]
        %v717 = vld [vmem:[%s1 + $0x370] sm:$0xff]
        %v718 = vld [vmem:[%s1 + $0x378] sm:$0xff]
        %v719 = vld [vmem:[%s1 + $0x380] sm:$0xff]
        %v720 = vld [vmem:[%s1 + $0x388] sm:$0xff]
        %v721 = vld [vmem:[%s1 + $0x390] sm:$0xff]
        %v722 = vld [vmem:[%s1 + $0x398] sm:$0xff]
        %v723 = vld [vmem:[%s1 + $0x3a0] sm:$0xff]
        %v724 = vld [vmem:[%s1 + $0x3a8] sm:$0xff]
        %v725 = vld [vmem:[%s1 + $0x3b0] sm:$0xff]
        %v726 = vld [vmem:[%s1 + $0x3b8] sm:$0xff]
        %v727 = vld [vmem:[%s1 + $0x3c0] sm:$0xff]
        %v728 = vld [vmem:[%s1 + $0x3c8] sm:$0xff]
        %v729 = vld [vmem:[%s1 + $0x3d0] sm:$0xff]
        %v730 = vld [vmem:[%s1 + $0x3d8] sm:$0xff]
        %v731 = vld [vmem:[%s1 + $0x3e0] sm:$0xff]
        %v732 = vld [vmem:[%s1 + $0x3e8] sm:$0xff]
        %v733 = vld [vmem:[%s1 + $0x3f0] sm:$0xff]
        %v734 = vld [vmem:[%s1 + $0x3f8] sm:$0xff]
        %v735 = vld [vmem:[%s1 + $0x400] sm:$0xff]
        %v736 = vld [vmem:[%s1 + $0x408] sm:$0xff]
        %v737 = vld [vmem:[%s1 + $0x410] sm:$0xff]
        %v738 = vld [vmem:[%s1 + $0x418] sm:$0xff]
        %v739 = vld [vmem:[%s1 + $0x420] sm:$0xff]
        %v740 = vld [vmem:[%s1 + $0x428] sm:$0xff]
        %v741 = vld [vmem:[%s1 + $0x430] sm:$0xff]
        %v742 = vld [vmem:[%s1 + $0x438] sm:$0xff]
        %v743 = vld [vmem:[%s1 + $0x440] sm:$0xff]
        %v744 = vld [vmem:[%s1 + $0x448] sm:$0xff]
        %v745 = vld [vmem:[%s1 + $0x450] sm:$0xff]
        %v746 = vld [vmem:[%s1 + $0x458] sm:$0xff]
        %v747 = vld [vmem:[%s1 + $0x460] sm:$0xff]
        %v748 = vld [vmem:[%s1 + $0x468] sm:$0xff]
        %v749 = vld [vmem:[%s1 + $0x470] sm:$0xff]
        %v750 = vld [vmem:[%s1 + $0x478] sm:$0xff]
        %v751 = vld [vmem:[%s1 + $0x480] sm:$0xff]
        %v752 = vld [vmem:[%s1 + $0x488] sm:$0xff]
        %v753 = vld [vmem:[%s1 + $0x490] sm:$0xff]
        %v754 = vld [vmem:[%s1 + $0x498] sm:$0xff]
        %v755 = vld [vmem:[%s1 + $0x4a0] sm:$0xff]
        %v756 = vld [vmem:[%s1 + $0x4a8] sm:$0xff]
        %v757 = vld [vmem:[%s1 + $0x4b0] sm:$0xff]
        %v758 = vld [vmem:[%s1 + $0x4b8] sm:$0xff]
        %v759 = vld [vmem:[%s1 + $0x4c0] sm:$0xff]
        %v760 = vld [vmem:[%s1 + $0x4c8] sm:$0xff]
        %v761 = vld [vmem:[%s1 + $0x4d0] sm:$0xff]
        %v762 = vld [vmem:[%s1 + $0x4d8] sm:$0xff]
        %v763 = vld [vmem:[%s1 + $0x4e0] sm:$0xff]
        %v764 = vld [vmem:[%s1 + $0x4e8] sm:$0xff]
        %v765 = vld [vmem:[%s1 + $0x4f0] sm:$0xff]
        %v766 = vld [vmem:[%s1 + $0x4f8] sm:$0xff]
        %v767 = vld [vmem:[%s1 + $0x500] sm:$0xff]
        %v768 = vld [vmem:[%s1 + $0x508] sm:$0xff]
        %v769 = vld [vmem:[%s1 + $0x510] sm:$0xff]
        %v770 = vld [vmem:[%s1 + $0x518] sm:$0xff]
        %v771 = vld [vmem:[%s1 + $0x520] sm:$0xff]
        %v772 = vld [vmem:[%s1 + $0x528] sm:$0xff]
        %v773 = vld [vmem:[%s1 + $0x530] sm:$0xff]
        %v774 = vld [vmem:[%s1 + $0x538] sm:$0xff]
        %v775 = vld [vmem:[%s1 + $0x540] sm:$0xff]
        %v776 = vld [vmem:[%s1 + $0x548] sm:$0xff]
        %v777 = vld [vmem:[%s1 + $0x550] sm:$0xff]
        %v778 = vld [vmem:[%s1 + $0x558] sm:$0xff]
        %v779 = vld [vmem:[%s1 + $0x560] sm:$0xff]
        %v780 = vld [vmem:[%s1 + $0x568] sm:$0xff]
        %v781 = vld [vmem:[%s1 + $0x570] sm:$0xff]
        %v782 = vld [vmem:[%s1 + $0x578] sm:$0xff]
        %v783 = vld [vmem:[%s1 + $0x580] sm:$0xff]
        %v784 = vld [vmem:[%s1 + $0x588] sm:$0xff]
        %v785 = vld [vmem:[%s1 + $0x590] sm:$0xff]
        %v786 = vld [vmem:[%s1 + $0x598] sm:$0xff]
        %v787 = vld [vmem:[%s1 + $0x5a0] sm:$0xff]
        %v788 = vld [vmem:[%s1 + $0x5a8] sm:$0xff]
        %v789 = vld [vmem:[%s1 + $0x5b0] sm:$0xff]
        %v790 = vld [vmem:[%s1 + $0x5b8] sm:$0xff]
        %v791 = vld [vmem:[%s1 + $0x5c0] sm:$0xff]
        %v792 = vld [vmem:[%s1 + $0x5c8] sm:$0xff]
        %v793 = vld [vmem:[%s1 + $0x5d0] sm:$0xff]
        %v794 = vld [vmem:[%s1 + $0x5d8] sm:$0xff]
        %v795 = vld [vmem:[%s1 + $0x5e0] sm:$0xff]
        %v796 = vld [vmem:[%s1 + $0x5e8] sm:$0xff]
        %v797 = vld [vmem:[%s1 + $0x5f0] sm:$0xff]
        %v798 = vld [vmem:[%s1 + $0x5f8] sm:$0xff]
        %v799 = vld [vmem:[%s1 + $0x600] sm:$0xff]
        %v800 = vld [vmem:[%s1 + $0x608] sm:$0xff]
        %v801 = vld [vmem:[%s1 + $0x610] sm:$0xff]
        %v802 = vld [vmem:[%s1 + $0x618] sm:$0xff]
        %v803 = vld [vmem:[%s1 + $0x620] sm:$0xff]
        %v804 = vld [vmem:[%s1 + $0x628] sm:$0xff]
        %v805 = vld [vmem:[%s1 + $0x630] sm:$0xff]
        %v806 = vld [vmem:[%s1 + $0x638] sm:$0xff]
        %v807 = vld [vmem:[%s1 + $0x640] sm:$0xff]
        %v808 = vld [vmem:[%s1 + $0x648] sm:$0xff]
        %v809 = vld [vmem:[%s1 + $0x650] sm:$0xff]
        %v810 = vld [vmem:[%s1 + $0x658] sm:$0xff]
        %v811 = vld [vmem:[%s1 + $0x660] sm:$0xff]
        %v812 = vld [vmem:[%s1 + $0x668] sm:$0xff]
        %v813 = vld [vmem:[%s1 + $0x670] sm:$0xff]
        %v814 = vld [vmem:[%s1 + $0x678] sm:$0xff]
        %v815 = vld [vmem:[%s1 + $0x680] sm:$0xff]
        %v816 = vld [vmem:[%s1 + $0x688] sm:$0xff]
        %v817 = vld [vmem:[%s1 + $0x690] sm:$0xff]
        %v818 = vld [vmem:[%s1 + $0x698] sm:$0xff]
        %v819 = vld [vmem:[%s1 + $0x6a0] sm:$0xff]
        %v820 = vld [vmem:[%s1 + $0x6a8] sm:$0xff]
        %v821 = vld [vmem:[%s1 + $0x6b0] sm:$0xff]
        %v822 = vld [vmem:[%s1 + $0x6b8] sm:$0xff]
        %v823 = vld [vmem:[%s1 + $0x6c0] sm:$0xff]
        %v824 = vld [vmem:[%s1 + $0x6c8] sm:$0xff]
        %v825 = vld [vmem:[%s1 + $0x6d0] sm:$0xff]
        %v826 = vld [vmem:[%s1 + $0x6d8] sm:$0xff]
        %v827 = vld [vmem:[%s1 + $0x6e0] sm:$0xff]
        %v828 = vld [vmem:[%s1 + $0x6e8] sm:$0xff]
        %v829 = vld [vmem:[%s1 + $0x6f0] sm:$0xff]
        %v830 = vld [vmem:[%s1 + $0x6f8] sm:$0xff]
        %v831 = vld [vmem:[%s1 + $0x700] sm:$0xff]
        %v832 = vld [vmem:[%s1 + $0x708] sm:$0xff]
        %v833 = vld [vmem:[%s1 + $0x710] sm:$0xff]
        %v834 = vld [vmem:[%s1 + $0x718] sm:$0xff]
        %v835 = vld [vmem:[%s1 + $0x720] sm:$0xff]
        %v836 = vld [vmem:[%s1 + $0x728] sm:$0xff]
        %v837 = vld [vmem:[%s1 + $0x730] sm:$0xff]
        %v838 = vld [vmem:[%s1 + $0x738] sm:$0xff]
        %v839 = vld [vmem:[%s1 + $0x740] sm:$0xff]
        %v840 = vld [vmem:[%s1 + $0x748] sm:$0xff]
        %v841 = vld [vmem:[%s1 + $0x750] sm:$0xff]
        %v842 = vld [vmem:[%s1 + $0x758] sm:$0xff]
        %v843 = vld [vmem:[%s1 + $0x760] sm:$0xff]
        %v844 = vld [vmem:[%s1 + $0x768] sm:$0xff]
        %v845 = vld [vmem:[%s1 + $0x770] sm:$0xff]
        %v846 = vld [vmem:[%s1 + $0x778] sm:$0xff]
        %v847 = vld [vmem:[%s1 + $0x780] sm:$0xff]
        %v848 = vld [vmem:[%s1 + $0x788] sm:$0xff]
        %v849 = vld [vmem:[%s1 + $0x790] sm:$0xff]
        %v850 = vld [vmem:[%s1 + $0x798] sm:$0xff]
        %v851 = vld [vmem:[%s1 + $0x7a0] sm:$0xff]
        %v852 = vld [vmem:[%s1 + $0x7a8] sm:$0xff]
        %v853 = vld [vmem:[%s1 + $0x7b0] sm:$0xff]
        %v854 = vld [vmem:[%s1 + $0x7b8] sm:$0xff]
        %v855 = vld [vmem:[%s1 + $0x7c0] sm:$0xff]
        %v856 = vld [vmem:[%s1 + $0x7c8] sm:$0xff]
        %v857 = vld [vmem:[%s1 + $0x7d0] sm:$0xff]
        %v858 = vld [vmem:[%s1 + $0x7d8] sm:$0xff]
        %v859 = vld [vmem:[%s1 + $0x7e0] sm:$0xff]
        %v860 = vld [vmem:[%s1 + $0x7e8] sm:$0xff]
        %v861 = vld [vmem:[%s1 + $0x7f0] sm:$0xff]
        %v862 = vld [vmem:[%s1 + $0x7f8] sm:$0xff]
        %v863 = vld [vmem:[%s1 + $0x800] sm:$0xff]
        %v864 = vld [vmem:[%s1 + $0x808] sm:$0xff]
        %v865 = vld [vmem:[%s1 + $0x810] sm:$0xff]
        %v866 = vld [vmem:[%s1 + $0x818] sm:$0xff]
        %v867 = vld [vmem:[%s1 + $0x820] sm:$0xff]
        %v868 = vld [vmem:[%s1 + $0x828] sm:$0xff]
        %v869 = vld [vmem:[%s1 + $0x830] sm:$0xff]
        %v870 = vld [vmem:[%s1 + $0x838] sm:$0xff]
        %v871 = vld [vmem:[%s1 + $0x840] sm:$0xff]
        %v872 = vld [vmem:[%s1 + $0x848] sm:$0xff]
        %v873 = vld [vmem:[%s1 + $0x850] sm:$0xff]
        %v874 = vld [vmem:[%s1 + $0x858] sm:$0xff]
        %v875 = vld [vmem:[%s1 + $0x860] sm:$0xff]
        %v876 = vld [vmem:[%s1 + $0x868] sm:$0xff]
        %v877 = vld [vmem:[%s1 + $0x870] sm:$0xff]
        %v878 = vld [vmem:[%s1 + $0x878] sm:$0xff]
        %v879 = vld [vmem:[%s1 + $0x880] sm:$0xff]
        %v880 = vld [vmem:[%s1 + $0x888] sm:$0xff]
        %v881 = vld [vmem:[%s1 + $0x890] sm:$0xff]
        %v882 = vld [vmem:[%s1 + $0x898] sm:$0xff]
        %v883 = vld [vmem:[%s1 + $0x8a0] sm:$0xff]
        %v884 = vld [vmem:[%s1 + $0x8a8] sm:$0xff]
        %v885 = vld [vmem:[%s1 + $0x8b0] sm:$0xff]
        %v886 = vld [vmem:[%s1 + $0x8b8] sm:$0xff]
        %v887 = vld [vmem:[%s1 + $0x8c0] sm:$0xff]
        %v888 = vld [vmem:[%s1 + $0x8c8] sm:$0xff]
        %v889 = vld [vmem:[%s1 + $0x8d0] sm:$0xff]
        %v890 = vld [vmem:[%s1 + $0x8d8] sm:$0xff]
        %v891 = vld [vmem:[%s1 + $0x8e0] sm:$0xff]
        %v892 = vld [vmem:[%s1 + $0x8e8] sm:$0xff]
        %v893 = vld [vmem:[%s1 + $0x8f0] sm:$0xff]
        %v894 = vld [vmem:[%s1 + $0x8f8] sm:$0xff]
        %v1183 = vunpack.c.l.b16 %v607
        %v1184 = vunpack.c.h.b16 %v607
        %v1185 = vunpack.c.l.b16 %v608
        %v1186 = vunpack.c.h.b16 %v608
        %v1187 = vunpack.c.l.b16 %v609
        %v1188 = vunpack.c.h.b16 %v609
        %v1189 = vunpack.c.l.b16 %v610
        %v1190 = vunpack.c.h.b16 %v610
        %v1191 = vunpack.c.l.b16 %v611
        %v1192 = vunpack.c.h.b16 %v611
        %v1193 = vunpack.c.l.b16 %v612
        %v1194 = vunpack.c.h.b16 %v612
        %v1195 = vunpack.c.l.b16 %v613
        %v1196 = vunpack.c.h.b16 %v613
        %v1197 = vunpack.c.l.b16 %v614
        %v1198 = vunpack.c.h.b16 %v614
        %v1199 = vunpack.c.l.b16 %v615
        %v1200 = vunpack.c.h.b16 %v615
        %v1201 = vunpack.c.l.b16 %v616
        %v1202 = vunpack.c.h.b16 %v616
        %v1203 = vunpack.c.l.b16 %v617
        %v1204 = vunpack.c.h.b16 %v617
        %v1205 = vunpack.c.l.b16 %v618
        %v1206 = vunpack.c.h.b16 %v618
        %v1207 = vunpack.c.l.b16 %v619
        %v1208 = vunpack.c.h.b16 %v619
        %v1209 = vunpack.c.l.b16 %v620
        %v1210 = vunpack.c.h.b16 %v620
        %v1211 = vunpack.c.l.b16 %v621
        %v1212 = vunpack.c.h.b16 %v621
        %v1213 = vunpack.c.l.b16 %v622
        %v1214 = vunpack.c.h.b16 %v622
        %v1215 = vunpack.c.l.b16 %v623
        %v1216 = vunpack.c.h.b16 %v623
        %v1217 = vunpack.c.l.b16 %v624
        %v1218 = vunpack.c.h.b16 %v624
        %v1219 = vunpack.c.l.b16 %v625
        %v1220 = vunpack.c.h.b16 %v625
        %v1221 = vunpack.c.l.b16 %v626
        %v1222 = vunpack.c.h.b16 %v626
        %v1223 = vunpack.c.l.b16 %v627
        %v1224 = vunpack.c.h.b16 %v627
        %v1225 = vunpack.c.l.b16 %v628
        %v1226 = vunpack.c.h.b16 %v628
        %v1227 = vunpack.c.l.b16 %v629
        %v1228 = vunpack.c.h.b16 %v629
        %v1229 = vunpack.c.l.b16 %v630
        %v1230 = vunpack.c.h.b16 %v630
        %v1231 = vunpack.c.l.b16 %v631
        %v1232 = vunpack.c.h.b16 %v631
        %v1233 = vunpack.c.l.b16 %v632
        %v1234 = vunpack.c.h.b16 %v632
        %v1235 = vunpack.c.l.b16 %v633
        %v1236 = vunpack.c.h.b16 %v633
        %v1237 = vunpack.c.l.b16 %v634
        %v1238 = vunpack.c.h.b16 %v634
        %v1239 = vunpack.c.l.b16 %v635
        %v1240 = vunpack.c.h.b16 %v635
        %v1241 = vunpack.c.l.b16 %v636
        %v1242 = vunpack.c.h.b16 %v636
        %v1243 = vunpack.c.l.b16 %v637
        %v1244 = vunpack.c.h.b16 %v637
        %v1245 = vunpack.c.l.b16 %v638
        %v1246 = vunpack.c.h.b16 %v638
        %v1247 = vunpack.c.l.b16 %v639
        %v1248 = vunpack.c.h.b16 %v639
        %v1249 = vunpack.c.l.b16 %v640
        %v1250 = vunpack.c.h.b16 %v640
        %v1251 = vunpack.c.l.b16 %v641
        %v1252 = vunpack.c.h.b16 %v641
        %v1253 = vunpack.c.l.b16 %v642
        %v1254 = vunpack.c.h.b16 %v642
        %v1255 = vunpack.c.l.b16 %v643
        %v1256 = vunpack.c.h.b16 %v643
        %v1257 = vunpack.c.l.b16 %v644
        %v1258 = vunpack.c.h.b16 %v644
        %v1259 = vunpack.c.l.b16 %v645
        %v1260 = vunpack.c.h.b16 %v645
        %v1261 = vunpack.c.l.b16 %v646
        %v1262 = vunpack.c.h.b16 %v646
        %v1263 = vunpack.c.l.b16 %v647
        %v1264 = vunpack.c.h.b16 %v647
        %v1265 = vunpack.c.l.b16 %v648
        %v1266 = vunpack.c.h.b16 %v648
        %v1267 = vunpack.c.l.b16 %v649
        %v1268 = vunpack.c.h.b16 %v649
        %v1269 = vunpack.c.l.b16 %v650
        %v1270 = vunpack.c.h.b16 %v650
        %v1271 = vunpack.c.l.b16 %v651
        %v1272 = vunpack.c.h.b16 %v651
        %v1273 = vunpack.c.l.b16 %v652
        %v1274 = vunpack.c.h.b16 %v652
        %v1275 = vunpack.c.l.b16 %v653
        %v1276 = vunpack.c.h.b16 %v653
        %v1277 = vunpack.c.l.b16 %v654
        %v1278 = vunpack.c.h.b16 %v654
        %v1279 = vunpack.c.l.b16 %v655
        %v1280 = vunpack.c.h.b16 %v655
        %v1281 = vunpack.c.l.b16 %v656
        %v1282 = vunpack.c.h.b16 %v656
        %v1283 = vunpack.c.l.b16 %v657
        %v1284 = vunpack.c.h.b16 %v657
        %v1285 = vunpack.c.l.b16 %v658
        %v1286 = vunpack.c.h.b16 %v658
        %v1287 = vunpack.c.l.b16 %v659
        %v1288 = vunpack.c.h.b16 %v659
        %v1289 = vunpack.c.l.b16 %v660
        %v1290 = vunpack.c.h.b16 %v660
        %v1291 = vunpack.c.l.b16 %v661
        %v1292 = vunpack.c.h.b16 %v661
        %v1293 = vunpack.c.l.b16 %v662
        %v1294 = vunpack.c.h.b16 %v662
        %v1295 = vunpack.c.l.b16 %v663
        %v1296 = vunpack.c.h.b16 %v663
        %v1297 = vunpack.c.l.b16 %v664
        %v1298 = vunpack.c.h.b16 %v664
        %v1299 = vunpack.c.l.b16 %v665
        %v1300 = vunpack.c.h.b16 %v665
        %v1301 = vunpack.c.l.b16 %v666
        %v1302 = vunpack.c.h.b16 %v666
        %v1303 = vunpack.c.l.b16 %v667
        %v1304 = vunpack.c.h.b16 %v667
        %v1305 = vunpack.c.l.b16 %v668
        %v1306 = vunpack.c.h.b16 %v668
        %v1307 = vunpack.c.l.b16 %v669
        %v1308 = vunpack.c.h.b16 %v669
        %v1309 = vunpack.c.l.b16 %v670
        %v1310 = vunpack.c.h.b16 %v670
        %v1311 = vunpack.c.l.b16 %v671
        %v1312 = vunpack.c.h.b16 %v671
        %v1313 = vunpack.c.l.b16 %v672
        %v1314 = vunpack.c.h.b16 %v672
        %v1315 = vunpack.c.l.b16 %v673
        %v1316 = vunpack.c.h.b16 %v673
        %v1317 = vunpack.c.l.b16 %v674
        %v1318 = vunpack.c.h.b16 %v674
        %v1319 = vunpack.c.l.b16 %v675
        %v1320 = vunpack.c.h.b16 %v675
        %v1321 = vunpack.c.l.b16 %v676
        %v1322 = vunpack.c.h.b16 %v676
        %v1323 = vunpack.c.l.b16 %v677
        %v1324 = vunpack.c.h.b16 %v677
        %v1325 = vunpack.c.l.b16 %v678
        %v1326 = vunpack.c.h.b16 %v678
        %v1327 = vunpack.c.l.b16 %v679
        %v1328 = vunpack.c.h.b16 %v679
        %v1329 = vunpack.c.l.b16 %v680
        %v1330 = vunpack.c.h.b16 %v680
        %v1331 = vunpack.c.l.b16 %v681
        %v1332 = vunpack.c.h.b16 %v681
        %v1333 = vunpack.c.l.b16 %v682
        %v1334 = vunpack.c.h.b16 %v682
        %v1335 = vunpack.c.l.b16 %v683
        %v1336 = vunpack.c.h.b16 %v683
        %v1337 = vunpack.c.l.b16 %v684
        %v1338 = vunpack.c.h.b16 %v684
        %v1339 = vunpack.c.l.b16 %v685
        %v1340 = vunpack.c.h.b16 %v685
        %v1341 = vunpack.c.l.b16 %v686
        %v1342 = vunpack.c.h.b16 %v686
        %v1343 = vunpack.c.l.b16 %v687
        %v1344 = vunpack.c.h.b16 %v687
        %v1345 = vunpack.c.l.b16 %v688
        %v1346 = vunpack.c.h.b16 %v688
        %v1347 = vunpack.c.l.b16 %v689
        %v1348 = vunpack.c.h.b16 %v689
        %v1349 = vunpack.c.l.b16 %v690
        %v1350 = vunpack.c.h.b16 %v690
        %v1351 = vunpack.c.l.b16 %v691
        %v1352 = vunpack.c.h.b16 %v691
        %v1353 = vunpack.c.l.b16 %v692
        %v1354 = vunpack.c.h.b16 %v692
        %v1355 = vunpack.c.l.b16 %v693
        %v1356 = vunpack.c.h.b16 %v693
        %v1357 = vunpack.c.l.b16 %v694
        %v1358 = vunpack.c.h.b16 %v694
        %v1359 = vunpack.c.l.b16 %v695
        %v1360 = vunpack.c.h.b16 %v695
        %v1361 = vunpack.c.l.b16 %v696
        %v1362 = vunpack.c.h.b16 %v696
        %v1363 = vunpack.c.l.b16 %v697
        %v1364 = vunpack.c.h.b16 %v697
        %v1365 = vunpack.c.l.b16 %v698
        %v1366 = vunpack.c.h.b16 %v698
        %v1367 = vunpack.c.l.b16 %v699
        %v1368 = vunpack.c.h.b16 %v699
        %v1369 = vunpack.c.l.b16 %v700
        %v1370 = vunpack.c.h.b16 %v700
        %v1371 = vunpack.c.l.b16 %v701
        %v1372 = vunpack.c.h.b16 %v701
        %v1373 = vunpack.c.l.b16 %v702
        %v1374 = vunpack.c.h.b16 %v702
        %v1375 = vunpack.c.l.b16 %v703
        %v1376 = vunpack.c.h.b16 %v703
        %v1377 = vunpack.c.l.b16 %v704
        %v1378 = vunpack.c.h.b16 %v704
        %v1379 = vunpack.c.l.b16 %v705
        %v1380 = vunpack.c.h.b16 %v705
        %v1381 = vunpack.c.l.b16 %v706
        %v1382 = vunpack.c.h.b16 %v706
        %v1383 = vunpack.c.l.b16 %v707
        %v1384 = vunpack.c.h.b16 %v707
        %v1385 = vunpack.c.l.b16 %v708
        %v1386 = vunpack.c.h.b16 %v708
        %v1387 = vunpack.c.l.b16 %v709
        %v1388 = vunpack.c.h.b16 %v709
        %v1389 = vunpack.c.l.b16 %v710
        %v1390 = vunpack.c.h.b16 %v710
        %v1391 = vunpack.c.l.b16 %v711
        %v1392 = vunpack.c.h.b16 %v711
        %v1393 = vunpack.c.l.b16 %v712
        %v1394 = vunpack.c.h.b16 %v712
        %v1395 = vunpack.c.l.b16 %v713
        %v1396 = vunpack.c.h.b16 %v713
        %v1397 = vunpack.c.l.b16 %v714
        %v1398 = vunpack.c.h.b16 %v714
        %v1399 = vunpack.c.l.b16 %v715
        %v1400 = vunpack.c.h.b16 %v715
        %v1401 = vunpack.c.l.b16 %v716
        %v1402 = vunpack.c.h.b16 %v716
        %v1403 = vunpack.c.l.b16 %v717
        %v1404 = vunpack.c.h.b16 %v717
        %v1405 = vunpack.c.l.b16 %v718
        %v1406 = vunpack.c.h.b16 %v718
        %v1407 = vunpack.c.l.b16 %v719
        %v1408 = vunpack.c.h.b16 %v719
        %v1409 = vunpack.c.l.b16 %v720
        %v1410 = vunpack.c.h.b16 %v720
        %v1411 = vunpack.c.l.b16 %v721
        %v1412 = vunpack.c.h.b16 %v721
        %v1413 = vunpack.c.l.b16 %v722
        %v1414 = vunpack.c.h.b16 %v722
        %v1415 = vunpack.c.l.b16 %v723
        %v1416 = vunpack.c.h.b16 %v723
        %v1417 = vunpack.c.l.b16 %v724
        %v1418 = vunpack.c.h.b16 %v724
        %v1419 = vunpack.c.l.b16 %v725
        %v1420 = vunpack.c.h.b16 %v725
        %v1421 = vunpack.c.l.b16 %v726
        %v1422 = vunpack.c.h.b16 %v726
        %v1423 = vunpack.c.l.b16 %v727
        %v1424 = vunpack.c.h.b16 %v727
        %v1425 = vunpack.c.l.b16 %v728
        %v1426 = vunpack.c.h.b16 %v728
        %v1427 = vunpack.c.l.b16 %v729
        %v1428 = vunpack.c.h.b16 %v729
        %v1429 = vunpack.c.l.b16 %v730
        %v1430 = vunpack.c.h.b16 %v730
        %v1431 = vunpack.c.l.b16 %v731
        %v1432 = vunpack.c.h.b16 %v731
        %v1433 = vunpack.c.l.b16 %v732
        %v1434 = vunpack.c.h.b16 %v732
        %v1435 = vunpack.c.l.b16 %v733
        %v1436 = vunpack.c.h.b16 %v733
        %v1437 = vunpack.c.l.b16 %v734
        %v1438 = vunpack.c.h.b16 %v734
        %v1439 = vunpack.c.l.b16 %v735
        %v1440 = vunpack.c.h.b16 %v735
        %v1441 = vunpack.c.l.b16 %v736
        %v1442 = vunpack.c.h.b16 %v736
        %v1443 = vunpack.c.l.b16 %v737
        %v1444 = vunpack.c.h.b16 %v737
        %v1445 = vunpack.c.l.b16 %v738
        %v1446 = vunpack.c.h.b16 %v738
        %v1447 = vunpack.c.l.b16 %v739
        %v1448 = vunpack.c.h.b16 %v739
        %v1449 = vunpack.c.l.b16 %v740
        %v1450 = vunpack.c.h.b16 %v740
        %v1451 = vunpack.c.l.b16 %v741
        %v1452 = vunpack.c.h.b16 %v741
        %v1453 = vunpack.c.l.b16 %v742
        %v1454 = vunpack.c.h.b16 %v742
        %v1455 = vunpack.c.l.b16 %v743
        %v1456 = vunpack.c.h.b16 %v743
        %v1457 = vunpack.c.l.b16 %v744
        %v1458 = vunpack.c.h.b16 %v744
        %v1459 = vunpack.c.l.b16 %v745
        %v1460 = vunpack.c.h.b16 %v745
        %v1461 = vunpack.c.l.b16 %v746
        %v1462 = vunpack.c.h.b16 %v746
        %v1463 = vunpack.c.l.b16 %v747
        %v1464 = vunpack.c.h.b16 %v747
        %v1465 = vunpack.c.l.b16 %v748
        %v1466 = vunpack.c.h.b16 %v748
        %v1467 = vunpack.c.l.b16 %v749
        %v1468 = vunpack.c.h.b16 %v749
        %v1469 = vunpack.c.l.b16 %v750
        %v1470 = vunpack.c.h.b16 %v750
        %v1471 = vunpack.c.l.b16 %v751
        %v1472 = vunpack.c.h.b16 %v751
        %v1473 = vunpack.c.l.b16 %v752
        %v1474 = vunpack.c.h.b16 %v752
        %v1475 = vunpack.c.l.b16 %v753
        %v1476 = vunpack.c.h.b16 %v753
        %v1477 = vunpack.c.l.b16 %v754
        %v1478 = vunpack.c.h.b16 %v754
        %v1479 = vunpack.c.l.b16 %v755
        %v1480 = vunpack.c.h.b16 %v755
        %v1481 = vunpack.c.l.b16 %v756
        %v1482 = vunpack.c.h.b16 %v756
        %v1483 = vunpack.c.l.b16 %v757
        %v1484 = vunpack.c.h.b16 %v757
        %v1485 = vunpack.c.l.b16 %v758
        %v1486 = vunpack.c.h.b16 %v758
        %v1487 = vunpack.c.l.b16 %v759
        %v1488 = vunpack.c.h.b16 %v759
        %v1489 = vunpack.c.l.b16 %v760
        %v1490 = vunpack.c.h.b16 %v760
        %v1491 = vunpack.c.l.b16 %v761
        %v1492 = vunpack.c.h.b16 %v761
        %v1493 = vunpack.c.l.b16 %v762
        %v1494 = vunpack.c.h.b16 %v762
        %v1495 = vunpack.c.l.b16 %v763
        %v1496 = vunpack.c.h.b16 %v763
        %v1497 = vunpack.c.l.b16 %v764
        %v1498 = vunpack.c.h.b16 %v764
        %v1499 = vunpack.c.l.b16 %v765
        %v1500 = vunpack.c.h.b16 %v765
        %v1501 = vunpack.c.l.b16 %v766
        %v1502 = vunpack.c.h.b16 %v766
        %v1503 = vunpack.c.l.b16 %v767
        %v1504 = vunpack.c.h.b16 %v767
        %v1505 = vunpack.c.l.b16 %v768
        %v1506 = vunpack.c.h.b16 %v768
        %v1507 = vunpack.c.l.b16 %v769
        %v1508 = vunpack.c.h.b16 %v769
        %v1509 = vunpack.c.l.b16 %v770
        %v1510 = vunpack.c.h.b16 %v770
        %v1511 = vunpack.c.l.b16 %v771
        %v1512 = vunpack.c.h.b16 %v771
        %v1513 = vunpack.c.l.b16 %v772
        %v1514 = vunpack.c.h.b16 %v772
        %v1515 = vunpack.c.l.b16 %v773
        %v1516 = vunpack.c.h.b16 %v773
        %v1517 = vunpack.c.l.b16 %v774
        %v1518 = vunpack.c.h.b16 %v774
        %v1519 = vunpack.c.l.b16 %v775
        %v1520 = vunpack.c.h.b16 %v775
        %v1521 = vunpack.c.l.b16 %v776
        %v1522 = vunpack.c.h.b16 %v776
        %v1523 = vunpack.c.l.b16 %v777
        %v1524 = vunpack.c.h.b16 %v777
        %v1525 = vunpack.c.l.b16 %v778
        %v1526 = vunpack.c.h.b16 %v778
        %v1527 = vunpack.c.l.b16 %v779
        %v1528 = vunpack.c.h.b16 %v779
        %v1529 = vunpack.c.l.b16 %v780
        %v1530 = vunpack.c.h.b16 %v780
        %v1531 = vunpack.c.l.b16 %v781
        %v1532 = vunpack.c.h.b16 %v781
        %v1533 = vunpack.c.l.b16 %v782
        %v1534 = vunpack.c.h.b16 %v782
        %v1535 = vunpack.c.l.b16 %v783
        %v1536 = vunpack.c.h.b16 %v783
        %v1537 = vunpack.c.l.b16 %v784
        %v1538 = vunpack.c.h.b16 %v784
        %v1539 = vunpack.c.l.b16 %v785
        %v1540 = vunpack.c.h.b16 %v785
        %v1541 = vunpack.c.l.b16 %v786
        %v1542 = vunpack.c.h.b16 %v786
        %v1543 = vunpack.c.l.b16 %v787
        %v1544 = vunpack.c.h.b16 %v787
        %v1545 = vunpack.c.l.b16 %v788
        %v1546 = vunpack.c.h.b16 %v788
        %v1547 = vunpack.c.l.b16 %v789
        %v1548 = vunpack.c.h.b16 %v789
        %v1549 = vunpack.c.l.b16 %v790
        %v1550 = vunpack.c.h.b16 %v790
        %v1551 = vunpack.c.l.b16 %v791
        %v1552 = vunpack.c.h.b16 %v791
        %v1553 = vunpack.c.l.b16 %v792
        %v1554 = vunpack.c.h.b16 %v792
        %v1555 = vunpack.c.l.b16 %v793
        %v1556 = vunpack.c.h.b16 %v793
        %v1557 = vunpack.c.l.b16 %v794
        %v1558 = vunpack.c.h.b16 %v794
        %v1559 = vunpack.c.l.b16 %v795
        %v1560 = vunpack.c.h.b16 %v795
        %v1561 = vunpack.c.l.b16 %v796
        %v1562 = vunpack.c.h.b16 %v796
        %v1563 = vunpack.c.l.b16 %v797
        %v1564 = vunpack.c.h.b16 %v797
        %v1565 = vunpack.c.l.b16 %v798
        %v1566 = vunpack.c.h.b16 %v798
        %v1567 = vunpack.c.l.b16 %v799
        %v1568 = vunpack.c.h.b16 %v799
        %v1569 = vunpack.c.l.b16 %v800
        %v1570 = vunpack.c.h.b16 %v800
        %v1571 = vunpack.c.l.b16 %v801
        %v1572 = vunpack.c.h.b16 %v801
        %v1573 = vunpack.c.l.b16 %v802
        %v1574 = vunpack.c.h.b16 %v802
        %v1575 = vunpack.c.l.b16 %v803
        %v1576 = vunpack.c.h.b16 %v803
        %v1577 = vunpack.c.l.b16 %v804
        %v1578 = vunpack.c.h.b16 %v804
        %v1579 = vunpack.c.l.b16 %v805
        %v1580 = vunpack.c.h.b16 %v805
        %v1581 = vunpack.c.l.b16 %v806
        %v1582 = vunpack.c.h.b16 %v806
        %v1583 = vunpack.c.l.b16 %v807
        %v1584 = vunpack.c.h.b16 %v807
        %v1585 = vunpack.c.l.b16 %v808
        %v1586 = vunpack.c.h.b16 %v808
        %v1587 = vunpack.c.l.b16 %v809
        %v1588 = vunpack.c.h.b16 %v809
        %v1589 = vunpack.c.l.b16 %v810
        %v1590 = vunpack.c.h.b16 %v810
        %v1591 = vunpack.c.l.b16 %v811
        %v1592 = vunpack.c.h.b16 %v811
        %v1593 = vunpack.c.l.b16 %v812
        %v1594 = vunpack.c.h.b16 %v812
        %v1595 = vunpack.c.l.b16 %v813
        %v1596 = vunpack.c.h.b16 %v813
        %v1597 = vunpack.c.l.b16 %v814
        %v1598 = vunpack.c.h.b16 %v814
        %v1599 = vunpack.c.l.b16 %v815
        %v1600 = vunpack.c.h.b16 %v815
        %v1601 = vunpack.c.l.b16 %v816
        %v1602 = vunpack.c.h.b16 %v816
        %v1603 = vunpack.c.l.b16 %v817
        %v1604 = vunpack.c.h.b16 %v817
        %v1605 = vunpack.c.l.b16 %v818
        %v1606 = vunpack.c.h.b16 %v818
        %v1607 = vunpack.c.l.b16 %v819
        %v1608 = vunpack.c.h.b16 %v819
        %v1609 = vunpack.c.l.b16 %v820
        %v1610 = vunpack.c.h.b16 %v820
        %v1611 = vunpack.c.l.b16 %v821
        %v1612 = vunpack.c.h.b16 %v821
        %v1613 = vunpack.c.l.b16 %v822
        %v1614 = vunpack.c.h.b16 %v822
        %v1615 = vunpack.c.l.b16 %v823
        %v1616 = vunpack.c.h.b16 %v823
        %v1617 = vunpack.c.l.b16 %v824
        %v1618 = vunpack.c.h.b16 %v824
        %v1619 = vunpack.c.l.b16 %v825
        %v1620 = vunpack.c.h.b16 %v825
        %v1621 = vunpack.c.l.b16 %v826
        %v1622 = vunpack.c.h.b16 %v826
        %v1623 = vunpack.c.l.b16 %v827
        %v1624 = vunpack.c.h.b16 %v827
        %v1625 = vunpack.c.l.b16 %v828
        %v1626 = vunpack.c.h.b16 %v828
        %v1627 = vunpack.c.l.b16 %v829
        %v1628 = vunpack.c.h.b16 %v829
        %v1629 = vunpack.c.l.b16 %v830
        %v1630 = vunpack.c.h.b16 %v830
        %v1631 = vunpack.c.l.b16 %v831
        %v1632 = vunpack.c.h.b16 %v831
        %v1633 = vunpack.c.l.b16 %v832
        %v1634 = vunpack.c.h.b16 %v832
        %v1635 = vunpack.c.l.b16 %v833
        %v1636 = vunpack.c.h.b16 %v833
        %v1637 = vunpack.c.l.b16 %v834
        %v1638 = vunpack.c.h.b16 %v834
        %v1639 = vunpack.c.l.b16 %v835
        %v1640 = vunpack.c.h.b16 %v835
        %v1641 = vunpack.c.l.b16 %v836
        %v1642 = vunpack.c.h.b16 %v836
        %v1643 = vunpack.c.l.b16 %v837
        %v1644 = vunpack.c.h.b16 %v837
        %v1645 = vunpack.c.l.b16 %v838
        %v1646 = vunpack.c.h.b16 %v838
        %v1647 = vunpack.c.l.b16 %v839
        %v1648 = vunpack.c.h.b16 %v839
        %v1649 = vunpack.c.l.b16 %v840
        %v1650 = vunpack.c.h.b16 %v840
        %v1651 = vunpack.c.l.b16 %v841
        %v1652 = vunpack.c.h.b16 %v841
        %v1653 = vunpack.c.l.b16 %v842
        %v1654 = vunpack.c.h.b16 %v842
        %v1655 = vunpack.c.l.b16 %v843
        %v1656 = vunpack.c.h.b16 %v843
        %v1657 = vunpack.c.l.b16 %v844
        %v1658 = vunpack.c.h.b16 %v844
        %v1659 = vunpack.c.l.b16 %v845
        %v1660 = vunpack.c.h.b16 %v845
        %v1661 = vunpack.c.l.b16 %v846
        %v1662 = vunpack.c.h.b16 %v846
        %v1663 = vunpack.c.l.b16 %v847
        %v1664 = vunpack.c.h.b16 %v847
        %v1665 = vunpack.c.l.b16 %v848
        %v1666 = vunpack.c.h.b16 %v848
        %v1667 = vunpack.c.l.b16 %v849
        %v1668 = vunpack.c.h.b16 %v849
        %v1669 = vunpack.c.l.b16 %v850
        %v1670 = vunpack.c.h.b16 %v850
        %v1671 = vunpack.c.l.b16 %v851
        %v1672 = vunpack.c.h.b16 %v851
        %v1673 = vunpack.c.l.b16 %v852
        %v1674 = vunpack.c.h.b16 %v852
        %v1675 = vunpack.c.l.b16 %v853
        %v1676 = vunpack.c.h.b16 %v853
        %v1677 = vunpack.c.l.b16 %v854
        %v1678 = vunpack.c.h.b16 %v854
        %v1679 = vunpack.c.l.b16 %v855
        %v1680 = vunpack.c.h.b16 %v855
        %v1681 = vunpack.c.l.b16 %v856
        %v1682 = vunpack.c.h.b16 %v856
        %v1683 = vunpack.c.l.b16 %v857
        %v1684 = vunpack.c.h.b16 %v857
        %v1685 = vunpack.c.l.b16 %v858
        %v1686 = vunpack.c.h.b16 %v858
        %v1687 = vunpack.c.l.b16 %v859
        %v1688 = vunpack.c.h.b16 %v859
        %v1689 = vunpack.c.l.b16 %v860
        %v1690 = vunpack.c.h.b16 %v860
        %v1691 = vunpack.c.l.b16 %v861
        %v1692 = vunpack.c.h.b16 %v861
        %v1693 = vunpack.c.l.b16 %v862
        %v1694 = vunpack.c.h.b16 %v862
        %v1695 = vunpack.c.l.b16 %v863
        %v1696 = vunpack.c.h.b16 %v863
        %v1697 = vunpack.c.l.b16 %v864
        %v1698 = vunpack.c.h.b16 %v864
        %v1699 = vunpack.c.l.b16 %v865
        %v1700 = vunpack.c.h.b16 %v865
        %v1701 = vunpack.c.l.b16 %v866
        %v1702 = vunpack.c.h.b16 %v866
        %v1703 = vunpack.c.l.b16 %v867
        %v1704 = vunpack.c.h.b16 %v867
        %v1705 = vunpack.c.l.b16 %v868
        %v1706 = vunpack.c.h.b16 %v868
        %v1707 = vunpack.c.l.b16 %v869
        %v1708 = vunpack.c.h.b16 %v869
        %v1709 = vunpack.c.l.b16 %v870
        %v1710 = vunpack.c.h.b16 %v870
        %v1711 = vunpack.c.l.b16 %v871
        %v1712 = vunpack.c.h.b16 %v871
        %v1713 = vunpack.c.l.b16 %v872
        %v1714 = vunpack.c.h.b16 %v872
        %v1715 = vunpack.c.l.b16 %v873
        %v1716 = vunpack.c.h.b16 %v873
        %v1717 = vunpack.c.l.b16 %v874
        %v1718 = vunpack.c.h.b16 %v874
        %v1719 = vunpack.c.l.b16 %v875
        %v1720 = vunpack.c.h.b16 %v875
        %v1721 = vunpack.c.l.b16 %v876
        %v1722 = vunpack.c.h.b16 %v876
        %v1723 = vunpack.c.l.b16 %v877
        %v1724 = vunpack.c.h.b16 %v877
        %v1725 = vunpack.c.l.b16 %v878
        %v1726 = vunpack.c.h.b16 %v878
        %v1727 = vunpack.c.l.b16 %v879
        %v1728 = vunpack.c.h.b16 %v879
        %v1729 = vunpack.c.l.b16 %v880
        %v1730 = vunpack.c.h.b16 %v880
        %v1731 = vunpack.c.l.b16 %v881
        %v1732 = vunpack.c.h.b16 %v881
        %v1733 = vunpack.c.l.b16 %v882
        %v1734 = vunpack.c.h.b16 %v882
        %v1735 = vunpack.c.l.b16 %v883
        %v1736 = vunpack.c.h.b16 %v883
        %v1737 = vunpack.c.l.b16 %v884
        %v1738 = vunpack.c.h.b16 %v884
        %v1739 = vunpack.c.l.b16 %v885
        %v1740 = vunpack.c.h.b16 %v885
        %v1741 = vunpack.c.l.b16 %v886
        %v1742 = vunpack.c.h.b16 %v886
        %v1743 = vunpack.c.l.b16 %v887
        %v1744 = vunpack.c.h.b16 %v887
        %v1745 = vunpack.c.l.b16 %v888
        %v1746 = vunpack.c.h.b16 %v888
        %v1747 = vunpack.c.l.b16 %v889
        %v1748 = vunpack.c.h.b16 %v889
        %v1749 = vunpack.c.l.b16 %v890
        %v1750 = vunpack.c.h.b16 %v890
        %v1751 = vunpack.c.l.b16 %v891
        %v1752 = vunpack.c.h.b16 %v891
        %v1753 = vunpack.c.l.b16 %v892
        %v1754 = vunpack.c.h.b16 %v892
        %v1755 = vunpack.c.l.b16 %v893
        %v1756 = vunpack.c.h.b16 %v893
        %v1757 = vunpack.c.l.b16 %v894
        %v1758 = vunpack.c.h.b16 %v894
        %v1759 = vpack.c.b16 %v1185, %v1183
        %v1760 = vpack.c.b16 %v1186, %v1184
        %v1761 = vpack.c.b16 %v1189, %v1187
        %v1762 = vpack.c.b16 %v1190, %v1188
        %v1763 = vpack.c.b16 %v1193, %v1191
        %v1764 = vpack.c.b16 %v1194, %v1192
        %v1765 = vpack.c.b16 %v1197, %v1195
        %v1766 = vpack.c.b16 %v1198, %v1196
        %v1767 = vpack.c.b16 %v1201, %v1199
        %v1768 = vpack.c.b16 %v1202, %v1200
        %v1769 = vpack.c.b16 %v1205, %v1203
        %v1770 = vpack.c.b16 %v1206, %v1204
        %v1771 = vpack.c.b16 %v1209, %v1207
        %v1772 = vpack.c.b16 %v1210, %v1208
        %v1773 = vpack.c.b16 %v1213, %v1211
        %v1774 = vpack.c.b16 %v1214, %v1212
        %v1775 = vpack.c.b16 %v1217, %v1215
        %v1776 = vpack.c.b16 %v1218, %v1216
        %v1777 = vpack.c.b16 %v1221, %v1219
        %v1778 = vpack.c.b16 %v1222, %v1220
        %v1779 = vpack.c.b16 %v1225, %v1223
        %v1780 = vpack.c.b16 %v1226, %v1224
        %v1781 = vpack.c.b16 %v1229, %v1227
        %v1782 = vpack.c.b16 %v1230, %v1228
        %v1783 = vpack.c.b16 %v1233, %v1231
        %v1784 = vpack.c.b16 %v1234, %v1232
        %v1785 = vpack.c.b16 %v1237, %v1235
        %v1786 = vpack.c.b16 %v1238, %v1236
        %v1787 = vpack.c.b16 %v1241, %v1239
        %v1788 = vpack.c.b16 %v1242, %v1240
        %v1789 = vpack.c.b16 %v1245, %v1243
        %v1790 = vpack.c.b16 %v1246, %v1244
        %v1791 = vpack.c.b16 %v1249, %v1247
        %v1792 = vpack.c.b16 %v1250, %v1248
        %v1793 = vpack.c.b16 %v1253, %v1251
        %v1794 = vpack.c.b16 %v1254, %v1252
        %v1795 = vpack.c.b16 %v1257, %v1255
        %v1796 = vpack.c.b16 %v1258, %v1256
        %v1797 = vpack.c.b16 %v1261, %v1259
        %v1798 = vpack.c.b16 %v1262, %v1260
        %v1799 = vpack.c.b16 %v1265, %v1263
        %v1800 = vpack.c.b16 %v1266, %v1264
        %v1801 = vpack.c.b16 %v1269, %v1267
        %v1802 = vpack.c.b16 %v1270, %v1268
        %v1803 = vpack.c.b16 %v1273, %v1271
        %v1804 = vpack.c.b16 %v1274, %v1272
        %v1805 = vpack.c.b16 %v1277, %v1275
        %v1806 = vpack.c.b16 %v1278, %v1276
        %v1807 = vpack.c.b16 %v1281, %v1279
        %v1808 = vpack.c.b16 %v1282, %v1280
        %v1809 = vpack.c.b16 %v1285, %v1283
        %v1810 = vpack.c.b16 %v1286, %v1284
        %v1811 = vpack.c.b16 %v1289, %v1287
        %v1812 = vpack.c.b16 %v1290, %v1288
        %v1813 = vpack.c.b16 %v1293, %v1291
        %v1814 = vpack.c.b16 %v1294, %v1292
        %v1815 = vpack.c.b16 %v1297, %v1295
        %v1816 = vpack.c.b16 %v1298, %v1296
        %v1817 = vpack.c.b16 %v1301, %v1299
        %v1818 = vpack.c.b16 %v1302, %v1300
        %v1819 = vpack.c.b16 %v1305, %v1303
        %v1820 = vpack.c.b16 %v1306, %v1304
        %v1821 = vpack.c.b16 %v1309, %v1307
        %v1822 = vpack.c.b16 %v1310, %v1308
        %v1823 = vpack.c.b16 %v1313, %v1311
        %v1824 = vpack.c.b16 %v1314, %v1312
        %v1825 = vpack.c.b16 %v1317, %v1315
        %v1826 = vpack.c.b16 %v1318, %v1316
        %v1827 = vpack.c.b16 %v1321, %v1319
        %v1828 = vpack.c.b16 %v1322, %v1320
        %v1829 = vpack.c.b16 %v1325, %v1323
        %v1830 = vpack.c.b16 %v1326, %v1324
        %v1831 = vpack.c.b16 %v1329, %v1327
        %v1832 = vpack.c.b16 %v1330, %v1328
        %v1833 = vpack.c.b16 %v1333, %v1331
        %v1834 = vpack.c.b16 %v1334, %v1332
        %v1835 = vpack.c.b16 %v1337, %v1335
        %v1836 = vpack.c.b16 %v1338, %v1336
        %v1837 = vpack.c.b16 %v1341, %v1339
        %v1838 = vpack.c.b16 %v1342, %v1340
        %v1839 = vpack.c.b16 %v1345, %v1343
        %v1840 = vpack.c.b16 %v1346, %v1344
        %v1841 = vpack.c.b16 %v1349, %v1347
        %v1842 = vpack.c.b16 %v1350, %v1348
        %v1843 = vpack.c.b16 %v1353, %v1351
        %v1844 = vpack.c.b16 %v1354, %v1352
        %v1845 = vpack.c.b16 %v1357, %v1355
        %v1846 = vpack.c.b16 %v1358, %v1356
        %v1847 = vpack.c.b16 %v1361, %v1359
        %v1848 = vpack.c.b16 %v1362, %v1360
        %v1849 = vpack.c.b16 %v1365, %v1363
        %v1850 = vpack.c.b16 %v1366, %v1364
        %v1851 = vpack.c.b16 %v1369, %v1367
        %v1852 = vpack.c.b16 %v1370, %v1368
        %v1853 = vpack.c.b16 %v1373, %v1371
        %v1854 = vpack.c.b16 %v1374, %v1372
        %v1855 = vpack.c.b16 %v1377, %v1375
        %v1856 = vpack.c.b16 %v1378, %v1376
        %v1857 = vpack.c.b16 %v1381, %v1379
        %v1858 = vpack.c.b16 %v1382, %v1380
        %v1859 = vpack.c.b16 %v1385, %v1383
        %v1860 = vpack.c.b16 %v1386, %v1384
        %v1861 = vpack.c.b16 %v1389, %v1387
        %v1862 = vpack.c.b16 %v1390, %v1388
        %v1863 = vpack.c.b16 %v1393, %v1391
        %v1864 = vpack.c.b16 %v1394, %v1392
        %v1865 = vpack.c.b16 %v1397, %v1395
        %v1866 = vpack.c.b16 %v1398, %v1396
        %v1867 = vpack.c.b16 %v1401, %v1399
        %v1868 = vpack.c.b16 %v1402, %v1400
        %v1869 = vpack.c.b16 %v1405, %v1403
        %v1870 = vpack.c.b16 %v1406, %v1404
        %v1871 = vpack.c.b16 %v1409, %v1407
        %v1872 = vpack.c.b16 %v1410, %v1408
        %v1873 = vpack.c.b16 %v1413, %v1411
        %v1874 = vpack.c.b16 %v1414, %v1412
        %v1875 = vpack.c.b16 %v1417, %v1415
        %v1876 = vpack.c.b16 %v1418, %v1416
        %v1877 = vpack.c.b16 %v1421, %v1419
        %v1878 = vpack.c.b16 %v1422, %v1420
        %v1879 = vpack.c.b16 %v1425, %v1423
        %v1880 = vpack.c.b16 %v1426, %v1424
        %v1881 = vpack.c.b16 %v1429, %v1427
        %v1882 = vpack.c.b16 %v1430, %v1428
        %v1883 = vpack.c.b16 %v1433, %v1431
        %v1884 = vpack.c.b16 %v1434, %v1432
        %v1885 = vpack.c.b16 %v1437, %v1435
        %v1886 = vpack.c.b16 %v1438, %v1436
        %v1887 = vpack.c.b16 %v1441, %v1439
        %v1888 = vpack.c.b16 %v1442, %v1440
        %v1889 = vpack.c.b16 %v1445, %v1443
        %v1890 = vpack.c.b16 %v1446, %v1444
        %v1891 = vpack.c.b16 %v1449, %v1447
        %v1892 = vpack.c.b16 %v1450, %v1448
        %v1893 = vpack.c.b16 %v1453, %v1451
        %v1894 = vpack.c.b16 %v1454, %v1452
        %v1895 = vpack.c.b16 %v1457, %v1455
        %v1896 = vpack.c.b16 %v1458, %v1456
        %v1897 = vpack.c.b16 %v1461, %v1459
        %v1898 = vpack.c.b16 %v1462, %v1460
        %v1899 = vpack.c.b16 %v1465, %v1463
        %v1900 = vpack.c.b16 %v1466, %v1464
        %v1901 = vpack.c.b16 %v1469, %v1467
        %v1902 = vpack.c.b16 %v1470, %v1468
        %v1903 = vpack.c.b16 %v1473, %v1471
        %v1904 = vpack.c.b16 %v1474, %v1472
        %v1905 = vpack.c.b16 %v1477, %v1475
        %v1906 = vpack.c.b16 %v1478, %v1476
        %v1907 = vpack.c.b16 %v1481, %v1479
        %v1908 = vpack.c.b16 %v1482, %v1480
        %v1909 = vpack.c.b16 %v1485, %v1483
        %v1910 = vpack.c.b16 %v1486, %v1484
        %v1911 = vpack.c.b16 %v1489, %v1487
        %v1912 = vpack.c.b16 %v1490, %v1488
        %v1913 = vpack.c.b16 %v1493, %v1491
        %v1914 = vpack.c.b16 %v1494, %v1492
        %v1915 = vpack.c.b16 %v1497, %v1495
        %v1916 = vpack.c.b16 %v1498, %v1496
        %v1917 = vpack.c.b16 %v1501, %v1499
        %v1918 = vpack.c.b16 %v1502, %v1500
        %v1919 = vpack.c.b16 %v1505, %v1503
        %v1920 = vpack.c.b16 %v1506, %v1504
        %v1921 = vpack.c.b16 %v1509, %v1507
        %v1922 = vpack.c.b16 %v1510, %v1508
        %v1923 = vpack.c.b16 %v1513, %v1511
        %v1924 = vpack.c.b16 %v1514, %v1512
        %v1925 = vpack.c.b16 %v1517, %v1515
        %v1926 = vpack.c.b16 %v1518, %v1516
        %v1927 = vpack.c.b16 %v1521, %v1519
        %v1928 = vpack.c.b16 %v1522, %v1520
        %v1929 = vpack.c.b16 %v1525, %v1523
        %v1930 = vpack.c.b16 %v1526, %v1524
        %v1931 = vpack.c.b16 %v1529, %v1527
        %v1932 = vpack.c.b16 %v1530, %v1528
        %v1933 = vpack.c.b16 %v1533, %v1531
        %v1934 = vpack.c.b16 %v1534, %v1532
        %v1935 = vpack.c.b16 %v1537, %v1535
        %v1936 = vpack.c.b16 %v1538, %v1536
        %v1937 = vpack.c.b16 %v1541, %v1539
        %v1938 = vpack.c.b16 %v1542, %v1540
        %v1939 = vpack.c.b16 %v1545, %v1543
        %v1940 = vpack.c.b16 %v1546, %v1544
        %v1941 = vpack.c.b16 %v1549, %v1547
        %v1942 = vpack.c.b16 %v1550, %v1548
        %v1943 = vpack.c.b16 %v1553, %v1551
        %v1944 = vpack.c.b16 %v1554, %v1552
        %v1945 = vpack.c.b16 %v1557, %v1555
        %v1946 = vpack.c.b16 %v1558, %v1556
        %v1947 = vpack.c.b16 %v1561, %v1559
        %v1948 = vpack.c.b16 %v1562, %v1560
        %v1949 = vpack.c.b16 %v1565, %v1563
        %v1950 = vpack.c.b16 %v1566, %v1564
        %v1951 = vpack.c.b16 %v1569, %v1567
        %v1952 = vpack.c.b16 %v1570, %v1568
        %v1953 = vpack.c.b16 %v1573, %v1571
        %v1954 = vpack.c.b16 %v1574, %v1572
        %v1955 = vpack.c.b16 %v1577, %v1575
        %v1956 = vpack.c.b16 %v1578, %v1576
        %v1957 = vpack.c.b16 %v1581, %v1579
        %v1958 = vpack.c.b16 %v1582, %v1580
        %v1959 = vpack.c.b16 %v1585, %v1583
        %v1960 = vpack.c.b16 %v1586, %v1584
        %v1961 = vpack.c.b16 %v1589, %v1587
        %v1962 = vpack.c.b16 %v1590, %v1588
        %v1963 = vpack.c.b16 %v1593, %v1591
        %v1964 = vpack.c.b16 %v1594, %v1592
        %v1965 = vpack.c.b16 %v1597, %v1595
        %v1966 = vpack.c.b16 %v1598, %v1596
        %v1967 = vpack.c.b16 %v1601, %v1599
        %v1968 = vpack.c.b16 %v1602, %v1600
        %v1969 = vpack.c.b16 %v1605, %v1603
        %v1970 = vpack.c.b16 %v1606, %v1604
        %v1971 = vpack.c.b16 %v1609, %v1607
        %v1972 = vpack.c.b16 %v1610, %v1608
        %v1973 = vpack.c.b16 %v1613, %v1611
        %v1974 = vpack.c.b16 %v1614, %v1612
        %v1975 = vpack.c.b16 %v1617, %v1615
        %v1976 = vpack.c.b16 %v1618, %v1616
        %v1977 = vpack.c.b16 %v1621, %v1619
        %v1978 = vpack.c.b16 %v1622, %v1620
        %v1979 = vpack.c.b16 %v1625, %v1623
        %v1980 = vpack.c.b16 %v1626, %v1624
        %v1981 = vpack.c.b16 %v1629, %v1627
        %v1982 = vpack.c.b16 %v1630, %v1628
        %v1983 = vpack.c.b16 %v1633, %v1631
        %v1984 = vpack.c.b16 %v1634, %v1632
        %v1985 = vpack.c.b16 %v1637, %v1635
        %v1986 = vpack.c.b16 %v1638, %v1636
        %v1987 = vpack.c.b16 %v1641, %v1639
        %v1988 = vpack.c.b16 %v1642, %v1640
        %v1989 = vpack.c.b16 %v1645, %v1643
        %v1990 = vpack.c.b16 %v1646, %v1644
        %v1991 = vpack.c.b16 %v1649, %v1647
        %v1992 = vpack.c.b16 %v1650, %v1648
        %v1993 = vpack.c.b16 %v1653, %v1651
        %v1994 = vpack.c.b16 %v1654, %v1652
        %v1995 = vpack.c.b16 %v1657, %v1655
        %v1996 = vpack.c.b16 %v1658, %v1656
        %v1997 = vpack.c.b16 %v1661, %v1659
        %v1998 = vpack.c.b16 %v1662, %v1660
        %v1999 = vpack.c.b16 %v1665, %v1663
        %v2000 = vpack.c.b16 %v1666, %v1664
        %v2001 = vpack.c.b16 %v1669, %v1667
        %v2002 = vpack.c.b16 %v1670, %v1668
        %v2003 = vpack.c.b16 %v1673, %v1671
        %v2004 = vpack.c.b16 %v1674, %v1672
        %v2005 = vpack.c.b16 %v1677, %v1675
        %v2006 = vpack.c.b16 %v1678, %v1676
        %v2007 = vpack.c.b16 %v1681, %v1679
        %v2008 = vpack.c.b16 %v1682, %v1680
        %v2009 = vpack.c.b16 %v1685, %v1683
        %v2010 = vpack.c.b16 %v1686, %v1684
        %v2011 = vpack.c.b16 %v1689, %v1687
        %v2012 = vpack.c.b16 %v1690, %v1688
        %v2013 = vpack.c.b16 %v1693, %v1691
        %v2014 = vpack.c.b16 %v1694, %v1692
        %v2015 = vpack.c.b16 %v1697, %v1695
        %v2016 = vpack.c.b16 %v1698, %v1696
        %v2017 = vpack.c.b16 %v1701, %v1699
        %v2018 = vpack.c.b16 %v1702, %v1700
        %v2019 = vpack.c.b16 %v1705, %v1703
        %v2020 = vpack.c.b16 %v1706, %v1704
        %v2021 = vpack.c.b16 %v1709, %v1707
        %v2022 = vpack.c.b16 %v1710, %v1708
        %v2023 = vpack.c.b16 %v1713, %v1711
        %v2024 = vpack.c.b16 %v1714, %v1712
        %v2025 = vpack.c.b16 %v1717, %v1715
        %v2026 = vpack.c.b16 %v1718, %v1716
        %v2027 = vpack.c.b16 %v1721, %v1719
        %v2028 = vpack.c.b16 %v1722, %v1720
        %v2029 = vpack.c.b16 %v1725, %v1723
        %v2030 = vpack.c.b16 %v1726, %v1724
        %v2031 = vpack.c.b16 %v1729, %v1727
        %v2032 = vpack.c.b16 %v1730, %v1728
        %v2033 = vpack.c.b16 %v1733, %v1731
        %v2034 = vpack.c.b16 %v1734, %v1732
        %v2035 = vpack.c.b16 %v1737, %v1735
        %v2036 = vpack.c.b16 %v1738, %v1736
        %v2037 = vpack.c.b16 %v1741, %v1739
        %v2038 = vpack.c.b16 %v1742, %v1740
        %v2039 = vpack.c.b16 %v1745, %v1743
        %v2040 = vpack.c.b16 %v1746, %v1744
        %v2041 = vpack.c.b16 %v1749, %v1747
        %v2042 = vpack.c.b16 %v1750, %v1748
        %v2043 = vpack.c.b16 %v1753, %v1751
        %v2044 = vpack.c.b16 %v1754, %v1752
        %v2045 = vpack.c.b16 %v1757, %v1755
        %v2046 = vpack.c.b16 %v1758, %v1756
        %v2367 = vunpack.c.l.b16 %v575
        %v2368 = vunpack.c.l.b16 %v576
        %v2369 = vunpack.c.l.b16 %v577
        %v2370 = vunpack.c.l.b16 %v578
        %v2371 = vunpack.c.l.b16 %v579
        %v2372 = vunpack.c.l.b16 %v580
        %v2373 = vunpack.c.l.b16 %v581
        %v2374 = vunpack.c.l.b16 %v582
        %v2375 = vunpack.c.l.b16 %v583
        %v2376 = vunpack.c.l.b16 %v584
        %v2377 = vunpack.c.l.b16 %v585
        %v2378 = vunpack.c.l.b16 %v586
        %v2379 = vunpack.c.l.b16 %v587
        %v2380 = vunpack.c.l.b16 %v588
        %v2381 = vunpack.c.l.b16 %v589
        %v2382 = vunpack.c.l.b16 %v590
        %v2383 = vunpack.c.l.b16 %v591
        %v2384 = vunpack.c.l.b16 %v592
        %v2385 = vunpack.c.l.b16 %v593
        %v2386 = vunpack.c.l.b16 %v594
        %v2387 = vunpack.c.l.b16 %v595
        %v2388 = vunpack.c.l.b16 %v596
        %v2389 = vunpack.c.l.b16 %v597
        %v2390 = vunpack.c.l.b16 %v598
        %v2391 = vunpack.c.l.b16 %v599
        %v2392 = vunpack.c.l.b16 %v600
        %v2393 = vunpack.c.l.b16 %v601
        %v2394 = vunpack.c.l.b16 %v602
        %v2395 = vunpack.c.l.b16 %v603
        %v2396 = vunpack.c.l.b16 %v604
        %v2397 = vunpack.c.l.b16 %v605
        %v2398 = vunpack.c.l.b16 %v606
        %v2399 = vpack.c.b16 %v2368, %v2367
        %v2400 = vpack.c.b16 %v2370, %v2369
        %v2401 = vpack.c.b16 %v2372, %v2371
        %v2402 = vpack.c.b16 %v2374, %v2373
        %v2403 = vpack.c.b16 %v2376, %v2375
        %v2404 = vpack.c.b16 %v2378, %v2377
        %v2405 = vpack.c.b16 %v2380, %v2379
        %v2406 = vpack.c.b16 %v2382, %v2381
        %v2407 = vpack.c.b16 %v2384, %v2383
        %v2408 = vpack.c.b16 %v2386, %v2385
        %v2409 = vpack.c.b16 %v2388, %v2387
        %v2410 = vpack.c.b16 %v2390, %v2389
        %v2411 = vpack.c.b16 %v2392, %v2391
        %v2412 = vpack.c.b16 %v2394, %v2393
        %v2413 = vpack.c.b16 %v2396, %v2395
        %v2414 = vpack.c.b16 %v2398, %v2397
        %2431 = vmatprep.subr.bf16.mxu0 0
        %2432 = vmatpush1.bf16.msra.mxu0 %v2399
        %2433 = vmatprep.subr.bf16.mxu0 0
        %2434 = vmatpush1.bf16.msra.mxu0 %v2400
        %2435 = vmatprep.subr.bf16.mxu0 0
        %2436 = vmatpush1.bf16.msra.mxu0 %v2401
        %2437 = vmatprep.subr.bf16.mxu0 0
        %2438 = vmatpush1.bf16.msra.mxu0 %v2402
        %2439 = vmatprep.subr.bf16.mxu0 0
        %2440 = vmatpush1.bf16.msra.mxu0 %v2403
        %2441 = vmatprep.subr.bf16.mxu0 0
        %2442 = vmatpush1.bf16.msra.mxu0 %v2404
        %2443 = vmatprep.subr.bf16.mxu0 0
        %2444 = vmatpush1.bf16.msra.mxu0 %v2405
        %2445 = vmatprep.subr.bf16.mxu0 0
        %2446 = vmatpush1.bf16.msra.mxu0 %v2406
        %2447 = vmatprep.subr.bf16.mxu0 0
        %2448 = vmatpush1.bf16.msra.mxu0 %v2407
        %2449 = vmatprep.subr.bf16.mxu0 0
        %2450 = vmatpush1.bf16.msra.mxu0 %v2408
        %2451 = vmatprep.subr.bf16.mxu0 0
        %2452 = vmatpush1.bf16.msra.mxu0 %v2409
        %2453 = vmatprep.subr.bf16.mxu0 0
        %2454 = vmatpush1.bf16.msra.mxu0 %v2410
        %2455 = vmatprep.subr.bf16.mxu0 0
        %2456 = vmatpush1.bf16.msra.mxu0 %v2411
        %2457 = vmatprep.subr.bf16.mxu0 0
        %2458 = vmatpush1.bf16.msra.mxu0 %v2412
        %2459 = vmatprep.subr.bf16.mxu0 0
        %2460 = vmatpush1.bf16.msra.mxu0 %v2413
        %2461 = vmatprep.subr.bf16.mxu0 0
        %2462 = vmatpush1.bf16.msra.mxu0 %v2414
        %2463 = vmatprep.mubr.bf16.mxu0 %v1760
        %2464 = vmatmul.mubr.bf16.gmra.mrb[0].mxu0 %v1759
        %v2465 = vpop.f32.mrb[0].mxu0
        %v2466 = vadd.f32 0.0, %v2465
        %v2467 = vpop.f32.mrb[0].mxu0
        %v2468 = vpop.f32.mrb[0].mxu0
        %v2469 = vadd.f32 0.0, %v2468
        %v2470 = vpop.f32.mrb[0].mxu0
        %2471 = vmatprep.mubr.bf16.mxu0 %v1762
        %2472 = vmatmul.mubr.bf16.gmra.mrb[0].mxu0 %v1761
        %v2473 = vpop.f32.mrb[0].mxu0
        %v2474 = vadd.f32 0.0, %v2473
        %v2475 = vpop.f32.mrb[0].mxu0
        %v2476 = vpop.f32.mrb[0].mxu0
        %v2477 = vadd.f32 0.0, %v2476
        %v2478 = vpop.f32.mrb[0].mxu0
        %2479 = vmatprep.mubr.bf16.mxu0 %v1764
        %2480 = vmatmul.mubr.bf16.gmra.mrb[0].mxu0 %v1763
        %v2481 = vpop.f32.mrb[0].mxu0
        %v2482 = vadd.f32 0.0, %v2481
        %v2483 = vpop.f32.mrb[0].mxu0
        %v2484 = vpop.f32.mrb[0].mxu0
        %v2485 = vadd.f32 0.0, %v2484
        %v2486 = vpop.f32.mrb[0].mxu0
        %2487 = vmatprep.mubr.bf16.mxu0 %v1766
        %2488 = vmatmul.mubr.bf16.gmra.mrb[0].mxu0 %v1765
        %v2489 = vpop.f32.mrb[0].mxu0
        %v2490 = vadd.f32 0.0, %v2489
        %v2491 = vpop.f32.mrb[0].mxu0
        %v2492 = vpop.f32.mrb[0].mxu0
        %v2493 = vadd.f32 0.0, %v2492
        %v2494 = vpop.f32.mrb[0].mxu0
        %2495 = vmatprep.mubr.bf16.mxu0 %v1768
        %2496 = vmatmul.mubr.bf16.gmra.mrb[0].mxu0 %v1767
        %v2497 = vpop.f32.mrb[0].mxu0
        %v2498 = vadd.f32 0.0, %v2497
        %v2499 = vpop.f32.mrb[0].mxu0
        %v2500 = vpop.f32.mrb[0].mxu0
        %v2501 = vadd.f32 0.0, %v2500
        %v2502 = vpop.f32.mrb[0].mxu0
        %2503 = vmatprep.mubr.bf16.mxu0 %v1770
        %2504 = vmatmul.mubr.bf16.gmra.mrb[0].mxu0 %v1769
        %v2505 = vpop.f32.mrb[0].mxu0
        %v2506 = vadd.f32 0.0, %v2505
        %v2507 = vpop.f32.mrb[0].mxu0
        %v2508 = vpop.f32.mrb[0].mxu0
        %v2509 = vadd.f32 0.0, %v2508
        %v2510 = vpop.f32.mrb[0].mxu0
        %2511 = vmatprep.mubr.bf16.mxu0 %v1772
        %2512 = vmatmul.mubr.bf16.gmra.mrb[0].mxu0 %v1771
        %v2513 = vpop.f32.mrb[0].mxu0
        %v2514 = vadd.f32 0.0, %v2513
        %v2515 = vpop.f32.mrb[0].mxu0
        %v2516 = vpop.f32.mrb[0].mxu0
        %v2517 = vadd.f32 0.0, %v2516
        %v2518 = vpop.f32.mrb[0].mxu0
        %2519 = vmatprep.mubr.bf16.mxu0 %v1774
        %2520 = vmatmul.mubr.bf16.gmra.mrb[0].mxu0 %v1773
        %v2521 = vpop.f32.mrb[0].mxu0
        %v2522 = vadd.f32 0.0, %v2521
        %v2523 = vpop.f32.mrb[0].mxu0
        %v2524 = vpop.f32.mrb[0].mxu0
        %v2525 = vadd.f32 0.0, %v2524
        %v2526 = vpop.f32.mrb[0].mxu0
        %2527 = vmatprep.mubr.bf16.mxu0 %v1776
        %2528 = vmatmul.mubr.bf16.gmra.mrb[0].mxu0 %v1775
        %v2529 = vpop.f32.mrb[0].mxu0
        %v2530 = vadd.f32 0.0, %v2529
        %v2531 = vpop.f32.mrb[0].mxu0
        %v2532 = vpop.f32.mrb[0].mxu0
        %v2533 = vadd.f32 0.0, %v2532
        %v2534 = vpop.f32.mrb[0].mxu0
        %2535 = vmatprep.mubr.bf16.mxu0 %v1778
        %2536 = vmatmul.mubr.bf16.gmra.mrb[0].mxu0 %v1777
        %v2537 = vpop.f32.mrb[0].mxu0
        %v2538 = vadd.f32 0.0, %v2537
        %v2539 = vpop.f32.mrb[0].mxu0
        %v2540 = vpop.f32.mrb[0].mxu0
        %v2541 = vadd.f32 0.0, %v2540
        %v2542 = vpop.f32.mrb[0].mxu0
        %2543 = vmatprep.mubr.bf16.mxu0 %v1780
        %2544 = vmatmul.mubr.bf16.gmra.mrb[0].mxu0 %v1779
        %v2545 = vpop.f32.mrb[0].mxu0
        %v2546 = vadd.f32 0.0, %v2545
        %v2547 = vpop.f32.mrb[0].mxu0
        %v2548 = vpop.f32.mrb[0].mxu0
        %v2549 = vadd.f32 0.0, %v2548
        %v2550 = vpop.f32.mrb[0].mxu0
        %2551 = vmatprep.mubr.bf16.mxu0 %v1782
        %2552 = vmatmul.mubr.bf16.gmra.mrb[0].mxu0 %v1781
        %v2553 = vpop.f32.mrb[0].mxu0
        %v2554 = vadd.f32 0.0, %v2553
        %v2555 = vpop.f32.mrb[0].mxu0
        %v2556 = vpop.f32.mrb[0].mxu0
        %v2557 = vadd.f32 0.0, %v2556
        %v2558 = vpop.f32.mrb[0].mxu0
        %2559 = vmatprep.mubr.bf16.mxu0 %v1784
        %2560 = vmatmul.mubr.bf16.gmra.mrb[0].mxu0 %v1783
        %v2561 = vpop.f32.mrb[0].mxu0
        %v2562 = vadd.f32 0.0, %v2561
        %v2563 = vpop.f32.mrb[0].mxu0
        %v2564 = vpop.f32.mrb[0].mxu0
        %v2565 = vadd.f32 0.0, %v2564
        %v2566 = vpop.f32.mrb[0].mxu0
        %2567 = vmatprep.mubr.bf16.mxu0 %v1786
        %2568 = vmatmul.mubr.bf16.gmra.mrb[0].mxu0 %v1785
        %v2569 = vpop.f32.mrb[0].mxu0
        %v2570 = vadd.f32 0.0, %v2569
        %v2571 = vpop.f32.mrb[0].mxu0
        %v2572 = vpop.f32.mrb[0].mxu0
        %v2573 = vadd.f32 0.0, %v2572
        %v2574 = vpop.f32.mrb[0].mxu0
        %2575 = vmatprep.mubr.bf16.mxu0 %v1788
        %2576 = vmatmul.mubr.bf16.gmra.mrb[0].mxu0 %v1787
        %v2577 = vpop.f32.mrb[0].mxu0
        %v2578 = vadd.f32 0.0, %v2577
        %v2579 = vpop.f32.mrb[0].mxu0
        %v2580 = vpop.f32.mrb[0].mxu0
        %v2581 = vadd.f32 0.0, %v2580
        %v2582 = vpop.f32.mrb[0].mxu0
        %2583 = vmatprep.mubr.bf16.mxu0 %v1790
        %2584 = vmatmul.mubr.bf16.gmra.mrb[0].mxu0 %v1789
        %v2585 = vpop.f32.mrb[0].mxu0
        %v2586 = vadd.f32 0.0, %v2585
        %v2587 = vpop.f32.mrb[0].mxu0
        %v2588 = vpop.f32.mrb[0].mxu0
        %v2589 = vadd.f32 0.0, %v2588
        %v2590 = vpop.f32.mrb[0].mxu0
        %2591 = vmatprep.mubr.bf16.mxu0 %v1792
        %2592 = vmatmul.mubr.bf16.gmra.mrb[0].mxu0 %v1791
        %v2593 = vpop.f32.mrb[0].mxu0
        %v2594 = vadd.f32 0.0, %v2593
        %v2595 = vpop.f32.mrb[0].mxu0
        %v2596 = vpop.f32.mrb[0].mxu0
        %v2597 = vadd.f32 0.0, %v2596
        %v2598 = vpop.f32.mrb[0].mxu0
        %2599 = vmatprep.mubr.bf16.mxu0 %v1794
        %2600 = vmatmul.mubr.bf16.gmra.mrb[0].mxu0 %v1793
        %v2601 = vpop.f32.mrb[0].mxu0
        %v2602 = vadd.f32 0.0, %v2601
        %v2603 = vpop.f32.mrb[0].mxu0
        %v2604 = vpop.f32.mrb[0].mxu0
        %v2605 = vadd.f32 0.0, %v2604
        %v2606 = vpop.f32.mrb[0].mxu0
        %2607 = vmatprep.mubr.bf16.mxu0 %v1796
        %2608 = vmatmul.mubr.bf16.gmra.mrb[0].mxu0 %v1795
        %v2609 = vpop.f32.mrb[0].mxu0
        %v2610 = vadd.f32 0.0, %v2609
        %v2611 = vpop.f32.mrb[0].mxu0
        %v2612 = vpop.f32.mrb[0].mxu0
        %v2613 = vadd.f32 0.0, %v2612
        %v2614 = vpop.f32.mrb[0].mxu0
        %2615 = vmatprep.mubr.bf16.mxu0 %v1798
        %2616 = vmatmul.mubr.bf16.gmra.mrb[0].mxu0 %v1797
        %v2617 = vpop.f32.mrb[0].mxu0
        %v2618 = vadd.f32 0.0, %v2617
        %v2619 = vpop.f32.mrb[0].mxu0
        %v2620 = vpop.f32.mrb[0].mxu0
        %v2621 = vadd.f32 0.0, %v2620
        %v2622 = vpop.f32.mrb[0].mxu0
        %2623 = vmatprep.mubr.bf16.mxu0 %v1800
        %2624 = vmatmul.mubr.bf16.gmra.mrb[0].mxu0 %v1799
        %v2625 = vpop.f32.mrb[0].mxu0
        %v2626 = vadd.f32 0.0, %v2625
        %v2627 = vpop.f32.mrb[0].mxu0
        %v2628 = vpop.f32.mrb[0].mxu0
        %v2629 = vadd.f32 0.0, %v2628
        %v2630 = vpop.f32.mrb[0].mxu0
        %2631 = vmatprep.mubr.bf16.mxu0 %v1802
        %2632 = vmatmul.mubr.bf16.gmra.mrb[0].mxu0 %v1801
        %v2633 = vpop.f32.mrb[0].mxu0
        %v2634 = vadd.f32 0.0, %v2633
        %v2635 = vpop.f32.mrb[0].mxu0
        %v2636 = vpop.f32.mrb[0].mxu0
        %v2637 = vadd.f32 0.0, %v2636
        %v2638 = vpop.f32.mrb[0].mxu0
        %2639 = vmatprep.mubr.bf16.mxu0 %v1804
        %2640 = vmatmul.mubr.bf16.gmra.mrb[0].mxu0 %v1803
        %v2641 = vpop.f32.mrb[0].mxu0
        %v2642 = vadd.f32 0.0, %v2641
        %v2643 = vpop.f32.mrb[0].mxu0
        %v2644 = vpop.f32.mrb[0].mxu0
        %v2645 = vadd.f32 0.0, %v2644
        %v2646 = vpop.f32.mrb[0].mxu0
        %2647 = vmatprep.mubr.bf16.mxu0 %v1806
        %2648 = vmatmul.mubr.bf16.gmra.mrb[0].mxu0 %v1805
        %v2649 = vpop.f32.mrb[0].mxu0
        %v2650 = vadd.f32 0.0, %v2649
        %v2651 = vpop.f32.mrb[0].mxu0
        %v2652 = vpop.f32.mrb[0].mxu0
        %v2653 = vadd.f32 0.0, %v2652
        %v2654 = vpop.f32.mrb[0].mxu0
        %2655 = vmatprep.mubr.bf16.mxu0 %v1808
        %2656 = vmatmul.mubr.bf16.gmra.mrb[0].mxu0 %v1807
        %v2657 = vpop.f32.mrb[0].mxu0
        %v2658 = vadd.f32 0.0, %v2657
        %v2659 = vpop.f32.mrb[0].mxu0
        %v2660 = vpop.f32.mrb[0].mxu0
        %v2661 = vadd.f32 0.0, %v2660
        %v2662 = vpop.f32.mrb[0].mxu0
        %2663 = vmatprep.mubr.bf16.mxu0 %v1810
        %2664 = vmatmul.mubr.bf16.gmra.mrb[0].mxu0 %v1809
        %v2665 = vpop.f32.mrb[0].mxu0
        %v2666 = vadd.f32 0.0, %v2665
        %v2667 = vpop.f32.mrb[0].mxu0
        %v2668 = vpop.f32.mrb[0].mxu0
        %v2669 = vadd.f32 0.0, %v2668
        %v2670 = vpop.f32.mrb[0].mxu0
        %2671 = vmatprep.mubr.bf16.mxu0 %v1812
        %2672 = vmatmul.mubr.bf16.gmra.mrb[0].mxu0 %v1811
        %v2673 = vpop.f32.mrb[0].mxu0
        %v2674 = vadd.f32 0.0, %v2673
        %v2675 = vpop.f32.mrb[0].mxu0
        %v2676 = vpop.f32.mrb[0].mxu0
        %v2677 = vadd.f32 0.0, %v2676
        %v2678 = vpop.f32.mrb[0].mxu0
        %2679 = vmatprep.mubr.bf16.mxu0 %v1814
        %2680 = vmatmul.mubr.bf16.gmra.mrb[0].mxu0 %v1813
        %v2681 = vpop.f32.mrb[0].mxu0
        %v2682 = vadd.f32 0.0, %v2681
        %v2683 = vpop.f32.mrb[0].mxu0
        %v2684 = vpop.f32.mrb[0].mxu0
        %v2685 = vadd.f32 0.0, %v2684
        %v2686 = vpop.f32.mrb[0].mxu0
        %2687 = vmatprep.mubr.bf16.mxu0 %v1816
        %2688 = vmatmul.mubr.bf16.gmra.mrb[0].mxu0 %v1815
        %v2689 = vpop.f32.mrb[0].mxu0
        %v2690 = vadd.f32 0.0, %v2689
        %v2691 = vpop.f32.mrb[0].mxu0
        %v2692 = vpop.f32.mrb[0].mxu0
        %v2693 = vadd.f32 0.0, %v2692
        %v2694 = vpop.f32.mrb[0].mxu0
        %2695 = vmatprep.mubr.bf16.mxu0 %v1818
        %2696 = vmatmul.mubr.bf16.gmra.mrb[0].mxu0 %v1817
        %v2697 = vpop.f32.mrb[0].mxu0
        %v2698 = vadd.f32 0.0, %v2697
        %v2699 = vpop.f32.mrb[0].mxu0
        %v2700 = vpop.f32.mrb[0].mxu0
        %v2701 = vadd.f32 0.0, %v2700
        %v2702 = vpop.f32.mrb[0].mxu0
        %2703 = vmatprep.mubr.bf16.mxu0 %v1820
        %2704 = vmatmul.mubr.bf16.gmra.mrb[0].mxu0 %v1819
        %v2705 = vpop.f32.mrb[0].mxu0
        %v2706 = vadd.f32 0.0, %v2705
        %v2707 = vpop.f32.mrb[0].mxu0
        %v2708 = vpop.f32.mrb[0].mxu0
        %v2709 = vadd.f32 0.0, %v2708
        %v2710 = vpop.f32.mrb[0].mxu0
        %2711 = vmatprep.mubr.bf16.mxu0 %v1822
        %2712 = vmatmul.mubr.bf16.gmra.mrb[0].mxu0 %v1821
        %v2713 = vpop.f32.mrb[0].mxu0
        %v2714 = vadd.f32 0.0, %v2713
        %v2715 = vpop.f32.mrb[0].mxu0
        %v2716 = vpop.f32.mrb[0].mxu0
        %v2717 = vadd.f32 0.0, %v2716
        %v2718 = vpop.f32.mrb[0].mxu0
        %2719 = vmatprep.mubr.bf16.mxu0 %v1824
        %2720 = vmatmul.mubr.bf16.gmra.mrb[0].mxu0 %v1823
        %v2721 = vpop.f32.mrb[0].mxu0
        %v2722 = vadd.f32 0.0, %v2721
        %v2723 = vpop.f32.mrb[0].mxu0
        %v2724 = vpop.f32.mrb[0].mxu0
        %v2725 = vadd.f32 0.0, %v2724
        %v2726 = vpop.f32.mrb[0].mxu0
        %2727 = vmatprep.mubr.bf16.mxu0 %v1826
        %2728 = vmatmul.mubr.bf16.gmra.mrb[0].mxu0 %v1825
        %v2729 = vpop.f32.mrb[0].mxu0
        %v2730 = vadd.f32 0.0, %v2729
        %v2731 = vpop.f32.mrb[0].mxu0
        %v2732 = vpop.f32.mrb[0].mxu0
        %v2733 = vadd.f32 0.0, %v2732
        %v2734 = vpop.f32.mrb[0].mxu0
        %2735 = vmatprep.mubr.bf16.mxu0 %v1828
        %2736 = vmatmul.mubr.bf16.gmra.mrb[0].mxu0 %v1827
        %v2737 = vpop.f32.mrb[0].mxu0
        %v2738 = vadd.f32 0.0, %v2737
        %v2739 = vpop.f32.mrb[0].mxu0
        %v2740 = vpop.f32.mrb[0].mxu0
        %v2741 = vadd.f32 0.0, %v2740
        %v2742 = vpop.f32.mrb[0].mxu0
        %2743 = vmatprep.mubr.bf16.mxu0 %v1830
        %2744 = vmatmul.mubr.bf16.gmra.mrb[0].mxu0 %v1829
        %v2745 = vpop.f32.mrb[0].mxu0
        %v2746 = vadd.f32 0.0, %v2745
        %v2747 = vpop.f32.mrb[0].mxu0
        %v2748 = vpop.f32.mrb[0].mxu0
        %v2749 = vadd.f32 0.0, %v2748
        %v2750 = vpop.f32.mrb[0].mxu0
        %2751 = vmatprep.mubr.bf16.mxu0 %v1832
        %2752 = vmatmul.mubr.bf16.gmra.mrb[0].mxu0 %v1831
        %v2753 = vpop.f32.mrb[0].mxu0
        %v2754 = vadd.f32 0.0, %v2753
        %v2755 = vpop.f32.mrb[0].mxu0
        %v2756 = vpop.f32.mrb[0].mxu0
        %v2757 = vadd.f32 0.0, %v2756
        %v2758 = vpop.f32.mrb[0].mxu0
        %2759 = vmatprep.mubr.bf16.mxu0 %v1834
        %2760 = vmatmul.mubr.bf16.gmra.mrb[0].mxu0 %v1833
        %v2761 = vpop.f32.mrb[0].mxu0
        %v2762 = vadd.f32 0.0, %v2761
        %v2763 = vpop.f32.mrb[0].mxu0
        %v2764 = vpop.f32.mrb[0].mxu0
        %v2765 = vadd.f32 0.0, %v2764
        %v2766 = vpop.f32.mrb[0].mxu0
        %2767 = vmatprep.mubr.bf16.mxu0 %v1836
        %2768 = vmatmul.mubr.bf16.gmra.mrb[0].mxu0 %v1835
        %v2769 = vpop.f32.mrb[0].mxu0
        %v2770 = vadd.f32 0.0, %v2769
        %v2771 = vpop.f32.mrb[0].mxu0
        %v2772 = vpop.f32.mrb[0].mxu0
        %v2773 = vadd.f32 0.0, %v2772
        %v2774 = vpop.f32.mrb[0].mxu0
        %2775 = vmatprep.mubr.bf16.mxu0 %v1838
        %2776 = vmatmul.mubr.bf16.gmra.mrb[0].mxu0 %v1837
        %v2777 = vpop.f32.mrb[0].mxu0
        %v2778 = vadd.f32 0.0, %v2777
        %v2779 = vpop.f32.mrb[0].mxu0
        %v2780 = vpop.f32.mrb[0].mxu0
        %v2781 = vadd.f32 0.0, %v2780
        %v2782 = vpop.f32.mrb[0].mxu0
        %2783 = vmatprep.mubr.bf16.mxu0 %v1840
        %2784 = vmatmul.mubr.bf16.gmra.mrb[0].mxu0 %v1839
        %v2785 = vpop.f32.mrb[0].mxu0
        %v2786 = vadd.f32 0.0, %v2785
        %v2787 = vpop.f32.mrb[0].mxu0
        %v2788 = vpop.f32.mrb[0].mxu0
        %v2789 = vadd.f32 0.0, %v2788
        %v2790 = vpop.f32.mrb[0].mxu0
        %2791 = vmatprep.mubr.bf16.mxu0 %v1842
        %2792 = vmatmul.mubr.bf16.gmra.mrb[0].mxu0 %v1841
        %v2793 = vpop.f32.mrb[0].mxu0
        %v2794 = vadd.f32 0.0, %v2793
        %v2795 = vpop.f32.mrb[0].mxu0
        %v2796 = vpop.f32.mrb[0].mxu0
        %v2797 = vadd.f32 0.0, %v2796
        %v2798 = vpop.f32.mrb[0].mxu0
        %2799 = vmatprep.mubr.bf16.mxu0 %v1844
        %2800 = vmatmul.mubr.bf16.gmra.mrb[0].mxu0 %v1843
        %v2801 = vpop.f32.mrb[0].mxu0
        %v2802 = vadd.f32 0.0, %v2801
        %v2803 = vpop.f32.mrb[0].mxu0
        %v2804 = vpop.f32.mrb[0].mxu0
        %v2805 = vadd.f32 0.0, %v2804
        %v2806 = vpop.f32.mrb[0].mxu0
        %2807 = vmatprep.mubr.bf16.mxu0 %v1846
        %2808 = vmatmul.mubr.bf16.gmra.mrb[0].mxu0 %v1845
        %v2809 = vpop.f32.mrb[0].mxu0
        %v2810 = vadd.f32 0.0, %v2809
        %v2811 = vpop.f32.mrb[0].mxu0
        %v2812 = vpop.f32.mrb[0].mxu0
        %v2813 = vadd.f32 0.0, %v2812
        %v2814 = vpop.f32.mrb[0].mxu0
        %2815 = vmatprep.mubr.bf16.mxu0 %v1848
        %2816 = vmatmul.mubr.bf16.gmra.mrb[0].mxu0 %v1847
        %v2817 = vpop.f32.mrb[0].mxu0
        %v2818 = vadd.f32 0.0, %v2817
        %v2819 = vpop.f32.mrb[0].mxu0
        %v2820 = vpop.f32.mrb[0].mxu0
        %v2821 = vadd.f32 0.0, %v2820
        %v2822 = vpop.f32.mrb[0].mxu0
        %2823 = vmatprep.mubr.bf16.mxu0 %v1850
        %2824 = vmatmul.mubr.bf16.gmra.mrb[0].mxu0 %v1849
        %v2825 = vpop.f32.mrb[0].mxu0
        %v2826 = vadd.f32 0.0, %v2825
        %v2827 = vpop.f32.mrb[0].mxu0
        %v2828 = vpop.f32.mrb[0].mxu0
        %v2829 = vadd.f32 0.0, %v2828
        %v2830 = vpop.f32.mrb[0].mxu0
        %2831 = vmatprep.mubr.bf16.mxu0 %v1852
        %2832 = vmatmul.mubr.bf16.gmra.mrb[0].mxu0 %v1851
        %v2833 = vpop.f32.mrb[0].mxu0
        %v2834 = vadd.f32 0.0, %v2833
        %v2835 = vpop.f32.mrb[0].mxu0
        %v2836 = vpop.f32.mrb[0].mxu0
        %v2837 = vadd.f32 0.0, %v2836
        %v2838 = vpop.f32.mrb[0].mxu0
        %2839 = vmatprep.mubr.bf16.mxu0 %v1854
        %2840 = vmatmul.mubr.bf16.gmra.mrb[0].mxu0 %v1853
        %v2841 = vpop.f32.mrb[0].mxu0
        %v2842 = vadd.f32 0.0, %v2841
        %v2843 = vpop.f32.mrb[0].mxu0
        %v2844 = vpop.f32.mrb[0].mxu0
        %v2845 = vadd.f32 0.0, %v2844
        %v2846 = vpop.f32.mrb[0].mxu0
        %2847 = vmatprep.mubr.bf16.mxu0 %v1856
        %2848 = vmatmul.mubr.bf16.gmra.mrb[0].mxu0 %v1855
        %v2849 = vpop.f32.mrb[0].mxu0
        %v2850 = vadd.f32 0.0, %v2849
        %v2851 = vpop.f32.mrb[0].mxu0
        %v2852 = vpop.f32.mrb[0].mxu0
        %v2853 = vadd.f32 0.0, %v2852
        %v2854 = vpop.f32.mrb[0].mxu0
        %2855 = vmatprep.mubr.bf16.mxu0 %v1858
        %2856 = vmatmul.mubr.bf16.gmra.mrb[0].mxu0 %v1857
        %v2857 = vpop.f32.mrb[0].mxu0
        %v2858 = vadd.f32 0.0, %v2857
        %v2859 = vpop.f32.mrb[0].mxu0
        %v2860 = vpop.f32.mrb[0].mxu0
        %v2861 = vadd.f32 0.0, %v2860
        %v2862 = vpop.f32.mrb[0].mxu0
        %2863 = vmatprep.mubr.bf16.mxu0 %v1860
        %2864 = vmatmul.mubr.bf16.gmra.mrb[0].mxu0 %v1859
        %v2865 = vpop.f32.mrb[0].mxu0
        %v2866 = vadd.f32 0.0, %v2865
        %v2867 = vpop.f32.mrb[0].mxu0
        %v2868 = vpop.f32.mrb[0].mxu0
        %v2869 = vadd.f32 0.0, %v2868
        %v2870 = vpop.f32.mrb[0].mxu0
        %2871 = vmatprep.mubr.bf16.mxu0 %v1862
        %2872 = vmatmul.mubr.bf16.gmra.mrb[0].mxu0 %v1861
        %v2873 = vpop.f32.mrb[0].mxu0
        %v2874 = vadd.f32 0.0, %v2873
        %v2875 = vpop.f32.mrb[0].mxu0
        %v2876 = vpop.f32.mrb[0].mxu0
        %v2877 = vadd.f32 0.0, %v2876
        %v2878 = vpop.f32.mrb[0].mxu0
        %2879 = vmatprep.mubr.bf16.mxu0 %v1864
        %2880 = vmatmul.mubr.bf16.gmra.mrb[0].mxu0 %v1863
        %v2881 = vpop.f32.mrb[0].mxu0
        %v2882 = vadd.f32 0.0, %v2881
        %v2883 = vpop.f32.mrb[0].mxu0
        %v2884 = vpop.f32.mrb[0].mxu0
        %v2885 = vadd.f32 0.0, %v2884
        %v2886 = vpop.f32.mrb[0].mxu0
        %2887 = vmatprep.mubr.bf16.mxu0 %v1866
        %2888 = vmatmul.mubr.bf16.gmra.mrb[0].mxu0 %v1865
        %v2889 = vpop.f32.mrb[0].mxu0
        %v2890 = vadd.f32 0.0, %v2889
        %v2891 = vpop.f32.mrb[0].mxu0
        %v2892 = vpop.f32.mrb[0].mxu0
        %v2893 = vadd.f32 0.0, %v2892
        %v2894 = vpop.f32.mrb[0].mxu0
        %2895 = vmatprep.mubr.bf16.mxu0 %v1868
        %2896 = vmatmul.mubr.bf16.gmra.mrb[0].mxu0 %v1867
        %v2897 = vpop.f32.mrb[0].mxu0
        %v2898 = vadd.f32 0.0, %v2897
        %v2899 = vpop.f32.mrb[0].mxu0
        %v2900 = vpop.f32.mrb[0].mxu0
        %v2901 = vadd.f32 0.0, %v2900
        %v2902 = vpop.f32.mrb[0].mxu0
        %2903 = vmatprep.mubr.bf16.mxu0 %v1870
        %2904 = vmatmul.mubr.bf16.gmra.mrb[0].mxu0 %v1869
        %v2905 = vpop.f32.mrb[0].mxu0
        %v2906 = vadd.f32 0.0, %v2905
        %v2907 = vpop.f32.mrb[0].mxu0
        %v2908 = vpop.f32.mrb[0].mxu0
        %v2909 = vadd.f32 0.0, %v2908
        %v2910 = vpop.f32.mrb[0].mxu0
        %2911 = vmatprep.mubr.bf16.mxu0 %v1872
        %2912 = vmatmul.mubr.bf16.gmra.mrb[0].mxu0 %v1871
        %v2913 = vpop.f32.mrb[0].mxu0
        %v2914 = vadd.f32 0.0, %v2913
        %v2915 = vpop.f32.mrb[0].mxu0
        %v2916 = vpop.f32.mrb[0].mxu0
        %v2917 = vadd.f32 0.0, %v2916
        %v2918 = vpop.f32.mrb[0].mxu0
        %2919 = vmatprep.mubr.bf16.mxu0 %v1874
        %2920 = vmatmul.mubr.bf16.gmra.mrb[0].mxu0 %v1873
        %v2921 = vpop.f32.mrb[0].mxu0
        %v2922 = vadd.f32 0.0, %v2921
        %v2923 = vpop.f32.mrb[0].mxu0
        %v2924 = vpop.f32.mrb[0].mxu0
        %v2925 = vadd.f32 0.0, %v2924
        %v2926 = vpop.f32.mrb[0].mxu0
        %2927 = vmatprep.mubr.bf16.mxu0 %v1876
        %2928 = vmatmul.mubr.bf16.gmra.mrb[0].mxu0 %v1875
        %v2929 = vpop.f32.mrb[0].mxu0
        %v2930 = vadd.f32 0.0, %v2929
        %v2931 = vpop.f32.mrb[0].mxu0
        %v2932 = vpop.f32.mrb[0].mxu0
        %v2933 = vadd.f32 0.0, %v2932
        %v2934 = vpop.f32.mrb[0].mxu0
        %2935 = vmatprep.mubr.bf16.mxu0 %v1878
        %2936 = vmatmul.mubr.bf16.gmra.mrb[0].mxu0 %v1877
        %v2937 = vpop.f32.mrb[0].mxu0
        %v2938 = vadd.f32 0.0, %v2937
        %v2939 = vpop.f32.mrb[0].mxu0
        %v2940 = vpop.f32.mrb[0].mxu0
        %v2941 = vadd.f32 0.0, %v2940
        %v2942 = vpop.f32.mrb[0].mxu0
        %2943 = vmatprep.mubr.bf16.mxu0 %v1880
        %2944 = vmatmul.mubr.bf16.gmra.mrb[0].mxu0 %v1879
        %v2945 = vpop.f32.mrb[0].mxu0
        %v2946 = vadd.f32 0.0, %v2945
        %v2947 = vpop.f32.mrb[0].mxu0
        %v2948 = vpop.f32.mrb[0].mxu0
        %v2949 = vadd.f32 0.0, %v2948
        %v2950 = vpop.f32.mrb[0].mxu0
        %2951 = vmatprep.mubr.bf16.mxu0 %v1882
        %2952 = vmatmul.mubr.bf16.gmra.mrb[0].mxu0 %v1881
        %v2953 = vpop.f32.mrb[0].mxu0
        %v2954 = vadd.f32 0.0, %v2953
        %v2955 = vpop.f32.mrb[0].mxu0
        %v2956 = vpop.f32.mrb[0].mxu0
        %v2957 = vadd.f32 0.0, %v2956
        %v2958 = vpop.f32.mrb[0].mxu0
        %2959 = vmatprep.mubr.bf16.mxu0 %v1884
        %2960 = vmatmul.mubr.bf16.gmra.mrb[0].mxu0 %v1883
        %v2961 = vpop.f32.mrb[0].mxu0
        %v2962 = vadd.f32 0.0, %v2961
        %v2963 = vpop.f32.mrb[0].mxu0
        %v2964 = vpop.f32.mrb[0].mxu0
        %v2965 = vadd.f32 0.0, %v2964
        %v2966 = vpop.f32.mrb[0].mxu0
        %2967 = vmatprep.mubr.bf16.mxu0 %v1886
        %2968 = vmatmul.mubr.bf16.gmra.mrb[0].mxu0 %v1885
        %v2969 = vpop.f32.mrb[0].mxu0
        %v2970 = vadd.f32 0.0, %v2969
        %v2971 = vpop.f32.mrb[0].mxu0
        %v2972 = vpop.f32.mrb[0].mxu0
        %v2973 = vadd.f32 0.0, %v2972
        %v2974 = vpop.f32.mrb[0].mxu0
        %2975 = vmatprep.mubr.bf16.mxu0 %v1888
        %2976 = vmatmul.mubr.bf16.gmra.mrb[0].mxu0 %v1887
        %v2977 = vpop.f32.mrb[0].mxu0
        %v2978 = vadd.f32 0.0, %v2977
        %v2979 = vpop.f32.mrb[0].mxu0
        %v2980 = vpop.f32.mrb[0].mxu0
        %v2981 = vadd.f32 0.0, %v2980
        %v2982 = vpop.f32.mrb[0].mxu0
        %2983 = vmatprep.mubr.bf16.mxu0 %v1890
        %2984 = vmatmul.mubr.bf16.gmra.mrb[0].mxu0 %v1889
        %v2985 = vpop.f32.mrb[0].mxu0
        %v2986 = vadd.f32 0.0, %v2985
        %v2987 = vpop.f32.mrb[0].mxu0
        %v2988 = vpop.f32.mrb[0].mxu0
        %v2989 = vadd.f32 0.0, %v2988
        %v2990 = vpop.f32.mrb[0].mxu0
        %2991 = vmatprep.mubr.bf16.mxu0 %v1892
        %2992 = vmatmul.mubr.bf16.gmra.mrb[0].mxu0 %v1891
        %v2993 = vpop.f32.mrb[0].mxu0
        %v2994 = vadd.f32 0.0, %v2993
        %v2995 = vpop.f32.mrb[0].mxu0
        %v2996 = vpop.f32.mrb[0].mxu0
        %v2997 = vadd.f32 0.0, %v2996
        %v2998 = vpop.f32.mrb[0].mxu0
        %2999 = vmatprep.mubr.bf16.mxu0 %v1894
        %3000 = vmatmul.mubr.bf16.gmra.mrb[0].mxu0 %v1893
        %v3001 = vpop.f32.mrb[0].mxu0
        %v3002 = vadd.f32 0.0, %v3001
        %v3003 = vpop.f32.mrb[0].mxu0
        %v3004 = vpop.f32.mrb[0].mxu0
        %v3005 = vadd.f32 0.0, %v3004
        %v3006 = vpop.f32.mrb[0].mxu0
        %3007 = vmatprep.mubr.bf16.mxu0 %v1896
        %3008 = vmatmul.mubr.bf16.gmra.mrb[0].mxu0 %v1895
        %v3009 = vpop.f32.mrb[0].mxu0
        %v3010 = vadd.f32 0.0, %v3009
        %v3011 = vpop.f32.mrb[0].mxu0
        %v3012 = vpop.f32.mrb[0].mxu0
        %v3013 = vadd.f32 0.0, %v3012
        %v3014 = vpop.f32.mrb[0].mxu0
        %3015 = vmatprep.mubr.bf16.mxu0 %v1898
        %3016 = vmatmul.mubr.bf16.gmra.mrb[0].mxu0 %v1897
        %v3017 = vpop.f32.mrb[0].mxu0
        %v3018 = vadd.f32 0.0, %v3017
        %v3019 = vpop.f32.mrb[0].mxu0
        %v3020 = vpop.f32.mrb[0].mxu0
        %v3021 = vadd.f32 0.0, %v3020
        %v3022 = vpop.f32.mrb[0].mxu0
        %3023 = vmatprep.mubr.bf16.mxu0 %v1900
        %3024 = vmatmul.mubr.bf16.gmra.mrb[0].mxu0 %v1899
        %v3025 = vpop.f32.mrb[0].mxu0
        %v3026 = vadd.f32 0.0, %v3025
        %v3027 = vpop.f32.mrb[0].mxu0
        %v3028 = vpop.f32.mrb[0].mxu0
        %v3029 = vadd.f32 0.0, %v3028
        %v3030 = vpop.f32.mrb[0].mxu0
        %3031 = vmatprep.mubr.bf16.mxu0 %v1902
        %3032 = vmatmul.mubr.bf16.gmra.mrb[0].mxu0 %v1901
        %v3033 = vpop.f32.mrb[0].mxu0
        %v3034 = vadd.f32 0.0, %v3033
        %v3035 = vpop.f32.mrb[0].mxu0
        %v3036 = vpop.f32.mrb[0].mxu0
        %v3037 = vadd.f32 0.0, %v3036
        %v3038 = vpop.f32.mrb[0].mxu0
        %3039 = vmatprep.mubr.bf16.mxu0 %v1904
        %3040 = vmatmul.mubr.bf16.gmra.mrb[0].mxu0 %v1903
        %v3041 = vpop.f32.mrb[0].mxu0
        %v3042 = vadd.f32 0.0, %v3041
        %v3043 = vpop.f32.mrb[0].mxu0
        %v3044 = vpop.f32.mrb[0].mxu0
        %v3045 = vadd.f32 0.0, %v3044
        %v3046 = vpop.f32.mrb[0].mxu0
        %3047 = vmatprep.mubr.bf16.mxu0 %v1906
        %3048 = vmatmul.mubr.bf16.gmra.mrb[0].mxu0 %v1905
        %v3049 = vpop.f32.mrb[0].mxu0
        %v3050 = vadd.f32 0.0, %v3049
        %v3051 = vpop.f32.mrb[0].mxu0
        %v3052 = vpop.f32.mrb[0].mxu0
        %v3053 = vadd.f32 0.0, %v3052
        %v3054 = vpop.f32.mrb[0].mxu0
        %3055 = vmatprep.mubr.bf16.mxu0 %v1908
        %3056 = vmatmul.mubr.bf16.gmra.mrb[0].mxu0 %v1907
        %v3057 = vpop.f32.mrb[0].mxu0
        %v3058 = vadd.f32 0.0, %v3057
        %v3059 = vpop.f32.mrb[0].mxu0
        %v3060 = vpop.f32.mrb[0].mxu0
        %v3061 = vadd.f32 0.0, %v3060
        %v3062 = vpop.f32.mrb[0].mxu0
        %3063 = vmatprep.mubr.bf16.mxu0 %v1910
        %3064 = vmatmul.mubr.bf16.gmra.mrb[0].mxu0 %v1909
        %v3065 = vpop.f32.mrb[0].mxu0
        %v3066 = vadd.f32 0.0, %v3065
        %v3067 = vpop.f32.mrb[0].mxu0
        %v3068 = vpop.f32.mrb[0].mxu0
        %v3069 = vadd.f32 0.0, %v3068
        %v3070 = vpop.f32.mrb[0].mxu0
        %3071 = vmatprep.mubr.bf16.mxu0 %v1912
        %3072 = vmatmul.mubr.bf16.gmra.mrb[0].mxu0 %v1911
        %v3073 = vpop.f32.mrb[0].mxu0
        %v3074 = vadd.f32 0.0, %v3073
        %v3075 = vpop.f32.mrb[0].mxu0
        %v3076 = vpop.f32.mrb[0].mxu0
        %v3077 = vadd.f32 0.0, %v3076
        %v3078 = vpop.f32.mrb[0].mxu0
        %3079 = vmatprep.mubr.bf16.mxu0 %v1914
        %3080 = vmatmul.mubr.bf16.gmra.mrb[0].mxu0 %v1913
        %v3081 = vpop.f32.mrb[0].mxu0
        %v3082 = vadd.f32 0.0, %v3081
        %v3083 = vpop.f32.mrb[0].mxu0
        %v3084 = vpop.f32.mrb[0].mxu0
        %v3085 = vadd.f32 0.0, %v3084
        %v3086 = vpop.f32.mrb[0].mxu0
        %3087 = vmatprep.mubr.bf16.mxu0 %v1916
        %3088 = vmatmul.mubr.bf16.gmra.mrb[0].mxu0 %v1915
        %v3089 = vpop.f32.mrb[0].mxu0
        %v3090 = vadd.f32 0.0, %v3089
        %v3091 = vpop.f32.mrb[0].mxu0
        %v3092 = vpop.f32.mrb[0].mxu0
        %v3093 = vadd.f32 0.0, %v3092
        %v3094 = vpop.f32.mrb[0].mxu0
        %3095 = vmatprep.mubr.bf16.mxu0 %v1918
        %3096 = vmatmul.mubr.bf16.gmra.mrb[0].mxu0 %v1917
        %v3097 = vpop.f32.mrb[0].mxu0
        %v3098 = vadd.f32 0.0, %v3097
        %v3099 = vpop.f32.mrb[0].mxu0
        %v3100 = vpop.f32.mrb[0].mxu0
        %v3101 = vadd.f32 0.0, %v3100
        %v3102 = vpop.f32.mrb[0].mxu0
        %3103 = vmatprep.mubr.bf16.mxu0 %v1920
        %3104 = vmatmul.mubr.bf16.gmra.mrb[0].mxu0 %v1919
        %v3105 = vpop.f32.mrb[0].mxu0
        %v3106 = vadd.f32 0.0, %v3105
        %v3107 = vpop.f32.mrb[0].mxu0
        %v3108 = vpop.f32.mrb[0].mxu0
        %v3109 = vadd.f32 0.0, %v3108
        %v3110 = vpop.f32.mrb[0].mxu0
        %3111 = vmatprep.mubr.bf16.mxu0 %v1922
        %3112 = vmatmul.mubr.bf16.gmra.mrb[0].mxu0 %v1921
        %v3113 = vpop.f32.mrb[0].mxu0
        %v3114 = vadd.f32 0.0, %v3113
        %v3115 = vpop.f32.mrb[0].mxu0
        %v3116 = vpop.f32.mrb[0].mxu0
        %v3117 = vadd.f32 0.0, %v3116
        %v3118 = vpop.f32.mrb[0].mxu0
        %3119 = vmatprep.mubr.bf16.mxu0 %v1924
        %3120 = vmatmul.mubr.bf16.gmra.mrb[0].mxu0 %v1923
        %v3121 = vpop.f32.mrb[0].mxu0
        %v3122 = vadd.f32 0.0, %v3121
        %v3123 = vpop.f32.mrb[0].mxu0
        %v3124 = vpop.f32.mrb[0].mxu0
        %v3125 = vadd.f32 0.0, %v3124
        %v3126 = vpop.f32.mrb[0].mxu0
        %3127 = vmatprep.mubr.bf16.mxu0 %v1926
        %3128 = vmatmul.mubr.bf16.gmra.mrb[0].mxu0 %v1925
        %v3129 = vpop.f32.mrb[0].mxu0
        %v3130 = vadd.f32 0.0, %v3129
        %v3131 = vpop.f32.mrb[0].mxu0
        %v3132 = vpop.f32.mrb[0].mxu0
        %v3133 = vadd.f32 0.0, %v3132
        %v3134 = vpop.f32.mrb[0].mxu0
        %3135 = vmatprep.mubr.bf16.mxu0 %v1928
        %3136 = vmatmul.mubr.bf16.gmra.mrb[0].mxu0 %v1927
        %v3137 = vpop.f32.mrb[0].mxu0
        %v3138 = vadd.f32 0.0, %v3137
        %v3139 = vpop.f32.mrb[0].mxu0
        %v3140 = vpop.f32.mrb[0].mxu0
        %v3141 = vadd.f32 0.0, %v3140
        %v3142 = vpop.f32.mrb[0].mxu0
        %3143 = vmatprep.mubr.bf16.mxu0 %v1930
        %3144 = vmatmul.mubr.bf16.gmra.mrb[0].mxu0 %v1929
        %v3145 = vpop.f32.mrb[0].mxu0
        %v3146 = vadd.f32 0.0, %v3145
        %v3147 = vpop.f32.mrb[0].mxu0
        %v3148 = vpop.f32.mrb[0].mxu0
        %v3149 = vadd.f32 0.0, %v3148
        %v3150 = vpop.f32.mrb[0].mxu0
        %3151 = vmatprep.mubr.bf16.mxu0 %v1932
        %3152 = vmatmul.mubr.bf16.gmra.mrb[0].mxu0 %v1931
        %v3153 = vpop.f32.mrb[0].mxu0
        %v3154 = vadd.f32 0.0, %v3153
        %v3155 = vpop.f32.mrb[0].mxu0
        %v3156 = vpop.f32.mrb[0].mxu0
        %v3157 = vadd.f32 0.0, %v3156
        %v3158 = vpop.f32.mrb[0].mxu0
        %3159 = vmatprep.mubr.bf16.mxu0 %v1934
        %3160 = vmatmul.mubr.bf16.gmra.mrb[0].mxu0 %v1933
        %v3161 = vpop.f32.mrb[0].mxu0
        %v3162 = vadd.f32 0.0, %v3161
        %v3163 = vpop.f32.mrb[0].mxu0
        %v3164 = vpop.f32.mrb[0].mxu0
        %v3165 = vadd.f32 0.0, %v3164
        %v3166 = vpop.f32.mrb[0].mxu0
        %3167 = vmatprep.mubr.bf16.mxu0 %v1936
        %3168 = vmatmul.mubr.bf16.gmra.mrb[0].mxu0 %v1935
        %v3169 = vpop.f32.mrb[0].mxu0
        %v3170 = vadd.f32 0.0, %v3169
        %v3171 = vpop.f32.mrb[0].mxu0
        %v3172 = vpop.f32.mrb[0].mxu0
        %v3173 = vadd.f32 0.0, %v3172
        %v3174 = vpop.f32.mrb[0].mxu0
        %3175 = vmatprep.mubr.bf16.mxu0 %v1938
        %3176 = vmatmul.mubr.bf16.gmra.mrb[0].mxu0 %v1937
        %v3177 = vpop.f32.mrb[0].mxu0
        %v3178 = vadd.f32 0.0, %v3177
        %v3179 = vpop.f32.mrb[0].mxu0
        %v3180 = vpop.f32.mrb[0].mxu0
        %v3181 = vadd.f32 0.0, %v3180
        %v3182 = vpop.f32.mrb[0].mxu0
        %3183 = vmatprep.mubr.bf16.mxu0 %v1940
        %3184 = vmatmul.mubr.bf16.gmra.mrb[0].mxu0 %v1939
        %v3185 = vpop.f32.mrb[0].mxu0
        %v3186 = vadd.f32 0.0, %v3185
        %v3187 = vpop.f32.mrb[0].mxu0
        %v3188 = vpop.f32.mrb[0].mxu0
        %v3189 = vadd.f32 0.0, %v3188
        %v3190 = vpop.f32.mrb[0].mxu0
        %3191 = vmatprep.mubr.bf16.mxu0 %v1942
        %3192 = vmatmul.mubr.bf16.gmra.mrb[0].mxu0 %v1941
        %v3193 = vpop.f32.mrb[0].mxu0
        %v3194 = vadd.f32 0.0, %v3193
        %v3195 = vpop.f32.mrb[0].mxu0
        %v3196 = vpop.f32.mrb[0].mxu0
        %v3197 = vadd.f32 0.0, %v3196
        %v3198 = vpop.f32.mrb[0].mxu0
        %3199 = vmatprep.mubr.bf16.mxu0 %v1944
        %3200 = vmatmul.mubr.bf16.gmra.mrb[0].mxu0 %v1943
        %v3201 = vpop.f32.mrb[0].mxu0
        %v3202 = vadd.f32 0.0, %v3201
        %v3203 = vpop.f32.mrb[0].mxu0
        %v3204 = vpop.f32.mrb[0].mxu0
        %v3205 = vadd.f32 0.0, %v3204
        %v3206 = vpop.f32.mrb[0].mxu0
        %3207 = vmatprep.mubr.bf16.mxu0 %v1946
        %3208 = vmatmul.mubr.bf16.gmra.mrb[0].mxu0 %v1945
        %v3209 = vpop.f32.mrb[0].mxu0
        %v3210 = vadd.f32 0.0, %v3209
        %v3211 = vpop.f32.mrb[0].mxu0
        %v3212 = vpop.f32.mrb[0].mxu0
        %v3213 = vadd.f32 0.0, %v3212
        %v3214 = vpop.f32.mrb[0].mxu0
        %3215 = vmatprep.mubr.bf16.mxu0 %v1948
        %3216 = vmatmul.mubr.bf16.gmra.mrb[0].mxu0 %v1947
        %v3217 = vpop.f32.mrb[0].mxu0
        %v3218 = vadd.f32 0.0, %v3217
        %v3219 = vpop.f32.mrb[0].mxu0
        %v3220 = vpop.f32.mrb[0].mxu0
        %v3221 = vadd.f32 0.0, %v3220
        %v3222 = vpop.f32.mrb[0].mxu0
        %3223 = vmatprep.mubr.bf16.mxu0 %v1950
        %3224 = vmatmul.mubr.bf16.gmra.mrb[0].mxu0 %v1949
        %v3225 = vpop.f32.mrb[0].mxu0
        %v3226 = vadd.f32 0.0, %v3225
        %v3227 = vpop.f32.mrb[0].mxu0
        %v3228 = vpop.f32.mrb[0].mxu0
        %v3229 = vadd.f32 0.0, %v3228
        %v3230 = vpop.f32.mrb[0].mxu0
        %3231 = vmatprep.mubr.bf16.mxu0 %v1952
        %3232 = vmatmul.mubr.bf16.gmra.mrb[0].mxu0 %v1951
        %v3233 = vpop.f32.mrb[0].mxu0
        %v3234 = vadd.f32 0.0, %v3233
        %v3235 = vpop.f32.mrb[0].mxu0
        %v3236 = vpop.f32.mrb[0].mxu0
        %v3237 = vadd.f32 0.0, %v3236
        %v3238 = vpop.f32.mrb[0].mxu0
        %3239 = vmatprep.mubr.bf16.mxu0 %v1954
        %3240 = vmatmul.mubr.bf16.gmra.mrb[0].mxu0 %v1953
        %v3241 = vpop.f32.mrb[0].mxu0
        %v3242 = vadd.f32 0.0, %v3241
        %v3243 = vpop.f32.mrb[0].mxu0
        %v3244 = vpop.f32.mrb[0].mxu0
        %v3245 = vadd.f32 0.0, %v3244
        %v3246 = vpop.f32.mrb[0].mxu0
        %3247 = vmatprep.mubr.bf16.mxu0 %v1956
        %3248 = vmatmul.mubr.bf16.gmra.mrb[0].mxu0 %v1955
        %v3249 = vpop.f32.mrb[0].mxu0
        %v3250 = vadd.f32 0.0, %v3249
        %v3251 = vpop.f32.mrb[0].mxu0
        %v3252 = vpop.f32.mrb[0].mxu0
        %v3253 = vadd.f32 0.0, %v3252
        %v3254 = vpop.f32.mrb[0].mxu0
        %3255 = vmatprep.mubr.bf16.mxu0 %v1958
        %3256 = vmatmul.mubr.bf16.gmra.mrb[0].mxu0 %v1957
        %v3257 = vpop.f32.mrb[0].mxu0
        %v3258 = vadd.f32 0.0, %v3257
        %v3259 = vpop.f32.mrb[0].mxu0
        %v3260 = vpop.f32.mrb[0].mxu0
        %v3261 = vadd.f32 0.0, %v3260
        %v3262 = vpop.f32.mrb[0].mxu0
        %3263 = vmatprep.mubr.bf16.mxu0 %v1960
        %3264 = vmatmul.mubr.bf16.gmra.mrb[0].mxu0 %v1959
        %v3265 = vpop.f32.mrb[0].mxu0
        %v3266 = vadd.f32 0.0, %v3265
        %v3267 = vpop.f32.mrb[0].mxu0
        %v3268 = vpop.f32.mrb[0].mxu0
        %v3269 = vadd.f32 0.0, %v3268
        %v3270 = vpop.f32.mrb[0].mxu0
        %3271 = vmatprep.mubr.bf16.mxu0 %v1962
        %3272 = vmatmul.mubr.bf16.gmra.mrb[0].mxu0 %v1961
        %v3273 = vpop.f32.mrb[0].mxu0
        %v3274 = vadd.f32 0.0, %v3273
        %v3275 = vpop.f32.mrb[0].mxu0
        %v3276 = vpop.f32.mrb[0].mxu0
        %v3277 = vadd.f32 0.0, %v3276
        %v3278 = vpop.f32.mrb[0].mxu0
        %3279 = vmatprep.mubr.bf16.mxu0 %v1964
        %3280 = vmatmul.mubr.bf16.gmra.mrb[0].mxu0 %v1963
        %v3281 = vpop.f32.mrb[0].mxu0
        %v3282 = vadd.f32 0.0, %v3281
        %v3283 = vpop.f32.mrb[0].mxu0
        %v3284 = vpop.f32.mrb[0].mxu0
        %v3285 = vadd.f32 0.0, %v3284
        %v3286 = vpop.f32.mrb[0].mxu0
        %3287 = vmatprep.mubr.bf16.mxu0 %v1966
        %3288 = vmatmul.mubr.bf16.gmra.mrb[0].mxu0 %v1965
        %v3289 = vpop.f32.mrb[0].mxu0
        %v3290 = vadd.f32 0.0, %v3289
        %v3291 = vpop.f32.mrb[0].mxu0
        %v3292 = vpop.f32.mrb[0].mxu0
        %v3293 = vadd.f32 0.0, %v3292
        %v3294 = vpop.f32.mrb[0].mxu0
        %3295 = vmatprep.mubr.bf16.mxu0 %v1968
        %3296 = vmatmul.mubr.bf16.gmra.mrb[0].mxu0 %v1967
        %v3297 = vpop.f32.mrb[0].mxu0
        %v3298 = vadd.f32 0.0, %v3297
        %v3299 = vpop.f32.mrb[0].mxu0
        %v3300 = vpop.f32.mrb[0].mxu0
        %v3301 = vadd.f32 0.0, %v3300
        %v3302 = vpop.f32.mrb[0].mxu0
        %3303 = vmatprep.mubr.bf16.mxu0 %v1970
        %3304 = vmatmul.mubr.bf16.gmra.mrb[0].mxu0 %v1969
        %v3305 = vpop.f32.mrb[0].mxu0
        %v3306 = vadd.f32 0.0, %v3305
        %v3307 = vpop.f32.mrb[0].mxu0
        %v3308 = vpop.f32.mrb[0].mxu0
        %v3309 = vadd.f32 0.0, %v3308
        %v3310 = vpop.f32.mrb[0].mxu0
        %3311 = vmatprep.mubr.bf16.mxu0 %v1972
        %3312 = vmatmul.mubr.bf16.gmra.mrb[0].mxu0 %v1971
        %v3313 = vpop.f32.mrb[0].mxu0
        %v3314 = vadd.f32 0.0, %v3313
        %v3315 = vpop.f32.mrb[0].mxu0
        %v3316 = vpop.f32.mrb[0].mxu0
        %v3317 = vadd.f32 0.0, %v3316
        %v3318 = vpop.f32.mrb[0].mxu0
        %3319 = vmatprep.mubr.bf16.mxu0 %v1974
        %3320 = vmatmul.mubr.bf16.gmra.mrb[0].mxu0 %v1973
        %v3321 = vpop.f32.mrb[0].mxu0
        %v3322 = vadd.f32 0.0, %v3321
        %v3323 = vpop.f32.mrb[0].mxu0
        %v3324 = vpop.f32.mrb[0].mxu0
        %v3325 = vadd.f32 0.0, %v3324
        %v3326 = vpop.f32.mrb[0].mxu0
        %3327 = vmatprep.mubr.bf16.mxu0 %v1976
        %3328 = vmatmul.mubr.bf16.gmra.mrb[0].mxu0 %v1975
        %v3329 = vpop.f32.mrb[0].mxu0
        %v3330 = vadd.f32 0.0, %v3329
        %v3331 = vpop.f32.mrb[0].mxu0
        %v3332 = vpop.f32.mrb[0].mxu0
        %v3333 = vadd.f32 0.0, %v3332
        %v3334 = vpop.f32.mrb[0].mxu0
        %3335 = vmatprep.mubr.bf16.mxu0 %v1978
        %3336 = vmatmul.mubr.bf16.gmra.mrb[0].mxu0 %v1977
        %v3337 = vpop.f32.mrb[0].mxu0
        %v3338 = vadd.f32 0.0, %v3337
        %v3339 = vpop.f32.mrb[0].mxu0
        %v3340 = vpop.f32.mrb[0].mxu0
        %v3341 = vadd.f32 0.0, %v3340
        %v3342 = vpop.f32.mrb[0].mxu0
        %3343 = vmatprep.mubr.bf16.mxu0 %v1980
        %3344 = vmatmul.mubr.bf16.gmra.mrb[0].mxu0 %v1979
        %v3345 = vpop.f32.mrb[0].mxu0
        %v3346 = vadd.f32 0.0, %v3345
        %v3347 = vpop.f32.mrb[0].mxu0
        %v3348 = vpop.f32.mrb[0].mxu0
        %v3349 = vadd.f32 0.0, %v3348
        %v3350 = vpop.f32.mrb[0].mxu0
        %3351 = vmatprep.mubr.bf16.mxu0 %v1982
        %3352 = vmatmul.mubr.bf16.gmra.mrb[0].mxu0 %v1981
        %v3353 = vpop.f32.mrb[0].mxu0
        %v3354 = vadd.f32 0.0, %v3353
        %v3355 = vpop.f32.mrb[0].mxu0
        %v3356 = vpop.f32.mrb[0].mxu0
        %v3357 = vadd.f32 0.0, %v3356
        %v3358 = vpop.f32.mrb[0].mxu0
        %3359 = vmatprep.mubr.bf16.mxu0 %v1984
        %3360 = vmatmul.mubr.bf16.gmra.mrb[0].mxu0 %v1983
        %v3361 = vpop.f32.mrb[0].mxu0
        %v3362 = vadd.f32 0.0, %v3361
        %v3363 = vpop.f32.mrb[0].mxu0
        %v3364 = vpop.f32.mrb[0].mxu0
        %v3365 = vadd.f32 0.0, %v3364
        %v3366 = vpop.f32.mrb[0].mxu0
        %3367 = vmatprep.mubr.bf16.mxu0 %v1986
        %3368 = vmatmul.mubr.bf16.gmra.mrb[0].mxu0 %v1985
        %v3369 = vpop.f32.mrb[0].mxu0
        %v3370 = vadd.f32 0.0, %v3369
        %v3371 = vpop.f32.mrb[0].mxu0
        %v3372 = vpop.f32.mrb[0].mxu0
        %v3373 = vadd.f32 0.0, %v3372
        %v3374 = vpop.f32.mrb[0].mxu0
        %3375 = vmatprep.mubr.bf16.mxu0 %v1988
        %3376 = vmatmul.mubr.bf16.gmra.mrb[0].mxu0 %v1987
        %v3377 = vpop.f32.mrb[0].mxu0
        %v3378 = vadd.f32 0.0, %v3377
        %v3379 = vpop.f32.mrb[0].mxu0
        %v3380 = vpop.f32.mrb[0].mxu0
        %v3381 = vadd.f32 0.0, %v3380
        %v3382 = vpop.f32.mrb[0].mxu0
        %3383 = vmatprep.mubr.bf16.mxu0 %v1990
        %3384 = vmatmul.mubr.bf16.gmra.mrb[0].mxu0 %v1989
        %v3385 = vpop.f32.mrb[0].mxu0
        %v3386 = vadd.f32 0.0, %v3385
        %v3387 = vpop.f32.mrb[0].mxu0
        %v3388 = vpop.f32.mrb[0].mxu0
        %v3389 = vadd.f32 0.0, %v3388
        %v3390 = vpop.f32.mrb[0].mxu0
        %3391 = vmatprep.mubr.bf16.mxu0 %v1992
        %3392 = vmatmul.mubr.bf16.gmra.mrb[0].mxu0 %v1991
        %v3393 = vpop.f32.mrb[0].mxu0
        %v3394 = vadd.f32 0.0, %v3393
        %v3395 = vpop.f32.mrb[0].mxu0
        %v3396 = vpop.f32.mrb[0].mxu0
        %v3397 = vadd.f32 0.0, %v3396
        %v3398 = vpop.f32.mrb[0].mxu0
        %3399 = vmatprep.mubr.bf16.mxu0 %v1994
        %3400 = vmatmul.mubr.bf16.gmra.mrb[0].mxu0 %v1993
        %v3401 = vpop.f32.mrb[0].mxu0
        %v3402 = vadd.f32 0.0, %v3401
        %v3403 = vpop.f32.mrb[0].mxu0
        %v3404 = vpop.f32.mrb[0].mxu0
        %v3405 = vadd.f32 0.0, %v3404
        %v3406 = vpop.f32.mrb[0].mxu0
        %3407 = vmatprep.mubr.bf16.mxu0 %v1996
        %3408 = vmatmul.mubr.bf16.gmra.mrb[0].mxu0 %v1995
        %v3409 = vpop.f32.mrb[0].mxu0
        %v3410 = vadd.f32 0.0, %v3409
        %v3411 = vpop.f32.mrb[0].mxu0
        %v3412 = vpop.f32.mrb[0].mxu0
        %v3413 = vadd.f32 0.0, %v3412
        %v3414 = vpop.f32.mrb[0].mxu0
        %3415 = vmatprep.mubr.bf16.mxu0 %v1998
        %3416 = vmatmul.mubr.bf16.gmra.mrb[0].mxu0 %v1997
        %v3417 = vpop.f32.mrb[0].mxu0
        %v3418 = vadd.f32 0.0, %v3417
        %v3419 = vpop.f32.mrb[0].mxu0
        %v3420 = vpop.f32.mrb[0].mxu0
        %v3421 = vadd.f32 0.0, %v3420
        %v3422 = vpop.f32.mrb[0].mxu0
        %3423 = vmatprep.mubr.bf16.mxu0 %v2000
        %3424 = vmatmul.mubr.bf16.gmra.mrb[0].mxu0 %v1999
        %v3425 = vpop.f32.mrb[0].mxu0
        %v3426 = vadd.f32 0.0, %v3425
        %v3427 = vpop.f32.mrb[0].mxu0
        %v3428 = vpop.f32.mrb[0].mxu0
        %v3429 = vadd.f32 0.0, %v3428
        %v3430 = vpop.f32.mrb[0].mxu0
        %3431 = vmatprep.mubr.bf16.mxu0 %v2002
        %3432 = vmatmul.mubr.bf16.gmra.mrb[0].mxu0 %v2001
        %v3433 = vpop.f32.mrb[0].mxu0
        %v3434 = vadd.f32 0.0, %v3433
        %v3435 = vpop.f32.mrb[0].mxu0
        %v3436 = vpop.f32.mrb[0].mxu0
        %v3437 = vadd.f32 0.0, %v3436
        %v3438 = vpop.f32.mrb[0].mxu0
        %3439 = vmatprep.mubr.bf16.mxu0 %v2004
        %3440 = vmatmul.mubr.bf16.gmra.mrb[0].mxu0 %v2003
        %v3441 = vpop.f32.mrb[0].mxu0
        %v3442 = vadd.f32 0.0, %v3441
        %v3443 = vpop.f32.mrb[0].mxu0
        %v3444 = vpop.f32.mrb[0].mxu0
        %v3445 = vadd.f32 0.0, %v3444
        %v3446 = vpop.f32.mrb[0].mxu0
        %3447 = vmatprep.mubr.bf16.mxu0 %v2006
        %3448 = vmatmul.mubr.bf16.gmra.mrb[0].mxu0 %v2005
        %v3449 = vpop.f32.mrb[0].mxu0
        %v3450 = vadd.f32 0.0, %v3449
        %v3451 = vpop.f32.mrb[0].mxu0
        %v3452 = vpop.f32.mrb[0].mxu0
        %v3453 = vadd.f32 0.0, %v3452
        %v3454 = vpop.f32.mrb[0].mxu0
        %3455 = vmatprep.mubr.bf16.mxu0 %v2008
        %3456 = vmatmul.mubr.bf16.gmra.mrb[0].mxu0 %v2007
        %v3457 = vpop.f32.mrb[0].mxu0
        %v3458 = vadd.f32 0.0, %v3457
        %v3459 = vpop.f32.mrb[0].mxu0
        %v3460 = vpop.f32.mrb[0].mxu0
        %v3461 = vadd.f32 0.0, %v3460
        %v3462 = vpop.f32.mrb[0].mxu0
        %3463 = vmatprep.mubr.bf16.mxu0 %v2010
        %3464 = vmatmul.mubr.bf16.gmra.mrb[0].mxu0 %v2009
        %v3465 = vpop.f32.mrb[0].mxu0
        %v3466 = vadd.f32 0.0, %v3465
        %v3467 = vpop.f32.mrb[0].mxu0
        %v3468 = vpop.f32.mrb[0].mxu0
        %v3469 = vadd.f32 0.0, %v3468
        %v3470 = vpop.f32.mrb[0].mxu0
        %3471 = vmatprep.mubr.bf16.mxu0 %v2012
        %3472 = vmatmul.mubr.bf16.gmra.mrb[0].mxu0 %v2011
        %v3473 = vpop.f32.mrb[0].mxu0
        %v3474 = vadd.f32 0.0, %v3473
        %v3475 = vpop.f32.mrb[0].mxu0
        %v3476 = vpop.f32.mrb[0].mxu0
        %v3477 = vadd.f32 0.0, %v3476
        %v3478 = vpop.f32.mrb[0].mxu0
        %3479 = vmatprep.mubr.bf16.mxu0 %v2014
        %3480 = vmatmul.mubr.bf16.gmra.mrb[0].mxu0 %v2013
        %v3481 = vpop.f32.mrb[0].mxu0
        %v3482 = vadd.f32 0.0, %v3481
        %v3483 = vpop.f32.mrb[0].mxu0
        %v3484 = vpop.f32.mrb[0].mxu0
        %v3485 = vadd.f32 0.0, %v3484
        %v3486 = vpop.f32.mrb[0].mxu0
        %3487 = vmatprep.mubr.bf16.mxu0 %v2016
        %3488 = vmatmul.mubr.bf16.gmra.mrb[0].mxu0 %v2015
        %v3489 = vpop.f32.mrb[0].mxu0
        %v3490 = vadd.f32 0.0, %v3489
        %v3491 = vpop.f32.mrb[0].mxu0
        %v3492 = vpop.f32.mrb[0].mxu0
        %v3493 = vadd.f32 0.0, %v3492
        %v3494 = vpop.f32.mrb[0].mxu0
        %3495 = vmatprep.mubr.bf16.mxu0 %v2018
        %3496 = vmatmul.mubr.bf16.gmra.mrb[0].mxu0 %v2017
        %v3497 = vpop.f32.mrb[0].mxu0
        %v3498 = vadd.f32 0.0, %v3497
        %v3499 = vpop.f32.mrb[0].mxu0
        %v3500 = vpop.f32.mrb[0].mxu0
        %v3501 = vadd.f32 0.0, %v3500
        %v3502 = vpop.f32.mrb[0].mxu0
        %3503 = vmatprep.mubr.bf16.mxu0 %v2020
        %3504 = vmatmul.mubr.bf16.gmra.mrb[0].mxu0 %v2019
        %v3505 = vpop.f32.mrb[0].mxu0
        %v3506 = vadd.f32 0.0, %v3505
        %v3507 = vpop.f32.mrb[0].mxu0
        %v3508 = vpop.f32.mrb[0].mxu0
        %v3509 = vadd.f32 0.0, %v3508
        %v3510 = vpop.f32.mrb[0].mxu0
        %3511 = vmatprep.mubr.bf16.mxu0 %v2022
        %3512 = vmatmul.mubr.bf16.gmra.mrb[0].mxu0 %v2021
        %v3513 = vpop.f32.mrb[0].mxu0
        %v3514 = vadd.f32 0.0, %v3513
        %v3515 = vpop.f32.mrb[0].mxu0
        %v3516 = vpop.f32.mrb[0].mxu0
        %v3517 = vadd.f32 0.0, %v3516
        %v3518 = vpop.f32.mrb[0].mxu0
        %3519 = vmatprep.mubr.bf16.mxu0 %v2024
        %3520 = vmatmul.mubr.bf16.gmra.mrb[0].mxu0 %v2023
        %v3521 = vpop.f32.mrb[0].mxu0
        %v3522 = vadd.f32 0.0, %v3521
        %v3523 = vpop.f32.mrb[0].mxu0
        %v3524 = vpop.f32.mrb[0].mxu0
        %v3525 = vadd.f32 0.0, %v3524
        %v3526 = vpop.f32.mrb[0].mxu0
        %3527 = vmatprep.mubr.bf16.mxu0 %v2026
        %3528 = vmatmul.mubr.bf16.gmra.mrb[0].mxu0 %v2025
        %v3529 = vpop.f32.mrb[0].mxu0
        %v3530 = vadd.f32 0.0, %v3529
        %v3531 = vpop.f32.mrb[0].mxu0
        %v3532 = vpop.f32.mrb[0].mxu0
        %v3533 = vadd.f32 0.0, %v3532
        %v3534 = vpop.f32.mrb[0].mxu0
        %3535 = vmatprep.mubr.bf16.mxu0 %v2028
        %3536 = vmatmul.mubr.bf16.gmra.mrb[0].mxu0 %v2027
        %v3537 = vpop.f32.mrb[0].mxu0
        %v3538 = vadd.f32 0.0, %v3537
        %v3539 = vpop.f32.mrb[0].mxu0
        %v3540 = vpop.f32.mrb[0].mxu0
        %v3541 = vadd.f32 0.0, %v3540
        %v3542 = vpop.f32.mrb[0].mxu0
        %3543 = vmatprep.mubr.bf16.mxu0 %v2030
        %3544 = vmatmul.mubr.bf16.gmra.mrb[0].mxu0 %v2029
        %v3545 = vpop.f32.mrb[0].mxu0
        %v3546 = vadd.f32 0.0, %v3545
        %v3547 = vpop.f32.mrb[0].mxu0
        %v3548 = vpop.f32.mrb[0].mxu0
        %v3549 = vadd.f32 0.0, %v3548
        %v3550 = vpop.f32.mrb[0].mxu0
        %3551 = vmatprep.mubr.bf16.mxu0 %v2032
        %3552 = vmatmul.mubr.bf16.gmra.mrb[0].mxu0 %v2031
        %v3553 = vpop.f32.mrb[0].mxu0
        %v3554 = vadd.f32 0.0, %v3553
        %v3555 = vpop.f32.mrb[0].mxu0
        %v3556 = vpop.f32.mrb[0].mxu0
        %v3557 = vadd.f32 0.0, %v3556
        %v3558 = vpop.f32.mrb[0].mxu0
        %3559 = vmatprep.mubr.bf16.mxu0 %v2034
        %3560 = vmatmul.mubr.bf16.gmra.mrb[0].mxu0 %v2033
        %v3561 = vpop.f32.mrb[0].mxu0
        %v3562 = vadd.f32 0.0, %v3561
        %v3563 = vpop.f32.mrb[0].mxu0
        %v3564 = vpop.f32.mrb[0].mxu0
        %v3565 = vadd.f32 0.0, %v3564
        %v3566 = vpop.f32.mrb[0].mxu0
        %3567 = vmatprep.mubr.bf16.mxu0 %v2036
        %3568 = vmatmul.mubr.bf16.gmra.mrb[0].mxu0 %v2035
        %v3569 = vpop.f32.mrb[0].mxu0
        %v3570 = vadd.f32 0.0, %v3569
        %v3571 = vpop.f32.mrb[0].mxu0
        %v3572 = vpop.f32.mrb[0].mxu0
        %v3573 = vadd.f32 0.0, %v3572
        %v3574 = vpop.f32.mrb[0].mxu0
        %3575 = vmatprep.mubr.bf16.mxu0 %v2038
        %3576 = vmatmul.mubr.bf16.gmra.mrb[0].mxu0 %v2037
        %v3577 = vpop.f32.mrb[0].mxu0
        %v3578 = vadd.f32 0.0, %v3577
        %v3579 = vpop.f32.mrb[0].mxu0
        %v3580 = vpop.f32.mrb[0].mxu0
        %v3581 = vadd.f32 0.0, %v3580
        %v3582 = vpop.f32.mrb[0].mxu0
        %3583 = vmatprep.mubr.bf16.mxu0 %v2040
        %3584 = vmatmul.mubr.bf16.gmra.mrb[0].mxu0 %v2039
        %v3585 = vpop.f32.mrb[0].mxu0
        %v3586 = vadd.f32 0.0, %v3585
        %v3587 = vpop.f32.mrb[0].mxu0
        %v3588 = vpop.f32.mrb[0].mxu0
        %v3589 = vadd.f32 0.0, %v3588
        %v3590 = vpop.f32.mrb[0].mxu0
        %3591 = vmatprep.mubr.bf16.mxu0 %v2042
        %3592 = vmatmul.mubr.bf16.gmra.mrb[0].mxu0 %v2041
        %v3593 = vpop.f32.mrb[0].mxu0
        %v3594 = vadd.f32 0.0, %v3593
        %v3595 = vpop.f32.mrb[0].mxu0
        %v3596 = vpop.f32.mrb[0].mxu0
        %v3597 = vadd.f32 0.0, %v3596
        %v3598 = vpop.f32.mrb[0].mxu0
        %3599 = vmatprep.mubr.bf16.mxu0 %v2044
        %3600 = vmatmul.mubr.bf16.gmra.mrb[0].mxu0 %v2043
        %v3601 = vpop.f32.mrb[0].mxu0
        %v3602 = vadd.f32 0.0, %v3601
        %v3603 = vpop.f32.mrb[0].mxu0
        %v3604 = vpop.f32.mrb[0].mxu0
        %v3605 = vadd.f32 0.0, %v3604
        %v3606 = vpop.f32.mrb[0].mxu0
        %3607 = vmatprep.mubr.bf16.mxu0 %v2046
        %3608 = vmatmul.mubr.bf16.gmra.mrb[0].mxu0 %v2045
        %v3609 = vpop.f32.mrb[0].mxu0
        %v3610 = vadd.f32 0.0, %v3609
        %v3611 = vpop.f32.mrb[0].mxu0
        %v3612 = vpop.f32.mrb[0].mxu0
        %v3613 = vadd.f32 0.0, %v3612
        %v3614 = vpop.f32.mrb[0].mxu0
        %3615 = vdwg.mxu0
        %v3616 = vpack.c.bf16 %v2469, %v2466
        %v3617 = vpack.c.bf16 %v2477, %v2474
        %v3618 = vpack.c.bf16 %v2485, %v2482
        %v3619 = vpack.c.bf16 %v2493, %v2490
        %v3620 = vpack.c.bf16 %v2501, %v2498
        %v3621 = vpack.c.bf16 %v2509, %v2506
        %v3622 = vpack.c.bf16 %v2517, %v2514
        %v3623 = vpack.c.bf16 %v2525, %v2522
        %v3624 = vpack.c.bf16 %v2533, %v2530
        %v3625 = vpack.c.bf16 %v2541, %v2538
        %v3626 = vpack.c.bf16 %v2549, %v2546
        %v3627 = vpack.c.bf16 %v2557, %v2554
        %v3628 = vpack.c.bf16 %v2565, %v2562
        %v3629 = vpack.c.bf16 %v2573, %v2570
        %v3630 = vpack.c.bf16 %v2581, %v2578
        %v3631 = vpack.c.bf16 %v2589, %v2586
        %v3632 = vpack.c.bf16 %v2597, %v2594
        %v3633 = vpack.c.bf16 %v2605, %v2602
        %v3634 = vpack.c.bf16 %v2613, %v2610
        %v3635 = vpack.c.bf16 %v2621, %v2618
        %v3636 = vpack.c.bf16 %v2629, %v2626
        %v3637 = vpack.c.bf16 %v2637, %v2634
        %v3638 = vpack.c.bf16 %v2645, %v2642
        %v3639 = vpack.c.bf16 %v2653, %v2650
        %v3640 = vpack.c.bf16 %v2661, %v2658
        %v3641 = vpack.c.bf16 %v2669, %v2666
        %v3642 = vpack.c.bf16 %v2677, %v2674
        %v3643 = vpack.c.bf16 %v2685, %v2682
        %v3644 = vpack.c.bf16 %v2693, %v2690
        %v3645 = vpack.c.bf16 %v2701, %v2698
        %v3646 = vpack.c.bf16 %v2709, %v2706
        %v3647 = vpack.c.bf16 %v2717, %v2714
        %v3648 = vpack.c.bf16 %v2725, %v2722
        %v3649 = vpack.c.bf16 %v2733, %v2730
        %v3650 = vpack.c.bf16 %v2741, %v2738
        %v3651 = vpack.c.bf16 %v2749, %v2746
        %v3652 = vpack.c.bf16 %v2757, %v2754
        %v3653 = vpack.c.bf16 %v2765, %v2762
        %v3654 = vpack.c.bf16 %v2773, %v2770
        %v3655 = vpack.c.bf16 %v2781, %v2778
        %v3656 = vpack.c.bf16 %v2789, %v2786
        %v3657 = vpack.c.bf16 %v2797, %v2794
        %v3658 = vpack.c.bf16 %v2805, %v2802
        %v3659 = vpack.c.bf16 %v2813, %v2810
        %v3660 = vpack.c.bf16 %v2821, %v2818
        %v3661 = vpack.c.bf16 %v2829, %v2826
        %v3662 = vpack.c.bf16 %v2837, %v2834
        %v3663 = vpack.c.bf16 %v2845, %v2842
        %v3664 = vpack.c.bf16 %v2853, %v2850
        %v3665 = vpack.c.bf16 %v2861, %v2858
        %v3666 = vpack.c.bf16 %v2869, %v2866
        %v3667 = vpack.c.bf16 %v2877, %v2874
        %v3668 = vpack.c.bf16 %v2885, %v2882
        %v3669 = vpack.c.bf16 %v2893, %v2890
        %v3670 = vpack.c.bf16 %v2901, %v2898
        %v3671 = vpack.c.bf16 %v2909, %v2906
        %v3672 = vpack.c.bf16 %v2917, %v2914
        %v3673 = vpack.c.bf16 %v2925, %v2922
        %v3674 = vpack.c.bf16 %v2933, %v2930
        %v3675 = vpack.c.bf16 %v2941, %v2938
        %v3676 = vpack.c.bf16 %v2949, %v2946
        %v3677 = vpack.c.bf16 %v2957, %v2954
        %v3678 = vpack.c.bf16 %v2965, %v2962
        %v3679 = vpack.c.bf16 %v2973, %v2970
        %v3680 = vpack.c.bf16 %v2981, %v2978
        %v3681 = vpack.c.bf16 %v2989, %v2986
        %v3682 = vpack.c.bf16 %v2997, %v2994
        %v3683 = vpack.c.bf16 %v3005, %v3002
        %v3684 = vpack.c.bf16 %v3013, %v3010
        %v3685 = vpack.c.bf16 %v3021, %v3018
        %v3686 = vpack.c.bf16 %v3029, %v3026
        %v3687 = vpack.c.bf16 %v3037, %v3034
        %v3688 = vpack.c.bf16 %v3045, %v3042
        %v3689 = vpack.c.bf16 %v3053, %v3050
        %v3690 = vpack.c.bf16 %v3061, %v3058
        %v3691 = vpack.c.bf16 %v3069, %v3066
        %v3692 = vpack.c.bf16 %v3077, %v3074
        %v3693 = vpack.c.bf16 %v3085, %v3082
        %v3694 = vpack.c.bf16 %v3093, %v3090
        %v3695 = vpack.c.bf16 %v3101, %v3098
        %v3696 = vpack.c.bf16 %v3109, %v3106
        %v3697 = vpack.c.bf16 %v3117, %v3114
        %v3698 = vpack.c.bf16 %v3125, %v3122
        %v3699 = vpack.c.bf16 %v3133, %v3130
        %v3700 = vpack.c.bf16 %v3141, %v3138
        %v3701 = vpack.c.bf16 %v3149, %v3146
        %v3702 = vpack.c.bf16 %v3157, %v3154
        %v3703 = vpack.c.bf16 %v3165, %v3162
        %v3704 = vpack.c.bf16 %v3173, %v3170
        %v3705 = vpack.c.bf16 %v3181, %v3178
        %v3706 = vpack.c.bf16 %v3189, %v3186
        %v3707 = vpack.c.bf16 %v3197, %v3194
        %v3708 = vpack.c.bf16 %v3205, %v3202
        %v3709 = vpack.c.bf16 %v3213, %v3210
        %v3710 = vpack.c.bf16 %v3221, %v3218
        %v3711 = vpack.c.bf16 %v3229, %v3226
        %v3712 = vpack.c.bf16 %v3237, %v3234
        %v3713 = vpack.c.bf16 %v3245, %v3242
        %v3714 = vpack.c.bf16 %v3253, %v3250
        %v3715 = vpack.c.bf16 %v3261, %v3258
        %v3716 = vpack.c.bf16 %v3269, %v3266
        %v3717 = vpack.c.bf16 %v3277, %v3274
        %v3718 = vpack.c.bf16 %v3285, %v3282
        %v3719 = vpack.c.bf16 %v3293, %v3290
        %v3720 = vpack.c.bf16 %v3301, %v3298
        %v3721 = vpack.c.bf16 %v3309, %v3306
        %v3722 = vpack.c.bf16 %v3317, %v3314
        %v3723 = vpack.c.bf16 %v3325, %v3322
        %v3724 = vpack.c.bf16 %v3333, %v3330
        %v3725 = vpack.c.bf16 %v3341, %v3338
        %v3726 = vpack.c.bf16 %v3349, %v3346
        %v3727 = vpack.c.bf16 %v3357, %v3354
        %v3728 = vpack.c.bf16 %v3365, %v3362
        %v3729 = vpack.c.bf16 %v3373, %v3370
        %v3730 = vpack.c.bf16 %v3381, %v3378
        %v3731 = vpack.c.bf16 %v3389, %v3386
        %v3732 = vpack.c.bf16 %v3397, %v3394
        %v3733 = vpack.c.bf16 %v3405, %v3402
        %v3734 = vpack.c.bf16 %v3413, %v3410
        %v3735 = vpack.c.bf16 %v3421, %v3418
        %v3736 = vpack.c.bf16 %v3429, %v3426
        %v3737 = vpack.c.bf16 %v3437, %v3434
        %v3738 = vpack.c.bf16 %v3445, %v3442
        %v3739 = vpack.c.bf16 %v3453, %v3450
        %v3740 = vpack.c.bf16 %v3461, %v3458
        %v3741 = vpack.c.bf16 %v3469, %v3466
        %v3742 = vpack.c.bf16 %v3477, %v3474
        %v3743 = vpack.c.bf16 %v3485, %v3482
        %v3744 = vpack.c.bf16 %v3493, %v3490
        %v3745 = vpack.c.bf16 %v3501, %v3498
        %v3746 = vpack.c.bf16 %v3509, %v3506
        %v3747 = vpack.c.bf16 %v3517, %v3514
        %v3748 = vpack.c.bf16 %v3525, %v3522
        %v3749 = vpack.c.bf16 %v3533, %v3530
        %v3750 = vpack.c.bf16 %v3541, %v3538
        %v3751 = vpack.c.bf16 %v3549, %v3546
        %v3752 = vpack.c.bf16 %v3557, %v3554
        %v3753 = vpack.c.bf16 %v3565, %v3562
        %v3754 = vpack.c.bf16 %v3573, %v3570
        %v3755 = vpack.c.bf16 %v3581, %v3578
        %v3756 = vpack.c.bf16 %v3589, %v3586
        %v3757 = vpack.c.bf16 %v3597, %v3594
        %v3758 = vpack.c.bf16 %v3605, %v3602
        %v3759 = vpack.c.bf16 %v3613, %v3610
        %v3760 = vld [vmem:[%s2] sm:$0xf]
        %s3761 = scalar_lea.vmem %s2, 4
        %v3762 = vld [vmem:[%s3761] sm:$0xf]
        %vm3763 = vcmask 64512
        %v3765 = vsel %vm3763, %v3632, 0
        %v3768 = vsel %vm3763, %v3633, 0
        %v3771 = vsel %vm3763, %v3634, 0
        %v3774 = vsel %vm3763, %v3635, 0
        %v3777 = vsel %vm3763, %v3636, 0
        %v3780 = vsel %vm3763, %v3637, 0
        %v3783 = vsel %vm3763, %v3638, 0
        %v3786 = vsel %vm3763, %v3639, 0
        %v3789 = vsel %vm3763, %v3640, 0
        %v3792 = vsel %vm3763, %v3641, 0
        %v3795 = vsel %vm3763, %v3642, 0
        %v3798 = vsel %vm3763, %v3643, 0
        %v3801 = vsel %vm3763, %v3644, 0
        %v3804 = vsel %vm3763, %v3645, 0
        %v3807 = vsel %vm3763, %v3646, 0
        %v3810 = vsel %vm3763, %v3647, 0
        %vm3812 = vcmask 1043456
        %v3814 = vsel %vm3812, %v3762, 0
        %3816 = vmatprep.subr.bf16.mxu0 0
        %3817 = vmatpush1.bf16.msra.mxu0 %v3814
        %3818 = vmatprep.subr.bf16.mxu0 0
        %3819 = vmatpush1.bf16.msra.mxu0 0
        %3820 = vmatprep.subr.bf16.mxu0 0
        %3821 = vmatpush1.bf16.msra.mxu0 0
        %3822 = vmatprep.subr.bf16.mxu0 0
        %3823 = vmatpush1.bf16.msra.mxu0 0
        %3824 = vmatprep.subr.bf16.mxu0 0
        %3825 = vmatpush1.bf16.msra.mxu0 0
        %3826 = vmatprep.subr.bf16.mxu0 0
        %3827 = vmatpush1.bf16.msra.mxu0 0
        %3828 = vmatprep.subr.bf16.mxu0 0
        %3829 = vmatpush1.bf16.msra.mxu0 0
        %3830 = vmatprep.subr.bf16.mxu0 0
        %3831 = vmatpush1.bf16.msra.mxu0 0
        %3832 = vmatprep.subr.bf16.mxu0 0
        %3833 = vmatpush1.bf16.msra.mxu0 0
        %3834 = vmatprep.subr.bf16.mxu0 0
        %3835 = vmatpush1.bf16.msra.mxu0 0
        %3836 = vmatprep.subr.bf16.mxu0 0
        %3837 = vmatpush1.bf16.msra.mxu0 0
        %3838 = vmatprep.subr.bf16.mxu0 0
        %3839 = vmatpush1.bf16.msra.mxu0 0
        %3840 = vmatprep.subr.bf16.mxu0 0
        %3841 = vmatpush1.bf16.msra.mxu0 0
        %3842 = vmatprep.subr.bf16.mxu0 0
        %3843 = vmatpush1.bf16.msra.mxu0 0
        %3844 = vmatprep.subr.bf16.mxu0 0
        %3845 = vmatpush1.bf16.msra.mxu0 0
        %3846 = vmatprep.subr.bf16.mxu0 0
        %3847 = vmatpush1.bf16.msra.mxu0 0
        %3848 = vmatprep.mubr.bf16.mxu0 0
        %3849 = vmatmul.mubr.bf16.gmra.mrb[0].mxu0 %v3765
        %v3850 = vpop.f32.mrb[0].mxu0
        %v3851 = vadd.f32 0.0, %v3850
        %v3852 = vpop.f32.mrb[0].mxu0
        %v3853 = vpop.f32.mrb[0].mxu0
        %v3854 = vadd.f32 0.0, %v3853
        %v3855 = vpop.f32.mrb[0].mxu0
        %3856 = vmatprep.mubr.bf16.mxu0 0
        %3857 = vmatmul.mubr.bf16.gmra.mrb[0].mxu0 %v3768
        %v3858 = vpop.f32.mrb[0].mxu0
        %v3859 = vadd.f32 0.0, %v3858
        %v3860 = vpop.f32.mrb[0].mxu0
        %v3861 = vpop.f32.mrb[0].mxu0
        %v3862 = vadd.f32 0.0, %v3861
        %v3863 = vpop.f32.mrb[0].mxu0
        %3864 = vmatprep.mubr.bf16.mxu0 0
        %3865 = vmatmul.mubr.bf16.gmra.mrb[0].mxu0 %v3771
        %v3866 = vpop.f32.mrb[0].mxu0
        %v3867 = vadd.f32 0.0, %v3866
        %v3868 = vpop.f32.mrb[0].mxu0
        %v3869 = vpop.f32.mrb[0].mxu0
        %v3870 = vadd.f32 0.0, %v3869
        %v3871 = vpop.f32.mrb[0].mxu0
        %3872 = vmatprep.mubr.bf16.mxu0 0
        %3873 = vmatmul.mubr.bf16.gmra.mrb[0].mxu0 %v3774
        %v3874 = vpop.f32.mrb[0].mxu0
        %v3875 = vadd.f32 0.0, %v3874
        %v3876 = vpop.f32.mrb[0].mxu0
        %v3877 = vpop.f32.mrb[0].mxu0
        %v3878 = vadd.f32 0.0, %v3877
        %v3879 = vpop.f32.mrb[0].mxu0
        %3880 = vmatprep.mubr.bf16.mxu0 0
        %3881 = vmatmul.mubr.bf16.gmra.mrb[0].mxu0 %v3777
        %v3882 = vpop.f32.mrb[0].mxu0
        %v3883 = vadd.f32 0.0, %v3882
        %v3884 = vpop.f32.mrb[0].mxu0
        %v3885 = vpop.f32.mrb[0].mxu0
        %v3886 = vadd.f32 0.0, %v3885
        %v3887 = vpop.f32.mrb[0].mxu0
        %3888 = vmatprep.mubr.bf16.mxu0 0
        %3889 = vmatmul.mubr.bf16.gmra.mrb[0].mxu0 %v3780
        %v3890 = vpop.f32.mrb[0].mxu0
        %v3891 = vadd.f32 0.0, %v3890
        %v3892 = vpop.f32.mrb[0].mxu0
        %v3893 = vpop.f32.mrb[0].mxu0
        %v3894 = vadd.f32 0.0, %v3893
        %v3895 = vpop.f32.mrb[0].mxu0
        %3896 = vmatprep.mubr.bf16.mxu0 0
        %3897 = vmatmul.mubr.bf16.gmra.mrb[0].mxu0 %v3783
        %v3898 = vpop.f32.mrb[0].mxu0
        %v3899 = vadd.f32 0.0, %v3898
        %v3900 = vpop.f32.mrb[0].mxu0
        %v3901 = vpop.f32.mrb[0].mxu0
        %v3902 = vadd.f32 0.0, %v3901
        %v3903 = vpop.f32.mrb[0].mxu0
        %3904 = vmatprep.mubr.bf16.mxu0 0
        %3905 = vmatmul.mubr.bf16.gmra.mrb[0].mxu0 %v3786
        %v3906 = vpop.f32.mrb[0].mxu0
        %v3907 = vadd.f32 0.0, %v3906
        %v3908 = vpop.f32.mrb[0].mxu0
        %v3909 = vpop.f32.mrb[0].mxu0
        %v3910 = vadd.f32 0.0, %v3909
        %v3911 = vpop.f32.mrb[0].mxu0
        %3912 = vmatprep.mubr.bf16.mxu0 0
        %3913 = vmatmul.mubr.bf16.gmra.mrb[0].mxu0 %v3789
        %v3914 = vpop.f32.mrb[0].mxu0
        %v3915 = vadd.f32 0.0, %v3914
        %v3916 = vpop.f32.mrb[0].mxu0
        %v3917 = vpop.f32.mrb[0].mxu0
        %v3918 = vadd.f32 0.0, %v3917
        %v3919 = vpop.f32.mrb[0].mxu0
        %3920 = vmatprep.mubr.bf16.mxu0 0
        %3921 = vmatmul.mubr.bf16.gmra.mrb[0].mxu0 %v3792
        %v3922 = vpop.f32.mrb[0].mxu0
        %v3923 = vadd.f32 0.0, %v3922
        %v3924 = vpop.f32.mrb[0].mxu0
        %v3925 = vpop.f32.mrb[0].mxu0
        %v3926 = vadd.f32 0.0, %v3925
        %v3927 = vpop.f32.mrb[0].mxu0
        %3928 = vmatprep.mubr.bf16.mxu0 0
        %3929 = vmatmul.mubr.bf16.gmra.mrb[0].mxu0 %v3795
        %v3930 = vpop.f32.mrb[0].mxu0
        %v3931 = vadd.f32 0.0, %v3930
        %v3932 = vpop.f32.mrb[0].mxu0
        %v3933 = vpop.f32.mrb[0].mxu0
        %v3934 = vadd.f32 0.0, %v3933
        %v3935 = vpop.f32.mrb[0].mxu0
        %3936 = vmatprep.mubr.bf16.mxu0 0
        %3937 = vmatmul.mubr.bf16.gmra.mrb[0].mxu0 %v3798
        %v3938 = vpop.f32.mrb[0].mxu0
        %v3939 = vadd.f32 0.0, %v3938
        %v3940 = vpop.f32.mrb[0].mxu0
        %v3941 = vpop.f32.mrb[0].mxu0
        %v3942 = vadd.f32 0.0, %v3941
        %v3943 = vpop.f32.mrb[0].mxu0
        %3944 = vmatprep.mubr.bf16.mxu0 0
        %3945 = vmatmul.mubr.bf16.gmra.mrb[0].mxu0 %v3801
        %v3946 = vpop.f32.mrb[0].mxu0
        %v3947 = vadd.f32 0.0, %v3946
        %v3948 = vpop.f32.mrb[0].mxu0
        %v3949 = vpop.f32.mrb[0].mxu0
        %v3950 = vadd.f32 0.0, %v3949
        %v3951 = vpop.f32.mrb[0].mxu0
        %3952 = vmatprep.mubr.bf16.mxu0 0
        %3953 = vmatmul.mubr.bf16.gmra.mrb[0].mxu0 %v3804
        %v3954 = vpop.f32.mrb[0].mxu0
        %v3955 = vadd.f32 0.0, %v3954
        %v3956 = vpop.f32.mrb[0].mxu0
        %v3957 = vpop.f32.mrb[0].mxu0
        %v3958 = vadd.f32 0.0, %v3957
        %v3959 = vpop.f32.mrb[0].mxu0
        %3960 = vmatprep.mubr.bf16.mxu0 0
        %3961 = vmatmul.mubr.bf16.gmra.mrb[0].mxu0 %v3807
        %v3962 = vpop.f32.mrb[0].mxu0
        %v3963 = vadd.f32 0.0, %v3962
        %v3964 = vpop.f32.mrb[0].mxu0
        %v3965 = vpop.f32.mrb[0].mxu0
        %v3966 = vadd.f32 0.0, %v3965
        %v3967 = vpop.f32.mrb[0].mxu0
        %3968 = vmatprep.mubr.bf16.mxu0 0
        %3969 = vmatmul.mubr.bf16.gmra.mrb[0].mxu0 %v3810
        %v3970 = vpop.f32.mrb[0].mxu0
        %v3971 = vadd.f32 0.0, %v3970
        %v3972 = vpop.f32.mrb[0].mxu0
        %v3973 = vpop.f32.mrb[0].mxu0
        %v3974 = vadd.f32 0.0, %v3973
        %v3975 = vpop.f32.mrb[0].mxu0
        %3976 = vdwg.mxu0
        %v3978 = vsel %vm3763, %v3616, 0
        %v3981 = vsel %vm3763, %v3617, 0
        %v3984 = vsel %vm3763, %v3618, 0
        %v3987 = vsel %vm3763, %v3619, 0
        %v3990 = vsel %vm3763, %v3620, 0
        %v3993 = vsel %vm3763, %v3621, 0
        %v3996 = vsel %vm3763, %v3622, 0
        %v3999 = vsel %vm3763, %v3623, 0
        %v4002 = vsel %vm3763, %v3624, 0
        %v4005 = vsel %vm3763, %v3625, 0
        %v4008 = vsel %vm3763, %v3626, 0
        %v4011 = vsel %vm3763, %v3627, 0
        %v4014 = vsel %vm3763, %v3628, 0
        %v4017 = vsel %vm3763, %v3629, 0
        %v4020 = vsel %vm3763, %v3630, 0
        %v4023 = vsel %vm3763, %v3631, 0
        %v4026 = vsel %vm3812, %v3760, 0
        %4028 = vmatprep.subr.bf16.mxu0 0
        %4029 = vmatpush1.bf16.msra.mxu0 %v4026
        %4030 = vmatprep.subr.bf16.mxu0 0
        %4031 = vmatpush1.bf16.msra.mxu0 0
        %4032 = vmatprep.subr.bf16.mxu0 0
        %4033 = vmatpush1.bf16.msra.mxu0 0
        %4034 = vmatprep.subr.bf16.mxu0 0
        %4035 = vmatpush1.bf16.msra.mxu0 0
        %4036 = vmatprep.subr.bf16.mxu0 0
        %4037 = vmatpush1.bf16.msra.mxu0 0
        %4038 = vmatprep.subr.bf16.mxu0 0
        %4039 = vmatpush1.bf16.msra.mxu0 0
        %4040 = vmatprep.subr.bf16.mxu0 0
        %4041 = vmatpush1.bf16.msra.mxu0 0
        %4042 = vmatprep.subr.bf16.mxu0 0
        %4043 = vmatpush1.bf16.msra.mxu0 0
        %4044 = vmatprep.subr.bf16.mxu0 0
        %4045 = vmatpush1.bf16.msra.mxu0 0
        %4046 = vmatprep.subr.bf16.mxu0 0
        %4047 = vmatpush1.bf16.msra.mxu0 0
        %4048 = vmatprep.subr.bf16.mxu0 0
        %4049 = vmatpush1.bf16.msra.mxu0 0
        %4050 = vmatprep.subr.bf16.mxu0 0
        %4051 = vmatpush1.bf16.msra.mxu0 0
        %4052 = vmatprep.subr.bf16.mxu0 0
        %4053 = vmatpush1.bf16.msra.mxu0 0
        %4054 = vmatprep.subr.bf16.mxu0 0
        %4055 = vmatpush1.bf16.msra.mxu0 0
        %4056 = vmatprep.subr.bf16.mxu0 0
        %4057 = vmatpush1.bf16.msra.mxu0 0
        %4058 = vmatprep.subr.bf16.mxu0 0
        %4059 = vmatpush1.bf16.msra.mxu0 0
        %4060 = vmatprep.mubr.bf16.mxu0 0
        %4061 = vmatmul.mubr.bf16.gmra.mrb[0].mxu0 %v3978
        %v4062 = vpop.f32.mrb[0].mxu0
        %v4063 = vadd.f32 %v3851, %v4062
        %v4064 = vpop.f32.mrb[0].mxu0
        %v4065 = vpop.f32.mrb[0].mxu0
        %v4066 = vadd.f32 %v3854, %v4065
        %v4067 = vpop.f32.mrb[0].mxu0
        %4068 = vmatprep.mubr.bf16.mxu0 0
        %4069 = vmatmul.mubr.bf16.gmra.mrb[0].mxu0 %v3981
        %v4070 = vpop.f32.mrb[0].mxu0
        %v4071 = vadd.f32 %v3859, %v4070
        %v4072 = vpop.f32.mrb[0].mxu0
        %v4073 = vpop.f32.mrb[0].mxu0
        %v4074 = vadd.f32 %v3862, %v4073
        %v4075 = vpop.f32.mrb[0].mxu0
        %4076 = vmatprep.mubr.bf16.mxu0 0
        %4077 = vmatmul.mubr.bf16.gmra.mrb[0].mxu0 %v3984
        %v4078 = vpop.f32.mrb[0].mxu0
        %v4079 = vadd.f32 %v3867, %v4078
        %v4080 = vpop.f32.mrb[0].mxu0
        %v4081 = vpop.f32.mrb[0].mxu0
        %v4082 = vadd.f32 %v3870, %v4081
        %v4083 = vpop.f32.mrb[0].mxu0
        %4084 = vmatprep.mubr.bf16.mxu0 0
        %4085 = vmatmul.mubr.bf16.gmra.mrb[0].mxu0 %v3987
        %v4086 = vpop.f32.mrb[0].mxu0
        %v4087 = vadd.f32 %v3875, %v4086
        %v4088 = vpop.f32.mrb[0].mxu0
        %v4089 = vpop.f32.mrb[0].mxu0
        %v4090 = vadd.f32 %v3878, %v4089
        %v4091 = vpop.f32.mrb[0].mxu0
        %4092 = vmatprep.mubr.bf16.mxu0 0
        %4093 = vmatmul.mubr.bf16.gmra.mrb[0].mxu0 %v3990
        %v4094 = vpop.f32.mrb[0].mxu0
        %v4095 = vadd.f32 %v3883, %v4094
        %v4096 = vpop.f32.mrb[0].mxu0
        %v4097 = vpop.f32.mrb[0].mxu0
        %v4098 = vadd.f32 %v3886, %v4097
        %v4099 = vpop.f32.mrb[0].mxu0
        %4100 = vmatprep.mubr.bf16.mxu0 0
        %4101 = vmatmul.mubr.bf16.gmra.mrb[0].mxu0 %v3993
        %v4102 = vpop.f32.mrb[0].mxu0
        %v4103 = vadd.f32 %v3891, %v4102
        %v4104 = vpop.f32.mrb[0].mxu0
        %v4105 = vpop.f32.mrb[0].mxu0
        %v4106 = vadd.f32 %v3894, %v4105
        %v4107 = vpop.f32.mrb[0].mxu0
        %4108 = vmatprep.mubr.bf16.mxu0 0
        %4109 = vmatmul.mubr.bf16.gmra.mrb[0].mxu0 %v3996
        %v4110 = vpop.f32.mrb[0].mxu0
        %v4111 = vadd.f32 %v3899, %v4110
        %v4112 = vpop.f32.mrb[0].mxu0
        %v4113 = vpop.f32.mrb[0].mxu0
        %v4114 = vadd.f32 %v3902, %v4113
        %v4115 = vpop.f32.mrb[0].mxu0
        %4116 = vmatprep.mubr.bf16.mxu0 0
        %4117 = vmatmul.mubr.bf16.gmra.mrb[0].mxu0 %v3999
        %v4118 = vpop.f32.mrb[0].mxu0
        %v4119 = vadd.f32 %v3907, %v4118
        %v4120 = vpop.f32.mrb[0].mxu0
        %v4121 = vpop.f32.mrb[0].mxu0
        %v4122 = vadd.f32 %v3910, %v4121
        %v4123 = vpop.f32.mrb[0].mxu0
        %4124 = vmatprep.mubr.bf16.mxu0 0
        %4125 = vmatmul.mubr.bf16.gmra.mrb[0].mxu0 %v4002
        %v4126 = vpop.f32.mrb[0].mxu0
        %v4127 = vadd.f32 %v3915, %v4126
        %v4128 = vpop.f32.mrb[0].mxu0
        %v4129 = vpop.f32.mrb[0].mxu0
        %v4130 = vadd.f32 %v3918, %v4129
        %v4131 = vpop.f32.mrb[0].mxu0
        %4132 = vmatprep.mubr.bf16.mxu0 0
        %4133 = vmatmul.mubr.bf16.gmra.mrb[0].mxu0 %v4005
        %v4134 = vpop.f32.mrb[0].mxu0
        %v4135 = vadd.f32 %v3923, %v4134
        %v4136 = vpop.f32.mrb[0].mxu0
        %v4137 = vpop.f32.mrb[0].mxu0
        %v4138 = vadd.f32 %v3926, %v4137
        %v4139 = vpop.f32.mrb[0].mxu0
        %4140 = vmatprep.mubr.bf16.mxu0 0
        %4141 = vmatmul.mubr.bf16.gmra.mrb[0].mxu0 %v4008
        %v4142 = vpop.f32.mrb[0].mxu0
        %v4143 = vadd.f32 %v3931, %v4142
        %v4144 = vpop.f32.mrb[0].mxu0
        %v4145 = vpop.f32.mrb[0].mxu0
        %v4146 = vadd.f32 %v3934, %v4145
        %v4147 = vpop.f32.mrb[0].mxu0
        %4148 = vmatprep.mubr.bf16.mxu0 0
        %4149 = vmatmul.mubr.bf16.gmra.mrb[0].mxu0 %v4011
        %v4150 = vpop.f32.mrb[0].mxu0
        %v4151 = vadd.f32 %v3939, %v4150
        %v4152 = vpop.f32.mrb[0].mxu0
        %v4153 = vpop.f32.mrb[0].mxu0
        %v4154 = vadd.f32 %v3942, %v4153
        %v4155 = vpop.f32.mrb[0].mxu0
        %4156 = vmatprep.mubr.bf16.mxu0 0
        %4157 = vmatmul.mubr.bf16.gmra.mrb[0].mxu0 %v4014
        %v4158 = vpop.f32.mrb[0].mxu0
        %v4159 = vadd.f32 %v3947, %v4158
        %v4160 = vpop.f32.mrb[0].mxu0
        %v4161 = vpop.f32.mrb[0].mxu0
        %v4162 = vadd.f32 %v3950, %v4161
        %v4163 = vpop.f32.mrb[0].mxu0
        %4164 = vmatprep.mubr.bf16.mxu0 0
        %4165 = vmatmul.mubr.bf16.gmra.mrb[0].mxu0 %v4017
        %v4166 = vpop.f32.mrb[0].mxu0
        %v4167 = vadd.f32 %v3955, %v4166
        %v4168 = vpop.f32.mrb[0].mxu0
        %v4169 = vpop.f32.mrb[0].mxu0
        %v4170 = vadd.f32 %v3958, %v4169
        %v4171 = vpop.f32.mrb[0].mxu0
        %4172 = vmatprep.mubr.bf16.mxu0 0
        %4173 = vmatmul.mubr.bf16.gmra.mrb[0].mxu0 %v4020
        %v4174 = vpop.f32.mrb[0].mxu0
        %v4175 = vadd.f32 %v3963, %v4174
        %v4176 = vpop.f32.mrb[0].mxu0
        %v4177 = vpop.f32.mrb[0].mxu0
        %v4178 = vadd.f32 %v3966, %v4177
        %v4179 = vpop.f32.mrb[0].mxu0
        %4180 = vmatprep.mubr.bf16.mxu0 0
        %4181 = vmatmul.mubr.bf16.gmra.mrb[0].mxu0 %v4023
        %v4182 = vpop.f32.mrb[0].mxu0
        %v4183 = vadd.f32 %v3971, %v4182
        %v4184 = vpop.f32.mrb[0].mxu0
        %v4185 = vpop.f32.mrb[0].mxu0
        %v4186 = vadd.f32 %v3974, %v4185
        %v4187 = vpop.f32.mrb[0].mxu0
        %4188 = vdwg.mxu0
        %s4189 = scalar_lea.vmem %s2, 8
        %v4190 = vld [vmem:[%s4189] sm:$0xf]
        %v4192 = vsel %vm3763, %v3648, 0
        %v4195 = vsel %vm3763, %v3649, 0
        %v4198 = vsel %vm3763, %v3650, 0
        %v4201 = vsel %vm3763, %v3651, 0
        %v4204 = vsel %vm3763, %v3652, 0
        %v4207 = vsel %vm3763, %v3653, 0
        %v4210 = vsel %vm3763, %v3654, 0
        %v4213 = vsel %vm3763, %v3655, 0
        %v4216 = vsel %vm3763, %v3656, 0
        %v4219 = vsel %vm3763, %v3657, 0
        %v4222 = vsel %vm3763, %v3658, 0
        %v4225 = vsel %vm3763, %v3659, 0
        %v4228 = vsel %vm3763, %v3660, 0
        %v4231 = vsel %vm3763, %v3661, 0
        %v4234 = vsel %vm3763, %v3662, 0
        %v4237 = vsel %vm3763, %v3663, 0
        %v4240 = vsel %vm3812, %v4190, 0
        %4242 = vmatprep.subr.bf16.mxu0 0
        %4243 = vmatpush1.bf16.msra.mxu0 %v4240
        %4244 = vmatprep.subr.bf16.mxu0 0
        %4245 = vmatpush1.bf16.msra.mxu0 0
        %4246 = vmatprep.subr.bf16.mxu0 0
        %4247 = vmatpush1.bf16.msra.mxu0 0
        %4248 = vmatprep.subr.bf16.mxu0 0
        %4249 = vmatpush1.bf16.msra.mxu0 0
        %4250 = vmatprep.subr.bf16.mxu0 0
        %4251 = vmatpush1.bf16.msra.mxu0 0
        %4252 = vmatprep.subr.bf16.mxu0 0
        %4253 = vmatpush1.bf16.msra.mxu0 0
        %4254 = vmatprep.subr.bf16.mxu0 0
        %4255 = vmatpush1.bf16.msra.mxu0 0
        %4256 = vmatprep.subr.bf16.mxu0 0
        %4257 = vmatpush1.bf16.msra.mxu0 0
        %4258 = vmatprep.subr.bf16.mxu0 0
        %4259 = vmatpush1.bf16.msra.mxu0 0
        %4260 = vmatprep.subr.bf16.mxu0 0
        %4261 = vmatpush1.bf16.msra.mxu0 0
        %4262 = vmatprep.subr.bf16.mxu0 0
        %4263 = vmatpush1.bf16.msra.mxu0 0
        %4264 = vmatprep.subr.bf16.mxu0 0
        %4265 = vmatpush1.bf16.msra.mxu0 0
        %4266 = vmatprep.subr.bf16.mxu0 0
        %4267 = vmatpush1.bf16.msra.mxu0 0
        %4268 = vmatprep.subr.bf16.mxu0 0
        %4269 = vmatpush1.bf16.msra.mxu0 0
        %4270 = vmatprep.subr.bf16.mxu0 0
        %4271 = vmatpush1.bf16.msra.mxu0 0
        %4272 = vmatprep.subr.bf16.mxu0 0
        %4273 = vmatpush1.bf16.msra.mxu0 0
        %4274 = vmatprep.mubr.bf16.mxu0 0
        %4275 = vmatmul.mubr.bf16.gmra.mrb[0].mxu0 %v4192
        %v4276 = vpop.f32.mrb[0].mxu0
        %v4277 = vadd.f32 0.0, %v4276
        %v4278 = vpop.f32.mrb[0].mxu0
        %v4279 = vpop.f32.mrb[0].mxu0
        %v4280 = vadd.f32 0.0, %v4279
        %v4281 = vpop.f32.mrb[0].mxu0
        %4282 = vmatprep.mubr.bf16.mxu0 0
        %4283 = vmatmul.mubr.bf16.gmra.mrb[0].mxu0 %v4195
        %v4284 = vpop.f32.mrb[0].mxu0
        %v4285 = vadd.f32 0.0, %v4284
        %v4286 = vpop.f32.mrb[0].mxu0
        %v4287 = vpop.f32.mrb[0].mxu0
        %v4288 = vadd.f32 0.0, %v4287
        %v4289 = vpop.f32.mrb[0].mxu0
        %4290 = vmatprep.mubr.bf16.mxu0 0
        %4291 = vmatmul.mubr.bf16.gmra.mrb[0].mxu0 %v4198
        %v4292 = vpop.f32.mrb[0].mxu0
        %v4293 = vadd.f32 0.0, %v4292
        %v4294 = vpop.f32.mrb[0].mxu0
        %v4295 = vpop.f32.mrb[0].mxu0
        %v4296 = vadd.f32 0.0, %v4295
        %v4297 = vpop.f32.mrb[0].mxu0
        %4298 = vmatprep.mubr.bf16.mxu0 0
        %4299 = vmatmul.mubr.bf16.gmra.mrb[0].mxu0 %v4201
        %v4300 = vpop.f32.mrb[0].mxu0
        %v4301 = vadd.f32 0.0, %v4300
        %v4302 = vpop.f32.mrb[0].mxu0
        %v4303 = vpop.f32.mrb[0].mxu0
        %v4304 = vadd.f32 0.0, %v4303
        %v4305 = vpop.f32.mrb[0].mxu0
        %4306 = vmatprep.mubr.bf16.mxu0 0
        %4307 = vmatmul.mubr.bf16.gmra.mrb[0].mxu0 %v4204
        %v4308 = vpop.f32.mrb[0].mxu0
        %v4309 = vadd.f32 0.0, %v4308
        %v4310 = vpop.f32.mrb[0].mxu0
        %v4311 = vpop.f32.mrb[0].mxu0
        %v4312 = vadd.f32 0.0, %v4311
        %v4313 = vpop.f32.mrb[0].mxu0
        %4314 = vmatprep.mubr.bf16.mxu0 0
        %4315 = vmatmul.mubr.bf16.gmra.mrb[0].mxu0 %v4207
        %v4316 = vpop.f32.mrb[0].mxu0
        %v4317 = vadd.f32 0.0, %v4316
        %v4318 = vpop.f32.mrb[0].mxu0
        %v4319 = vpop.f32.mrb[0].mxu0
        %v4320 = vadd.f32 0.0, %v4319
        %v4321 = vpop.f32.mrb[0].mxu0
        %4322 = vmatprep.mubr.bf16.mxu0 0
        %4323 = vmatmul.mubr.bf16.gmra.mrb[0].mxu0 %v4210
        %v4324 = vpop.f32.mrb[0].mxu0
        %v4325 = vadd.f32 0.0, %v4324
        %v4326 = vpop.f32.mrb[0].mxu0
        %v4327 = vpop.f32.mrb[0].mxu0
        %v4328 = vadd.f32 0.0, %v4327
        %v4329 = vpop.f32.mrb[0].mxu0
        %4330 = vmatprep.mubr.bf16.mxu0 0
        %4331 = vmatmul.mubr.bf16.gmra.mrb[0].mxu0 %v4213
        %v4332 = vpop.f32.mrb[0].mxu0
        %v4333 = vadd.f32 0.0, %v4332
        %v4334 = vpop.f32.mrb[0].mxu0
        %v4335 = vpop.f32.mrb[0].mxu0
        %v4336 = vadd.f32 0.0, %v4335
        %v4337 = vpop.f32.mrb[0].mxu0
        %4338 = vmatprep.mubr.bf16.mxu0 0
        %4339 = vmatmul.mubr.bf16.gmra.mrb[0].mxu0 %v4216
        %v4340 = vpop.f32.mrb[0].mxu0
        %v4341 = vadd.f32 0.0, %v4340
        %v4342 = vpop.f32.mrb[0].mxu0
        %v4343 = vpop.f32.mrb[0].mxu0
        %v4344 = vadd.f32 0.0, %v4343
        %v4345 = vpop.f32.mrb[0].mxu0
        %4346 = vmatprep.mubr.bf16.mxu0 0
        %4347 = vmatmul.mubr.bf16.gmra.mrb[0].mxu0 %v4219
        %v4348 = vpop.f32.mrb[0].mxu0
        %v4349 = vadd.f32 0.0, %v4348
        %v4350 = vpop.f32.mrb[0].mxu0
        %v4351 = vpop.f32.mrb[0].mxu0
        %v4352 = vadd.f32 0.0, %v4351
        %v4353 = vpop.f32.mrb[0].mxu0
        %4354 = vmatprep.mubr.bf16.mxu0 0
        %4355 = vmatmul.mubr.bf16.gmra.mrb[0].mxu0 %v4222
        %v4356 = vpop.f32.mrb[0].mxu0
        %v4357 = vadd.f32 0.0, %v4356
        %v4358 = vpop.f32.mrb[0].mxu0
        %v4359 = vpop.f32.mrb[0].mxu0
        %v4360 = vadd.f32 0.0, %v4359
        %v4361 = vpop.f32.mrb[0].mxu0
        %4362 = vmatprep.mubr.bf16.mxu0 0
        %4363 = vmatmul.mubr.bf16.gmra.mrb[0].mxu0 %v4225
        %v4364 = vpop.f32.mrb[0].mxu0
        %v4365 = vadd.f32 0.0, %v4364
        %v4366 = vpop.f32.mrb[0].mxu0
        %v4367 = vpop.f32.mrb[0].mxu0
        %v4368 = vadd.f32 0.0, %v4367
        %v4369 = vpop.f32.mrb[0].mxu0
        %4370 = vmatprep.mubr.bf16.mxu0 0
        %4371 = vmatmul.mubr.bf16.gmra.mrb[0].mxu0 %v4228
        %v4372 = vpop.f32.mrb[0].mxu0
        %v4373 = vadd.f32 0.0, %v4372
        %v4374 = vpop.f32.mrb[0].mxu0
        %v4375 = vpop.f32.mrb[0].mxu0
        %v4376 = vadd.f32 0.0, %v4375
        %v4377 = vpop.f32.mrb[0].mxu0
        %4378 = vmatprep.mubr.bf16.mxu0 0
        %4379 = vmatmul.mubr.bf16.gmra.mrb[0].mxu0 %v4231
        %v4380 = vpop.f32.mrb[0].mxu0
        %v4381 = vadd.f32 0.0, %v4380
        %v4382 = vpop.f32.mrb[0].mxu0
        %v4383 = vpop.f32.mrb[0].mxu0
        %v4384 = vadd.f32 0.0, %v4383
        %v4385 = vpop.f32.mrb[0].mxu0
        %4386 = vmatprep.mubr.bf16.mxu0 0
        %4387 = vmatmul.mubr.bf16.gmra.mrb[0].mxu0 %v4234
        %v4388 = vpop.f32.mrb[0].mxu0
        %v4389 = vadd.f32 0.0, %v4388
        %v4390 = vpop.f32.mrb[0].mxu0
        %v4391 = vpop.f32.mrb[0].mxu0
        %v4392 = vadd.f32 0.0, %v4391
        %v4393 = vpop.f32.mrb[0].mxu0
        %4394 = vmatprep.mubr.bf16.mxu0 0
        %4395 = vmatmul.mubr.bf16.gmra.mrb[0].mxu0 %v4237
        %v4396 = vpop.f32.mrb[0].mxu0
        %v4397 = vadd.f32 0.0, %v4396
        %v4398 = vpop.f32.mrb[0].mxu0
        %v4399 = vpop.f32.mrb[0].mxu0
        %v4400 = vadd.f32 0.0, %v4399
        %v4401 = vpop.f32.mrb[0].mxu0
        %4402 = vdwg.mxu0
        %v4403 = vadd.f32 %v4063, %v4277
        %v4404 = vadd.f32 %v4066, %v4280
        %v4405 = vadd.f32 %v4071, %v4285
        %v4406 = vadd.f32 %v4074, %v4288
        %v4407 = vadd.f32 %v4079, %v4293
        %v4408 = vadd.f32 %v4082, %v4296
        %v4409 = vadd.f32 %v4087, %v4301
        %v4410 = vadd.f32 %v4090, %v4304
        %v4411 = vadd.f32 %v4095, %v4309
        %v4412 = vadd.f32 %v4098, %v4312
        %v4413 = vadd.f32 %v4103, %v4317
        %v4414 = vadd.f32 %v4106, %v4320
        %v4415 = vadd.f32 %v4111, %v4325
        %v4416 = vadd.f32 %v4114, %v4328
        %v4417 = vadd.f32 %v4119, %v4333
        %v4418 = vadd.f32 %v4122, %v4336
        %v4419 = vadd.f32 %v4127, %v4341
        %v4420 = vadd.f32 %v4130, %v4344
        %v4421 = vadd.f32 %v4135, %v4349
        %v4422 = vadd.f32 %v4138, %v4352
        %v4423 = vadd.f32 %v4143, %v4357
        %v4424 = vadd.f32 %v4146, %v4360
        %v4425 = vadd.f32 %v4151, %v4365
        %v4426 = vadd.f32 %v4154, %v4368
        %v4427 = vadd.f32 %v4159, %v4373
        %v4428 = vadd.f32 %v4162, %v4376
        %v4429 = vadd.f32 %v4167, %v4381
        %v4430 = vadd.f32 %v4170, %v4384
        %v4431 = vadd.f32 %v4175, %v4389
        %v4432 = vadd.f32 %v4178, %v4392
        %v4433 = vadd.f32 %v4183, %v4397
        %v4434 = vadd.f32 %v4186, %v4400
        %s4435 = scalar_lea.vmem %s2, 12
        %v4436 = vld [vmem:[%s4435] sm:$0xf]
        %v4438 = vsel %vm3763, %v3664, 0
        %v4441 = vsel %vm3763, %v3665, 0
        %v4444 = vsel %vm3763, %v3666, 0
        %v4447 = vsel %vm3763, %v3667, 0
        %v4450 = vsel %vm3763, %v3668, 0
        %v4453 = vsel %vm3763, %v3669, 0
        %v4456 = vsel %vm3763, %v3670, 0
        %v4459 = vsel %vm3763, %v3671, 0
        %v4462 = vsel %vm3763, %v3672, 0
        %v4465 = vsel %vm3763, %v3673, 0
        %v4468 = vsel %vm3763, %v3674, 0
        %v4471 = vsel %vm3763, %v3675, 0
        %v4474 = vsel %vm3763, %v3676, 0
        %v4477 = vsel %vm3763, %v3677, 0
        %v4480 = vsel %vm3763, %v3678, 0
        %v4483 = vsel %vm3763, %v3679, 0
        %v4486 = vsel %vm3812, %v4436, 0
        %4488 = vmatprep.subr.bf16.mxu0 0
        %4489 = vmatpush1.bf16.msra.mxu0 %v4486
        %4490 = vmatprep.subr.bf16.mxu0 0
        %4491 = vmatpush1.bf16.msra.mxu0 0
        %4492 = vmatprep.subr.bf16.mxu0 0
        %4493 = vmatpush1.bf16.msra.mxu0 0
        %4494 = vmatprep.subr.bf16.mxu0 0
        %4495 = vmatpush1.bf16.msra.mxu0 0
        %4496 = vmatprep.subr.bf16.mxu0 0
        %4497 = vmatpush1.bf16.msra.mxu0 0
        %4498 = vmatprep.subr.bf16.mxu0 0
        %4499 = vmatpush1.bf16.msra.mxu0 0
        %4500 = vmatprep.subr.bf16.mxu0 0
        %4501 = vmatpush1.bf16.msra.mxu0 0
        %4502 = vmatprep.subr.bf16.mxu0 0
        %4503 = vmatpush1.bf16.msra.mxu0 0
        %4504 = vmatprep.subr.bf16.mxu0 0
        %4505 = vmatpush1.bf16.msra.mxu0 0
        %4506 = vmatprep.subr.bf16.mxu0 0
        %4507 = vmatpush1.bf16.msra.mxu0 0
        %4508 = vmatprep.subr.bf16.mxu0 0
        %4509 = vmatpush1.bf16.msra.mxu0 0
        %4510 = vmatprep.subr.bf16.mxu0 0
        %4511 = vmatpush1.bf16.msra.mxu0 0
        %4512 = vmatprep.subr.bf16.mxu0 0
        %4513 = vmatpush1.bf16.msra.mxu0 0
        %4514 = vmatprep.subr.bf16.mxu0 0
        %4515 = vmatpush1.bf16.msra.mxu0 0
        %4516 = vmatprep.subr.bf16.mxu0 0
        %4517 = vmatpush1.bf16.msra.mxu0 0
        %4518 = vmatprep.subr.bf16.mxu0 0
        %4519 = vmatpush1.bf16.msra.mxu0 0
        %4520 = vmatprep.mubr.bf16.mxu0 0
        %4521 = vmatmul.mubr.bf16.gmra.mrb[0].mxu0 %v4438
        %v4522 = vpop.f32.mrb[0].mxu0
        %v4523 = vadd.f32 0.0, %v4522
        %v4524 = vpop.f32.mrb[0].mxu0
        %v4525 = vpop.f32.mrb[0].mxu0
        %v4526 = vadd.f32 0.0, %v4525
        %v4527 = vpop.f32.mrb[0].mxu0
        %4528 = vmatprep.mubr.bf16.mxu0 0
        %4529 = vmatmul.mubr.bf16.gmra.mrb[0].mxu0 %v4441
        %v4530 = vpop.f32.mrb[0].mxu0
        %v4531 = vadd.f32 0.0, %v4530
        %v4532 = vpop.f32.mrb[0].mxu0
        %v4533 = vpop.f32.mrb[0].mxu0
        %v4534 = vadd.f32 0.0, %v4533
        %v4535 = vpop.f32.mrb[0].mxu0
        %4536 = vmatprep.mubr.bf16.mxu0 0
        %4537 = vmatmul.mubr.bf16.gmra.mrb[0].mxu0 %v4444
        %v4538 = vpop.f32.mrb[0].mxu0
        %v4539 = vadd.f32 0.0, %v4538
        %v4540 = vpop.f32.mrb[0].mxu0
        %v4541 = vpop.f32.mrb[0].mxu0
        %v4542 = vadd.f32 0.0, %v4541
        %v4543 = vpop.f32.mrb[0].mxu0
        %4544 = vmatprep.mubr.bf16.mxu0 0
        %4545 = vmatmul.mubr.bf16.gmra.mrb[0].mxu0 %v4447
        %v4546 = vpop.f32.mrb[0].mxu0
        %v4547 = vadd.f32 0.0, %v4546
        %v4548 = vpop.f32.mrb[0].mxu0
        %v4549 = vpop.f32.mrb[0].mxu0
        %v4550 = vadd.f32 0.0, %v4549
        %v4551 = vpop.f32.mrb[0].mxu0
        %4552 = vmatprep.mubr.bf16.mxu0 0
        %4553 = vmatmul.mubr.bf16.gmra.mrb[0].mxu0 %v4450
        %v4554 = vpop.f32.mrb[0].mxu0
        %v4555 = vadd.f32 0.0, %v4554
        %v4556 = vpop.f32.mrb[0].mxu0
        %v4557 = vpop.f32.mrb[0].mxu0
        %v4558 = vadd.f32 0.0, %v4557
        %v4559 = vpop.f32.mrb[0].mxu0
        %4560 = vmatprep.mubr.bf16.mxu0 0
        %4561 = vmatmul.mubr.bf16.gmra.mrb[0].mxu0 %v4453
        %v4562 = vpop.f32.mrb[0].mxu0
        %v4563 = vadd.f32 0.0, %v4562
        %v4564 = vpop.f32.mrb[0].mxu0
        %v4565 = vpop.f32.mrb[0].mxu0
        %v4566 = vadd.f32 0.0, %v4565
        %v4567 = vpop.f32.mrb[0].mxu0
        %4568 = vmatprep.mubr.bf16.mxu0 0
        %4569 = vmatmul.mubr.bf16.gmra.mrb[0].mxu0 %v4456
        %v4570 = vpop.f32.mrb[0].mxu0
        %v4571 = vadd.f32 0.0, %v4570
        %v4572 = vpop.f32.mrb[0].mxu0
        %v4573 = vpop.f32.mrb[0].mxu0
        %v4574 = vadd.f32 0.0, %v4573
        %v4575 = vpop.f32.mrb[0].mxu0
        %4576 = vmatprep.mubr.bf16.mxu0 0
        %4577 = vmatmul.mubr.bf16.gmra.mrb[0].mxu0 %v4459
        %v4578 = vpop.f32.mrb[0].mxu0
        %v4579 = vadd.f32 0.0, %v4578
        %v4580 = vpop.f32.mrb[0].mxu0
        %v4581 = vpop.f32.mrb[0].mxu0
        %v4582 = vadd.f32 0.0, %v4581
        %v4583 = vpop.f32.mrb[0].mxu0
        %4584 = vmatprep.mubr.bf16.mxu0 0
        %4585 = vmatmul.mubr.bf16.gmra.mrb[0].mxu0 %v4462
        %v4586 = vpop.f32.mrb[0].mxu0
        %v4587 = vadd.f32 0.0, %v4586
        %v4588 = vpop.f32.mrb[0].mxu0
        %v4589 = vpop.f32.mrb[0].mxu0
        %v4590 = vadd.f32 0.0, %v4589
        %v4591 = vpop.f32.mrb[0].mxu0
        %4592 = vmatprep.mubr.bf16.mxu0 0
        %4593 = vmatmul.mubr.bf16.gmra.mrb[0].mxu0 %v4465
        %v4594 = vpop.f32.mrb[0].mxu0
        %v4595 = vadd.f32 0.0, %v4594
        %v4596 = vpop.f32.mrb[0].mxu0
        %v4597 = vpop.f32.mrb[0].mxu0
        %v4598 = vadd.f32 0.0, %v4597
        %v4599 = vpop.f32.mrb[0].mxu0
        %4600 = vmatprep.mubr.bf16.mxu0 0
        %4601 = vmatmul.mubr.bf16.gmra.mrb[0].mxu0 %v4468
        %v4602 = vpop.f32.mrb[0].mxu0
        %v4603 = vadd.f32 0.0, %v4602
        %v4604 = vpop.f32.mrb[0].mxu0
        %v4605 = vpop.f32.mrb[0].mxu0
        %v4606 = vadd.f32 0.0, %v4605
        %v4607 = vpop.f32.mrb[0].mxu0
        %4608 = vmatprep.mubr.bf16.mxu0 0
        %4609 = vmatmul.mubr.bf16.gmra.mrb[0].mxu0 %v4471
        %v4610 = vpop.f32.mrb[0].mxu0
        %v4611 = vadd.f32 0.0, %v4610
        %v4612 = vpop.f32.mrb[0].mxu0
        %v4613 = vpop.f32.mrb[0].mxu0
        %v4614 = vadd.f32 0.0, %v4613
        %v4615 = vpop.f32.mrb[0].mxu0
        %4616 = vmatprep.mubr.bf16.mxu0 0
        %4617 = vmatmul.mubr.bf16.gmra.mrb[0].mxu0 %v4474
        %v4618 = vpop.f32.mrb[0].mxu0
        %v4619 = vadd.f32 0.0, %v4618
        %v4620 = vpop.f32.mrb[0].mxu0
        %v4621 = vpop.f32.mrb[0].mxu0
        %v4622 = vadd.f32 0.0, %v4621
        %v4623 = vpop.f32.mrb[0].mxu0
        %4624 = vmatprep.mubr.bf16.mxu0 0
        %4625 = vmatmul.mubr.bf16.gmra.mrb[0].mxu0 %v4477
        %v4626 = vpop.f32.mrb[0].mxu0
        %v4627 = vadd.f32 0.0, %v4626
        %v4628 = vpop.f32.mrb[0].mxu0
        %v4629 = vpop.f32.mrb[0].mxu0
        %v4630 = vadd.f32 0.0, %v4629
        %v4631 = vpop.f32.mrb[0].mxu0
        %4632 = vmatprep.mubr.bf16.mxu0 0
        %4633 = vmatmul.mubr.bf16.gmra.mrb[0].mxu0 %v4480
        %v4634 = vpop.f32.mrb[0].mxu0
        %v4635 = vadd.f32 0.0, %v4634
        %v4636 = vpop.f32.mrb[0].mxu0
        %v4637 = vpop.f32.mrb[0].mxu0
        %v4638 = vadd.f32 0.0, %v4637
        %v4639 = vpop.f32.mrb[0].mxu0
        %4640 = vmatprep.mubr.bf16.mxu0 0
        %4641 = vmatmul.mubr.bf16.gmra.mrb[0].mxu0 %v4483
        %v4642 = vpop.f32.mrb[0].mxu0
        %v4643 = vadd.f32 0.0, %v4642
        %v4644 = vpop.f32.mrb[0].mxu0
        %v4645 = vpop.f32.mrb[0].mxu0
        %v4646 = vadd.f32 0.0, %v4645
        %v4647 = vpop.f32.mrb[0].mxu0
        %4648 = vdwg.mxu0
        %v4649 = vadd.f32 %v4403, %v4523
        %v4650 = vadd.f32 %v4404, %v4526
        %v4651 = vadd.f32 %v4405, %v4531
        %v4652 = vadd.f32 %v4406, %v4534
        %v4653 = vadd.f32 %v4407, %v4539
        %v4654 = vadd.f32 %v4408, %v4542
        %v4655 = vadd.f32 %v4409, %v4547
        %v4656 = vadd.f32 %v4410, %v4550
        %v4657 = vadd.f32 %v4411, %v4555
        %v4658 = vadd.f32 %v4412, %v4558
        %v4659 = vadd.f32 %v4413, %v4563
        %v4660 = vadd.f32 %v4414, %v4566
        %v4661 = vadd.f32 %v4415, %v4571
        %v4662 = vadd.f32 %v4416, %v4574
        %v4663 = vadd.f32 %v4417, %v4579
        %v4664 = vadd.f32 %v4418, %v4582
        %v4665 = vadd.f32 %v4419, %v4587
        %v4666 = vadd.f32 %v4420, %v4590
        %v4667 = vadd.f32 %v4421, %v4595
        %v4668 = vadd.f32 %v4422, %v4598
        %v4669 = vadd.f32 %v4423, %v4603
        %v4670 = vadd.f32 %v4424, %v4606
        %v4671 = vadd.f32 %v4425, %v4611
        %v4672 = vadd.f32 %v4426, %v4614
        %v4673 = vadd.f32 %v4427, %v4619
        %v4674 = vadd.f32 %v4428, %v4622
        %v4675 = vadd.f32 %v4429, %v4627
        %v4676 = vadd.f32 %v4430, %v4630
        %v4677 = vadd.f32 %v4431, %v4635
        %v4678 = vadd.f32 %v4432, %v4638
        %v4679 = vadd.f32 %v4433, %v4643
        %v4680 = vadd.f32 %v4434, %v4646
        %s4681 = scalar_lea.vmem %s2, 16
        %v4682 = vld [vmem:[%s4681] sm:$0xf]
        %v4684 = vsel %vm3763, %v3680, 0
        %v4687 = vsel %vm3763, %v3681, 0
        %v4690 = vsel %vm3763, %v3682, 0
        %v4693 = vsel %vm3763, %v3683, 0
        %v4696 = vsel %vm3763, %v3684, 0
        %v4699 = vsel %vm3763, %v3685, 0
        %v4702 = vsel %vm3763, %v3686, 0
        %v4705 = vsel %vm3763, %v3687, 0
        %v4708 = vsel %vm3763, %v3688, 0
        %v4711 = vsel %vm3763, %v3689, 0
        %v4714 = vsel %vm3763, %v3690, 0
        %v4717 = vsel %vm3763, %v3691, 0
        %v4720 = vsel %vm3763, %v3692, 0
        %v4723 = vsel %vm3763, %v3693, 0
        %v4726 = vsel %vm3763, %v3694, 0
        %v4729 = vsel %vm3763, %v3695, 0
        %v4732 = vsel %vm3812, %v4682, 0
        %4734 = vmatprep.subr.bf16.mxu0 0
        %4735 = vmatpush1.bf16.msra.mxu0 %v4732
        %4736 = vmatprep.subr.bf16.mxu0 0
        %4737 = vmatpush1.bf16.msra.mxu0 0
        %4738 = vmatprep.subr.bf16.mxu0 0
        %4739 = vmatpush1.bf16.msra.mxu0 0
        %4740 = vmatprep.subr.bf16.mxu0 0
        %4741 = vmatpush1.bf16.msra.mxu0 0
        %4742 = vmatprep.subr.bf16.mxu0 0
        %4743 = vmatpush1.bf16.msra.mxu0 0
        %4744 = vmatprep.subr.bf16.mxu0 0
        %4745 = vmatpush1.bf16.msra.mxu0 0
        %4746 = vmatprep.subr.bf16.mxu0 0
        %4747 = vmatpush1.bf16.msra.mxu0 0
        %4748 = vmatprep.subr.bf16.mxu0 0
        %4749 = vmatpush1.bf16.msra.mxu0 0
        %4750 = vmatprep.subr.bf16.mxu0 0
        %4751 = vmatpush1.bf16.msra.mxu0 0
        %4752 = vmatprep.subr.bf16.mxu0 0
        %4753 = vmatpush1.bf16.msra.mxu0 0
        %4754 = vmatprep.subr.bf16.mxu0 0
        %4755 = vmatpush1.bf16.msra.mxu0 0
        %4756 = vmatprep.subr.bf16.mxu0 0
        %4757 = vmatpush1.bf16.msra.mxu0 0
        %4758 = vmatprep.subr.bf16.mxu0 0
        %4759 = vmatpush1.bf16.msra.mxu0 0
        %4760 = vmatprep.subr.bf16.mxu0 0
        %4761 = vmatpush1.bf16.msra.mxu0 0
        %4762 = vmatprep.subr.bf16.mxu0 0
        %4763 = vmatpush1.bf16.msra.mxu0 0
        %4764 = vmatprep.subr.bf16.mxu0 0
        %4765 = vmatpush1.bf16.msra.mxu0 0
        %4766 = vmatprep.mubr.bf16.mxu0 0
        %4767 = vmatmul.mubr.bf16.gmra.mrb[0].mxu0 %v4684
        %v4768 = vpop.f32.mrb[0].mxu0
        %v4769 = vadd.f32 0.0, %v4768
        %v4770 = vpop.f32.mrb[0].mxu0
        %v4771 = vpop.f32.mrb[0].mxu0
        %v4772 = vadd.f32 0.0, %v4771
        %v4773 = vpop.f32.mrb[0].mxu0
        %4774 = vmatprep.mubr.bf16.mxu0 0
        %4775 = vmatmul.mubr.bf16.gmra.mrb[0].mxu0 %v4687
        %v4776 = vpop.f32.mrb[0].mxu0
        %v4777 = vadd.f32 0.0, %v4776
        %v4778 = vpop.f32.mrb[0].mxu0
        %v4779 = vpop.f32.mrb[0].mxu0
        %v4780 = vadd.f32 0.0, %v4779
        %v4781 = vpop.f32.mrb[0].mxu0
        %4782 = vmatprep.mubr.bf16.mxu0 0
        %4783 = vmatmul.mubr.bf16.gmra.mrb[0].mxu0 %v4690
        %v4784 = vpop.f32.mrb[0].mxu0
        %v4785 = vadd.f32 0.0, %v4784
        %v4786 = vpop.f32.mrb[0].mxu0
        %v4787 = vpop.f32.mrb[0].mxu0
        %v4788 = vadd.f32 0.0, %v4787
        %v4789 = vpop.f32.mrb[0].mxu0
        %4790 = vmatprep.mubr.bf16.mxu0 0
        %4791 = vmatmul.mubr.bf16.gmra.mrb[0].mxu0 %v4693
        %v4792 = vpop.f32.mrb[0].mxu0
        %v4793 = vadd.f32 0.0, %v4792
        %v4794 = vpop.f32.mrb[0].mxu0
        %v4795 = vpop.f32.mrb[0].mxu0
        %v4796 = vadd.f32 0.0, %v4795
        %v4797 = vpop.f32.mrb[0].mxu0
        %4798 = vmatprep.mubr.bf16.mxu0 0
        %4799 = vmatmul.mubr.bf16.gmra.mrb[0].mxu0 %v4696
        %v4800 = vpop.f32.mrb[0].mxu0
        %v4801 = vadd.f32 0.0, %v4800
        %v4802 = vpop.f32.mrb[0].mxu0
        %v4803 = vpop.f32.mrb[0].mxu0
        %v4804 = vadd.f32 0.0, %v4803
        %v4805 = vpop.f32.mrb[0].mxu0
        %4806 = vmatprep.mubr.bf16.mxu0 0
        %4807 = vmatmul.mubr.bf16.gmra.mrb[0].mxu0 %v4699
        %v4808 = vpop.f32.mrb[0].mxu0
        %v4809 = vadd.f32 0.0, %v4808
        %v4810 = vpop.f32.mrb[0].mxu0
        %v4811 = vpop.f32.mrb[0].mxu0
        %v4812 = vadd.f32 0.0, %v4811
        %v4813 = vpop.f32.mrb[0].mxu0
        %4814 = vmatprep.mubr.bf16.mxu0 0
        %4815 = vmatmul.mubr.bf16.gmra.mrb[0].mxu0 %v4702
        %v4816 = vpop.f32.mrb[0].mxu0
        %v4817 = vadd.f32 0.0, %v4816
        %v4818 = vpop.f32.mrb[0].mxu0
        %v4819 = vpop.f32.mrb[0].mxu0
        %v4820 = vadd.f32 0.0, %v4819
        %v4821 = vpop.f32.mrb[0].mxu0
        %4822 = vmatprep.mubr.bf16.mxu0 0
        %4823 = vmatmul.mubr.bf16.gmra.mrb[0].mxu0 %v4705
        %v4824 = vpop.f32.mrb[0].mxu0
        %v4825 = vadd.f32 0.0, %v4824
        %v4826 = vpop.f32.mrb[0].mxu0
        %v4827 = vpop.f32.mrb[0].mxu0
        %v4828 = vadd.f32 0.0, %v4827
        %v4829 = vpop.f32.mrb[0].mxu0
        %4830 = vmatprep.mubr.bf16.mxu0 0
        %4831 = vmatmul.mubr.bf16.gmra.mrb[0].mxu0 %v4708
        %v4832 = vpop.f32.mrb[0].mxu0
        %v4833 = vadd.f32 0.0, %v4832
        %v4834 = vpop.f32.mrb[0].mxu0
        %v4835 = vpop.f32.mrb[0].mxu0
        %v4836 = vadd.f32 0.0, %v4835
        %v4837 = vpop.f32.mrb[0].mxu0
        %4838 = vmatprep.mubr.bf16.mxu0 0
        %4839 = vmatmul.mubr.bf16.gmra.mrb[0].mxu0 %v4711
        %v4840 = vpop.f32.mrb[0].mxu0
        %v4841 = vadd.f32 0.0, %v4840
        %v4842 = vpop.f32.mrb[0].mxu0
        %v4843 = vpop.f32.mrb[0].mxu0
        %v4844 = vadd.f32 0.0, %v4843
        %v4845 = vpop.f32.mrb[0].mxu0
        %4846 = vmatprep.mubr.bf16.mxu0 0
        %4847 = vmatmul.mubr.bf16.gmra.mrb[0].mxu0 %v4714
        %v4848 = vpop.f32.mrb[0].mxu0
        %v4849 = vadd.f32 0.0, %v4848
        %v4850 = vpop.f32.mrb[0].mxu0
        %v4851 = vpop.f32.mrb[0].mxu0
        %v4852 = vadd.f32 0.0, %v4851
        %v4853 = vpop.f32.mrb[0].mxu0
        %4854 = vmatprep.mubr.bf16.mxu0 0
        %4855 = vmatmul.mubr.bf16.gmra.mrb[0].mxu0 %v4717
        %v4856 = vpop.f32.mrb[0].mxu0
        %v4857 = vadd.f32 0.0, %v4856
        %v4858 = vpop.f32.mrb[0].mxu0
        %v4859 = vpop.f32.mrb[0].mxu0
        %v4860 = vadd.f32 0.0, %v4859
        %v4861 = vpop.f32.mrb[0].mxu0
        %4862 = vmatprep.mubr.bf16.mxu0 0
        %4863 = vmatmul.mubr.bf16.gmra.mrb[0].mxu0 %v4720
        %v4864 = vpop.f32.mrb[0].mxu0
        %v4865 = vadd.f32 0.0, %v4864
        %v4866 = vpop.f32.mrb[0].mxu0
        %v4867 = vpop.f32.mrb[0].mxu0
        %v4868 = vadd.f32 0.0, %v4867
        %v4869 = vpop.f32.mrb[0].mxu0
        %4870 = vmatprep.mubr.bf16.mxu0 0
        %4871 = vmatmul.mubr.bf16.gmra.mrb[0].mxu0 %v4723
        %v4872 = vpop.f32.mrb[0].mxu0
        %v4873 = vadd.f32 0.0, %v4872
        %v4874 = vpop.f32.mrb[0].mxu0
        %v4875 = vpop.f32.mrb[0].mxu0
        %v4876 = vadd.f32 0.0, %v4875
        %v4877 = vpop.f32.mrb[0].mxu0
        %4878 = vmatprep.mubr.bf16.mxu0 0
        %4879 = vmatmul.mubr.bf16.gmra.mrb[0].mxu0 %v4726
        %v4880 = vpop.f32.mrb[0].mxu0
        %v4881 = vadd.f32 0.0, %v4880
        %v4882 = vpop.f32.mrb[0].mxu0
        %v4883 = vpop.f32.mrb[0].mxu0
        %v4884 = vadd.f32 0.0, %v4883
        %v4885 = vpop.f32.mrb[0].mxu0
        %4886 = vmatprep.mubr.bf16.mxu0 0
        %4887 = vmatmul.mubr.bf16.gmra.mrb[0].mxu0 %v4729
        %v4888 = vpop.f32.mrb[0].mxu0
        %v4889 = vadd.f32 0.0, %v4888
        %v4890 = vpop.f32.mrb[0].mxu0
        %v4891 = vpop.f32.mrb[0].mxu0
        %v4892 = vadd.f32 0.0, %v4891
        %v4893 = vpop.f32.mrb[0].mxu0
        %4894 = vdwg.mxu0
        %v4895 = vadd.f32 %v4649, %v4769
        %v4896 = vadd.f32 %v4650, %v4772
        %v4897 = vadd.f32 %v4651, %v4777
        %v4898 = vadd.f32 %v4652, %v4780
        %v4899 = vadd.f32 %v4653, %v4785
        %v4900 = vadd.f32 %v4654, %v4788
        %v4901 = vadd.f32 %v4655, %v4793
        %v4902 = vadd.f32 %v4656, %v4796
        %v4903 = vadd.f32 %v4657, %v4801
        %v4904 = vadd.f32 %v4658, %v4804
        %v4905 = vadd.f32 %v4659, %v4809
        %v4906 = vadd.f32 %v4660, %v4812
        %v4907 = vadd.f32 %v4661, %v4817
        %v4908 = vadd.f32 %v4662, %v4820
        %v4909 = vadd.f32 %v4663, %v4825
        %v4910 = vadd.f32 %v4664, %v4828
        %v4911 = vadd.f32 %v4665, %v4833
        %v4912 = vadd.f32 %v4666, %v4836
        %v4913 = vadd.f32 %v4667, %v4841
        %v4914 = vadd.f32 %v4668, %v4844
        %v4915 = vadd.f32 %v4669, %v4849
        %v4916 = vadd.f32 %v4670, %v4852
        %v4917 = vadd.f32 %v4671, %v4857
        %v4918 = vadd.f32 %v4672, %v4860
        %v4919 = vadd.f32 %v4673, %v4865
        %v4920 = vadd.f32 %v4674, %v4868
        %v4921 = vadd.f32 %v4675, %v4873
        %v4922 = vadd.f32 %v4676, %v4876
        %v4923 = vadd.f32 %v4677, %v4881
        %v4924 = vadd.f32 %v4678, %v4884
        %v4925 = vadd.f32 %v4679, %v4889
        %v4926 = vadd.f32 %v4680, %v4892
        %s4927 = scalar_lea.vmem %s2, 20
        %v4928 = vld [vmem:[%s4927] sm:$0xf]
        %v4930 = vsel %vm3763, %v3696, 0
        %v4933 = vsel %vm3763, %v3697, 0
        %v4936 = vsel %vm3763, %v3698, 0
        %v4939 = vsel %vm3763, %v3699, 0
        %v4942 = vsel %vm3763, %v3700, 0
        %v4945 = vsel %vm3763, %v3701, 0
        %v4948 = vsel %vm3763, %v3702, 0
        %v4951 = vsel %vm3763, %v3703, 0
        %v4954 = vsel %vm3763, %v3704, 0
        %v4957 = vsel %vm3763, %v3705, 0
        %v4960 = vsel %vm3763, %v3706, 0
        %v4963 = vsel %vm3763, %v3707, 0
        %v4966 = vsel %vm3763, %v3708, 0
        %v4969 = vsel %vm3763, %v3709, 0
        %v4972 = vsel %vm3763, %v3710, 0
        %v4975 = vsel %vm3763, %v3711, 0
        %v4978 = vsel %vm3812, %v4928, 0
        %4980 = vmatprep.subr.bf16.mxu0 0
        %4981 = vmatpush1.bf16.msra.mxu0 %v4978
        %4982 = vmatprep.subr.bf16.mxu0 0
        %4983 = vmatpush1.bf16.msra.mxu0 0
        %4984 = vmatprep.subr.bf16.mxu0 0
        %4985 = vmatpush1.bf16.msra.mxu0 0
        %4986 = vmatprep.subr.bf16.mxu0 0
        %4987 = vmatpush1.bf16.msra.mxu0 0
        %4988 = vmatprep.subr.bf16.mxu0 0
        %4989 = vmatpush1.bf16.msra.mxu0 0
        %4990 = vmatprep.subr.bf16.mxu0 0
        %4991 = vmatpush1.bf16.msra.mxu0 0
        %4992 = vmatprep.subr.bf16.mxu0 0
        %4993 = vmatpush1.bf16.msra.mxu0 0
        %4994 = vmatprep.subr.bf16.mxu0 0
        %4995 = vmatpush1.bf16.msra.mxu0 0
        %4996 = vmatprep.subr.bf16.mxu0 0
        %4997 = vmatpush1.bf16.msra.mxu0 0
        %4998 = vmatprep.subr.bf16.mxu0 0
        %4999 = vmatpush1.bf16.msra.mxu0 0
        %5000 = vmatprep.subr.bf16.mxu0 0
        %5001 = vmatpush1.bf16.msra.mxu0 0
        %5002 = vmatprep.subr.bf16.mxu0 0
        %5003 = vmatpush1.bf16.msra.mxu0 0
        %5004 = vmatprep.subr.bf16.mxu0 0
        %5005 = vmatpush1.bf16.msra.mxu0 0
        %5006 = vmatprep.subr.bf16.mxu0 0
        %5007 = vmatpush1.bf16.msra.mxu0 0
        %5008 = vmatprep.subr.bf16.mxu0 0
        %5009 = vmatpush1.bf16.msra.mxu0 0
        %5010 = vmatprep.subr.bf16.mxu0 0
        %5011 = vmatpush1.bf16.msra.mxu0 0
        %5012 = vmatprep.mubr.bf16.mxu0 0
        %5013 = vmatmul.mubr.bf16.gmra.mrb[0].mxu0 %v4930
        %v5014 = vpop.f32.mrb[0].mxu0
        %v5015 = vadd.f32 0.0, %v5014
        %v5016 = vpop.f32.mrb[0].mxu0
        %v5017 = vpop.f32.mrb[0].mxu0
        %v5018 = vadd.f32 0.0, %v5017
        %v5019 = vpop.f32.mrb[0].mxu0
        %5020 = vmatprep.mubr.bf16.mxu0 0
        %5021 = vmatmul.mubr.bf16.gmra.mrb[0].mxu0 %v4933
        %v5022 = vpop.f32.mrb[0].mxu0
        %v5023 = vadd.f32 0.0, %v5022
        %v5024 = vpop.f32.mrb[0].mxu0
        %v5025 = vpop.f32.mrb[0].mxu0
        %v5026 = vadd.f32 0.0, %v5025
        %v5027 = vpop.f32.mrb[0].mxu0
        %5028 = vmatprep.mubr.bf16.mxu0 0
        %5029 = vmatmul.mubr.bf16.gmra.mrb[0].mxu0 %v4936
        %v5030 = vpop.f32.mrb[0].mxu0
        %v5031 = vadd.f32 0.0, %v5030
        %v5032 = vpop.f32.mrb[0].mxu0
        %v5033 = vpop.f32.mrb[0].mxu0
        %v5034 = vadd.f32 0.0, %v5033
        %v5035 = vpop.f32.mrb[0].mxu0
        %5036 = vmatprep.mubr.bf16.mxu0 0
        %5037 = vmatmul.mubr.bf16.gmra.mrb[0].mxu0 %v4939
        %v5038 = vpop.f32.mrb[0].mxu0
        %v5039 = vadd.f32 0.0, %v5038
        %v5040 = vpop.f32.mrb[0].mxu0
        %v5041 = vpop.f32.mrb[0].mxu0
        %v5042 = vadd.f32 0.0, %v5041
        %v5043 = vpop.f32.mrb[0].mxu0
        %5044 = vmatprep.mubr.bf16.mxu0 0
        %5045 = vmatmul.mubr.bf16.gmra.mrb[0].mxu0 %v4942
        %v5046 = vpop.f32.mrb[0].mxu0
        %v5047 = vadd.f32 0.0, %v5046
        %v5048 = vpop.f32.mrb[0].mxu0
        %v5049 = vpop.f32.mrb[0].mxu0
        %v5050 = vadd.f32 0.0, %v5049
        %v5051 = vpop.f32.mrb[0].mxu0
        %5052 = vmatprep.mubr.bf16.mxu0 0
        %5053 = vmatmul.mubr.bf16.gmra.mrb[0].mxu0 %v4945
        %v5054 = vpop.f32.mrb[0].mxu0
        %v5055 = vadd.f32 0.0, %v5054
        %v5056 = vpop.f32.mrb[0].mxu0
        %v5057 = vpop.f32.mrb[0].mxu0
        %v5058 = vadd.f32 0.0, %v5057
        %v5059 = vpop.f32.mrb[0].mxu0
        %5060 = vmatprep.mubr.bf16.mxu0 0
        %5061 = vmatmul.mubr.bf16.gmra.mrb[0].mxu0 %v4948
        %v5062 = vpop.f32.mrb[0].mxu0
        %v5063 = vadd.f32 0.0, %v5062
        %v5064 = vpop.f32.mrb[0].mxu0
        %v5065 = vpop.f32.mrb[0].mxu0
        %v5066 = vadd.f32 0.0, %v5065
        %v5067 = vpop.f32.mrb[0].mxu0
        %5068 = vmatprep.mubr.bf16.mxu0 0
        %5069 = vmatmul.mubr.bf16.gmra.mrb[0].mxu0 %v4951
        %v5070 = vpop.f32.mrb[0].mxu0
        %v5071 = vadd.f32 0.0, %v5070
        %v5072 = vpop.f32.mrb[0].mxu0
        %v5073 = vpop.f32.mrb[0].mxu0
        %v5074 = vadd.f32 0.0, %v5073
        %v5075 = vpop.f32.mrb[0].mxu0
        %5076 = vmatprep.mubr.bf16.mxu0 0
        %5077 = vmatmul.mubr.bf16.gmra.mrb[0].mxu0 %v4954
        %v5078 = vpop.f32.mrb[0].mxu0
        %v5079 = vadd.f32 0.0, %v5078
        %v5080 = vpop.f32.mrb[0].mxu0
        %v5081 = vpop.f32.mrb[0].mxu0
        %v5082 = vadd.f32 0.0, %v5081
        %v5083 = vpop.f32.mrb[0].mxu0
        %5084 = vmatprep.mubr.bf16.mxu0 0
        %5085 = vmatmul.mubr.bf16.gmra.mrb[0].mxu0 %v4957
        %v5086 = vpop.f32.mrb[0].mxu0
        %v5087 = vadd.f32 0.0, %v5086
        %v5088 = vpop.f32.mrb[0].mxu0
        %v5089 = vpop.f32.mrb[0].mxu0
        %v5090 = vadd.f32 0.0, %v5089
        %v5091 = vpop.f32.mrb[0].mxu0
        %5092 = vmatprep.mubr.bf16.mxu0 0
        %5093 = vmatmul.mubr.bf16.gmra.mrb[0].mxu0 %v4960
        %v5094 = vpop.f32.mrb[0].mxu0
        %v5095 = vadd.f32 0.0, %v5094
        %v5096 = vpop.f32.mrb[0].mxu0
        %v5097 = vpop.f32.mrb[0].mxu0
        %v5098 = vadd.f32 0.0, %v5097
        %v5099 = vpop.f32.mrb[0].mxu0
        %5100 = vmatprep.mubr.bf16.mxu0 0
        %5101 = vmatmul.mubr.bf16.gmra.mrb[0].mxu0 %v4963
        %v5102 = vpop.f32.mrb[0].mxu0
        %v5103 = vadd.f32 0.0, %v5102
        %v5104 = vpop.f32.mrb[0].mxu0
        %v5105 = vpop.f32.mrb[0].mxu0
        %v5106 = vadd.f32 0.0, %v5105
        %v5107 = vpop.f32.mrb[0].mxu0
        %5108 = vmatprep.mubr.bf16.mxu0 0
        %5109 = vmatmul.mubr.bf16.gmra.mrb[0].mxu0 %v4966
        %v5110 = vpop.f32.mrb[0].mxu0
        %v5111 = vadd.f32 0.0, %v5110
        %v5112 = vpop.f32.mrb[0].mxu0
        %v5113 = vpop.f32.mrb[0].mxu0
        %v5114 = vadd.f32 0.0, %v5113
        %v5115 = vpop.f32.mrb[0].mxu0
        %5116 = vmatprep.mubr.bf16.mxu0 0
        %5117 = vmatmul.mubr.bf16.gmra.mrb[0].mxu0 %v4969
        %v5118 = vpop.f32.mrb[0].mxu0
        %v5119 = vadd.f32 0.0, %v5118
        %v5120 = vpop.f32.mrb[0].mxu0
        %v5121 = vpop.f32.mrb[0].mxu0
        %v5122 = vadd.f32 0.0, %v5121
        %v5123 = vpop.f32.mrb[0].mxu0
        %5124 = vmatprep.mubr.bf16.mxu0 0
        %5125 = vmatmul.mubr.bf16.gmra.mrb[0].mxu0 %v4972
        %v5126 = vpop.f32.mrb[0].mxu0
        %v5127 = vadd.f32 0.0, %v5126
        %v5128 = vpop.f32.mrb[0].mxu0
        %v5129 = vpop.f32.mrb[0].mxu0
        %v5130 = vadd.f32 0.0, %v5129
        %v5131 = vpop.f32.mrb[0].mxu0
        %5132 = vmatprep.mubr.bf16.mxu0 0
        %5133 = vmatmul.mubr.bf16.gmra.mrb[0].mxu0 %v4975
        %v5134 = vpop.f32.mrb[0].mxu0
        %v5135 = vadd.f32 0.0, %v5134
        %v5136 = vpop.f32.mrb[0].mxu0
        %v5137 = vpop.f32.mrb[0].mxu0
        %v5138 = vadd.f32 0.0, %v5137
        %v5139 = vpop.f32.mrb[0].mxu0
        %5140 = vdwg.mxu0
        %v5141 = vadd.f32 %v4895, %v5015
        %v5142 = vadd.f32 %v4896, %v5018
        %v5143 = vadd.f32 %v4897, %v5023
        %v5144 = vadd.f32 %v4898, %v5026
        %v5145 = vadd.f32 %v4899, %v5031
        %v5146 = vadd.f32 %v4900, %v5034
        %v5147 = vadd.f32 %v4901, %v5039
        %v5148 = vadd.f32 %v4902, %v5042
        %v5149 = vadd.f32 %v4903, %v5047
        %v5150 = vadd.f32 %v4904, %v5050
        %v5151 = vadd.f32 %v4905, %v5055
        %v5152 = vadd.f32 %v4906, %v5058
        %v5153 = vadd.f32 %v4907, %v5063
        %v5154 = vadd.f32 %v4908, %v5066
        %v5155 = vadd.f32 %v4909, %v5071
        %v5156 = vadd.f32 %v4910, %v5074
        %v5157 = vadd.f32 %v4911, %v5079
        %v5158 = vadd.f32 %v4912, %v5082
        %v5159 = vadd.f32 %v4913, %v5087
        %v5160 = vadd.f32 %v4914, %v5090
        %v5161 = vadd.f32 %v4915, %v5095
        %v5162 = vadd.f32 %v4916, %v5098
        %v5163 = vadd.f32 %v4917, %v5103
        %v5164 = vadd.f32 %v4918, %v5106
        %v5165 = vadd.f32 %v4919, %v5111
        %v5166 = vadd.f32 %v4920, %v5114
        %v5167 = vadd.f32 %v4921, %v5119
        %v5168 = vadd.f32 %v4922, %v5122
        %v5169 = vadd.f32 %v4923, %v5127
        %v5170 = vadd.f32 %v4924, %v5130
        %v5171 = vadd.f32 %v4925, %v5135
        %v5172 = vadd.f32 %v4926, %v5138
        %s5173 = scalar_lea.vmem %s2, 24
        %v5174 = vld [vmem:[%s5173] sm:$0xf]
        %v5176 = vsel %vm3763, %v3712, 0
        %v5179 = vsel %vm3763, %v3713, 0
        %v5182 = vsel %vm3763, %v3714, 0
        %v5185 = vsel %vm3763, %v3715, 0
        %v5188 = vsel %vm3763, %v3716, 0
        %v5191 = vsel %vm3763, %v3717, 0
        %v5194 = vsel %vm3763, %v3718, 0
        %v5197 = vsel %vm3763, %v3719, 0
        %v5200 = vsel %vm3763, %v3720, 0
        %v5203 = vsel %vm3763, %v3721, 0
        %v5206 = vsel %vm3763, %v3722, 0
        %v5209 = vsel %vm3763, %v3723, 0
        %v5212 = vsel %vm3763, %v3724, 0
        %v5215 = vsel %vm3763, %v3725, 0
        %v5218 = vsel %vm3763, %v3726, 0
        %v5221 = vsel %vm3763, %v3727, 0
        %v5224 = vsel %vm3812, %v5174, 0
        %5226 = vmatprep.subr.bf16.mxu0 0
        %5227 = vmatpush1.bf16.msra.mxu0 %v5224
        %5228 = vmatprep.subr.bf16.mxu0 0
        %5229 = vmatpush1.bf16.msra.mxu0 0
        %5230 = vmatprep.subr.bf16.mxu0 0
        %5231 = vmatpush1.bf16.msra.mxu0 0
        %5232 = vmatprep.subr.bf16.mxu0 0
        %5233 = vmatpush1.bf16.msra.mxu0 0
        %5234 = vmatprep.subr.bf16.mxu0 0
        %5235 = vmatpush1.bf16.msra.mxu0 0
        %5236 = vmatprep.subr.bf16.mxu0 0
        %5237 = vmatpush1.bf16.msra.mxu0 0
        %5238 = vmatprep.subr.bf16.mxu0 0
        %5239 = vmatpush1.bf16.msra.mxu0 0
        %5240 = vmatprep.subr.bf16.mxu0 0
        %5241 = vmatpush1.bf16.msra.mxu0 0
        %5242 = vmatprep.subr.bf16.mxu0 0
        %5243 = vmatpush1.bf16.msra.mxu0 0
        %5244 = vmatprep.subr.bf16.mxu0 0
        %5245 = vmatpush1.bf16.msra.mxu0 0
        %5246 = vmatprep.subr.bf16.mxu0 0
        %5247 = vmatpush1.bf16.msra.mxu0 0
        %5248 = vmatprep.subr.bf16.mxu0 0
        %5249 = vmatpush1.bf16.msra.mxu0 0
        %5250 = vmatprep.subr.bf16.mxu0 0
        %5251 = vmatpush1.bf16.msra.mxu0 0
        %5252 = vmatprep.subr.bf16.mxu0 0
        %5253 = vmatpush1.bf16.msra.mxu0 0
        %5254 = vmatprep.subr.bf16.mxu0 0
        %5255 = vmatpush1.bf16.msra.mxu0 0
        %5256 = vmatprep.subr.bf16.mxu0 0
        %5257 = vmatpush1.bf16.msra.mxu0 0
        %5258 = vmatprep.mubr.bf16.mxu0 0
        %5259 = vmatmul.mubr.bf16.gmra.mrb[0].mxu0 %v5176
        %v5260 = vpop.f32.mrb[0].mxu0
        %v5261 = vadd.f32 0.0, %v5260
        %v5262 = vpop.f32.mrb[0].mxu0
        %v5263 = vpop.f32.mrb[0].mxu0
        %v5264 = vadd.f32 0.0, %v5263
        %v5265 = vpop.f32.mrb[0].mxu0
        %5266 = vmatprep.mubr.bf16.mxu0 0
        %5267 = vmatmul.mubr.bf16.gmra.mrb[0].mxu0 %v5179
        %v5268 = vpop.f32.mrb[0].mxu0
        %v5269 = vadd.f32 0.0, %v5268
        %v5270 = vpop.f32.mrb[0].mxu0
        %v5271 = vpop.f32.mrb[0].mxu0
        %v5272 = vadd.f32 0.0, %v5271
        %v5273 = vpop.f32.mrb[0].mxu0
        %5274 = vmatprep.mubr.bf16.mxu0 0
        %5275 = vmatmul.mubr.bf16.gmra.mrb[0].mxu0 %v5182
        %v5276 = vpop.f32.mrb[0].mxu0
        %v5277 = vadd.f32 0.0, %v5276
        %v5278 = vpop.f32.mrb[0].mxu0
        %v5279 = vpop.f32.mrb[0].mxu0
        %v5280 = vadd.f32 0.0, %v5279
        %v5281 = vpop.f32.mrb[0].mxu0
        %5282 = vmatprep.mubr.bf16.mxu0 0
        %5283 = vmatmul.mubr.bf16.gmra.mrb[0].mxu0 %v5185
        %v5284 = vpop.f32.mrb[0].mxu0
        %v5285 = vadd.f32 0.0, %v5284
        %v5286 = vpop.f32.mrb[0].mxu0
        %v5287 = vpop.f32.mrb[0].mxu0
        %v5288 = vadd.f32 0.0, %v5287
        %v5289 = vpop.f32.mrb[0].mxu0
        %5290 = vmatprep.mubr.bf16.mxu0 0
        %5291 = vmatmul.mubr.bf16.gmra.mrb[0].mxu0 %v5188
        %v5292 = vpop.f32.mrb[0].mxu0
        %v5293 = vadd.f32 0.0, %v5292
        %v5294 = vpop.f32.mrb[0].mxu0
        %v5295 = vpop.f32.mrb[0].mxu0
        %v5296 = vadd.f32 0.0, %v5295
        %v5297 = vpop.f32.mrb[0].mxu0
        %5298 = vmatprep.mubr.bf16.mxu0 0
        %5299 = vmatmul.mubr.bf16.gmra.mrb[0].mxu0 %v5191
        %v5300 = vpop.f32.mrb[0].mxu0
        %v5301 = vadd.f32 0.0, %v5300
        %v5302 = vpop.f32.mrb[0].mxu0
        %v5303 = vpop.f32.mrb[0].mxu0
        %v5304 = vadd.f32 0.0, %v5303
        %v5305 = vpop.f32.mrb[0].mxu0
        %5306 = vmatprep.mubr.bf16.mxu0 0
        %5307 = vmatmul.mubr.bf16.gmra.mrb[0].mxu0 %v5194
        %v5308 = vpop.f32.mrb[0].mxu0
        %v5309 = vadd.f32 0.0, %v5308
        %v5310 = vpop.f32.mrb[0].mxu0
        %v5311 = vpop.f32.mrb[0].mxu0
        %v5312 = vadd.f32 0.0, %v5311
        %v5313 = vpop.f32.mrb[0].mxu0
        %5314 = vmatprep.mubr.bf16.mxu0 0
        %5315 = vmatmul.mubr.bf16.gmra.mrb[0].mxu0 %v5197
        %v5316 = vpop.f32.mrb[0].mxu0
        %v5317 = vadd.f32 0.0, %v5316
        %v5318 = vpop.f32.mrb[0].mxu0
        %v5319 = vpop.f32.mrb[0].mxu0
        %v5320 = vadd.f32 0.0, %v5319
        %v5321 = vpop.f32.mrb[0].mxu0
        %5322 = vmatprep.mubr.bf16.mxu0 0
        %5323 = vmatmul.mubr.bf16.gmra.mrb[0].mxu0 %v5200
        %v5324 = vpop.f32.mrb[0].mxu0
        %v5325 = vadd.f32 0.0, %v5324
        %v5326 = vpop.f32.mrb[0].mxu0
        %v5327 = vpop.f32.mrb[0].mxu0
        %v5328 = vadd.f32 0.0, %v5327
        %v5329 = vpop.f32.mrb[0].mxu0
        %5330 = vmatprep.mubr.bf16.mxu0 0
        %5331 = vmatmul.mubr.bf16.gmra.mrb[0].mxu0 %v5203
        %v5332 = vpop.f32.mrb[0].mxu0
        %v5333 = vadd.f32 0.0, %v5332
        %v5334 = vpop.f32.mrb[0].mxu0
        %v5335 = vpop.f32.mrb[0].mxu0
        %v5336 = vadd.f32 0.0, %v5335
        %v5337 = vpop.f32.mrb[0].mxu0
        %5338 = vmatprep.mubr.bf16.mxu0 0
        %5339 = vmatmul.mubr.bf16.gmra.mrb[0].mxu0 %v5206
        %v5340 = vpop.f32.mrb[0].mxu0
        %v5341 = vadd.f32 0.0, %v5340
        %v5342 = vpop.f32.mrb[0].mxu0
        %v5343 = vpop.f32.mrb[0].mxu0
        %v5344 = vadd.f32 0.0, %v5343
        %v5345 = vpop.f32.mrb[0].mxu0
        %5346 = vmatprep.mubr.bf16.mxu0 0
        %5347 = vmatmul.mubr.bf16.gmra.mrb[0].mxu0 %v5209
        %v5348 = vpop.f32.mrb[0].mxu0
        %v5349 = vadd.f32 0.0, %v5348
        %v5350 = vpop.f32.mrb[0].mxu0
        %v5351 = vpop.f32.mrb[0].mxu0
        %v5352 = vadd.f32 0.0, %v5351
        %v5353 = vpop.f32.mrb[0].mxu0
        %5354 = vmatprep.mubr.bf16.mxu0 0
        %5355 = vmatmul.mubr.bf16.gmra.mrb[0].mxu0 %v5212
        %v5356 = vpop.f32.mrb[0].mxu0
        %v5357 = vadd.f32 0.0, %v5356
        %v5358 = vpop.f32.mrb[0].mxu0
        %v5359 = vpop.f32.mrb[0].mxu0
        %v5360 = vadd.f32 0.0, %v5359
        %v5361 = vpop.f32.mrb[0].mxu0
        %5362 = vmatprep.mubr.bf16.mxu0 0
        %5363 = vmatmul.mubr.bf16.gmra.mrb[0].mxu0 %v5215
        %v5364 = vpop.f32.mrb[0].mxu0
        %v5365 = vadd.f32 0.0, %v5364
        %v5366 = vpop.f32.mrb[0].mxu0
        %v5367 = vpop.f32.mrb[0].mxu0
        %v5368 = vadd.f32 0.0, %v5367
        %v5369 = vpop.f32.mrb[0].mxu0
        %5370 = vmatprep.mubr.bf16.mxu0 0
        %5371 = vmatmul.mubr.bf16.gmra.mrb[0].mxu0 %v5218
        %v5372 = vpop.f32.mrb[0].mxu0
        %v5373 = vadd.f32 0.0, %v5372
        %v5374 = vpop.f32.mrb[0].mxu0
        %v5375 = vpop.f32.mrb[0].mxu0
        %v5376 = vadd.f32 0.0, %v5375
        %v5377 = vpop.f32.mrb[0].mxu0
        %5378 = vmatprep.mubr.bf16.mxu0 0
        %5379 = vmatmul.mubr.bf16.gmra.mrb[0].mxu0 %v5221
        %v5380 = vpop.f32.mrb[0].mxu0
        %v5381 = vadd.f32 0.0, %v5380
        %v5382 = vpop.f32.mrb[0].mxu0
        %v5383 = vpop.f32.mrb[0].mxu0
        %v5384 = vadd.f32 0.0, %v5383
        %v5385 = vpop.f32.mrb[0].mxu0
        %5386 = vdwg.mxu0
        %v5387 = vadd.f32 %v5141, %v5261
        %v5388 = vadd.f32 %v5142, %v5264
        %v5389 = vadd.f32 %v5143, %v5269
        %v5390 = vadd.f32 %v5144, %v5272
        %v5391 = vadd.f32 %v5145, %v5277
        %v5392 = vadd.f32 %v5146, %v5280
        %v5393 = vadd.f32 %v5147, %v5285
        %v5394 = vadd.f32 %v5148, %v5288
        %v5395 = vadd.f32 %v5149, %v5293
        %v5396 = vadd.f32 %v5150, %v5296
        %v5397 = vadd.f32 %v5151, %v5301
        %v5398 = vadd.f32 %v5152, %v5304
        %v5399 = vadd.f32 %v5153, %v5309
        %v5400 = vadd.f32 %v5154, %v5312
        %v5401 = vadd.f32 %v5155, %v5317
        %v5402 = vadd.f32 %v5156, %v5320
        %v5403 = vadd.f32 %v5157, %v5325
        %v5404 = vadd.f32 %v5158, %v5328
        %v5405 = vadd.f32 %v5159, %v5333
        %v5406 = vadd.f32 %v5160, %v5336
        %v5407 = vadd.f32 %v5161, %v5341
        %v5408 = vadd.f32 %v5162, %v5344
        %v5409 = vadd.f32 %v5163, %v5349
        %v5410 = vadd.f32 %v5164, %v5352
        %v5411 = vadd.f32 %v5165, %v5357
        %v5412 = vadd.f32 %v5166, %v5360
        %v5413 = vadd.f32 %v5167, %v5365
        %v5414 = vadd.f32 %v5168, %v5368
        %v5415 = vadd.f32 %v5169, %v5373
        %v5416 = vadd.f32 %v5170, %v5376
        %v5417 = vadd.f32 %v5171, %v5381
        %v5418 = vadd.f32 %v5172, %v5384
        %s5419 = scalar_lea.vmem %s2, 28
        %v5420 = vld [vmem:[%s5419] sm:$0xf]
        %v5422 = vsel %vm3763, %v3728, 0
        %v5425 = vsel %vm3763, %v3729, 0
        %v5428 = vsel %vm3763, %v3730, 0
        %v5431 = vsel %vm3763, %v3731, 0
        %v5434 = vsel %vm3763, %v3732, 0
        %v5437 = vsel %vm3763, %v3733, 0
        %v5440 = vsel %vm3763, %v3734, 0
        %v5443 = vsel %vm3763, %v3735, 0
        %v5446 = vsel %vm3763, %v3736, 0
        %v5449 = vsel %vm3763, %v3737, 0
        %v5452 = vsel %vm3763, %v3738, 0
        %v5455 = vsel %vm3763, %v3739, 0
        %v5458 = vsel %vm3763, %v3740, 0
        %v5461 = vsel %vm3763, %v3741, 0
        %v5464 = vsel %vm3763, %v3742, 0
        %v5467 = vsel %vm3763, %v3743, 0
        %v5470 = vsel %vm3812, %v5420, 0
        %5472 = vmatprep.subr.bf16.mxu0 0
        %5473 = vmatpush1.bf16.msra.mxu0 %v5470
        %5474 = vmatprep.subr.bf16.mxu0 0
        %5475 = vmatpush1.bf16.msra.mxu0 0
        %5476 = vmatprep.subr.bf16.mxu0 0
        %5477 = vmatpush1.bf16.msra.mxu0 0
        %5478 = vmatprep.subr.bf16.mxu0 0
        %5479 = vmatpush1.bf16.msra.mxu0 0
        %5480 = vmatprep.subr.bf16.mxu0 0
        %5481 = vmatpush1.bf16.msra.mxu0 0
        %5482 = vmatprep.subr.bf16.mxu0 0
        %5483 = vmatpush1.bf16.msra.mxu0 0
        %5484 = vmatprep.subr.bf16.mxu0 0
        %5485 = vmatpush1.bf16.msra.mxu0 0
        %5486 = vmatprep.subr.bf16.mxu0 0
        %5487 = vmatpush1.bf16.msra.mxu0 0
        %5488 = vmatprep.subr.bf16.mxu0 0
        %5489 = vmatpush1.bf16.msra.mxu0 0
        %5490 = vmatprep.subr.bf16.mxu0 0
        %5491 = vmatpush1.bf16.msra.mxu0 0
        %5492 = vmatprep.subr.bf16.mxu0 0
        %5493 = vmatpush1.bf16.msra.mxu0 0
        %5494 = vmatprep.subr.bf16.mxu0 0
        %5495 = vmatpush1.bf16.msra.mxu0 0
        %5496 = vmatprep.subr.bf16.mxu0 0
        %5497 = vmatpush1.bf16.msra.mxu0 0
        %5498 = vmatprep.subr.bf16.mxu0 0
        %5499 = vmatpush1.bf16.msra.mxu0 0
        %5500 = vmatprep.subr.bf16.mxu0 0
        %5501 = vmatpush1.bf16.msra.mxu0 0
        %5502 = vmatprep.subr.bf16.mxu0 0
        %5503 = vmatpush1.bf16.msra.mxu0 0
        %5504 = vmatprep.mubr.bf16.mxu0 0
        %5505 = vmatmul.mubr.bf16.gmra.mrb[0].mxu0 %v5422
        %v5506 = vpop.f32.mrb[0].mxu0
        %v5507 = vadd.f32 0.0, %v5506
        %v5508 = vpop.f32.mrb[0].mxu0
        %v5509 = vpop.f32.mrb[0].mxu0
        %v5510 = vadd.f32 0.0, %v5509
        %v5511 = vpop.f32.mrb[0].mxu0
        %5512 = vmatprep.mubr.bf16.mxu0 0
        %5513 = vmatmul.mubr.bf16.gmra.mrb[0].mxu0 %v5425
        %v5514 = vpop.f32.mrb[0].mxu0
        %v5515 = vadd.f32 0.0, %v5514
        %v5516 = vpop.f32.mrb[0].mxu0
        %v5517 = vpop.f32.mrb[0].mxu0
        %v5518 = vadd.f32 0.0, %v5517
        %v5519 = vpop.f32.mrb[0].mxu0
        %5520 = vmatprep.mubr.bf16.mxu0 0
        %5521 = vmatmul.mubr.bf16.gmra.mrb[0].mxu0 %v5428
        %v5522 = vpop.f32.mrb[0].mxu0
        %v5523 = vadd.f32 0.0, %v5522
        %v5524 = vpop.f32.mrb[0].mxu0
        %v5525 = vpop.f32.mrb[0].mxu0
        %v5526 = vadd.f32 0.0, %v5525
        %v5527 = vpop.f32.mrb[0].mxu0
        %5528 = vmatprep.mubr.bf16.mxu0 0
        %5529 = vmatmul.mubr.bf16.gmra.mrb[0].mxu0 %v5431
        %v5530 = vpop.f32.mrb[0].mxu0
        %v5531 = vadd.f32 0.0, %v5530
        %v5532 = vpop.f32.mrb[0].mxu0
        %v5533 = vpop.f32.mrb[0].mxu0
        %v5534 = vadd.f32 0.0, %v5533
        %v5535 = vpop.f32.mrb[0].mxu0
        %5536 = vmatprep.mubr.bf16.mxu0 0
        %5537 = vmatmul.mubr.bf16.gmra.mrb[0].mxu0 %v5434
        %v5538 = vpop.f32.mrb[0].mxu0
        %v5539 = vadd.f32 0.0, %v5538
        %v5540 = vpop.f32.mrb[0].mxu0
        %v5541 = vpop.f32.mrb[0].mxu0
        %v5542 = vadd.f32 0.0, %v5541
        %v5543 = vpop.f32.mrb[0].mxu0
        %5544 = vmatprep.mubr.bf16.mxu0 0
        %5545 = vmatmul.mubr.bf16.gmra.mrb[0].mxu0 %v5437
        %v5546 = vpop.f32.mrb[0].mxu0
        %v5547 = vadd.f32 0.0, %v5546
        %v5548 = vpop.f32.mrb[0].mxu0
        %v5549 = vpop.f32.mrb[0].mxu0
        %v5550 = vadd.f32 0.0, %v5549
        %v5551 = vpop.f32.mrb[0].mxu0
        %5552 = vmatprep.mubr.bf16.mxu0 0
        %5553 = vmatmul.mubr.bf16.gmra.mrb[0].mxu0 %v5440
        %v5554 = vpop.f32.mrb[0].mxu0
        %v5555 = vadd.f32 0.0, %v5554
        %v5556 = vpop.f32.mrb[0].mxu0
        %v5557 = vpop.f32.mrb[0].mxu0
        %v5558 = vadd.f32 0.0, %v5557
        %v5559 = vpop.f32.mrb[0].mxu0
        %5560 = vmatprep.mubr.bf16.mxu0 0
        %5561 = vmatmul.mubr.bf16.gmra.mrb[0].mxu0 %v5443
        %v5562 = vpop.f32.mrb[0].mxu0
        %v5563 = vadd.f32 0.0, %v5562
        %v5564 = vpop.f32.mrb[0].mxu0
        %v5565 = vpop.f32.mrb[0].mxu0
        %v5566 = vadd.f32 0.0, %v5565
        %v5567 = vpop.f32.mrb[0].mxu0
        %5568 = vmatprep.mubr.bf16.mxu0 0
        %5569 = vmatmul.mubr.bf16.gmra.mrb[0].mxu0 %v5446
        %v5570 = vpop.f32.mrb[0].mxu0
        %v5571 = vadd.f32 0.0, %v5570
        %v5572 = vpop.f32.mrb[0].mxu0
        %v5573 = vpop.f32.mrb[0].mxu0
        %v5574 = vadd.f32 0.0, %v5573
        %v5575 = vpop.f32.mrb[0].mxu0
        %5576 = vmatprep.mubr.bf16.mxu0 0
        %5577 = vmatmul.mubr.bf16.gmra.mrb[0].mxu0 %v5449
        %v5578 = vpop.f32.mrb[0].mxu0
        %v5579 = vadd.f32 0.0, %v5578
        %v5580 = vpop.f32.mrb[0].mxu0
        %v5581 = vpop.f32.mrb[0].mxu0
        %v5582 = vadd.f32 0.0, %v5581
        %v5583 = vpop.f32.mrb[0].mxu0
        %5584 = vmatprep.mubr.bf16.mxu0 0
        %5585 = vmatmul.mubr.bf16.gmra.mrb[0].mxu0 %v5452
        %v5586 = vpop.f32.mrb[0].mxu0
        %v5587 = vadd.f32 0.0, %v5586
        %v5588 = vpop.f32.mrb[0].mxu0
        %v5589 = vpop.f32.mrb[0].mxu0
        %v5590 = vadd.f32 0.0, %v5589
        %v5591 = vpop.f32.mrb[0].mxu0
        %5592 = vmatprep.mubr.bf16.mxu0 0
        %5593 = vmatmul.mubr.bf16.gmra.mrb[0].mxu0 %v5455
        %v5594 = vpop.f32.mrb[0].mxu0
        %v5595 = vadd.f32 0.0, %v5594
        %v5596 = vpop.f32.mrb[0].mxu0
        %v5597 = vpop.f32.mrb[0].mxu0
        %v5598 = vadd.f32 0.0, %v5597
        %v5599 = vpop.f32.mrb[0].mxu0
        %5600 = vmatprep.mubr.bf16.mxu0 0
        %5601 = vmatmul.mubr.bf16.gmra.mrb[0].mxu0 %v5458
        %v5602 = vpop.f32.mrb[0].mxu0
        %v5603 = vadd.f32 0.0, %v5602
        %v5604 = vpop.f32.mrb[0].mxu0
        %v5605 = vpop.f32.mrb[0].mxu0
        %v5606 = vadd.f32 0.0, %v5605
        %v5607 = vpop.f32.mrb[0].mxu0
        %5608 = vmatprep.mubr.bf16.mxu0 0
        %5609 = vmatmul.mubr.bf16.gmra.mrb[0].mxu0 %v5461
        %v5610 = vpop.f32.mrb[0].mxu0
        %v5611 = vadd.f32 0.0, %v5610
        %v5612 = vpop.f32.mrb[0].mxu0
        %v5613 = vpop.f32.mrb[0].mxu0
        %v5614 = vadd.f32 0.0, %v5613
        %v5615 = vpop.f32.mrb[0].mxu0
        %5616 = vmatprep.mubr.bf16.mxu0 0
        %5617 = vmatmul.mubr.bf16.gmra.mrb[0].mxu0 %v5464
        %v5618 = vpop.f32.mrb[0].mxu0
        %v5619 = vadd.f32 0.0, %v5618
        %v5620 = vpop.f32.mrb[0].mxu0
        %v5621 = vpop.f32.mrb[0].mxu0
        %v5622 = vadd.f32 0.0, %v5621
        %v5623 = vpop.f32.mrb[0].mxu0
        %5624 = vmatprep.mubr.bf16.mxu0 0
        %5625 = vmatmul.mubr.bf16.gmra.mrb[0].mxu0 %v5467
        %v5626 = vpop.f32.mrb[0].mxu0
        %v5627 = vadd.f32 0.0, %v5626
        %v5628 = vpop.f32.mrb[0].mxu0
        %v5629 = vpop.f32.mrb[0].mxu0
        %v5630 = vadd.f32 0.0, %v5629
        %v5631 = vpop.f32.mrb[0].mxu0
        %5632 = vdwg.mxu0
        %v5633 = vadd.f32 %v5387, %v5507
        %v5634 = vadd.f32 %v5388, %v5510
        %v5635 = vadd.f32 %v5389, %v5515
        %v5636 = vadd.f32 %v5390, %v5518
        %v5637 = vadd.f32 %v5391, %v5523
        %v5638 = vadd.f32 %v5392, %v5526
        %v5639 = vadd.f32 %v5393, %v5531
        %v5640 = vadd.f32 %v5394, %v5534
        %v5641 = vadd.f32 %v5395, %v5539
        %v5642 = vadd.f32 %v5396, %v5542
        %v5643 = vadd.f32 %v5397, %v5547
        %v5644 = vadd.f32 %v5398, %v5550
        %v5645 = vadd.f32 %v5399, %v5555
        %v5646 = vadd.f32 %v5400, %v5558
        %v5647 = vadd.f32 %v5401, %v5563
        %v5648 = vadd.f32 %v5402, %v5566
        %v5649 = vadd.f32 %v5403, %v5571
        %v5650 = vadd.f32 %v5404, %v5574
        %v5651 = vadd.f32 %v5405, %v5579
        %v5652 = vadd.f32 %v5406, %v5582
        %v5653 = vadd.f32 %v5407, %v5587
        %v5654 = vadd.f32 %v5408, %v5590
        %v5655 = vadd.f32 %v5409, %v5595
        %v5656 = vadd.f32 %v5410, %v5598
        %v5657 = vadd.f32 %v5411, %v5603
        %v5658 = vadd.f32 %v5412, %v5606
        %v5659 = vadd.f32 %v5413, %v5611
        %v5660 = vadd.f32 %v5414, %v5614
        %v5661 = vadd.f32 %v5415, %v5619
        %v5662 = vadd.f32 %v5416, %v5622
        %v5663 = vadd.f32 %v5417, %v5627
        %v5664 = vadd.f32 %v5418, %v5630
        %s5665 = scalar_lea.vmem %s2, 32
        %v5666 = vld [vmem:[%s5665] sm:$0xf]
        %v5668 = vsel %vm3763, %v3744, 0
        %v5671 = vsel %vm3763, %v3745, 0
        %v5674 = vsel %vm3763, %v3746, 0
        %v5677 = vsel %vm3763, %v3747, 0
        %v5680 = vsel %vm3763, %v3748, 0
        %v5683 = vsel %vm3763, %v3749, 0
        %v5686 = vsel %vm3763, %v3750, 0
        %v5689 = vsel %vm3763, %v3751, 0
        %v5692 = vsel %vm3763, %v3752, 0
        %v5695 = vsel %vm3763, %v3753, 0
        %v5698 = vsel %vm3763, %v3754, 0
        %v5701 = vsel %vm3763, %v3755, 0
        %v5704 = vsel %vm3763, %v3756, 0
        %v5707 = vsel %vm3763, %v3757, 0
        %v5710 = vsel %vm3763, %v3758, 0
        %v5713 = vsel %vm3763, %v3759, 0
        %v5716 = vsel %vm3812, %v5666, 0
        %5718 = vmatprep.subr.bf16.mxu0 0
        %5719 = vmatpush1.bf16.msra.mxu0 %v5716
        %5720 = vmatprep.subr.bf16.mxu0 0
        %5721 = vmatpush1.bf16.msra.mxu0 0
        %5722 = vmatprep.subr.bf16.mxu0 0
        %5723 = vmatpush1.bf16.msra.mxu0 0
        %5724 = vmatprep.subr.bf16.mxu0 0
        %5725 = vmatpush1.bf16.msra.mxu0 0
        %5726 = vmatprep.subr.bf16.mxu0 0
        %5727 = vmatpush1.bf16.msra.mxu0 0
        %5728 = vmatprep.subr.bf16.mxu0 0
        %5729 = vmatpush1.bf16.msra.mxu0 0
        %5730 = vmatprep.subr.bf16.mxu0 0
        %5731 = vmatpush1.bf16.msra.mxu0 0
        %5732 = vmatprep.subr.bf16.mxu0 0
        %5733 = vmatpush1.bf16.msra.mxu0 0
        %5734 = vmatprep.subr.bf16.mxu0 0
        %5735 = vmatpush1.bf16.msra.mxu0 0
        %5736 = vmatprep.subr.bf16.mxu0 0
        %5737 = vmatpush1.bf16.msra.mxu0 0
        %5738 = vmatprep.subr.bf16.mxu0 0
        %5739 = vmatpush1.bf16.msra.mxu0 0
        %5740 = vmatprep.subr.bf16.mxu0 0
        %5741 = vmatpush1.bf16.msra.mxu0 0
        %5742 = vmatprep.subr.bf16.mxu0 0
        %5743 = vmatpush1.bf16.msra.mxu0 0
        %5744 = vmatprep.subr.bf16.mxu0 0
        %5745 = vmatpush1.bf16.msra.mxu0 0
        %5746 = vmatprep.subr.bf16.mxu0 0
        %5747 = vmatpush1.bf16.msra.mxu0 0
        %5748 = vmatprep.subr.bf16.mxu0 0
        %5749 = vmatpush1.bf16.msra.mxu0 0
        %5750 = vmatprep.mubr.bf16.mxu0 0
        %5751 = vmatmul.mubr.bf16.gmra.mrb[0].mxu0 %v5668
        %v5752 = vpop.f32.mrb[0].mxu0
        %v5753 = vadd.f32 0.0, %v5752
        %v5754 = vpop.f32.mrb[0].mxu0
        %v5755 = vpop.f32.mrb[0].mxu0
        %v5756 = vadd.f32 0.0, %v5755
        %v5757 = vpop.f32.mrb[0].mxu0
        %5758 = vmatprep.mubr.bf16.mxu0 0
        %5759 = vmatmul.mubr.bf16.gmra.mrb[0].mxu0 %v5671
        %v5760 = vpop.f32.mrb[0].mxu0
        %v5761 = vadd.f32 0.0, %v5760
        %v5762 = vpop.f32.mrb[0].mxu0
        %v5763 = vpop.f32.mrb[0].mxu0
        %v5764 = vadd.f32 0.0, %v5763
        %v5765 = vpop.f32.mrb[0].mxu0
        %5766 = vmatprep.mubr.bf16.mxu0 0
        %5767 = vmatmul.mubr.bf16.gmra.mrb[0].mxu0 %v5674
        %v5768 = vpop.f32.mrb[0].mxu0
        %v5769 = vadd.f32 0.0, %v5768
        %v5770 = vpop.f32.mrb[0].mxu0
        %v5771 = vpop.f32.mrb[0].mxu0
        %v5772 = vadd.f32 0.0, %v5771
        %v5773 = vpop.f32.mrb[0].mxu0
        %5774 = vmatprep.mubr.bf16.mxu0 0
        %5775 = vmatmul.mubr.bf16.gmra.mrb[0].mxu0 %v5677
        %v5776 = vpop.f32.mrb[0].mxu0
        %v5777 = vadd.f32 0.0, %v5776
        %v5778 = vpop.f32.mrb[0].mxu0
        %v5779 = vpop.f32.mrb[0].mxu0
        %v5780 = vadd.f32 0.0, %v5779
        %v5781 = vpop.f32.mrb[0].mxu0
        %5782 = vmatprep.mubr.bf16.mxu0 0
        %5783 = vmatmul.mubr.bf16.gmra.mrb[0].mxu0 %v5680
        %v5784 = vpop.f32.mrb[0].mxu0
        %v5785 = vadd.f32 0.0, %v5784
        %v5786 = vpop.f32.mrb[0].mxu0
        %v5787 = vpop.f32.mrb[0].mxu0
        %v5788 = vadd.f32 0.0, %v5787
        %v5789 = vpop.f32.mrb[0].mxu0
        %5790 = vmatprep.mubr.bf16.mxu0 0
        %5791 = vmatmul.mubr.bf16.gmra.mrb[0].mxu0 %v5683
        %v5792 = vpop.f32.mrb[0].mxu0
        %v5793 = vadd.f32 0.0, %v5792
        %v5794 = vpop.f32.mrb[0].mxu0
        %v5795 = vpop.f32.mrb[0].mxu0
        %v5796 = vadd.f32 0.0, %v5795
        %v5797 = vpop.f32.mrb[0].mxu0
        %5798 = vmatprep.mubr.bf16.mxu0 0
        %5799 = vmatmul.mubr.bf16.gmra.mrb[0].mxu0 %v5686
        %v5800 = vpop.f32.mrb[0].mxu0
        %v5801 = vadd.f32 0.0, %v5800
        %v5802 = vpop.f32.mrb[0].mxu0
        %v5803 = vpop.f32.mrb[0].mxu0
        %v5804 = vadd.f32 0.0, %v5803
        %v5805 = vpop.f32.mrb[0].mxu0
        %5806 = vmatprep.mubr.bf16.mxu0 0
        %5807 = vmatmul.mubr.bf16.gmra.mrb[0].mxu0 %v5689
        %v5808 = vpop.f32.mrb[0].mxu0
        %v5809 = vadd.f32 0.0, %v5808
        %v5810 = vpop.f32.mrb[0].mxu0
        %v5811 = vpop.f32.mrb[0].mxu0
        %v5812 = vadd.f32 0.0, %v5811
        %v5813 = vpop.f32.mrb[0].mxu0
        %5814 = vmatprep.mubr.bf16.mxu0 0
        %5815 = vmatmul.mubr.bf16.gmra.mrb[0].mxu0 %v5692
        %v5816 = vpop.f32.mrb[0].mxu0
        %v5817 = vadd.f32 0.0, %v5816
        %v5818 = vpop.f32.mrb[0].mxu0
        %v5819 = vpop.f32.mrb[0].mxu0
        %v5820 = vadd.f32 0.0, %v5819
        %v5821 = vpop.f32.mrb[0].mxu0
        %5822 = vmatprep.mubr.bf16.mxu0 0
        %5823 = vmatmul.mubr.bf16.gmra.mrb[0].mxu0 %v5695
        %v5824 = vpop.f32.mrb[0].mxu0
        %v5825 = vadd.f32 0.0, %v5824
        %v5826 = vpop.f32.mrb[0].mxu0
        %v5827 = vpop.f32.mrb[0].mxu0
        %v5828 = vadd.f32 0.0, %v5827
        %v5829 = vpop.f32.mrb[0].mxu0
        %5830 = vmatprep.mubr.bf16.mxu0 0
        %5831 = vmatmul.mubr.bf16.gmra.mrb[0].mxu0 %v5698
        %v5832 = vpop.f32.mrb[0].mxu0
        %v5833 = vadd.f32 0.0, %v5832
        %v5834 = vpop.f32.mrb[0].mxu0
        %v5835 = vpop.f32.mrb[0].mxu0
        %v5836 = vadd.f32 0.0, %v5835
        %v5837 = vpop.f32.mrb[0].mxu0
        %5838 = vmatprep.mubr.bf16.mxu0 0
        %5839 = vmatmul.mubr.bf16.gmra.mrb[0].mxu0 %v5701
        %v5840 = vpop.f32.mrb[0].mxu0
        %v5841 = vadd.f32 0.0, %v5840
        %v5842 = vpop.f32.mrb[0].mxu0
        %v5843 = vpop.f32.mrb[0].mxu0
        %v5844 = vadd.f32 0.0, %v5843
        %v5845 = vpop.f32.mrb[0].mxu0
        %5846 = vmatprep.mubr.bf16.mxu0 0
        %5847 = vmatmul.mubr.bf16.gmra.mrb[0].mxu0 %v5704
        %v5848 = vpop.f32.mrb[0].mxu0
        %v5849 = vadd.f32 0.0, %v5848
        %v5850 = vpop.f32.mrb[0].mxu0
        %v5851 = vpop.f32.mrb[0].mxu0
        %v5852 = vadd.f32 0.0, %v5851
        %v5853 = vpop.f32.mrb[0].mxu0
        %5854 = vmatprep.mubr.bf16.mxu0 0
        %5855 = vmatmul.mubr.bf16.gmra.mrb[0].mxu0 %v5707
        %v5856 = vpop.f32.mrb[0].mxu0
        %v5857 = vadd.f32 0.0, %v5856
        %v5858 = vpop.f32.mrb[0].mxu0
        %v5859 = vpop.f32.mrb[0].mxu0
        %v5860 = vadd.f32 0.0, %v5859
        %v5861 = vpop.f32.mrb[0].mxu0
        %5862 = vmatprep.mubr.bf16.mxu0 0
        %5863 = vmatmul.mubr.bf16.gmra.mrb[0].mxu0 %v5710
        %v5864 = vpop.f32.mrb[0].mxu0
        %v5865 = vadd.f32 0.0, %v5864
        %v5866 = vpop.f32.mrb[0].mxu0
        %v5867 = vpop.f32.mrb[0].mxu0
        %v5868 = vadd.f32 0.0, %v5867
        %v5869 = vpop.f32.mrb[0].mxu0
        %5870 = vmatprep.mubr.bf16.mxu0 0
        %5871 = vmatmul.mubr.bf16.gmra.mrb[0].mxu0 %v5713
        %v5872 = vpop.f32.mrb[0].mxu0
        %v5873 = vadd.f32 0.0, %v5872
        %v5874 = vpop.f32.mrb[0].mxu0
        %v5875 = vpop.f32.mrb[0].mxu0
        %v5876 = vadd.f32 0.0, %v5875
        %v5877 = vpop.f32.mrb[0].mxu0
        %5878 = vdwg.mxu0
        %v5879 = vadd.f32 %v5633, %v5753
        %v5880 = vadd.f32 %v5634, %v5756
        %v5881 = vadd.f32 %v5635, %v5761
        %v5882 = vadd.f32 %v5636, %v5764
        %v5883 = vadd.f32 %v5637, %v5769
        %v5884 = vadd.f32 %v5638, %v5772
        %v5885 = vadd.f32 %v5639, %v5777
        %v5886 = vadd.f32 %v5640, %v5780
        %v5887 = vadd.f32 %v5641, %v5785
        %v5888 = vadd.f32 %v5642, %v5788
        %v5889 = vadd.f32 %v5643, %v5793
        %v5890 = vadd.f32 %v5644, %v5796
        %v5891 = vadd.f32 %v5645, %v5801
        %v5892 = vadd.f32 %v5646, %v5804
        %v5893 = vadd.f32 %v5647, %v5809
        %v5894 = vadd.f32 %v5648, %v5812
        %v5895 = vadd.f32 %v5649, %v5817
        %v5896 = vadd.f32 %v5650, %v5820
        %v5897 = vadd.f32 %v5651, %v5825
        %v5898 = vadd.f32 %v5652, %v5828
        %v5899 = vadd.f32 %v5653, %v5833
        %v5900 = vadd.f32 %v5654, %v5836
        %v5901 = vadd.f32 %v5655, %v5841
        %v5902 = vadd.f32 %v5656, %v5844
        %v5903 = vadd.f32 %v5657, %v5849
        %v5904 = vadd.f32 %v5658, %v5852
        %v5905 = vadd.f32 %v5659, %v5857
        %v5906 = vadd.f32 %v5660, %v5860
        %v5907 = vadd.f32 %v5661, %v5865
        %v5908 = vadd.f32 %v5662, %v5868
        %v5909 = vadd.f32 %v5663, %v5873
        %v5910 = vadd.f32 %v5664, %v5876
        %v5911 = vld [vmem:[%s3] sm:$0x1]
        %v5913 = vlaneseq
        %v5914 = vshrl.u32 %v5913, 7
        %v5915 = vsub.s32 0, %v5914
        %v5916 = vrot.slane %v5911, %v5915
        %v5918 = vadd.f32 %v5879, %v5916
        %v5919 = vadd.f32 %v5880, %v5916
        %v5920 = vadd.f32 %v5881, %v5916
        %v5921 = vadd.f32 %v5882, %v5916
        %v5922 = vadd.f32 %v5883, %v5916
        %v5923 = vadd.f32 %v5884, %v5916
        %v5924 = vadd.f32 %v5885, %v5916
        %v5925 = vadd.f32 %v5886, %v5916
        %v5926 = vadd.f32 %v5887, %v5916
        %v5927 = vadd.f32 %v5888, %v5916
        %v5928 = vadd.f32 %v5889, %v5916
        %v5929 = vadd.f32 %v5890, %v5916
        %v5930 = vadd.f32 %v5891, %v5916
        %v5931 = vadd.f32 %v5892, %v5916
        %v5932 = vadd.f32 %v5893, %v5916
        %v5933 = vadd.f32 %v5894, %v5916
        %v5934 = vadd.f32 %v5895, %v5916
        %v5935 = vadd.f32 %v5896, %v5916
        %v5936 = vadd.f32 %v5897, %v5916
        %v5937 = vadd.f32 %v5898, %v5916
        %v5938 = vadd.f32 %v5899, %v5916
        %v5939 = vadd.f32 %v5900, %v5916
        %v5940 = vadd.f32 %v5901, %v5916
        %v5941 = vadd.f32 %v5902, %v5916
        %v5942 = vadd.f32 %v5903, %v5916
        %v5943 = vadd.f32 %v5904, %v5916
        %v5944 = vadd.f32 %v5905, %v5916
        %v5945 = vadd.f32 %v5906, %v5916
        %v5946 = vadd.f32 %v5907, %v5916
        %v5947 = vadd.f32 %v5908, %v5916
        %v5948 = vadd.f32 %v5909, %v5916
        %v5949 = vadd.f32 %v5910, %v5916
        %v5950 = vmax.f32 %v5918, 0.0
        %v5951 = vmax.f32 %v5919, 0.0
        %v5952 = vmax.f32 %v5920, 0.0
        %v5953 = vmax.f32 %v5921, 0.0
        %v5954 = vmax.f32 %v5922, 0.0
        %v5955 = vmax.f32 %v5923, 0.0
        %v5956 = vmax.f32 %v5924, 0.0
        %v5957 = vmax.f32 %v5925, 0.0
        %v5958 = vmax.f32 %v5926, 0.0
        %v5959 = vmax.f32 %v5927, 0.0
        %v5960 = vmax.f32 %v5928, 0.0
        %v5961 = vmax.f32 %v5929, 0.0
        %v5962 = vmax.f32 %v5930, 0.0
        %v5963 = vmax.f32 %v5931, 0.0
        %v5964 = vmax.f32 %v5932, 0.0
        %v5965 = vmax.f32 %v5933, 0.0
        %v5966 = vmax.f32 %v5934, 0.0
        %v5967 = vmax.f32 %v5935, 0.0
        %v5968 = vmax.f32 %v5936, 0.0
        %v5969 = vmax.f32 %v5937, 0.0
        %v5970 = vmax.f32 %v5938, 0.0
        %v5971 = vmax.f32 %v5939, 0.0
        %v5972 = vmax.f32 %v5940, 0.0
        %v5973 = vmax.f32 %v5941, 0.0
        %v5974 = vmax.f32 %v5942, 0.0
        %v5975 = vmax.f32 %v5943, 0.0
        %v5976 = vmax.f32 %v5944, 0.0
        %v5977 = vmax.f32 %v5945, 0.0
        %v5978 = vmax.f32 %v5946, 0.0
        %v5979 = vmax.f32 %v5947, 0.0
        %v5980 = vmax.f32 %v5948, 0.0
        %v5981 = vmax.f32 %v5949, 0.0
        %v5982 = vpack.c.bf16 %v5951, %v5950
        %v5983 = vpack.c.bf16 %v5953, %v5952
        %v5984 = vpack.c.bf16 %v5955, %v5954
        %v5985 = vpack.c.bf16 %v5957, %v5956
        %v5986 = vpack.c.bf16 %v5959, %v5958
        %v5987 = vpack.c.bf16 %v5961, %v5960
        %v5988 = vpack.c.bf16 %v5963, %v5962
        %v5989 = vpack.c.bf16 %v5965, %v5964
        %v5990 = vpack.c.bf16 %v5967, %v5966
        %v5991 = vpack.c.bf16 %v5969, %v5968
        %v5992 = vpack.c.bf16 %v5971, %v5970
        %v5993 = vpack.c.bf16 %v5973, %v5972
        %v5994 = vpack.c.bf16 %v5975, %v5974
        %v5995 = vpack.c.bf16 %v5977, %v5976
        %v5996 = vpack.c.bf16 %v5979, %v5978
        %v5997 = vpack.c.bf16 %v5981, %v5980
        %v5998 = vld [vmem:[%s4] sm:$0xff]
        %v5999 = vld [vmem:[%s4 + $0x8] sm:$0xff]
        %v6000 = vld [vmem:[%s4 + $0x10] sm:$0xff]
        %v6001 = vld [vmem:[%s4 + $0x18] sm:$0xff]
        %v6002 = vld [vmem:[%s4 + $0x20] sm:$0xff]
        %v6003 = vld [vmem:[%s4 + $0x28] sm:$0xff]
        %v6004 = vld [vmem:[%s4 + $0x30] sm:$0xff]
        %v6005 = vld [vmem:[%s4 + $0x38] sm:$0xff]
        %v6006 = vld [vmem:[%s4 + $0x40] sm:$0xff]
        %v6007 = vld [vmem:[%s4 + $0x48] sm:$0xff]
        %v6008 = vld [vmem:[%s4 + $0x50] sm:$0xff]
        %v6009 = vld [vmem:[%s4 + $0x58] sm:$0xff]
        %v6010 = vld [vmem:[%s4 + $0x60] sm:$0xff]
        %v6011 = vld [vmem:[%s4 + $0x68] sm:$0xff]
        %v6012 = vld [vmem:[%s4 + $0x70] sm:$0xff]
        %v6013 = vld [vmem:[%s4 + $0x78] sm:$0xff]
        %v6014 = vld [vmem:[%s4 + $0x80] sm:$0xff]
        %v6015 = vld [vmem:[%s4 + $0x88] sm:$0xff]
        %v6016 = vld [vmem:[%s4 + $0x90] sm:$0xff]
        %v6017 = vld [vmem:[%s4 + $0x98] sm:$0xff]
        %v6018 = vld [vmem:[%s4 + $0xa0] sm:$0xff]
        %v6019 = vld [vmem:[%s4 + $0xa8] sm:$0xff]
        %v6020 = vld [vmem:[%s4 + $0xb0] sm:$0xff]
        %v6021 = vld [vmem:[%s4 + $0xb8] sm:$0xff]
        %v6022 = vld [vmem:[%s4 + $0xc0] sm:$0xff]
        %v6023 = vld [vmem:[%s4 + $0xc8] sm:$0xff]
        %v6024 = vld [vmem:[%s4 + $0xd0] sm:$0xff]
        %v6025 = vld [vmem:[%s4 + $0xd8] sm:$0xff]
        %v6026 = vld [vmem:[%s4 + $0xe0] sm:$0xff]
        %v6027 = vld [vmem:[%s4 + $0xe8] sm:$0xff]
        %v6028 = vld [vmem:[%s4 + $0xf0] sm:$0xff]
        %v6029 = vld [vmem:[%s4 + $0xf8] sm:$0xff]
        %v6030 = vld [vmem:[%s4 + $0x100] sm:$0xff]
        %v6031 = vld [vmem:[%s4 + $0x108] sm:$0xff]
        %v6032 = vld [vmem:[%s4 + $0x110] sm:$0xff]
        %v6033 = vld [vmem:[%s4 + $0x118] sm:$0xff]
        %v6034 = vld [vmem:[%s4 + $0x120] sm:$0xff]
        %v6035 = vld [vmem:[%s4 + $0x128] sm:$0xff]
        %v6036 = vld [vmem:[%s4 + $0x130] sm:$0xff]
        %v6037 = vld [vmem:[%s4 + $0x138] sm:$0xff]
        %v6038 = vld [vmem:[%s4 + $0x140] sm:$0xff]
        %v6039 = vld [vmem:[%s4 + $0x148] sm:$0xff]
        %v6040 = vld [vmem:[%s4 + $0x150] sm:$0xff]
        %v6041 = vld [vmem:[%s4 + $0x158] sm:$0xff]
        %v6042 = vld [vmem:[%s4 + $0x160] sm:$0xff]
        %v6043 = vld [vmem:[%s4 + $0x168] sm:$0xff]
        %v6044 = vld [vmem:[%s4 + $0x170] sm:$0xff]
        %v6045 = vld [vmem:[%s4 + $0x178] sm:$0xff]
        %v6046 = vld [vmem:[%s4 + $0x180] sm:$0xff]
        %v6047 = vld [vmem:[%s4 + $0x188] sm:$0xff]
        %v6048 = vld [vmem:[%s4 + $0x190] sm:$0xff]
        %v6049 = vld [vmem:[%s4 + $0x198] sm:$0xff]
        %v6050 = vld [vmem:[%s4 + $0x1a0] sm:$0xff]
        %v6051 = vld [vmem:[%s4 + $0x1a8] sm:$0xff]
        %v6052 = vld [vmem:[%s4 + $0x1b0] sm:$0xff]
        %v6053 = vld [vmem:[%s4 + $0x1b8] sm:$0xff]
        %v6054 = vld [vmem:[%s4 + $0x1c0] sm:$0xff]
        %v6055 = vld [vmem:[%s4 + $0x1c8] sm:$0xff]
        %v6056 = vld [vmem:[%s4 + $0x1d0] sm:$0xff]
        %v6057 = vld [vmem:[%s4 + $0x1d8] sm:$0xff]
        %v6058 = vld [vmem:[%s4 + $0x1e0] sm:$0xff]
        %v6059 = vld [vmem:[%s4 + $0x1e8] sm:$0xff]
        %v6060 = vld [vmem:[%s4 + $0x1f0] sm:$0xff]
        %v6061 = vld [vmem:[%s4 + $0x1f8] sm:$0xff]
        %v6062 = vld [vmem:[%s4 + $0x200] sm:$0xff]
        %v6063 = vld [vmem:[%s4 + $0x208] sm:$0xff]
        %v6064 = vld [vmem:[%s4 + $0x210] sm:$0xff]
        %v6065 = vld [vmem:[%s4 + $0x218] sm:$0xff]
        %v6066 = vld [vmem:[%s4 + $0x220] sm:$0xff]
        %v6067 = vld [vmem:[%s4 + $0x228] sm:$0xff]
        %v6068 = vld [vmem:[%s4 + $0x230] sm:$0xff]
        %v6069 = vld [vmem:[%s4 + $0x238] sm:$0xff]
        %v6142 = vunpack.c.l.b16 %v5998
        %v6143 = vunpack.c.h.b16 %v5998
        %v6144 = vunpack.c.l.b16 %v5999
        %v6145 = vunpack.c.h.b16 %v5999
        %v6146 = vunpack.c.l.b16 %v6000
        %v6147 = vunpack.c.h.b16 %v6000
        %v6148 = vunpack.c.l.b16 %v6001
        %v6149 = vunpack.c.h.b16 %v6001
        %v6150 = vunpack.c.l.b16 %v6002
        %v6151 = vunpack.c.h.b16 %v6002
        %v6152 = vunpack.c.l.b16 %v6003
        %v6153 = vunpack.c.h.b16 %v6003
        %v6154 = vunpack.c.l.b16 %v6004
        %v6155 = vunpack.c.h.b16 %v6004
        %v6156 = vunpack.c.l.b16 %v6005
        %v6157 = vunpack.c.h.b16 %v6005
        %v6158 = vunpack.c.l.b16 %v6006
        %v6159 = vunpack.c.h.b16 %v6006
        %v6160 = vunpack.c.l.b16 %v6007
        %v6161 = vunpack.c.h.b16 %v6007
        %v6162 = vunpack.c.l.b16 %v6008
        %v6163 = vunpack.c.h.b16 %v6008
        %v6164 = vunpack.c.l.b16 %v6009
        %v6165 = vunpack.c.h.b16 %v6009
        %v6166 = vunpack.c.l.b16 %v6010
        %v6167 = vunpack.c.h.b16 %v6010
        %v6168 = vunpack.c.l.b16 %v6011
        %v6169 = vunpack.c.h.b16 %v6011
        %v6170 = vunpack.c.l.b16 %v6012
        %v6171 = vunpack.c.h.b16 %v6012
        %v6172 = vunpack.c.l.b16 %v6013
        %v6173 = vunpack.c.h.b16 %v6013
        %v6174 = vunpack.c.l.b16 %v6014
        %v6175 = vunpack.c.h.b16 %v6014
        %v6176 = vunpack.c.l.b16 %v6015
        %v6177 = vunpack.c.h.b16 %v6015
        %v6178 = vunpack.c.l.b16 %v6016
        %v6179 = vunpack.c.h.b16 %v6016
        %v6180 = vunpack.c.l.b16 %v6017
        %v6181 = vunpack.c.h.b16 %v6017
        %v6182 = vunpack.c.l.b16 %v6018
        %v6183 = vunpack.c.h.b16 %v6018
        %v6184 = vunpack.c.l.b16 %v6019
        %v6185 = vunpack.c.h.b16 %v6019
        %v6186 = vunpack.c.l.b16 %v6020
        %v6187 = vunpack.c.h.b16 %v6020
        %v6188 = vunpack.c.l.b16 %v6021
        %v6189 = vunpack.c.h.b16 %v6021
        %v6190 = vunpack.c.l.b16 %v6022
        %v6191 = vunpack.c.h.b16 %v6022
        %v6192 = vunpack.c.l.b16 %v6023
        %v6193 = vunpack.c.h.b16 %v6023
        %v6194 = vunpack.c.l.b16 %v6024
        %v6195 = vunpack.c.h.b16 %v6024
        %v6196 = vunpack.c.l.b16 %v6025
        %v6197 = vunpack.c.h.b16 %v6025
        %v6198 = vunpack.c.l.b16 %v6026
        %v6199 = vunpack.c.h.b16 %v6026
        %v6200 = vunpack.c.l.b16 %v6027
        %v6201 = vunpack.c.h.b16 %v6027
        %v6202 = vunpack.c.l.b16 %v6028
        %v6203 = vunpack.c.h.b16 %v6028
        %v6204 = vunpack.c.l.b16 %v6029
        %v6205 = vunpack.c.h.b16 %v6029
        %v6206 = vunpack.c.l.b16 %v6030
        %v6207 = vunpack.c.h.b16 %v6030
        %v6208 = vunpack.c.l.b16 %v6031
        %v6209 = vunpack.c.h.b16 %v6031
        %v6210 = vunpack.c.l.b16 %v6032
        %v6211 = vunpack.c.h.b16 %v6032
        %v6212 = vunpack.c.l.b16 %v6033
        %v6213 = vunpack.c.h.b16 %v6033
        %v6214 = vunpack.c.l.b16 %v6034
        %v6215 = vunpack.c.h.b16 %v6034
        %v6216 = vunpack.c.l.b16 %v6035
        %v6217 = vunpack.c.h.b16 %v6035
        %v6218 = vunpack.c.l.b16 %v6036
        %v6219 = vunpack.c.h.b16 %v6036
        %v6220 = vunpack.c.l.b16 %v6037
        %v6221 = vunpack.c.h.b16 %v6037
        %v6222 = vunpack.c.l.b16 %v6038
        %v6223 = vunpack.c.h.b16 %v6038
        %v6224 = vunpack.c.l.b16 %v6039
        %v6225 = vunpack.c.h.b16 %v6039
        %v6226 = vunpack.c.l.b16 %v6040
        %v6227 = vunpack.c.h.b16 %v6040
        %v6228 = vunpack.c.l.b16 %v6041
        %v6229 = vunpack.c.h.b16 %v6041
        %v6230 = vunpack.c.l.b16 %v6042
        %v6231 = vunpack.c.h.b16 %v6042
        %v6232 = vunpack.c.l.b16 %v6043
        %v6233 = vunpack.c.h.b16 %v6043
        %v6234 = vunpack.c.l.b16 %v6044
        %v6235 = vunpack.c.h.b16 %v6044
        %v6236 = vunpack.c.l.b16 %v6045
        %v6237 = vunpack.c.h.b16 %v6045
        %v6238 = vunpack.c.l.b16 %v6046
        %v6239 = vunpack.c.h.b16 %v6046
        %v6240 = vunpack.c.l.b16 %v6047
        %v6241 = vunpack.c.h.b16 %v6047
        %v6242 = vunpack.c.l.b16 %v6048
        %v6243 = vunpack.c.h.b16 %v6048
        %v6244 = vunpack.c.l.b16 %v6049
        %v6245 = vunpack.c.h.b16 %v6049
        %v6246 = vunpack.c.l.b16 %v6050
        %v6247 = vunpack.c.h.b16 %v6050
        %v6248 = vunpack.c.l.b16 %v6051
        %v6249 = vunpack.c.h.b16 %v6051
        %v6250 = vunpack.c.l.b16 %v6052
        %v6251 = vunpack.c.h.b16 %v6052
        %v6252 = vunpack.c.l.b16 %v6053
        %v6253 = vunpack.c.h.b16 %v6053
        %v6254 = vunpack.c.l.b16 %v6054
        %v6255 = vunpack.c.h.b16 %v6054
        %v6256 = vunpack.c.l.b16 %v6055
        %v6257 = vunpack.c.h.b16 %v6055
        %v6258 = vunpack.c.l.b16 %v6056
        %v6259 = vunpack.c.h.b16 %v6056
        %v6260 = vunpack.c.l.b16 %v6057
        %v6261 = vunpack.c.h.b16 %v6057
        %v6262 = vunpack.c.l.b16 %v6058
        %v6263 = vunpack.c.h.b16 %v6058
        %v6264 = vunpack.c.l.b16 %v6059
        %v6265 = vunpack.c.h.b16 %v6059
        %v6266 = vunpack.c.l.b16 %v6060
        %v6267 = vunpack.c.h.b16 %v6060
        %v6268 = vunpack.c.l.b16 %v6061
        %v6269 = vunpack.c.h.b16 %v6061
        %v6270 = vunpack.c.l.b16 %v6062
        %v6271 = vunpack.c.h.b16 %v6062
        %v6272 = vunpack.c.l.b16 %v6063
        %v6273 = vunpack.c.h.b16 %v6063
        %v6274 = vunpack.c.l.b16 %v6064
        %v6275 = vunpack.c.h.b16 %v6064
        %v6276 = vunpack.c.l.b16 %v6065
        %v6277 = vunpack.c.h.b16 %v6065
        %v6278 = vunpack.c.l.b16 %v6066
        %v6279 = vunpack.c.h.b16 %v6066
        %v6280 = vunpack.c.l.b16 %v6067
        %v6281 = vunpack.c.h.b16 %v6067
        %v6282 = vunpack.c.l.b16 %v6068
        %v6283 = vunpack.c.h.b16 %v6068
        %v6284 = vunpack.c.l.b16 %v6069
        %v6285 = vunpack.c.h.b16 %v6069
        %v6286 = vpack.c.b16 %v6144, %v6142
        %v6287 = vpack.c.b16 %v6145, %v6143
        %v6288 = vpack.c.b16 %v6148, %v6146
        %v6289 = vpack.c.b16 %v6149, %v6147
        %v6290 = vpack.c.b16 %v6152, %v6150
        %v6291 = vpack.c.b16 %v6153, %v6151
        %v6292 = vpack.c.b16 %v6156, %v6154
        %v6293 = vpack.c.b16 %v6157, %v6155
        %v6294 = vpack.c.b16 %v6160, %v6158
        %v6295 = vpack.c.b16 %v6161, %v6159
        %v6296 = vpack.c.b16 %v6164, %v6162
        %v6297 = vpack.c.b16 %v6165, %v6163
        %v6298 = vpack.c.b16 %v6168, %v6166
        %v6299 = vpack.c.b16 %v6169, %v6167
        %v6300 = vpack.c.b16 %v6172, %v6170
        %v6301 = vpack.c.b16 %v6173, %v6171
        %v6302 = vpack.c.b16 %v6176, %v6174
        %v6303 = vpack.c.b16 %v6177, %v6175
        %v6304 = vpack.c.b16 %v6180, %v6178
        %v6305 = vpack.c.b16 %v6181, %v6179
        %v6306 = vpack.c.b16 %v6184, %v6182
        %v6307 = vpack.c.b16 %v6185, %v6183
        %v6308 = vpack.c.b16 %v6188, %v6186
        %v6309 = vpack.c.b16 %v6189, %v6187
        %v6310 = vpack.c.b16 %v6192, %v6190
        %v6311 = vpack.c.b16 %v6193, %v6191
        %v6312 = vpack.c.b16 %v6196, %v6194
        %v6313 = vpack.c.b16 %v6197, %v6195
        %v6314 = vpack.c.b16 %v6200, %v6198
        %v6315 = vpack.c.b16 %v6201, %v6199
        %v6316 = vpack.c.b16 %v6204, %v6202
        %v6317 = vpack.c.b16 %v6205, %v6203
        %v6318 = vpack.c.b16 %v6208, %v6206
        %v6319 = vpack.c.b16 %v6209, %v6207
        %v6320 = vpack.c.b16 %v6212, %v6210
        %v6321 = vpack.c.b16 %v6213, %v6211
        %v6322 = vpack.c.b16 %v6216, %v6214
        %v6323 = vpack.c.b16 %v6217, %v6215
        %v6324 = vpack.c.b16 %v6220, %v6218
        %v6325 = vpack.c.b16 %v6221, %v6219
        %v6326 = vpack.c.b16 %v6224, %v6222
        %v6327 = vpack.c.b16 %v6225, %v6223
        %v6328 = vpack.c.b16 %v6228, %v6226
        %v6329 = vpack.c.b16 %v6229, %v6227
        %v6330 = vpack.c.b16 %v6232, %v6230
        %v6331 = vpack.c.b16 %v6233, %v6231
        %v6332 = vpack.c.b16 %v6236, %v6234
        %v6333 = vpack.c.b16 %v6237, %v6235
        %v6334 = vpack.c.b16 %v6240, %v6238
        %v6335 = vpack.c.b16 %v6241, %v6239
        %v6336 = vpack.c.b16 %v6244, %v6242
        %v6337 = vpack.c.b16 %v6245, %v6243
        %v6338 = vpack.c.b16 %v6248, %v6246
        %v6339 = vpack.c.b16 %v6249, %v6247
        %v6340 = vpack.c.b16 %v6252, %v6250
        %v6341 = vpack.c.b16 %v6253, %v6251
        %v6342 = vpack.c.b16 %v6256, %v6254
        %v6343 = vpack.c.b16 %v6257, %v6255
        %v6344 = vpack.c.b16 %v6260, %v6258
        %v6345 = vpack.c.b16 %v6261, %v6259
        %v6346 = vpack.c.b16 %v6264, %v6262
        %v6347 = vpack.c.b16 %v6265, %v6263
        %v6348 = vpack.c.b16 %v6268, %v6266
        %v6349 = vpack.c.b16 %v6269, %v6267
        %v6350 = vpack.c.b16 %v6272, %v6270
        %v6351 = vpack.c.b16 %v6273, %v6271
        %v6352 = vpack.c.b16 %v6276, %v6274
        %v6353 = vpack.c.b16 %v6277, %v6275
        %v6354 = vpack.c.b16 %v6280, %v6278
        %v6355 = vpack.c.b16 %v6281, %v6279
        %v6356 = vpack.c.b16 %v6284, %v6282
        %v6357 = vpack.c.b16 %v6285, %v6283
        %6430 = vmatprep.subr.bf16.mxu0 0
        %6431 = vmatpush1.bf16.msra.mxu0 %v5982
        %6432 = vmatprep.subr.bf16.mxu0 0
        %6433 = vmatpush1.bf16.msra.mxu0 %v5983
        %6434 = vmatprep.subr.bf16.mxu0 0
        %6435 = vmatpush1.bf16.msra.mxu0 %v5984
        %6436 = vmatprep.subr.bf16.mxu0 0
        %6437 = vmatpush1.bf16.msra.mxu0 %v5985
        %6438 = vmatprep.subr.bf16.mxu0 0
        %6439 = vmatpush1.bf16.msra.mxu0 %v5986
        %6440 = vmatprep.subr.bf16.mxu0 0
        %6441 = vmatpush1.bf16.msra.mxu0 %v5987
        %6442 = vmatprep.subr.bf16.mxu0 0
        %6443 = vmatpush1.bf16.msra.mxu0 %v5988
        %6444 = vmatprep.subr.bf16.mxu0 0
        %6445 = vmatpush1.bf16.msra.mxu0 %v5989
        %6446 = vmatprep.subr.bf16.mxu0 0
        %6447 = vmatpush1.bf16.msra.mxu0 %v5990
        %6448 = vmatprep.subr.bf16.mxu0 0
        %6449 = vmatpush1.bf16.msra.mxu0 %v5991
        %6450 = vmatprep.subr.bf16.mxu0 0
        %6451 = vmatpush1.bf16.msra.mxu0 %v5992
        %6452 = vmatprep.subr.bf16.mxu0 0
        %6453 = vmatpush1.bf16.msra.mxu0 %v5993
        %6454 = vmatprep.subr.bf16.mxu0 0
        %6455 = vmatpush1.bf16.msra.mxu0 %v5994
        %6456 = vmatprep.subr.bf16.mxu0 0
        %6457 = vmatpush1.bf16.msra.mxu0 %v5995
        %6458 = vmatprep.subr.bf16.mxu0 0
        %6459 = vmatpush1.bf16.msra.mxu0 %v5996
        %6460 = vmatprep.subr.bf16.mxu0 0
        %6461 = vmatpush1.bf16.msra.mxu0 %v5997
        %6462 = vmatprep.mubr.bf16.mxu0 %v6287
        %6463 = vmatmul.mubr.bf16.gmra.mrb[0].mxu0 %v6286
        %v6464 = vpop.f32.mrb[0].mxu0
        %v6465 = vadd.f32 0.0, %v6464
        %v6466 = vpop.f32.mrb[0].mxu0
        %v6467 = vpop.f32.mrb[0].mxu0
        %v6468 = vadd.f32 0.0, %v6467
        %v6469 = vpop.f32.mrb[0].mxu0
        %6470 = vmatprep.mubr.bf16.mxu0 %v6289
        %6471 = vmatmul.mubr.bf16.gmra.mrb[0].mxu0 %v6288
        %v6472 = vpop.f32.mrb[0].mxu0
        %v6473 = vadd.f32 0.0, %v6472
        %v6474 = vpop.f32.mrb[0].mxu0
        %v6475 = vpop.f32.mrb[0].mxu0
        %v6476 = vadd.f32 0.0, %v6475
        %v6477 = vpop.f32.mrb[0].mxu0
        %6478 = vmatprep.mubr.bf16.mxu0 %v6291
        %6479 = vmatmul.mubr.bf16.gmra.mrb[0].mxu0 %v6290
        %v6480 = vpop.f32.mrb[0].mxu0
        %v6481 = vadd.f32 0.0, %v6480
        %v6482 = vpop.f32.mrb[0].mxu0
        %v6483 = vpop.f32.mrb[0].mxu0
        %v6484 = vadd.f32 0.0, %v6483
        %v6485 = vpop.f32.mrb[0].mxu0
        %6486 = vmatprep.mubr.bf16.mxu0 %v6293
        %6487 = vmatmul.mubr.bf16.gmra.mrb[0].mxu0 %v6292
        %v6488 = vpop.f32.mrb[0].mxu0
        %v6489 = vadd.f32 0.0, %v6488
        %v6490 = vpop.f32.mrb[0].mxu0
        %v6491 = vpop.f32.mrb[0].mxu0
        %v6492 = vadd.f32 0.0, %v6491
        %v6493 = vpop.f32.mrb[0].mxu0
        %6494 = vmatprep.mubr.bf16.mxu0 %v6295
        %6495 = vmatmul.mubr.bf16.gmra.mrb[0].mxu0 %v6294
        %v6496 = vpop.f32.mrb[0].mxu0
        %v6497 = vadd.f32 0.0, %v6496
        %v6498 = vpop.f32.mrb[0].mxu0
        %v6499 = vpop.f32.mrb[0].mxu0
        %v6500 = vadd.f32 0.0, %v6499
        %v6501 = vpop.f32.mrb[0].mxu0
        %6502 = vmatprep.mubr.bf16.mxu0 %v6297
        %6503 = vmatmul.mubr.bf16.gmra.mrb[0].mxu0 %v6296
        %v6504 = vpop.f32.mrb[0].mxu0
        %v6505 = vadd.f32 0.0, %v6504
        %v6506 = vpop.f32.mrb[0].mxu0
        %v6507 = vpop.f32.mrb[0].mxu0
        %v6508 = vadd.f32 0.0, %v6507
        %v6509 = vpop.f32.mrb[0].mxu0
        %6510 = vmatprep.mubr.bf16.mxu0 %v6299
        %6511 = vmatmul.mubr.bf16.gmra.mrb[0].mxu0 %v6298
        %v6512 = vpop.f32.mrb[0].mxu0
        %v6513 = vadd.f32 0.0, %v6512
        %v6514 = vpop.f32.mrb[0].mxu0
        %v6515 = vpop.f32.mrb[0].mxu0
        %v6516 = vadd.f32 0.0, %v6515
        %v6517 = vpop.f32.mrb[0].mxu0
        %6518 = vmatprep.mubr.bf16.mxu0 %v6301
        %6519 = vmatmul.mubr.bf16.gmra.mrb[0].mxu0 %v6300
        %v6520 = vpop.f32.mrb[0].mxu0
        %v6521 = vadd.f32 0.0, %v6520
        %v6522 = vpop.f32.mrb[0].mxu0
        %v6523 = vpop.f32.mrb[0].mxu0
        %v6524 = vadd.f32 0.0, %v6523
        %v6525 = vpop.f32.mrb[0].mxu0
        %6526 = vmatprep.mubr.bf16.mxu0 %v6303
        %6527 = vmatmul.mubr.bf16.gmra.mrb[0].mxu0 %v6302
        %v6528 = vpop.f32.mrb[0].mxu0
        %v6529 = vadd.f32 0.0, %v6528
        %v6530 = vpop.f32.mrb[0].mxu0
        %v6531 = vpop.f32.mrb[0].mxu0
        %v6532 = vadd.f32 0.0, %v6531
        %v6533 = vpop.f32.mrb[0].mxu0
        %6534 = vmatprep.mubr.bf16.mxu0 %v6305
        %6535 = vmatmul.mubr.bf16.gmra.mrb[0].mxu0 %v6304
        %v6536 = vpop.f32.mrb[0].mxu0
        %v6537 = vadd.f32 0.0, %v6536
        %v6538 = vpop.f32.mrb[0].mxu0
        %v6539 = vpop.f32.mrb[0].mxu0
        %v6540 = vadd.f32 0.0, %v6539
        %v6541 = vpop.f32.mrb[0].mxu0
        %6542 = vmatprep.mubr.bf16.mxu0 %v6307
        %6543 = vmatmul.mubr.bf16.gmra.mrb[0].mxu0 %v6306
        %v6544 = vpop.f32.mrb[0].mxu0
        %v6545 = vadd.f32 0.0, %v6544
        %v6546 = vpop.f32.mrb[0].mxu0
        %v6547 = vpop.f32.mrb[0].mxu0
        %v6548 = vadd.f32 0.0, %v6547
        %v6549 = vpop.f32.mrb[0].mxu0
        %6550 = vmatprep.mubr.bf16.mxu0 %v6309
        %6551 = vmatmul.mubr.bf16.gmra.mrb[0].mxu0 %v6308
        %v6552 = vpop.f32.mrb[0].mxu0
        %v6553 = vadd.f32 0.0, %v6552
        %v6554 = vpop.f32.mrb[0].mxu0
        %v6555 = vpop.f32.mrb[0].mxu0
        %v6556 = vadd.f32 0.0, %v6555
        %v6557 = vpop.f32.mrb[0].mxu0
        %6558 = vmatprep.mubr.bf16.mxu0 %v6311
        %6559 = vmatmul.mubr.bf16.gmra.mrb[0].mxu0 %v6310
        %v6560 = vpop.f32.mrb[0].mxu0
        %v6561 = vadd.f32 0.0, %v6560
        %v6562 = vpop.f32.mrb[0].mxu0
        %v6563 = vpop.f32.mrb[0].mxu0
        %v6564 = vadd.f32 0.0, %v6563
        %v6565 = vpop.f32.mrb[0].mxu0
        %6566 = vmatprep.mubr.bf16.mxu0 %v6313
        %6567 = vmatmul.mubr.bf16.gmra.mrb[0].mxu0 %v6312
        %v6568 = vpop.f32.mrb[0].mxu0
        %v6569 = vadd.f32 0.0, %v6568
        %v6570 = vpop.f32.mrb[0].mxu0
        %v6571 = vpop.f32.mrb[0].mxu0
        %v6572 = vadd.f32 0.0, %v6571
        %v6573 = vpop.f32.mrb[0].mxu0
        %6574 = vmatprep.mubr.bf16.mxu0 %v6315
        %6575 = vmatmul.mubr.bf16.gmra.mrb[0].mxu0 %v6314
        %v6576 = vpop.f32.mrb[0].mxu0
        %v6577 = vadd.f32 0.0, %v6576
        %v6578 = vpop.f32.mrb[0].mxu0
        %v6579 = vpop.f32.mrb[0].mxu0
        %v6580 = vadd.f32 0.0, %v6579
        %v6581 = vpop.f32.mrb[0].mxu0
        %6582 = vmatprep.mubr.bf16.mxu0 %v6317
        %6583 = vmatmul.mubr.bf16.gmra.mrb[0].mxu0 %v6316
        %v6584 = vpop.f32.mrb[0].mxu0
        %v6585 = vadd.f32 0.0, %v6584
        %v6586 = vpop.f32.mrb[0].mxu0
        %v6587 = vpop.f32.mrb[0].mxu0
        %v6588 = vadd.f32 0.0, %v6587
        %v6589 = vpop.f32.mrb[0].mxu0
        %6590 = vmatprep.mubr.bf16.mxu0 %v6319
        %6591 = vmatmul.mubr.bf16.gmra.mrb[0].mxu0 %v6318
        %v6592 = vpop.f32.mrb[0].mxu0
        %v6593 = vadd.f32 0.0, %v6592
        %v6594 = vpop.f32.mrb[0].mxu0
        %v6595 = vpop.f32.mrb[0].mxu0
        %v6596 = vadd.f32 0.0, %v6595
        %v6597 = vpop.f32.mrb[0].mxu0
        %6598 = vmatprep.mubr.bf16.mxu0 %v6321
        %6599 = vmatmul.mubr.bf16.gmra.mrb[0].mxu0 %v6320
        %v6600 = vpop.f32.mrb[0].mxu0
        %v6601 = vadd.f32 0.0, %v6600
        %v6602 = vpop.f32.mrb[0].mxu0
        %v6603 = vpop.f32.mrb[0].mxu0
        %v6604 = vadd.f32 0.0, %v6603
        %v6605 = vpop.f32.mrb[0].mxu0
        %6606 = vmatprep.mubr.bf16.mxu0 %v6323
        %6607 = vmatmul.mubr.bf16.gmra.mrb[0].mxu0 %v6322
        %v6608 = vpop.f32.mrb[0].mxu0
        %v6609 = vadd.f32 0.0, %v6608
        %v6610 = vpop.f32.mrb[0].mxu0
        %v6611 = vpop.f32.mrb[0].mxu0
        %v6612 = vadd.f32 0.0, %v6611
        %v6613 = vpop.f32.mrb[0].mxu0
        %6614 = vmatprep.mubr.bf16.mxu0 %v6325
        %6615 = vmatmul.mubr.bf16.gmra.mrb[0].mxu0 %v6324
        %v6616 = vpop.f32.mrb[0].mxu0
        %v6617 = vadd.f32 0.0, %v6616
        %v6618 = vpop.f32.mrb[0].mxu0
        %v6619 = vpop.f32.mrb[0].mxu0
        %v6620 = vadd.f32 0.0, %v6619
        %v6621 = vpop.f32.mrb[0].mxu0
        %6622 = vmatprep.mubr.bf16.mxu0 %v6327
        %6623 = vmatmul.mubr.bf16.gmra.mrb[0].mxu0 %v6326
        %v6624 = vpop.f32.mrb[0].mxu0
        %v6625 = vadd.f32 0.0, %v6624
        %v6626 = vpop.f32.mrb[0].mxu0
        %v6627 = vpop.f32.mrb[0].mxu0
        %v6628 = vadd.f32 0.0, %v6627
        %v6629 = vpop.f32.mrb[0].mxu0
        %6630 = vmatprep.mubr.bf16.mxu0 %v6329
        %6631 = vmatmul.mubr.bf16.gmra.mrb[0].mxu0 %v6328
        %v6632 = vpop.f32.mrb[0].mxu0
        %v6633 = vadd.f32 0.0, %v6632
        %v6634 = vpop.f32.mrb[0].mxu0
        %v6635 = vpop.f32.mrb[0].mxu0
        %v6636 = vadd.f32 0.0, %v6635
        %v6637 = vpop.f32.mrb[0].mxu0
        %6638 = vmatprep.mubr.bf16.mxu0 %v6331
        %6639 = vmatmul.mubr.bf16.gmra.mrb[0].mxu0 %v6330
        %v6640 = vpop.f32.mrb[0].mxu0
        %v6641 = vadd.f32 0.0, %v6640
        %v6642 = vpop.f32.mrb[0].mxu0
        %v6643 = vpop.f32.mrb[0].mxu0
        %v6644 = vadd.f32 0.0, %v6643
        %v6645 = vpop.f32.mrb[0].mxu0
        %6646 = vmatprep.mubr.bf16.mxu0 %v6333
        %6647 = vmatmul.mubr.bf16.gmra.mrb[0].mxu0 %v6332
        %v6648 = vpop.f32.mrb[0].mxu0
        %v6649 = vadd.f32 0.0, %v6648
        %v6650 = vpop.f32.mrb[0].mxu0
        %v6651 = vpop.f32.mrb[0].mxu0
        %v6652 = vadd.f32 0.0, %v6651
        %v6653 = vpop.f32.mrb[0].mxu0
        %6654 = vmatprep.mubr.bf16.mxu0 %v6335
        %6655 = vmatmul.mubr.bf16.gmra.mrb[0].mxu0 %v6334
        %v6656 = vpop.f32.mrb[0].mxu0
        %v6657 = vadd.f32 0.0, %v6656
        %v6658 = vpop.f32.mrb[0].mxu0
        %v6659 = vpop.f32.mrb[0].mxu0
        %v6660 = vadd.f32 0.0, %v6659
        %v6661 = vpop.f32.mrb[0].mxu0
        %6662 = vmatprep.mubr.bf16.mxu0 %v6337
        %6663 = vmatmul.mubr.bf16.gmra.mrb[0].mxu0 %v6336
        %v6664 = vpop.f32.mrb[0].mxu0
        %v6665 = vadd.f32 0.0, %v6664
        %v6666 = vpop.f32.mrb[0].mxu0
        %v6667 = vpop.f32.mrb[0].mxu0
        %v6668 = vadd.f32 0.0, %v6667
        %v6669 = vpop.f32.mrb[0].mxu0
        %6670 = vmatprep.mubr.bf16.mxu0 %v6339
        %6671 = vmatmul.mubr.bf16.gmra.mrb[0].mxu0 %v6338
        %v6672 = vpop.f32.mrb[0].mxu0
        %v6673 = vadd.f32 0.0, %v6672
        %v6674 = vpop.f32.mrb[0].mxu0
        %v6675 = vpop.f32.mrb[0].mxu0
        %v6676 = vadd.f32 0.0, %v6675
        %v6677 = vpop.f32.mrb[0].mxu0
        %6678 = vmatprep.mubr.bf16.mxu0 %v6341
        %6679 = vmatmul.mubr.bf16.gmra.mrb[0].mxu0 %v6340
        %v6680 = vpop.f32.mrb[0].mxu0
        %v6681 = vadd.f32 0.0, %v6680
        %v6682 = vpop.f32.mrb[0].mxu0
        %v6683 = vpop.f32.mrb[0].mxu0
        %v6684 = vadd.f32 0.0, %v6683
        %v6685 = vpop.f32.mrb[0].mxu0
        %6686 = vmatprep.mubr.bf16.mxu0 %v6343
        %6687 = vmatmul.mubr.bf16.gmra.mrb[0].mxu0 %v6342
        %v6688 = vpop.f32.mrb[0].mxu0
        %v6689 = vadd.f32 0.0, %v6688
        %v6690 = vpop.f32.mrb[0].mxu0
        %v6691 = vpop.f32.mrb[0].mxu0
        %v6692 = vadd.f32 0.0, %v6691
        %v6693 = vpop.f32.mrb[0].mxu0
        %6694 = vmatprep.mubr.bf16.mxu0 %v6345
        %6695 = vmatmul.mubr.bf16.gmra.mrb[0].mxu0 %v6344
        %v6696 = vpop.f32.mrb[0].mxu0
        %v6697 = vadd.f32 0.0, %v6696
        %v6698 = vpop.f32.mrb[0].mxu0
        %v6699 = vpop.f32.mrb[0].mxu0
        %v6700 = vadd.f32 0.0, %v6699
        %v6701 = vpop.f32.mrb[0].mxu0
        %6702 = vmatprep.mubr.bf16.mxu0 %v6347
        %6703 = vmatmul.mubr.bf16.gmra.mrb[0].mxu0 %v6346
        %v6704 = vpop.f32.mrb[0].mxu0
        %v6705 = vadd.f32 0.0, %v6704
        %v6706 = vpop.f32.mrb[0].mxu0
        %v6707 = vpop.f32.mrb[0].mxu0
        %v6708 = vadd.f32 0.0, %v6707
        %v6709 = vpop.f32.mrb[0].mxu0
        %6710 = vmatprep.mubr.bf16.mxu0 %v6349
        %6711 = vmatmul.mubr.bf16.gmra.mrb[0].mxu0 %v6348
        %v6712 = vpop.f32.mrb[0].mxu0
        %v6713 = vadd.f32 0.0, %v6712
        %v6714 = vpop.f32.mrb[0].mxu0
        %v6715 = vpop.f32.mrb[0].mxu0
        %v6716 = vadd.f32 0.0, %v6715
        %v6717 = vpop.f32.mrb[0].mxu0
        %6718 = vmatprep.mubr.bf16.mxu0 %v6351
        %6719 = vmatmul.mubr.bf16.gmra.mrb[0].mxu0 %v6350
        %v6720 = vpop.f32.mrb[0].mxu0
        %v6721 = vadd.f32 0.0, %v6720
        %v6722 = vpop.f32.mrb[0].mxu0
        %v6723 = vpop.f32.mrb[0].mxu0
        %v6724 = vadd.f32 0.0, %v6723
        %v6725 = vpop.f32.mrb[0].mxu0
        %6726 = vmatprep.mubr.bf16.mxu0 %v6353
        %6727 = vmatmul.mubr.bf16.gmra.mrb[0].mxu0 %v6352
        %v6728 = vpop.f32.mrb[0].mxu0
        %v6729 = vadd.f32 0.0, %v6728
        %v6730 = vpop.f32.mrb[0].mxu0
        %v6731 = vpop.f32.mrb[0].mxu0
        %v6732 = vadd.f32 0.0, %v6731
        %v6733 = vpop.f32.mrb[0].mxu0
        %6734 = vmatprep.mubr.bf16.mxu0 %v6355
        %6735 = vmatmul.mubr.bf16.gmra.mrb[0].mxu0 %v6354
        %v6736 = vpop.f32.mrb[0].mxu0
        %v6737 = vadd.f32 0.0, %v6736
        %v6738 = vpop.f32.mrb[0].mxu0
        %v6739 = vpop.f32.mrb[0].mxu0
        %v6740 = vadd.f32 0.0, %v6739
        %v6741 = vpop.f32.mrb[0].mxu0
        %6742 = vmatprep.mubr.bf16.mxu0 %v6357
        %6743 = vmatmul.mubr.bf16.gmra.mrb[0].mxu0 %v6356
        %v6744 = vpop.f32.mrb[0].mxu0
        %v6745 = vadd.f32 0.0, %v6744
        %v6746 = vpop.f32.mrb[0].mxu0
        %v6747 = vpop.f32.mrb[0].mxu0
        %v6748 = vadd.f32 0.0, %v6747
        %v6749 = vpop.f32.mrb[0].mxu0
        %6750 = vdwg.mxu0
        %v6751 = vpack.c.bf16 %v6468, %v6465
        %v6752 = vpack.c.bf16 %v6476, %v6473
        %v6753 = vpack.c.bf16 %v6484, %v6481
        %v6754 = vpack.c.bf16 %v6492, %v6489
        %v6755 = vpack.c.bf16 %v6500, %v6497
        %v6756 = vpack.c.bf16 %v6508, %v6505
        %v6757 = vpack.c.bf16 %v6516, %v6513
        %v6758 = vpack.c.bf16 %v6524, %v6521
        %v6759 = vpack.c.bf16 %v6532, %v6529
        %v6760 = vpack.c.bf16 %v6540, %v6537
        %v6761 = vpack.c.bf16 %v6548, %v6545
        %v6762 = vpack.c.bf16 %v6556, %v6553
        %v6763 = vpack.c.bf16 %v6564, %v6561
        %v6764 = vpack.c.bf16 %v6572, %v6569
        %v6765 = vpack.c.bf16 %v6580, %v6577
        %v6766 = vpack.c.bf16 %v6588, %v6585
        %v6767 = vpack.c.bf16 %v6596, %v6593
        %v6768 = vpack.c.bf16 %v6604, %v6601
        %v6769 = vpack.c.bf16 %v6612, %v6609
        %v6770 = vpack.c.bf16 %v6620, %v6617
        %v6771 = vpack.c.bf16 %v6628, %v6625
        %v6772 = vpack.c.bf16 %v6636, %v6633
        %v6773 = vpack.c.bf16 %v6644, %v6641
        %v6774 = vpack.c.bf16 %v6652, %v6649
        %v6775 = vpack.c.bf16 %v6660, %v6657
        %v6776 = vpack.c.bf16 %v6668, %v6665
        %v6777 = vpack.c.bf16 %v6676, %v6673
        %v6778 = vpack.c.bf16 %v6684, %v6681
        %v6779 = vpack.c.bf16 %v6692, %v6689
        %v6780 = vpack.c.bf16 %v6700, %v6697
        %v6781 = vpack.c.bf16 %v6708, %v6705
        %v6782 = vpack.c.bf16 %v6716, %v6713
        %v6783 = vpack.c.bf16 %v6724, %v6721
        %v6784 = vpack.c.bf16 %v6732, %v6729
        %v6785 = vpack.c.bf16 %v6740, %v6737
        %v6786 = vpack.c.bf16 %v6748, %v6745
        %v6787 = vld [vmem:[%s5] sm:$0xf]
        %v6788 = vld [vmem:[%s5 + $0x4] sm:$0xf]
        %v6789 = vld [vmem:[%s5 + $0x8] sm:$0xf]
        %v6790 = vld [vmem:[%s5 + $0xc] sm:$0xf]
        %v6791 = vld [vmem:[%s5 + $0x10] sm:$0xf]
        %v6792 = vld [vmem:[%s5 + $0x14] sm:$0xf]
        %v6793 = vld [vmem:[%s5 + $0x18] sm:$0xf]
        %v6794 = vld [vmem:[%s5 + $0x1c] sm:$0xf]
        %v6795 = vld [vmem:[%s5 + $0x20] sm:$0xf]
        %v6796 = vld [vmem:[%s5 + $0x24] sm:$0xf]
        %v6797 = vld [vmem:[%s5 + $0x28] sm:$0xf]
        %v6798 = vld [vmem:[%s5 + $0x2c] sm:$0xf]
        %v6799 = vld [vmem:[%s5 + $0x30] sm:$0xf]
        %v6800 = vld [vmem:[%s5 + $0x34] sm:$0xf]
        %v6801 = vld [vmem:[%s5 + $0x38] sm:$0xf]
        %v6802 = vld [vmem:[%s5 + $0x3c] sm:$0xf]
        %s6803 = scalar_lea.vmem %s5, 64
        %v6804 = vld [vmem:[%s6803] sm:$0xf]
        %v6805 = vld [vmem:[%s6803 + $0x4] sm:$0xf]
        %v6806 = vld [vmem:[%s6803 + $0x8] sm:$0xf]
        %v6807 = vld [vmem:[%s6803 + $0xc] sm:$0xf]
        %v6808 = vld [vmem:[%s6803 + $0x10] sm:$0xf]
        %v6809 = vld [vmem:[%s6803 + $0x14] sm:$0xf]
        %v6810 = vld [vmem:[%s6803 + $0x18] sm:$0xf]
        %v6811 = vld [vmem:[%s6803 + $0x1c] sm:$0xf]
        %v6812 = vld [vmem:[%s6803 + $0x20] sm:$0xf]
        %v6813 = vld [vmem:[%s6803 + $0x24] sm:$0xf]
        %v6814 = vld [vmem:[%s6803 + $0x28] sm:$0xf]
        %v6815 = vld [vmem:[%s6803 + $0x2c] sm:$0xf]
        %v6816 = vld [vmem:[%s6803 + $0x30] sm:$0xf]
        %v6817 = vld [vmem:[%s6803 + $0x34] sm:$0xf]
        %v6818 = vld [vmem:[%s6803 + $0x38] sm:$0xf]
        %v6819 = vld [vmem:[%s6803 + $0x3c] sm:$0xf]
        %v6836 = vunpack.c.l.b16 %v6804
        %v6837 = vunpack.c.l.b16 %v6805
        %v6838 = vunpack.c.l.b16 %v6806
        %v6839 = vunpack.c.l.b16 %v6807
        %v6840 = vunpack.c.l.b16 %v6808
        %v6841 = vunpack.c.l.b16 %v6809
        %v6842 = vunpack.c.l.b16 %v6810
        %v6843 = vunpack.c.l.b16 %v6811
        %v6844 = vunpack.c.l.b16 %v6812
        %v6845 = vunpack.c.l.b16 %v6813
        %v6846 = vunpack.c.l.b16 %v6814
        %v6847 = vunpack.c.l.b16 %v6815
        %v6848 = vunpack.c.l.b16 %v6816
        %v6849 = vunpack.c.l.b16 %v6817
        %v6850 = vunpack.c.l.b16 %v6818
        %v6851 = vunpack.c.l.b16 %v6819
        %v6852 = vpack.c.b16 %v6837, %v6836
        %v6853 = vpack.c.b16 %v6839, %v6838
        %v6854 = vpack.c.b16 %v6841, %v6840
        %v6855 = vpack.c.b16 %v6843, %v6842
        %v6856 = vpack.c.b16 %v6845, %v6844
        %v6857 = vpack.c.b16 %v6847, %v6846
        %v6858 = vpack.c.b16 %v6849, %v6848
        %v6859 = vpack.c.b16 %v6851, %v6850
        %6868 = vmatprep.subr.bf16.mxu0 0
        %6869 = vmatpush1.bf16.msra.mxu0 %v6852
        %6870 = vmatprep.subr.bf16.mxu0 0
        %6871 = vmatpush1.bf16.msra.mxu0 %v6853
        %6872 = vmatprep.subr.bf16.mxu0 0
        %6873 = vmatpush1.bf16.msra.mxu0 %v6854
        %6874 = vmatprep.subr.bf16.mxu0 0
        %6875 = vmatpush1.bf16.msra.mxu0 %v6855
        %6876 = vmatprep.subr.bf16.mxu0 0
        %6877 = vmatpush1.bf16.msra.mxu0 %v6856
        %6878 = vmatprep.subr.bf16.mxu0 0
        %6879 = vmatpush1.bf16.msra.mxu0 %v6857
        %6880 = vmatprep.subr.bf16.mxu0 0
        %6881 = vmatpush1.bf16.msra.mxu0 %v6858
        %6882 = vmatprep.subr.bf16.mxu0 0
        %6883 = vmatpush1.bf16.msra.mxu0 %v6859
        %6884 = vmatprep.subr.bf16.mxu0 0
        %6885 = vmatpush1.bf16.msra.mxu0 0
        %6886 = vmatprep.subr.bf16.mxu0 0
        %6887 = vmatpush1.bf16.msra.mxu0 0
        %6888 = vmatprep.subr.bf16.mxu0 0
        %6889 = vmatpush1.bf16.msra.mxu0 0
        %6890 = vmatprep.subr.bf16.mxu0 0
        %6891 = vmatpush1.bf16.msra.mxu0 0
        %6892 = vmatprep.subr.bf16.mxu0 0
        %6893 = vmatpush1.bf16.msra.mxu0 0
        %6894 = vmatprep.subr.bf16.mxu0 0
        %6895 = vmatpush1.bf16.msra.mxu0 0
        %6896 = vmatprep.subr.bf16.mxu0 0
        %6897 = vmatpush1.bf16.msra.mxu0 0
        %6898 = vmatprep.subr.bf16.mxu0 0
        %6899 = vmatpush1.bf16.msra.mxu0 0
        %6900 = vmatprep.mubr.bf16.mxu0 0
        %6901 = vmatmul.mubr.bf16.gmra.mrb[0].mxu0 %v6755
        %v6902 = vpop.f32.mrb[0].mxu0
        %v6903 = vadd.f32 0.0, %v6902
        %v6904 = vpop.f32.mrb[0].mxu0
        %v6905 = vpop.f32.mrb[0].mxu0
        %v6906 = vadd.f32 0.0, %v6905
        %v6907 = vpop.f32.mrb[0].mxu0
        %6908 = vmatprep.mubr.bf16.mxu0 0
        %6909 = vmatmul.mubr.bf16.gmra.mrb[0].mxu0 %v6756
        %v6910 = vpop.f32.mrb[0].mxu0
        %v6911 = vadd.f32 0.0, %v6910
        %v6912 = vpop.f32.mrb[0].mxu0
        %v6913 = vpop.f32.mrb[0].mxu0
        %v6914 = vadd.f32 0.0, %v6913
        %v6915 = vpop.f32.mrb[0].mxu0
        %6916 = vmatprep.mubr.bf16.mxu0 0
        %6917 = vmatmul.mubr.bf16.gmra.mrb[0].mxu0 %v6757
        %v6918 = vpop.f32.mrb[0].mxu0
        %v6919 = vadd.f32 0.0, %v6918
        %v6920 = vpop.f32.mrb[0].mxu0
        %v6921 = vpop.f32.mrb[0].mxu0
        %v6922 = vadd.f32 0.0, %v6921
        %v6923 = vpop.f32.mrb[0].mxu0
        %6924 = vmatprep.mubr.bf16.mxu0 0
        %6925 = vmatmul.mubr.bf16.gmra.mrb[0].mxu0 %v6758
        %v6926 = vpop.f32.mrb[0].mxu0
        %v6927 = vadd.f32 0.0, %v6926
        %v6928 = vpop.f32.mrb[0].mxu0
        %v6929 = vpop.f32.mrb[0].mxu0
        %v6930 = vadd.f32 0.0, %v6929
        %v6931 = vpop.f32.mrb[0].mxu0
        %6932 = vdwg.mxu0
        %v6949 = vunpack.c.l.b16 %v6787
        %v6950 = vunpack.c.l.b16 %v6788
        %v6951 = vunpack.c.l.b16 %v6789
        %v6952 = vunpack.c.l.b16 %v6790
        %v6953 = vunpack.c.l.b16 %v6791
        %v6954 = vunpack.c.l.b16 %v6792
        %v6955 = vunpack.c.l.b16 %v6793
        %v6956 = vunpack.c.l.b16 %v6794
        %v6957 = vunpack.c.l.b16 %v6795
        %v6958 = vunpack.c.l.b16 %v6796
        %v6959 = vunpack.c.l.b16 %v6797
        %v6960 = vunpack.c.l.b16 %v6798
        %v6961 = vunpack.c.l.b16 %v6799
        %v6962 = vunpack.c.l.b16 %v6800
        %v6963 = vunpack.c.l.b16 %v6801
        %v6964 = vunpack.c.l.b16 %v6802
        %v6965 = vpack.c.b16 %v6950, %v6949
        %v6966 = vpack.c.b16 %v6952, %v6951
        %v6967 = vpack.c.b16 %v6954, %v6953
        %v6968 = vpack.c.b16 %v6956, %v6955
        %v6969 = vpack.c.b16 %v6958, %v6957
        %v6970 = vpack.c.b16 %v6960, %v6959
        %v6971 = vpack.c.b16 %v6962, %v6961
        %v6972 = vpack.c.b16 %v6964, %v6963
        %6981 = vmatprep.subr.bf16.mxu0 0
        %6982 = vmatpush1.bf16.msra.mxu0 %v6965
        %6983 = vmatprep.subr.bf16.mxu0 0
        %6984 = vmatpush1.bf16.msra.mxu0 %v6966
        %6985 = vmatprep.subr.bf16.mxu0 0
        %6986 = vmatpush1.bf16.msra.mxu0 %v6967
        %6987 = vmatprep.subr.bf16.mxu0 0
        %6988 = vmatpush1.bf16.msra.mxu0 %v6968
        %6989 = vmatprep.subr.bf16.mxu0 0
        %6990 = vmatpush1.bf16.msra.mxu0 %v6969
        %6991 = vmatprep.subr.bf16.mxu0 0
        %6992 = vmatpush1.bf16.msra.mxu0 %v6970
        %6993 = vmatprep.subr.bf16.mxu0 0
        %6994 = vmatpush1.bf16.msra.mxu0 %v6971
        %6995 = vmatprep.subr.bf16.mxu0 0
        %6996 = vmatpush1.bf16.msra.mxu0 %v6972
        %6997 = vmatprep.subr.bf16.mxu0 0
        %6998 = vmatpush1.bf16.msra.mxu0 0
        %6999 = vmatprep.subr.bf16.mxu0 0
        %7000 = vmatpush1.bf16.msra.mxu0 0
        %7001 = vmatprep.subr.bf16.mxu0 0
        %7002 = vmatpush1.bf16.msra.mxu0 0
        %7003 = vmatprep.subr.bf16.mxu0 0
        %7004 = vmatpush1.bf16.msra.mxu0 0
        %7005 = vmatprep.subr.bf16.mxu0 0
        %7006 = vmatpush1.bf16.msra.mxu0 0
        %7007 = vmatprep.subr.bf16.mxu0 0
        %7008 = vmatpush1.bf16.msra.mxu0 0
        %7009 = vmatprep.subr.bf16.mxu0 0
        %7010 = vmatpush1.bf16.msra.mxu0 0
        %7011 = vmatprep.subr.bf16.mxu0 0
        %7012 = vmatpush1.bf16.msra.mxu0 0
        %7013 = vmatprep.mubr.bf16.mxu0 0
        %7014 = vmatmul.mubr.bf16.gmra.mrb[0].mxu0 %v6751
        %v7015 = vpop.f32.mrb[0].mxu0
        %v7016 = vadd.f32 %v6903, %v7015
        %v7017 = vpop.f32.mrb[0].mxu0
        %v7018 = vpop.f32.mrb[0].mxu0
        %v7019 = vadd.f32 %v6906, %v7018
        %v7020 = vpop.f32.mrb[0].mxu0
        %7021 = vmatprep.mubr.bf16.mxu0 0
        %7022 = vmatmul.mubr.bf16.gmra.mrb[0].mxu0 %v6752
        %v7023 = vpop.f32.mrb[0].mxu0
        %v7024 = vadd.f32 %v6911, %v7023
        %v7025 = vpop.f32.mrb[0].mxu0
        %v7026 = vpop.f32.mrb[0].mxu0
        %v7027 = vadd.f32 %v6914, %v7026
        %v7028 = vpop.f32.mrb[0].mxu0
        %7029 = vmatprep.mubr.bf16.mxu0 0
        %7030 = vmatmul.mubr.bf16.gmra.mrb[0].mxu0 %v6753
        %v7031 = vpop.f32.mrb[0].mxu0
        %v7032 = vadd.f32 %v6919, %v7031
        %v7033 = vpop.f32.mrb[0].mxu0
        %v7034 = vpop.f32.mrb[0].mxu0
        %v7035 = vadd.f32 %v6922, %v7034
        %v7036 = vpop.f32.mrb[0].mxu0
        %7037 = vmatprep.mubr.bf16.mxu0 0
        %7038 = vmatmul.mubr.bf16.gmra.mrb[0].mxu0 %v6754
        %v7039 = vpop.f32.mrb[0].mxu0
        %v7040 = vadd.f32 %v6927, %v7039
        %v7041 = vpop.f32.mrb[0].mxu0
        %v7042 = vpop.f32.mrb[0].mxu0
        %v7043 = vadd.f32 %v6930, %v7042
        %v7044 = vpop.f32.mrb[0].mxu0
        %7045 = vdwg.mxu0
        %s7046 = scalar_lea.vmem %s5, 128
        %v7047 = vld [vmem:[%s7046] sm:$0xf]
        %v7048 = vld [vmem:[%s7046 + $0x4] sm:$0xf]
        %v7049 = vld [vmem:[%s7046 + $0x8] sm:$0xf]
        %v7050 = vld [vmem:[%s7046 + $0xc] sm:$0xf]
        %v7051 = vld [vmem:[%s7046 + $0x10] sm:$0xf]
        %v7052 = vld [vmem:[%s7046 + $0x14] sm:$0xf]
        %v7053 = vld [vmem:[%s7046 + $0x18] sm:$0xf]
        %v7054 = vld [vmem:[%s7046 + $0x1c] sm:$0xf]
        %v7055 = vld [vmem:[%s7046 + $0x20] sm:$0xf]
        %v7056 = vld [vmem:[%s7046 + $0x24] sm:$0xf]
        %v7057 = vld [vmem:[%s7046 + $0x28] sm:$0xf]
        %v7058 = vld [vmem:[%s7046 + $0x2c] sm:$0xf]
        %v7059 = vld [vmem:[%s7046 + $0x30] sm:$0xf]
        %v7060 = vld [vmem:[%s7046 + $0x34] sm:$0xf]
        %v7061 = vld [vmem:[%s7046 + $0x38] sm:$0xf]
        %v7062 = vld [vmem:[%s7046 + $0x3c] sm:$0xf]
        %v7079 = vunpack.c.l.b16 %v7047
        %v7080 = vunpack.c.l.b16 %v7048
        %v7081 = vunpack.c.l.b16 %v7049
        %v7082 = vunpack.c.l.b16 %v7050
        %v7083 = vunpack.c.l.b16 %v7051
        %v7084 = vunpack.c.l.b16 %v7052
        %v7085 = vunpack.c.l.b16 %v7053
        %v7086 = vunpack.c.l.b16 %v7054
        %v7087 = vunpack.c.l.b16 %v7055
        %v7088 = vunpack.c.l.b16 %v7056
        %v7089 = vunpack.c.l.b16 %v7057
        %v7090 = vunpack.c.l.b16 %v7058
        %v7091 = vunpack.c.l.b16 %v7059
        %v7092 = vunpack.c.l.b16 %v7060
        %v7093 = vunpack.c.l.b16 %v7061
        %v7094 = vunpack.c.l.b16 %v7062
        %v7095 = vpack.c.b16 %v7080, %v7079
        %v7096 = vpack.c.b16 %v7082, %v7081
        %v7097 = vpack.c.b16 %v7084, %v7083
        %v7098 = vpack.c.b16 %v7086, %v7085
        %v7099 = vpack.c.b16 %v7088, %v7087
        %v7100 = vpack.c.b16 %v7090, %v7089
        %v7101 = vpack.c.b16 %v7092, %v7091
        %v7102 = vpack.c.b16 %v7094, %v7093
        %7111 = vmatprep.subr.bf16.mxu0 0
        %7112 = vmatpush1.bf16.msra.mxu0 %v7095
        %7113 = vmatprep.subr.bf16.mxu0 0
        %7114 = vmatpush1.bf16.msra.mxu0 %v7096
        %7115 = vmatprep.subr.bf16.mxu0 0
        %7116 = vmatpush1.bf16.msra.mxu0 %v7097
        %7117 = vmatprep.subr.bf16.mxu0 0
        %7118 = vmatpush1.bf16.msra.mxu0 %v7098
        %7119 = vmatprep.subr.bf16.mxu0 0
        %7120 = vmatpush1.bf16.msra.mxu0 %v7099
        %7121 = vmatprep.subr.bf16.mxu0 0
        %7122 = vmatpush1.bf16.msra.mxu0 %v7100
        %7123 = vmatprep.subr.bf16.mxu0 0
        %7124 = vmatpush1.bf16.msra.mxu0 %v7101
        %7125 = vmatprep.subr.bf16.mxu0 0
        %7126 = vmatpush1.bf16.msra.mxu0 %v7102
        %7127 = vmatprep.subr.bf16.mxu0 0
        %7128 = vmatpush1.bf16.msra.mxu0 0
        %7129 = vmatprep.subr.bf16.mxu0 0
        %7130 = vmatpush1.bf16.msra.mxu0 0
        %7131 = vmatprep.subr.bf16.mxu0 0
        %7132 = vmatpush1.bf16.msra.mxu0 0
        %7133 = vmatprep.subr.bf16.mxu0 0
        %7134 = vmatpush1.bf16.msra.mxu0 0
        %7135 = vmatprep.subr.bf16.mxu0 0
        %7136 = vmatpush1.bf16.msra.mxu0 0
        %7137 = vmatprep.subr.bf16.mxu0 0
        %7138 = vmatpush1.bf16.msra.mxu0 0
        %7139 = vmatprep.subr.bf16.mxu0 0
        %7140 = vmatpush1.bf16.msra.mxu0 0
        %7141 = vmatprep.subr.bf16.mxu0 0
        %7142 = vmatpush1.bf16.msra.mxu0 0
        %7143 = vmatprep.mubr.bf16.mxu0 0
        %7144 = vmatmul.mubr.bf16.gmra.mrb[0].mxu0 %v6759
        %v7145 = vpop.f32.mrb[0].mxu0
        %v7146 = vadd.f32 0.0, %v7145
        %v7147 = vpop.f32.mrb[0].mxu0
        %v7148 = vpop.f32.mrb[0].mxu0
        %v7149 = vadd.f32 0.0, %v7148
        %v7150 = vpop.f32.mrb[0].mxu0
        %7151 = vmatprep.mubr.bf16.mxu0 0
        %7152 = vmatmul.mubr.bf16.gmra.mrb[0].mxu0 %v6760
        %v7153 = vpop.f32.mrb[0].mxu0
        %v7154 = vadd.f32 0.0, %v7153
        %v7155 = vpop.f32.mrb[0].mxu0
        %v7156 = vpop.f32.mrb[0].mxu0
        %v7157 = vadd.f32 0.0, %v7156
        %v7158 = vpop.f32.mrb[0].mxu0
        %7159 = vmatprep.mubr.bf16.mxu0 0
        %7160 = vmatmul.mubr.bf16.gmra.mrb[0].mxu0 %v6761
        %v7161 = vpop.f32.mrb[0].mxu0
        %v7162 = vadd.f32 0.0, %v7161
        %v7163 = vpop.f32.mrb[0].mxu0
        %v7164 = vpop.f32.mrb[0].mxu0
        %v7165 = vadd.f32 0.0, %v7164
        %v7166 = vpop.f32.mrb[0].mxu0
        %7167 = vmatprep.mubr.bf16.mxu0 0
        %7168 = vmatmul.mubr.bf16.gmra.mrb[0].mxu0 %v6762
        %v7169 = vpop.f32.mrb[0].mxu0
        %v7170 = vadd.f32 0.0, %v7169
        %v7171 = vpop.f32.mrb[0].mxu0
        %v7172 = vpop.f32.mrb[0].mxu0
        %v7173 = vadd.f32 0.0, %v7172
        %v7174 = vpop.f32.mrb[0].mxu0
        %7175 = vdwg.mxu0
        %v7176 = vadd.f32 %v7016, %v7146
        %v7177 = vadd.f32 %v7019, %v7149
        %v7178 = vadd.f32 %v7024, %v7154
        %v7179 = vadd.f32 %v7027, %v7157
        %v7180 = vadd.f32 %v7032, %v7162
        %v7181 = vadd.f32 %v7035, %v7165
        %v7182 = vadd.f32 %v7040, %v7170
        %v7183 = vadd.f32 %v7043, %v7173
        %s7184 = scalar_lea.vmem %s5, 192
        %v7185 = vld [vmem:[%s7184] sm:$0xf]
        %v7186 = vld [vmem:[%s7184 + $0x4] sm:$0xf]
        %v7187 = vld [vmem:[%s7184 + $0x8] sm:$0xf]
        %v7188 = vld [vmem:[%s7184 + $0xc] sm:$0xf]
        %v7189 = vld [vmem:[%s7184 + $0x10] sm:$0xf]
        %v7190 = vld [vmem:[%s7184 + $0x14] sm:$0xf]
        %v7191 = vld [vmem:[%s7184 + $0x18] sm:$0xf]
        %v7192 = vld [vmem:[%s7184 + $0x1c] sm:$0xf]
        %v7193 = vld [vmem:[%s7184 + $0x20] sm:$0xf]
        %v7194 = vld [vmem:[%s7184 + $0x24] sm:$0xf]
        %v7195 = vld [vmem:[%s7184 + $0x28] sm:$0xf]
        %v7196 = vld [vmem:[%s7184 + $0x2c] sm:$0xf]
        %v7197 = vld [vmem:[%s7184 + $0x30] sm:$0xf]
        %v7198 = vld [vmem:[%s7184 + $0x34] sm:$0xf]
        %v7199 = vld [vmem:[%s7184 + $0x38] sm:$0xf]
        %v7200 = vld [vmem:[%s7184 + $0x3c] sm:$0xf]
        %v7217 = vunpack.c.l.b16 %v7185
        %v7218 = vunpack.c.l.b16 %v7186
        %v7219 = vunpack.c.l.b16 %v7187
        %v7220 = vunpack.c.l.b16 %v7188
        %v7221 = vunpack.c.l.b16 %v7189
        %v7222 = vunpack.c.l.b16 %v7190
        %v7223 = vunpack.c.l.b16 %v7191
        %v7224 = vunpack.c.l.b16 %v7192
        %v7225 = vunpack.c.l.b16 %v7193
        %v7226 = vunpack.c.l.b16 %v7194
        %v7227 = vunpack.c.l.b16 %v7195
        %v7228 = vunpack.c.l.b16 %v7196
        %v7229 = vunpack.c.l.b16 %v7197
        %v7230 = vunpack.c.l.b16 %v7198
        %v7231 = vunpack.c.l.b16 %v7199
        %v7232 = vunpack.c.l.b16 %v7200
        %v7233 = vpack.c.b16 %v7218, %v7217
        %v7234 = vpack.c.b16 %v7220, %v7219
        %v7235 = vpack.c.b16 %v7222, %v7221
        %v7236 = vpack.c.b16 %v7224, %v7223
        %v7237 = vpack.c.b16 %v7226, %v7225
        %v7238 = vpack.c.b16 %v7228, %v7227
        %v7239 = vpack.c.b16 %v7230, %v7229
        %v7240 = vpack.c.b16 %v7232, %v7231
        %7249 = vmatprep.subr.bf16.mxu0 0
        %7250 = vmatpush1.bf16.msra.mxu0 %v7233
        %7251 = vmatprep.subr.bf16.mxu0 0
        %7252 = vmatpush1.bf16.msra.mxu0 %v7234
        %7253 = vmatprep.subr.bf16.mxu0 0
        %7254 = vmatpush1.bf16.msra.mxu0 %v7235
        %7255 = vmatprep.subr.bf16.mxu0 0
        %7256 = vmatpush1.bf16.msra.mxu0 %v7236
        %7257 = vmatprep.subr.bf16.mxu0 0
        %7258 = vmatpush1.bf16.msra.mxu0 %v7237
        %7259 = vmatprep.subr.bf16.mxu0 0
        %7260 = vmatpush1.bf16.msra.mxu0 %v7238
        %7261 = vmatprep.subr.bf16.mxu0 0
        %7262 = vmatpush1.bf16.msra.mxu0 %v7239
        %7263 = vmatprep.subr.bf16.mxu0 0
        %7264 = vmatpush1.bf16.msra.mxu0 %v7240
        %7265 = vmatprep.subr.bf16.mxu0 0
        %7266 = vmatpush1.bf16.msra.mxu0 0
        %7267 = vmatprep.subr.bf16.mxu0 0
        %7268 = vmatpush1.bf16.msra.mxu0 0
        %7269 = vmatprep.subr.bf16.mxu0 0
        %7270 = vmatpush1.bf16.msra.mxu0 0
        %7271 = vmatprep.subr.bf16.mxu0 0
        %7272 = vmatpush1.bf16.msra.mxu0 0
        %7273 = vmatprep.subr.bf16.mxu0 0
        %7274 = vmatpush1.bf16.msra.mxu0 0
        %7275 = vmatprep.subr.bf16.mxu0 0
        %7276 = vmatpush1.bf16.msra.mxu0 0
        %7277 = vmatprep.subr.bf16.mxu0 0
        %7278 = vmatpush1.bf16.msra.mxu0 0
        %7279 = vmatprep.subr.bf16.mxu0 0
        %7280 = vmatpush1.bf16.msra.mxu0 0
        %7281 = vmatprep.mubr.bf16.mxu0 0
        %7282 = vmatmul.mubr.bf16.gmra.mrb[0].mxu0 %v6763
        %v7283 = vpop.f32.mrb[0].mxu0
        %v7284 = vadd.f32 0.0, %v7283
        %v7285 = vpop.f32.mrb[0].mxu0
        %v7286 = vpop.f32.mrb[0].mxu0
        %v7287 = vadd.f32 0.0, %v7286
        %v7288 = vpop.f32.mrb[0].mxu0
        %7289 = vmatprep.mubr.bf16.mxu0 0
        %7290 = vmatmul.mubr.bf16.gmra.mrb[0].mxu0 %v6764
        %v7291 = vpop.f32.mrb[0].mxu0
        %v7292 = vadd.f32 0.0, %v7291
        %v7293 = vpop.f32.mrb[0].mxu0
        %v7294 = vpop.f32.mrb[0].mxu0
        %v7295 = vadd.f32 0.0, %v7294
        %v7296 = vpop.f32.mrb[0].mxu0
        %7297 = vmatprep.mubr.bf16.mxu0 0
        %7298 = vmatmul.mubr.bf16.gmra.mrb[0].mxu0 %v6765
        %v7299 = vpop.f32.mrb[0].mxu0
        %v7300 = vadd.f32 0.0, %v7299
        %v7301 = vpop.f32.mrb[0].mxu0
        %v7302 = vpop.f32.mrb[0].mxu0
        %v7303 = vadd.f32 0.0, %v7302
        %v7304 = vpop.f32.mrb[0].mxu0
        %7305 = vmatprep.mubr.bf16.mxu0 0
        %7306 = vmatmul.mubr.bf16.gmra.mrb[0].mxu0 %v6766
        %v7307 = vpop.f32.mrb[0].mxu0
        %v7308 = vadd.f32 0.0, %v7307
        %v7309 = vpop.f32.mrb[0].mxu0
        %v7310 = vpop.f32.mrb[0].mxu0
        %v7311 = vadd.f32 0.0, %v7310
        %v7312 = vpop.f32.mrb[0].mxu0
        %7313 = vdwg.mxu0
        %v7314 = vadd.f32 %v7176, %v7284
        %v7315 = vadd.f32 %v7177, %v7287
        %v7316 = vadd.f32 %v7178, %v7292
        %v7317 = vadd.f32 %v7179, %v7295
        %v7318 = vadd.f32 %v7180, %v7300
        %v7319 = vadd.f32 %v7181, %v7303
        %v7320 = vadd.f32 %v7182, %v7308
        %v7321 = vadd.f32 %v7183, %v7311
        %s7322 = scalar_lea.vmem %s5, 256
        %v7323 = vld [vmem:[%s7322] sm:$0xf]
        %v7324 = vld [vmem:[%s7322 + $0x4] sm:$0xf]
        %v7325 = vld [vmem:[%s7322 + $0x8] sm:$0xf]
        %v7326 = vld [vmem:[%s7322 + $0xc] sm:$0xf]
        %v7327 = vld [vmem:[%s7322 + $0x10] sm:$0xf]
        %v7328 = vld [vmem:[%s7322 + $0x14] sm:$0xf]
        %v7329 = vld [vmem:[%s7322 + $0x18] sm:$0xf]
        %v7330 = vld [vmem:[%s7322 + $0x1c] sm:$0xf]
        %v7331 = vld [vmem:[%s7322 + $0x20] sm:$0xf]
        %v7332 = vld [vmem:[%s7322 + $0x24] sm:$0xf]
        %v7333 = vld [vmem:[%s7322 + $0x28] sm:$0xf]
        %v7334 = vld [vmem:[%s7322 + $0x2c] sm:$0xf]
        %v7335 = vld [vmem:[%s7322 + $0x30] sm:$0xf]
        %v7336 = vld [vmem:[%s7322 + $0x34] sm:$0xf]
        %v7337 = vld [vmem:[%s7322 + $0x38] sm:$0xf]
        %v7338 = vld [vmem:[%s7322 + $0x3c] sm:$0xf]
        %v7355 = vunpack.c.l.b16 %v7323
        %v7356 = vunpack.c.l.b16 %v7324
        %v7357 = vunpack.c.l.b16 %v7325
        %v7358 = vunpack.c.l.b16 %v7326
        %v7359 = vunpack.c.l.b16 %v7327
        %v7360 = vunpack.c.l.b16 %v7328
        %v7361 = vunpack.c.l.b16 %v7329
        %v7362 = vunpack.c.l.b16 %v7330
        %v7363 = vunpack.c.l.b16 %v7331
        %v7364 = vunpack.c.l.b16 %v7332
        %v7365 = vunpack.c.l.b16 %v7333
        %v7366 = vunpack.c.l.b16 %v7334
        %v7367 = vunpack.c.l.b16 %v7335
        %v7368 = vunpack.c.l.b16 %v7336
        %v7369 = vunpack.c.l.b16 %v7337
        %v7370 = vunpack.c.l.b16 %v7338
        %v7371 = vpack.c.b16 %v7356, %v7355
        %v7372 = vpack.c.b16 %v7358, %v7357
        %v7373 = vpack.c.b16 %v7360, %v7359
        %v7374 = vpack.c.b16 %v7362, %v7361
        %v7375 = vpack.c.b16 %v7364, %v7363
        %v7376 = vpack.c.b16 %v7366, %v7365
        %v7377 = vpack.c.b16 %v7368, %v7367
        %v7378 = vpack.c.b16 %v7370, %v7369
        %7387 = vmatprep.subr.bf16.mxu0 0
        %7388 = vmatpush1.bf16.msra.mxu0 %v7371
        %7389 = vmatprep.subr.bf16.mxu0 0
        %7390 = vmatpush1.bf16.msra.mxu0 %v7372
        %7391 = vmatprep.subr.bf16.mxu0 0
        %7392 = vmatpush1.bf16.msra.mxu0 %v7373
        %7393 = vmatprep.subr.bf16.mxu0 0
        %7394 = vmatpush1.bf16.msra.mxu0 %v7374
        %7395 = vmatprep.subr.bf16.mxu0 0
        %7396 = vmatpush1.bf16.msra.mxu0 %v7375
        %7397 = vmatprep.subr.bf16.mxu0 0
        %7398 = vmatpush1.bf16.msra.mxu0 %v7376
        %7399 = vmatprep.subr.bf16.mxu0 0
        %7400 = vmatpush1.bf16.msra.mxu0 %v7377
        %7401 = vmatprep.subr.bf16.mxu0 0
        %7402 = vmatpush1.bf16.msra.mxu0 %v7378
        %7403 = vmatprep.subr.bf16.mxu0 0
        %7404 = vmatpush1.bf16.msra.mxu0 0
        %7405 = vmatprep.subr.bf16.mxu0 0
        %7406 = vmatpush1.bf16.msra.mxu0 0
        %7407 = vmatprep.subr.bf16.mxu0 0
        %7408 = vmatpush1.bf16.msra.mxu0 0
        %7409 = vmatprep.subr.bf16.mxu0 0
        %7410 = vmatpush1.bf16.msra.mxu0 0
        %7411 = vmatprep.subr.bf16.mxu0 0
        %7412 = vmatpush1.bf16.msra.mxu0 0
        %7413 = vmatprep.subr.bf16.mxu0 0
        %7414 = vmatpush1.bf16.msra.mxu0 0
        %7415 = vmatprep.subr.bf16.mxu0 0
        %7416 = vmatpush1.bf16.msra.mxu0 0
        %7417 = vmatprep.subr.bf16.mxu0 0
        %7418 = vmatpush1.bf16.msra.mxu0 0
        %7419 = vmatprep.mubr.bf16.mxu0 0
        %7420 = vmatmul.mubr.bf16.gmra.mrb[0].mxu0 %v6767
        %v7421 = vpop.f32.mrb[0].mxu0
        %v7422 = vadd.f32 0.0, %v7421
        %v7423 = vpop.f32.mrb[0].mxu0
        %v7424 = vpop.f32.mrb[0].mxu0
        %v7425 = vadd.f32 0.0, %v7424
        %v7426 = vpop.f32.mrb[0].mxu0
        %7427 = vmatprep.mubr.bf16.mxu0 0
        %7428 = vmatmul.mubr.bf16.gmra.mrb[0].mxu0 %v6768
        %v7429 = vpop.f32.mrb[0].mxu0
        %v7430 = vadd.f32 0.0, %v7429
        %v7431 = vpop.f32.mrb[0].mxu0
        %v7432 = vpop.f32.mrb[0].mxu0
        %v7433 = vadd.f32 0.0, %v7432
        %v7434 = vpop.f32.mrb[0].mxu0
        %7435 = vmatprep.mubr.bf16.mxu0 0
        %7436 = vmatmul.mubr.bf16.gmra.mrb[0].mxu0 %v6769
        %v7437 = vpop.f32.mrb[0].mxu0
        %v7438 = vadd.f32 0.0, %v7437
        %v7439 = vpop.f32.mrb[0].mxu0
        %v7440 = vpop.f32.mrb[0].mxu0
        %v7441 = vadd.f32 0.0, %v7440
        %v7442 = vpop.f32.mrb[0].mxu0
        %7443 = vmatprep.mubr.bf16.mxu0 0
        %7444 = vmatmul.mubr.bf16.gmra.mrb[0].mxu0 %v6770
        %v7445 = vpop.f32.mrb[0].mxu0
        %v7446 = vadd.f32 0.0, %v7445
        %v7447 = vpop.f32.mrb[0].mxu0
        %v7448 = vpop.f32.mrb[0].mxu0
        %v7449 = vadd.f32 0.0, %v7448
        %v7450 = vpop.f32.mrb[0].mxu0
        %7451 = vdwg.mxu0
        %v7452 = vadd.f32 %v7314, %v7422
        %v7453 = vadd.f32 %v7315, %v7425
        %v7454 = vadd.f32 %v7316, %v7430
        %v7455 = vadd.f32 %v7317, %v7433
        %v7456 = vadd.f32 %v7318, %v7438
        %v7457 = vadd.f32 %v7319, %v7441
        %v7458 = vadd.f32 %v7320, %v7446
        %v7459 = vadd.f32 %v7321, %v7449
        %s7460 = scalar_lea.vmem %s5, 320
        %v7461 = vld [vmem:[%s7460] sm:$0xf]
        %v7462 = vld [vmem:[%s7460 + $0x4] sm:$0xf]
        %v7463 = vld [vmem:[%s7460 + $0x8] sm:$0xf]
        %v7464 = vld [vmem:[%s7460 + $0xc] sm:$0xf]
        %v7465 = vld [vmem:[%s7460 + $0x10] sm:$0xf]
        %v7466 = vld [vmem:[%s7460 + $0x14] sm:$0xf]
        %v7467 = vld [vmem:[%s7460 + $0x18] sm:$0xf]
        %v7468 = vld [vmem:[%s7460 + $0x1c] sm:$0xf]
        %v7469 = vld [vmem:[%s7460 + $0x20] sm:$0xf]
        %v7470 = vld [vmem:[%s7460 + $0x24] sm:$0xf]
        %v7471 = vld [vmem:[%s7460 + $0x28] sm:$0xf]
        %v7472 = vld [vmem:[%s7460 + $0x2c] sm:$0xf]
        %v7473 = vld [vmem:[%s7460 + $0x30] sm:$0xf]
        %v7474 = vld [vmem:[%s7460 + $0x34] sm:$0xf]
        %v7475 = vld [vmem:[%s7460 + $0x38] sm:$0xf]
        %v7476 = vld [vmem:[%s7460 + $0x3c] sm:$0xf]
        %v7493 = vunpack.c.l.b16 %v7461
        %v7494 = vunpack.c.l.b16 %v7462
        %v7495 = vunpack.c.l.b16 %v7463
        %v7496 = vunpack.c.l.b16 %v7464
        %v7497 = vunpack.c.l.b16 %v7465
        %v7498 = vunpack.c.l.b16 %v7466
        %v7499 = vunpack.c.l.b16 %v7467
        %v7500 = vunpack.c.l.b16 %v7468
        %v7501 = vunpack.c.l.b16 %v7469
        %v7502 = vunpack.c.l.b16 %v7470
        %v7503 = vunpack.c.l.b16 %v7471
        %v7504 = vunpack.c.l.b16 %v7472
        %v7505 = vunpack.c.l.b16 %v7473
        %v7506 = vunpack.c.l.b16 %v7474
        %v7507 = vunpack.c.l.b16 %v7475
        %v7508 = vunpack.c.l.b16 %v7476
        %v7509 = vpack.c.b16 %v7494, %v7493
        %v7510 = vpack.c.b16 %v7496, %v7495
        %v7511 = vpack.c.b16 %v7498, %v7497
        %v7512 = vpack.c.b16 %v7500, %v7499
        %v7513 = vpack.c.b16 %v7502, %v7501
        %v7514 = vpack.c.b16 %v7504, %v7503
        %v7515 = vpack.c.b16 %v7506, %v7505
        %v7516 = vpack.c.b16 %v7508, %v7507
        %7525 = vmatprep.subr.bf16.mxu0 0
        %7526 = vmatpush1.bf16.msra.mxu0 %v7509
        %7527 = vmatprep.subr.bf16.mxu0 0
        %7528 = vmatpush1.bf16.msra.mxu0 %v7510
        %7529 = vmatprep.subr.bf16.mxu0 0
        %7530 = vmatpush1.bf16.msra.mxu0 %v7511
        %7531 = vmatprep.subr.bf16.mxu0 0
        %7532 = vmatpush1.bf16.msra.mxu0 %v7512
        %7533 = vmatprep.subr.bf16.mxu0 0
        %7534 = vmatpush1.bf16.msra.mxu0 %v7513
        %7535 = vmatprep.subr.bf16.mxu0 0
        %7536 = vmatpush1.bf16.msra.mxu0 %v7514
        %7537 = vmatprep.subr.bf16.mxu0 0
        %7538 = vmatpush1.bf16.msra.mxu0 %v7515
        %7539 = vmatprep.subr.bf16.mxu0 0
        %7540 = vmatpush1.bf16.msra.mxu0 %v7516
        %7541 = vmatprep.subr.bf16.mxu0 0
        %7542 = vmatpush1.bf16.msra.mxu0 0
        %7543 = vmatprep.subr.bf16.mxu0 0
        %7544 = vmatpush1.bf16.msra.mxu0 0
        %7545 = vmatprep.subr.bf16.mxu0 0
        %7546 = vmatpush1.bf16.msra.mxu0 0
        %7547 = vmatprep.subr.bf16.mxu0 0
        %7548 = vmatpush1.bf16.msra.mxu0 0
        %7549 = vmatprep.subr.bf16.mxu0 0
        %7550 = vmatpush1.bf16.msra.mxu0 0
        %7551 = vmatprep.subr.bf16.mxu0 0
        %7552 = vmatpush1.bf16.msra.mxu0 0
        %7553 = vmatprep.subr.bf16.mxu0 0
        %7554 = vmatpush1.bf16.msra.mxu0 0
        %7555 = vmatprep.subr.bf16.mxu0 0
        %7556 = vmatpush1.bf16.msra.mxu0 0
        %7557 = vmatprep.mubr.bf16.mxu0 0
        %7558 = vmatmul.mubr.bf16.gmra.mrb[0].mxu0 %v6771
        %v7559 = vpop.f32.mrb[0].mxu0
        %v7560 = vadd.f32 0.0, %v7559
        %v7561 = vpop.f32.mrb[0].mxu0
        %v7562 = vpop.f32.mrb[0].mxu0
        %v7563 = vadd.f32 0.0, %v7562
        %v7564 = vpop.f32.mrb[0].mxu0
        %7565 = vmatprep.mubr.bf16.mxu0 0
        %7566 = vmatmul.mubr.bf16.gmra.mrb[0].mxu0 %v6772
        %v7567 = vpop.f32.mrb[0].mxu0
        %v7568 = vadd.f32 0.0, %v7567
        %v7569 = vpop.f32.mrb[0].mxu0
        %v7570 = vpop.f32.mrb[0].mxu0
        %v7571 = vadd.f32 0.0, %v7570
        %v7572 = vpop.f32.mrb[0].mxu0
        %7573 = vmatprep.mubr.bf16.mxu0 0
        %7574 = vmatmul.mubr.bf16.gmra.mrb[0].mxu0 %v6773
        %v7575 = vpop.f32.mrb[0].mxu0
        %v7576 = vadd.f32 0.0, %v7575
        %v7577 = vpop.f32.mrb[0].mxu0
        %v7578 = vpop.f32.mrb[0].mxu0
        %v7579 = vadd.f32 0.0, %v7578
        %v7580 = vpop.f32.mrb[0].mxu0
        %7581 = vmatprep.mubr.bf16.mxu0 0
        %7582 = vmatmul.mubr.bf16.gmra.mrb[0].mxu0 %v6774
        %v7583 = vpop.f32.mrb[0].mxu0
        %v7584 = vadd.f32 0.0, %v7583
        %v7585 = vpop.f32.mrb[0].mxu0
        %v7586 = vpop.f32.mrb[0].mxu0
        %v7587 = vadd.f32 0.0, %v7586
        %v7588 = vpop.f32.mrb[0].mxu0
        %7589 = vdwg.mxu0
        %v7590 = vadd.f32 %v7452, %v7560
        %v7591 = vadd.f32 %v7453, %v7563
        %v7592 = vadd.f32 %v7454, %v7568
        %v7593 = vadd.f32 %v7455, %v7571
        %v7594 = vadd.f32 %v7456, %v7576
        %v7595 = vadd.f32 %v7457, %v7579
        %v7596 = vadd.f32 %v7458, %v7584
        %v7597 = vadd.f32 %v7459, %v7587
        %s7598 = scalar_lea.vmem %s5, 384
        %v7599 = vld [vmem:[%s7598] sm:$0xf]
        %v7600 = vld [vmem:[%s7598 + $0x4] sm:$0xf]
        %v7601 = vld [vmem:[%s7598 + $0x8] sm:$0xf]
        %v7602 = vld [vmem:[%s7598 + $0xc] sm:$0xf]
        %v7603 = vld [vmem:[%s7598 + $0x10] sm:$0xf]
        %v7604 = vld [vmem:[%s7598 + $0x14] sm:$0xf]
        %v7605 = vld [vmem:[%s7598 + $0x18] sm:$0xf]
        %v7606 = vld [vmem:[%s7598 + $0x1c] sm:$0xf]
        %v7607 = vld [vmem:[%s7598 + $0x20] sm:$0xf]
        %v7608 = vld [vmem:[%s7598 + $0x24] sm:$0xf]
        %v7609 = vld [vmem:[%s7598 + $0x28] sm:$0xf]
        %v7610 = vld [vmem:[%s7598 + $0x2c] sm:$0xf]
        %v7611 = vld [vmem:[%s7598 + $0x30] sm:$0xf]
        %v7612 = vld [vmem:[%s7598 + $0x34] sm:$0xf]
        %v7613 = vld [vmem:[%s7598 + $0x38] sm:$0xf]
        %v7614 = vld [vmem:[%s7598 + $0x3c] sm:$0xf]
        %v7631 = vunpack.c.l.b16 %v7599
        %v7632 = vunpack.c.l.b16 %v7600
        %v7633 = vunpack.c.l.b16 %v7601
        %v7634 = vunpack.c.l.b16 %v7602
        %v7635 = vunpack.c.l.b16 %v7603
        %v7636 = vunpack.c.l.b16 %v7604
        %v7637 = vunpack.c.l.b16 %v7605
        %v7638 = vunpack.c.l.b16 %v7606
        %v7639 = vunpack.c.l.b16 %v7607
        %v7640 = vunpack.c.l.b16 %v7608
        %v7641 = vunpack.c.l.b16 %v7609
        %v7642 = vunpack.c.l.b16 %v7610
        %v7643 = vunpack.c.l.b16 %v7611
        %v7644 = vunpack.c.l.b16 %v7612
        %v7645 = vunpack.c.l.b16 %v7613
        %v7646 = vunpack.c.l.b16 %v7614
        %v7647 = vpack.c.b16 %v7632, %v7631
        %v7648 = vpack.c.b16 %v7634, %v7633
        %v7649 = vpack.c.b16 %v7636, %v7635
        %v7650 = vpack.c.b16 %v7638, %v7637
        %v7651 = vpack.c.b16 %v7640, %v7639
        %v7652 = vpack.c.b16 %v7642, %v7641
        %v7653 = vpack.c.b16 %v7644, %v7643
        %v7654 = vpack.c.b16 %v7646, %v7645
        %7663 = vmatprep.subr.bf16.mxu0 0
        %7664 = vmatpush1.bf16.msra.mxu0 %v7647
        %7665 = vmatprep.subr.bf16.mxu0 0
        %7666 = vmatpush1.bf16.msra.mxu0 %v7648
        %7667 = vmatprep.subr.bf16.mxu0 0
        %7668 = vmatpush1.bf16.msra.mxu0 %v7649
        %7669 = vmatprep.subr.bf16.mxu0 0
        %7670 = vmatpush1.bf16.msra.mxu0 %v7650
        %7671 = vmatprep.subr.bf16.mxu0 0
        %7672 = vmatpush1.bf16.msra.mxu0 %v7651
        %7673 = vmatprep.subr.bf16.mxu0 0
        %7674 = vmatpush1.bf16.msra.mxu0 %v7652
        %7675 = vmatprep.subr.bf16.mxu0 0
        %7676 = vmatpush1.bf16.msra.mxu0 %v7653
        %7677 = vmatprep.subr.bf16.mxu0 0
        %7678 = vmatpush1.bf16.msra.mxu0 %v7654
        %7679 = vmatprep.subr.bf16.mxu0 0
        %7680 = vmatpush1.bf16.msra.mxu0 0
        %7681 = vmatprep.subr.bf16.mxu0 0
        %7682 = vmatpush1.bf16.msra.mxu0 0
        %7683 = vmatprep.subr.bf16.mxu0 0
        %7684 = vmatpush1.bf16.msra.mxu0 0
        %7685 = vmatprep.subr.bf16.mxu0 0
        %7686 = vmatpush1.bf16.msra.mxu0 0
        %7687 = vmatprep.subr.bf16.mxu0 0
        %7688 = vmatpush1.bf16.msra.mxu0 0
        %7689 = vmatprep.subr.bf16.mxu0 0
        %7690 = vmatpush1.bf16.msra.mxu0 0
        %7691 = vmatprep.subr.bf16.mxu0 0
        %7692 = vmatpush1.bf16.msra.mxu0 0
        %7693 = vmatprep.subr.bf16.mxu0 0
        %7694 = vmatpush1.bf16.msra.mxu0 0
        %7695 = vmatprep.mubr.bf16.mxu0 0
        %7696 = vmatmul.mubr.bf16.gmra.mrb[0].mxu0 %v6775
        %v7697 = vpop.f32.mrb[0].mxu0
        %v7698 = vadd.f32 0.0, %v7697
        %v7699 = vpop.f32.mrb[0].mxu0
        %v7700 = vpop.f32.mrb[0].mxu0
        %v7701 = vadd.f32 0.0, %v7700
        %v7702 = vpop.f32.mrb[0].mxu0
        %7703 = vmatprep.mubr.bf16.mxu0 0
        %7704 = vmatmul.mubr.bf16.gmra.mrb[0].mxu0 %v6776
        %v7705 = vpop.f32.mrb[0].mxu0
        %v7706 = vadd.f32 0.0, %v7705
        %v7707 = vpop.f32.mrb[0].mxu0
        %v7708 = vpop.f32.mrb[0].mxu0
        %v7709 = vadd.f32 0.0, %v7708
        %v7710 = vpop.f32.mrb[0].mxu0
        %7711 = vmatprep.mubr.bf16.mxu0 0
        %7712 = vmatmul.mubr.bf16.gmra.mrb[0].mxu0 %v6777
        %v7713 = vpop.f32.mrb[0].mxu0
        %v7714 = vadd.f32 0.0, %v7713
        %v7715 = vpop.f32.mrb[0].mxu0
        %v7716 = vpop.f32.mrb[0].mxu0
        %v7717 = vadd.f32 0.0, %v7716
        %v7718 = vpop.f32.mrb[0].mxu0
        %7719 = vmatprep.mubr.bf16.mxu0 0
        %7720 = vmatmul.mubr.bf16.gmra.mrb[0].mxu0 %v6778
        %v7721 = vpop.f32.mrb[0].mxu0
        %v7722 = vadd.f32 0.0, %v7721
        %v7723 = vpop.f32.mrb[0].mxu0
        %v7724 = vpop.f32.mrb[0].mxu0
        %v7725 = vadd.f32 0.0, %v7724
        %v7726 = vpop.f32.mrb[0].mxu0
        %7727 = vdwg.mxu0
        %v7728 = vadd.f32 %v7590, %v7698
        %v7729 = vadd.f32 %v7591, %v7701
        %v7730 = vadd.f32 %v7592, %v7706
        %v7731 = vadd.f32 %v7593, %v7709
        %v7732 = vadd.f32 %v7594, %v7714
        %v7733 = vadd.f32 %v7595, %v7717
        %v7734 = vadd.f32 %v7596, %v7722
        %v7735 = vadd.f32 %v7597, %v7725
        %s7736 = scalar_lea.vmem %s5, 448
        %v7737 = vld [vmem:[%s7736] sm:$0xf]
        %v7738 = vld [vmem:[%s7736 + $0x4] sm:$0xf]
        %v7739 = vld [vmem:[%s7736 + $0x8] sm:$0xf]
        %v7740 = vld [vmem:[%s7736 + $0xc] sm:$0xf]
        %v7741 = vld [vmem:[%s7736 + $0x10] sm:$0xf]
        %v7742 = vld [vmem:[%s7736 + $0x14] sm:$0xf]
        %v7743 = vld [vmem:[%s7736 + $0x18] sm:$0xf]
        %v7744 = vld [vmem:[%s7736 + $0x1c] sm:$0xf]
        %v7745 = vld [vmem:[%s7736 + $0x20] sm:$0xf]
        %v7746 = vld [vmem:[%s7736 + $0x24] sm:$0xf]
        %v7747 = vld [vmem:[%s7736 + $0x28] sm:$0xf]
        %v7748 = vld [vmem:[%s7736 + $0x2c] sm:$0xf]
        %v7749 = vld [vmem:[%s7736 + $0x30] sm:$0xf]
        %v7750 = vld [vmem:[%s7736 + $0x34] sm:$0xf]
        %v7751 = vld [vmem:[%s7736 + $0x38] sm:$0xf]
        %v7752 = vld [vmem:[%s7736 + $0x3c] sm:$0xf]
        %v7769 = vunpack.c.l.b16 %v7737
        %v7770 = vunpack.c.l.b16 %v7738
        %v7771 = vunpack.c.l.b16 %v7739
        %v7772 = vunpack.c.l.b16 %v7740
        %v7773 = vunpack.c.l.b16 %v7741
        %v7774 = vunpack.c.l.b16 %v7742
        %v7775 = vunpack.c.l.b16 %v7743
        %v7776 = vunpack.c.l.b16 %v7744
        %v7777 = vunpack.c.l.b16 %v7745
        %v7778 = vunpack.c.l.b16 %v7746
        %v7779 = vunpack.c.l.b16 %v7747
        %v7780 = vunpack.c.l.b16 %v7748
        %v7781 = vunpack.c.l.b16 %v7749
        %v7782 = vunpack.c.l.b16 %v7750
        %v7783 = vunpack.c.l.b16 %v7751
        %v7784 = vunpack.c.l.b16 %v7752
        %v7785 = vpack.c.b16 %v7770, %v7769
        %v7786 = vpack.c.b16 %v7772, %v7771
        %v7787 = vpack.c.b16 %v7774, %v7773
        %v7788 = vpack.c.b16 %v7776, %v7775
        %v7789 = vpack.c.b16 %v7778, %v7777
        %v7790 = vpack.c.b16 %v7780, %v7779
        %v7791 = vpack.c.b16 %v7782, %v7781
        %v7792 = vpack.c.b16 %v7784, %v7783
        %7801 = vmatprep.subr.bf16.mxu0 0
        %7802 = vmatpush1.bf16.msra.mxu0 %v7785
        %7803 = vmatprep.subr.bf16.mxu0 0
        %7804 = vmatpush1.bf16.msra.mxu0 %v7786
        %7805 = vmatprep.subr.bf16.mxu0 0
        %7806 = vmatpush1.bf16.msra.mxu0 %v7787
        %7807 = vmatprep.subr.bf16.mxu0 0
        %7808 = vmatpush1.bf16.msra.mxu0 %v7788
        %7809 = vmatprep.subr.bf16.mxu0 0
        %7810 = vmatpush1.bf16.msra.mxu0 %v7789
        %7811 = vmatprep.subr.bf16.mxu0 0
        %7812 = vmatpush1.bf16.msra.mxu0 %v7790
        %7813 = vmatprep.subr.bf16.mxu0 0
        %7814 = vmatpush1.bf16.msra.mxu0 %v7791
        %7815 = vmatprep.subr.bf16.mxu0 0
        %7816 = vmatpush1.bf16.msra.mxu0 %v7792
        %7817 = vmatprep.subr.bf16.mxu0 0
        %7818 = vmatpush1.bf16.msra.mxu0 0
        %7819 = vmatprep.subr.bf16.mxu0 0
        %7820 = vmatpush1.bf16.msra.mxu0 0
        %7821 = vmatprep.subr.bf16.mxu0 0
        %7822 = vmatpush1.bf16.msra.mxu0 0
        %7823 = vmatprep.subr.bf16.mxu0 0
        %7824 = vmatpush1.bf16.msra.mxu0 0
        %7825 = vmatprep.subr.bf16.mxu0 0
        %7826 = vmatpush1.bf16.msra.mxu0 0
        %7827 = vmatprep.subr.bf16.mxu0 0
        %7828 = vmatpush1.bf16.msra.mxu0 0
        %7829 = vmatprep.subr.bf16.mxu0 0
        %7830 = vmatpush1.bf16.msra.mxu0 0
        %7831 = vmatprep.subr.bf16.mxu0 0
        %7832 = vmatpush1.bf16.msra.mxu0 0
        %7833 = vmatprep.mubr.bf16.mxu0 0
        %7834 = vmatmul.mubr.bf16.gmra.mrb[0].mxu0 %v6779
        %v7835 = vpop.f32.mrb[0].mxu0
        %v7836 = vadd.f32 0.0, %v7835
        %v7837 = vpop.f32.mrb[0].mxu0
        %v7838 = vpop.f32.mrb[0].mxu0
        %v7839 = vadd.f32 0.0, %v7838
        %v7840 = vpop.f32.mrb[0].mxu0
        %7841 = vmatprep.mubr.bf16.mxu0 0
        %7842 = vmatmul.mubr.bf16.gmra.mrb[0].mxu0 %v6780
        %v7843 = vpop.f32.mrb[0].mxu0
        %v7844 = vadd.f32 0.0, %v7843
        %v7845 = vpop.f32.mrb[0].mxu0
        %v7846 = vpop.f32.mrb[0].mxu0
        %v7847 = vadd.f32 0.0, %v7846
        %v7848 = vpop.f32.mrb[0].mxu0
        %7849 = vmatprep.mubr.bf16.mxu0 0
        %7850 = vmatmul.mubr.bf16.gmra.mrb[0].mxu0 %v6781
        %v7851 = vpop.f32.mrb[0].mxu0
        %v7852 = vadd.f32 0.0, %v7851
        %v7853 = vpop.f32.mrb[0].mxu0
        %v7854 = vpop.f32.mrb[0].mxu0
        %v7855 = vadd.f32 0.0, %v7854
        %v7856 = vpop.f32.mrb[0].mxu0
        %7857 = vmatprep.mubr.bf16.mxu0 0
        %7858 = vmatmul.mubr.bf16.gmra.mrb[0].mxu0 %v6782
        %v7859 = vpop.f32.mrb[0].mxu0
        %v7860 = vadd.f32 0.0, %v7859
        %v7861 = vpop.f32.mrb[0].mxu0
        %v7862 = vpop.f32.mrb[0].mxu0
        %v7863 = vadd.f32 0.0, %v7862
        %v7864 = vpop.f32.mrb[0].mxu0
        %7865 = vdwg.mxu0
        %v7866 = vadd.f32 %v7728, %v7836
        %v7867 = vadd.f32 %v7729, %v7839
        %v7868 = vadd.f32 %v7730, %v7844
        %v7869 = vadd.f32 %v7731, %v7847
        %v7870 = vadd.f32 %v7732, %v7852
        %v7871 = vadd.f32 %v7733, %v7855
        %v7872 = vadd.f32 %v7734, %v7860
        %v7873 = vadd.f32 %v7735, %v7863
        %s7874 = scalar_lea.vmem %s5, 512
        %v7875 = vld [vmem:[%s7874] sm:$0xf]
        %v7876 = vld [vmem:[%s7874 + $0x4] sm:$0xf]
        %v7877 = vld [vmem:[%s7874 + $0x8] sm:$0xf]
        %v7878 = vld [vmem:[%s7874 + $0xc] sm:$0xf]
        %v7879 = vld [vmem:[%s7874 + $0x10] sm:$0xf]
        %v7880 = vld [vmem:[%s7874 + $0x14] sm:$0xf]
        %v7881 = vld [vmem:[%s7874 + $0x18] sm:$0xf]
        %v7882 = vld [vmem:[%s7874 + $0x1c] sm:$0xf]
        %v7883 = vld [vmem:[%s7874 + $0x20] sm:$0xf]
        %v7884 = vld [vmem:[%s7874 + $0x24] sm:$0xf]
        %v7885 = vld [vmem:[%s7874 + $0x28] sm:$0xf]
        %v7886 = vld [vmem:[%s7874 + $0x2c] sm:$0xf]
        %v7887 = vld [vmem:[%s7874 + $0x30] sm:$0xf]
        %v7888 = vld [vmem:[%s7874 + $0x34] sm:$0xf]
        %v7889 = vld [vmem:[%s7874 + $0x38] sm:$0xf]
        %v7890 = vld [vmem:[%s7874 + $0x3c] sm:$0xf]
        %v7907 = vunpack.c.l.b16 %v7875
        %v7908 = vunpack.c.l.b16 %v7876
        %v7909 = vunpack.c.l.b16 %v7877
        %v7910 = vunpack.c.l.b16 %v7878
        %v7911 = vunpack.c.l.b16 %v7879
        %v7912 = vunpack.c.l.b16 %v7880
        %v7913 = vunpack.c.l.b16 %v7881
        %v7914 = vunpack.c.l.b16 %v7882
        %v7915 = vunpack.c.l.b16 %v7883
        %v7916 = vunpack.c.l.b16 %v7884
        %v7917 = vunpack.c.l.b16 %v7885
        %v7918 = vunpack.c.l.b16 %v7886
        %v7919 = vunpack.c.l.b16 %v7887
        %v7920 = vunpack.c.l.b16 %v7888
        %v7921 = vunpack.c.l.b16 %v7889
        %v7922 = vunpack.c.l.b16 %v7890
        %v7923 = vpack.c.b16 %v7908, %v7907
        %v7924 = vpack.c.b16 %v7910, %v7909
        %v7925 = vpack.c.b16 %v7912, %v7911
        %v7926 = vpack.c.b16 %v7914, %v7913
        %v7927 = vpack.c.b16 %v7916, %v7915
        %v7928 = vpack.c.b16 %v7918, %v7917
        %v7929 = vpack.c.b16 %v7920, %v7919
        %v7930 = vpack.c.b16 %v7922, %v7921
        %7939 = vmatprep.subr.bf16.mxu0 0
        %7940 = vmatpush1.bf16.msra.mxu0 %v7923
        %7941 = vmatprep.subr.bf16.mxu0 0
        %7942 = vmatpush1.bf16.msra.mxu0 %v7924
        %7943 = vmatprep.subr.bf16.mxu0 0
        %7944 = vmatpush1.bf16.msra.mxu0 %v7925
        %7945 = vmatprep.subr.bf16.mxu0 0
        %7946 = vmatpush1.bf16.msra.mxu0 %v7926
        %7947 = vmatprep.subr.bf16.mxu0 0
        %7948 = vmatpush1.bf16.msra.mxu0 %v7927
        %7949 = vmatprep.subr.bf16.mxu0 0
        %7950 = vmatpush1.bf16.msra.mxu0 %v7928
        %7951 = vmatprep.subr.bf16.mxu0 0
        %7952 = vmatpush1.bf16.msra.mxu0 %v7929
        %7953 = vmatprep.subr.bf16.mxu0 0
        %7954 = vmatpush1.bf16.msra.mxu0 %v7930
        %7955 = vmatprep.subr.bf16.mxu0 0
        %7956 = vmatpush1.bf16.msra.mxu0 0
        %7957 = vmatprep.subr.bf16.mxu0 0
        %7958 = vmatpush1.bf16.msra.mxu0 0
        %7959 = vmatprep.subr.bf16.mxu0 0
        %7960 = vmatpush1.bf16.msra.mxu0 0
        %7961 = vmatprep.subr.bf16.mxu0 0
        %7962 = vmatpush1.bf16.msra.mxu0 0
        %7963 = vmatprep.subr.bf16.mxu0 0
        %7964 = vmatpush1.bf16.msra.mxu0 0
        %7965 = vmatprep.subr.bf16.mxu0 0
        %7966 = vmatpush1.bf16.msra.mxu0 0
        %7967 = vmatprep.subr.bf16.mxu0 0
        %7968 = vmatpush1.bf16.msra.mxu0 0
        %7969 = vmatprep.subr.bf16.mxu0 0
        %7970 = vmatpush1.bf16.msra.mxu0 0
        %7971 = vmatprep.mubr.bf16.mxu0 0
        %7972 = vmatmul.mubr.bf16.gmra.mrb[0].mxu0 %v6783
        %v7973 = vpop.f32.mrb[0].mxu0
        %v7974 = vadd.f32 0.0, %v7973
        %v7975 = vpop.f32.mrb[0].mxu0
        %v7976 = vpop.f32.mrb[0].mxu0
        %v7977 = vadd.f32 0.0, %v7976
        %v7978 = vpop.f32.mrb[0].mxu0
        %7979 = vmatprep.mubr.bf16.mxu0 0
        %7980 = vmatmul.mubr.bf16.gmra.mrb[0].mxu0 %v6784
        %v7981 = vpop.f32.mrb[0].mxu0
        %v7982 = vadd.f32 0.0, %v7981
        %v7983 = vpop.f32.mrb[0].mxu0
        %v7984 = vpop.f32.mrb[0].mxu0
        %v7985 = vadd.f32 0.0, %v7984
        %v7986 = vpop.f32.mrb[0].mxu0
        %7987 = vmatprep.mubr.bf16.mxu0 0
        %7988 = vmatmul.mubr.bf16.gmra.mrb[0].mxu0 %v6785
        %v7989 = vpop.f32.mrb[0].mxu0
        %v7990 = vadd.f32 0.0, %v7989
        %v7991 = vpop.f32.mrb[0].mxu0
        %v7992 = vpop.f32.mrb[0].mxu0
        %v7993 = vadd.f32 0.0, %v7992
        %v7994 = vpop.f32.mrb[0].mxu0
        %7995 = vmatprep.mubr.bf16.mxu0 0
        %7996 = vmatmul.mubr.bf16.gmra.mrb[0].mxu0 %v6786
        %v7997 = vpop.f32.mrb[0].mxu0
        %v7998 = vadd.f32 0.0, %v7997
        %v7999 = vpop.f32.mrb[0].mxu0
        %v8000 = vpop.f32.mrb[0].mxu0
        %v8001 = vadd.f32 0.0, %v8000
        %v8002 = vpop.f32.mrb[0].mxu0
        %8003 = vdwg.mxu0
        %v8004 = vadd.f32 %v7866, %v7974
        %v8005 = vadd.f32 %v7867, %v7977
        %v8006 = vadd.f32 %v7868, %v7982
        %v8007 = vadd.f32 %v7869, %v7985
        %v8008 = vadd.f32 %v7870, %v7990
        %v8009 = vadd.f32 %v7871, %v7993
        %v8010 = vadd.f32 %v7872, %v7998
        %v8011 = vadd.f32 %v7873, %v8001
        %v8012 = vld [vmem:[%s6] sm:$0x1]
        %v8014 = vlaneseq
        %v8015 = vshrl.u32 %v8014, 7
        %v8016 = vsub.s32 0, %v8015
        %v8017 = vrot.slane %v8012, %v8016
        %v8019 = vadd.f32 %v8004, %v8017
        %v8020 = vadd.f32 %v8005, %v8017
        %v8021 = vadd.f32 %v8006, %v8017
        %v8022 = vadd.f32 %v8007, %v8017
        %v8023 = vadd.f32 %v8008, %v8017
        %v8024 = vadd.f32 %v8009, %v8017
        %v8025 = vadd.f32 %v8010, %v8017
        %v8026 = vadd.f32 %v8011, %v8017
        %v8027 = vmax.f32 %v8019, 0.0
        %v8028 = vmax.f32 %v8020, 0.0
        %v8029 = vmax.f32 %v8021, 0.0
        %v8030 = vmax.f32 %v8022, 0.0
        %v8031 = vmax.f32 %v8023, 0.0
        %v8032 = vmax.f32 %v8024, 0.0
        %v8033 = vmax.f32 %v8025, 0.0
        %v8034 = vmax.f32 %v8026, 0.0
        %v8035 = vpack.c.bf16 %v8028, %v8027
        %v8036 = vpack.c.bf16 %v8030, %v8029
        %v8037 = vpack.c.bf16 %v8032, %v8031
        %v8038 = vpack.c.bf16 %v8034, %v8033
        %v8039 = vld [vmem:[%s7] sm:$0xf]
        %v8040 = vld [vmem:[%s7 + $0x4] sm:$0xf]
        %v8041 = vld [vmem:[%s7 + $0x8] sm:$0xf]
        %v8042 = vld [vmem:[%s7 + $0xc] sm:$0xf]
        %v8043 = vld [vmem:[%s7 + $0x10] sm:$0xf]
        %v8044 = vld [vmem:[%s7 + $0x14] sm:$0xf]
        %v8045 = vld [vmem:[%s7 + $0x18] sm:$0xf]
        %v8046 = vld [vmem:[%s7 + $0x1c] sm:$0xf]
        %v8047 = vld [vmem:[%s7 + $0x20] sm:$0xf]
        %v8048 = vld [vmem:[%s7 + $0x24] sm:$0xf]
        %v8049 = vld [vmem:[%s7 + $0x28] sm:$0xf]
        %v8050 = vld [vmem:[%s7 + $0x2c] sm:$0xf]
        %v8051 = vld [vmem:[%s7 + $0x30] sm:$0xf]
        %v8052 = vld [vmem:[%s7 + $0x34] sm:$0xf]
        %v8053 = vld [vmem:[%s7 + $0x38] sm:$0xf]
        %v8054 = vld [vmem:[%s7 + $0x3c] sm:$0xf]
        %v8055 = vld [vmem:[%s7 + $0x40] sm:$0xf]
        %v8056 = vld [vmem:[%s7 + $0x44] sm:$0xf]
        %v8075 = vunpack.c.l.b16 %v8039
        %v8076 = vunpack.c.l.b16 %v8040
        %v8077 = vunpack.c.l.b16 %v8041
        %v8078 = vunpack.c.l.b16 %v8042
        %v8079 = vunpack.c.l.b16 %v8043
        %v8080 = vunpack.c.l.b16 %v8044
        %v8081 = vunpack.c.l.b16 %v8045
        %v8082 = vunpack.c.l.b16 %v8046
        %v8083 = vunpack.c.l.b16 %v8047
        %v8084 = vunpack.c.l.b16 %v8048
        %v8085 = vunpack.c.l.b16 %v8049
        %v8086 = vunpack.c.l.b16 %v8050
        %v8087 = vunpack.c.l.b16 %v8051
        %v8088 = vunpack.c.l.b16 %v8052
        %v8089 = vunpack.c.l.b16 %v8053
        %v8090 = vunpack.c.l.b16 %v8054
        %v8091 = vunpack.c.l.b16 %v8055
        %v8092 = vunpack.c.l.b16 %v8056
        %v8093 = vpack.c.b16 %v8076, %v8075
        %v8094 = vpack.c.b16 %v8078, %v8077
        %v8095 = vpack.c.b16 %v8080, %v8079
        %v8096 = vpack.c.b16 %v8082, %v8081
        %v8097 = vpack.c.b16 %v8084, %v8083
        %v8098 = vpack.c.b16 %v8086, %v8085
        %v8099 = vpack.c.b16 %v8088, %v8087
        %v8100 = vpack.c.b16 %v8090, %v8089
        %v8101 = vpack.c.b16 %v8092, %v8091
        %vm8102 = vcmask 523264
        %v8104 = vsel %vm8102, %v8093, 0
        %v8107 = vsel %vm8102, %v8094, 0
        %v8110 = vsel %vm8102, %v8095, 0
        %v8113 = vsel %vm8102, %v8096, 0
        %v8116 = vsel %vm8102, %v8097, 0
        %v8119 = vsel %vm8102, %v8098, 0
        %v8122 = vsel %vm8102, %v8099, 0
        %v8125 = vsel %vm8102, %v8100, 0
        %v8128 = vsel %vm8102, %v8101, 0
        %8130 = vmatprep.subr.bf16.mxu0 0
        %8131 = vmatpush1.bf16.msra.mxu0 %v8035
        %8132 = vmatprep.subr.bf16.mxu0 0
        %8133 = vmatpush1.bf16.msra.mxu0 %v8036
        %8134 = vmatprep.subr.bf16.mxu0 0
        %8135 = vmatpush1.bf16.msra.mxu0 %v8037
        %8136 = vmatprep.subr.bf16.mxu0 0
        %8137 = vmatpush1.bf16.msra.mxu0 %v8038
        %8138 = vmatprep.subr.bf16.mxu0 0
        %8139 = vmatpush1.bf16.msra.mxu0 0
        %8140 = vmatprep.subr.bf16.mxu0 0
        %8141 = vmatpush1.bf16.msra.mxu0 0
        %8142 = vmatprep.subr.bf16.mxu0 0
        %8143 = vmatpush1.bf16.msra.mxu0 0
        %8144 = vmatprep.subr.bf16.mxu0 0
        %8145 = vmatpush1.bf16.msra.mxu0 0
        %8146 = vmatprep.subr.bf16.mxu0 0
        %8147 = vmatpush1.bf16.msra.mxu0 0
        %8148 = vmatprep.subr.bf16.mxu0 0
        %8149 = vmatpush1.bf16.msra.mxu0 0
        %8150 = vmatprep.subr.bf16.mxu0 0
        %8151 = vmatpush1.bf16.msra.mxu0 0
        %8152 = vmatprep.subr.bf16.mxu0 0
        %8153 = vmatpush1.bf16.msra.mxu0 0
        %8154 = vmatprep.subr.bf16.mxu0 0
        %8155 = vmatpush1.bf16.msra.mxu0 0
        %8156 = vmatprep.subr.bf16.mxu0 0
        %8157 = vmatpush1.bf16.msra.mxu0 0
        %8158 = vmatprep.subr.bf16.mxu0 0
        %8159 = vmatpush1.bf16.msra.mxu0 0
        %8160 = vmatprep.subr.bf16.mxu0 0
        %8161 = vmatpush1.bf16.msra.mxu0 0
        %8162 = vmatprep.mubr.bf16.mxu0 0
        %8163 = vmatmul.mubr.bf16.gmra.mrb[0].mxu0 %v8104
        %v8164 = vpop.f32.mrb[0].mxu0
        %v8165 = vadd.f32 0.0, %v8164
        %v8166 = vpop.f32.mrb[0].mxu0
        %v8167 = vpop.f32.mrb[0].mxu0
        %v8168 = vadd.f32 0.0, %v8167
        %v8169 = vpop.f32.mrb[0].mxu0
        %8170 = vmatprep.mubr.bf16.mxu0 0
        %8171 = vmatmul.mubr.bf16.gmra.mrb[0].mxu0 %v8107
        %v8172 = vpop.f32.mrb[0].mxu0
        %v8173 = vadd.f32 0.0, %v8172
        %v8174 = vpop.f32.mrb[0].mxu0
        %v8175 = vpop.f32.mrb[0].mxu0
        %v8176 = vadd.f32 0.0, %v8175
        %v8177 = vpop.f32.mrb[0].mxu0
        %8178 = vmatprep.mubr.bf16.mxu0 0
        %8179 = vmatmul.mubr.bf16.gmra.mrb[0].mxu0 %v8110
        %v8180 = vpop.f32.mrb[0].mxu0
        %v8181 = vadd.f32 0.0, %v8180
        %v8182 = vpop.f32.mrb[0].mxu0
        %v8183 = vpop.f32.mrb[0].mxu0
        %v8184 = vadd.f32 0.0, %v8183
        %v8185 = vpop.f32.mrb[0].mxu0
        %8186 = vmatprep.mubr.bf16.mxu0 0
        %8187 = vmatmul.mubr.bf16.gmra.mrb[0].mxu0 %v8113
        %v8188 = vpop.f32.mrb[0].mxu0
        %v8189 = vadd.f32 0.0, %v8188
        %v8190 = vpop.f32.mrb[0].mxu0
        %v8191 = vpop.f32.mrb[0].mxu0
        %v8192 = vadd.f32 0.0, %v8191
        %v8193 = vpop.f32.mrb[0].mxu0
        %8194 = vmatprep.mubr.bf16.mxu0 0
        %8195 = vmatmul.mubr.bf16.gmra.mrb[0].mxu0 %v8116
        %v8196 = vpop.f32.mrb[0].mxu0
        %v8197 = vadd.f32 0.0, %v8196
        %v8198 = vpop.f32.mrb[0].mxu0
        %v8199 = vpop.f32.mrb[0].mxu0
        %v8200 = vadd.f32 0.0, %v8199
        %v8201 = vpop.f32.mrb[0].mxu0
        %8202 = vmatprep.mubr.bf16.mxu0 0
        %8203 = vmatmul.mubr.bf16.gmra.mrb[0].mxu0 %v8119
        %v8204 = vpop.f32.mrb[0].mxu0
        %v8205 = vadd.f32 0.0, %v8204
        %v8206 = vpop.f32.mrb[0].mxu0
        %v8207 = vpop.f32.mrb[0].mxu0
        %v8208 = vadd.f32 0.0, %v8207
        %v8209 = vpop.f32.mrb[0].mxu0
        %8210 = vmatprep.mubr.bf16.mxu0 0
        %8211 = vmatmul.mubr.bf16.gmra.mrb[0].mxu0 %v8122
        %v8212 = vpop.f32.mrb[0].mxu0
        %v8213 = vadd.f32 0.0, %v8212
        %v8214 = vpop.f32.mrb[0].mxu0
        %v8215 = vpop.f32.mrb[0].mxu0
        %v8216 = vadd.f32 0.0, %v8215
        %v8217 = vpop.f32.mrb[0].mxu0
        %8218 = vmatprep.mubr.bf16.mxu0 0
        %8219 = vmatmul.mubr.bf16.gmra.mrb[0].mxu0 %v8125
        %v8220 = vpop.f32.mrb[0].mxu0
        %v8221 = vadd.f32 0.0, %v8220
        %v8222 = vpop.f32.mrb[0].mxu0
        %v8223 = vpop.f32.mrb[0].mxu0
        %v8224 = vadd.f32 0.0, %v8223
        %v8225 = vpop.f32.mrb[0].mxu0
        %8226 = vmatprep.mubr.bf16.mxu0 0
        %8227 = vmatmul.mubr.bf16.gmra.mrb[0].mxu0 %v8128
        %v8228 = vpop.f32.mrb[0].mxu0
        %v8229 = vadd.f32 0.0, %v8228
        %v8230 = vpop.f32.mrb[0].mxu0
        %v8231 = vpop.f32.mrb[0].mxu0
        %v8232 = vadd.f32 0.0, %v8231
        %v8233 = vpop.f32.mrb[0].mxu0
        %8234 = vdwg.mxu0
        %v8235 = vpack.c.bf16 %v8168, %v8165
        %v8236 = vpack.c.bf16 %v8176, %v8173
        %v8237 = vpack.c.bf16 %v8184, %v8181
        %v8238 = vpack.c.bf16 %v8192, %v8189
        %v8239 = vpack.c.bf16 %v8200, %v8197
        %v8240 = vpack.c.bf16 %v8208, %v8205
        %v8241 = vpack.c.bf16 %v8216, %v8213
        %v8242 = vpack.c.bf16 %v8224, %v8221
        %v8243 = vpack.c.bf16 %v8232, %v8229
        %v8244 = vld [vmem:[%s8] sm:$0xf]
        %v8245 = vld [vmem:[%s8 + $0x4] sm:$0xf]
        %v8246 = vld [vmem:[%s8 + $0x8] sm:$0xf]
        %v8247 = vld [vmem:[%s8 + $0xc] sm:$0xf]
        %v8248 = vld [vmem:[%s8 + $0x10] sm:$0xf]
        %v8249 = vld [vmem:[%s8 + $0x14] sm:$0xf]
        %v8250 = vld [vmem:[%s8 + $0x18] sm:$0xf]
        %v8251 = vld [vmem:[%s8 + $0x1c] sm:$0xf]
        %v8252 = vld [vmem:[%s8 + $0x20] sm:$0xf]
        %v8253 = vld [vmem:[%s8 + $0x24] sm:$0xf]
        %v8254 = vld [vmem:[%s8 + $0x28] sm:$0xf]
        %v8255 = vld [vmem:[%s8 + $0x2c] sm:$0xf]
        %v8256 = vld [vmem:[%s8 + $0x30] sm:$0xf]
        %v8257 = vld [vmem:[%s8 + $0x34] sm:$0xf]
        %v8258 = vld [vmem:[%s8 + $0x38] sm:$0xf]
        %v8259 = vld [vmem:[%s8 + $0x3c] sm:$0xf]
        %s8260 = scalar_lea.vmem %s8, 64
        %v8261 = vld [vmem:[%s8260] sm:$0xf]
        %v8262 = vld [vmem:[%s8260 + $0x4] sm:$0xf]
        %v8263 = vld [vmem:[%s8260 + $0x8] sm:$0xf]
        %v8264 = vld [vmem:[%s8260 + $0xc] sm:$0xf]
        %v8265 = vld [vmem:[%s8260 + $0x10] sm:$0xf]
        %v8266 = vld [vmem:[%s8260 + $0x14] sm:$0xf]
        %v8267 = vld [vmem:[%s8260 + $0x18] sm:$0xf]
        %v8268 = vld [vmem:[%s8260 + $0x1c] sm:$0xf]
        %v8269 = vld [vmem:[%s8260 + $0x20] sm:$0xf]
        %v8270 = vld [vmem:[%s8260 + $0x24] sm:$0xf]
        %v8271 = vld [vmem:[%s8260 + $0x28] sm:$0xf]
        %v8272 = vld [vmem:[%s8260 + $0x2c] sm:$0xf]
        %v8273 = vld [vmem:[%s8260 + $0x30] sm:$0xf]
        %v8274 = vld [vmem:[%s8260 + $0x34] sm:$0xf]
        %v8275 = vld [vmem:[%s8260 + $0x38] sm:$0xf]
        %v8276 = vld [vmem:[%s8260 + $0x3c] sm:$0xf]
        %v8293 = vunpack.c.l.b16 %v8261
        %v8294 = vunpack.c.l.b16 %v8262
        %v8295 = vunpack.c.l.b16 %v8263
        %v8296 = vunpack.c.l.b16 %v8264
        %v8297 = vunpack.c.l.b16 %v8265
        %v8298 = vunpack.c.l.b16 %v8266
        %v8299 = vunpack.c.l.b16 %v8267
        %v8300 = vunpack.c.l.b16 %v8268
        %v8301 = vunpack.c.l.b16 %v8269
        %v8302 = vunpack.c.l.b16 %v8270
        %v8303 = vunpack.c.l.b16 %v8271
        %v8304 = vunpack.c.l.b16 %v8272
        %v8305 = vunpack.c.l.b16 %v8273
        %v8306 = vunpack.c.l.b16 %v8274
        %v8307 = vunpack.c.l.b16 %v8275
        %v8308 = vunpack.c.l.b16 %v8276
        %v8309 = vpack.c.b16 %v8294, %v8293
        %v8310 = vpack.c.b16 %v8296, %v8295
        %v8311 = vpack.c.b16 %v8298, %v8297
        %v8312 = vpack.c.b16 %v8300, %v8299
        %v8313 = vpack.c.b16 %v8302, %v8301
        %v8314 = vpack.c.b16 %v8304, %v8303
        %v8315 = vpack.c.b16 %v8306, %v8305
        %v8316 = vpack.c.b16 %v8308, %v8307
        %8325 = vmatprep.subr.bf16.mxu0 0
        %8326 = vmatpush1.bf16.msra.mxu0 %v8309
        %8327 = vmatprep.subr.bf16.mxu0 0
        %8328 = vmatpush1.bf16.msra.mxu0 %v8310
        %8329 = vmatprep.subr.bf16.mxu0 0
        %8330 = vmatpush1.bf16.msra.mxu0 %v8311
        %8331 = vmatprep.subr.bf16.mxu0 0
        %8332 = vmatpush1.bf16.msra.mxu0 %v8312
        %8333 = vmatprep.subr.bf16.mxu0 0
        %8334 = vmatpush1.bf16.msra.mxu0 %v8313
        %8335 = vmatprep.subr.bf16.mxu0 0
        %8336 = vmatpush1.bf16.msra.mxu0 %v8314
        %8337 = vmatprep.subr.bf16.mxu0 0
        %8338 = vmatpush1.bf16.msra.mxu0 %v8315
        %8339 = vmatprep.subr.bf16.mxu0 0
        %8340 = vmatpush1.bf16.msra.mxu0 %v8316
        %8341 = vmatprep.subr.bf16.mxu0 0
        %8342 = vmatpush1.bf16.msra.mxu0 0
        %8343 = vmatprep.subr.bf16.mxu0 0
        %8344 = vmatpush1.bf16.msra.mxu0 0
        %8345 = vmatprep.subr.bf16.mxu0 0
        %8346 = vmatpush1.bf16.msra.mxu0 0
        %8347 = vmatprep.subr.bf16.mxu0 0
        %8348 = vmatpush1.bf16.msra.mxu0 0
        %8349 = vmatprep.subr.bf16.mxu0 0
        %8350 = vmatpush1.bf16.msra.mxu0 0
        %8351 = vmatprep.subr.bf16.mxu0 0
        %8352 = vmatpush1.bf16.msra.mxu0 0
        %8353 = vmatprep.subr.bf16.mxu0 0
        %8354 = vmatpush1.bf16.msra.mxu0 0
        %8355 = vmatprep.subr.bf16.mxu0 0
        %8356 = vmatpush1.bf16.msra.mxu0 0
        %8357 = vmatprep.mubr.bf16.mxu0 0
        %8358 = vmatmul.mubr.bf16.gmra.mrb[0].mxu0 %v8236
        %v8359 = vpop.f32.mrb[0].mxu0
        %v8360 = vadd.f32 0.0, %v8359
        %v8361 = vpop.f32.mrb[0].mxu0
        %v8362 = vpop.f32.mrb[0].mxu0
        %v8363 = vadd.f32 0.0, %v8362
        %v8364 = vpop.f32.mrb[0].mxu0
        %8365 = vdwg.mxu0
        %v8382 = vunpack.c.l.b16 %v8244
        %v8383 = vunpack.c.l.b16 %v8245
        %v8384 = vunpack.c.l.b16 %v8246
        %v8385 = vunpack.c.l.b16 %v8247
        %v8386 = vunpack.c.l.b16 %v8248
        %v8387 = vunpack.c.l.b16 %v8249
        %v8388 = vunpack.c.l.b16 %v8250
        %v8389 = vunpack.c.l.b16 %v8251
        %v8390 = vunpack.c.l.b16 %v8252
        %v8391 = vunpack.c.l.b16 %v8253
        %v8392 = vunpack.c.l.b16 %v8254
        %v8393 = vunpack.c.l.b16 %v8255
        %v8394 = vunpack.c.l.b16 %v8256
        %v8395 = vunpack.c.l.b16 %v8257
        %v8396 = vunpack.c.l.b16 %v8258
        %v8397 = vunpack.c.l.b16 %v8259
        %v8398 = vpack.c.b16 %v8383, %v8382
        %v8399 = vpack.c.b16 %v8385, %v8384
        %v8400 = vpack.c.b16 %v8387, %v8386
        %v8401 = vpack.c.b16 %v8389, %v8388
        %v8402 = vpack.c.b16 %v8391, %v8390
        %v8403 = vpack.c.b16 %v8393, %v8392
        %v8404 = vpack.c.b16 %v8395, %v8394
        %v8405 = vpack.c.b16 %v8397, %v8396
        %8414 = vmatprep.subr.bf16.mxu0 0
        %8415 = vmatpush1.bf16.msra.mxu0 %v8398
        %8416 = vmatprep.subr.bf16.mxu0 0
        %8417 = vmatpush1.bf16.msra.mxu0 %v8399
        %8418 = vmatprep.subr.bf16.mxu0 0
        %8419 = vmatpush1.bf16.msra.mxu0 %v8400
        %8420 = vmatprep.subr.bf16.mxu0 0
        %8421 = vmatpush1.bf16.msra.mxu0 %v8401
        %8422 = vmatprep.subr.bf16.mxu0 0
        %8423 = vmatpush1.bf16.msra.mxu0 %v8402
        %8424 = vmatprep.subr.bf16.mxu0 0
        %8425 = vmatpush1.bf16.msra.mxu0 %v8403
        %8426 = vmatprep.subr.bf16.mxu0 0
        %8427 = vmatpush1.bf16.msra.mxu0 %v8404
        %8428 = vmatprep.subr.bf16.mxu0 0
        %8429 = vmatpush1.bf16.msra.mxu0 %v8405
        %8430 = vmatprep.subr.bf16.mxu0 0
        %8431 = vmatpush1.bf16.msra.mxu0 0
        %8432 = vmatprep.subr.bf16.mxu0 0
        %8433 = vmatpush1.bf16.msra.mxu0 0
        %8434 = vmatprep.subr.bf16.mxu0 0
        %8435 = vmatpush1.bf16.msra.mxu0 0
        %8436 = vmatprep.subr.bf16.mxu0 0
        %8437 = vmatpush1.bf16.msra.mxu0 0
        %8438 = vmatprep.subr.bf16.mxu0 0
        %8439 = vmatpush1.bf16.msra.mxu0 0
        %8440 = vmatprep.subr.bf16.mxu0 0
        %8441 = vmatpush1.bf16.msra.mxu0 0
        %8442 = vmatprep.subr.bf16.mxu0 0
        %8443 = vmatpush1.bf16.msra.mxu0 0
        %8444 = vmatprep.subr.bf16.mxu0 0
        %8445 = vmatpush1.bf16.msra.mxu0 0
        %8446 = vmatprep.mubr.bf16.mxu0 0
        %8447 = vmatmul.mubr.bf16.gmra.mrb[0].mxu0 %v8235
        %v8448 = vpop.f32.mrb[0].mxu0
        %v8449 = vadd.f32 %v8360, %v8448
        %v8450 = vpop.f32.mrb[0].mxu0
        %v8451 = vpop.f32.mrb[0].mxu0
        %v8452 = vadd.f32 %v8363, %v8451
        %v8453 = vpop.f32.mrb[0].mxu0
        %8454 = vdwg.mxu0
        %s8455 = scalar_lea.vmem %s8, 128
        %v8456 = vld [vmem:[%s8455] sm:$0xf]
        %v8457 = vld [vmem:[%s8455 + $0x4] sm:$0xf]
        %v8458 = vld [vmem:[%s8455 + $0x8] sm:$0xf]
        %v8459 = vld [vmem:[%s8455 + $0xc] sm:$0xf]
        %v8460 = vld [vmem:[%s8455 + $0x10] sm:$0xf]
        %v8461 = vld [vmem:[%s8455 + $0x14] sm:$0xf]
        %v8462 = vld [vmem:[%s8455 + $0x18] sm:$0xf]
        %v8463 = vld [vmem:[%s8455 + $0x1c] sm:$0xf]
        %v8464 = vld [vmem:[%s8455 + $0x20] sm:$0xf]
        %v8465 = vld [vmem:[%s8455 + $0x24] sm:$0xf]
        %v8466 = vld [vmem:[%s8455 + $0x28] sm:$0xf]
        %v8467 = vld [vmem:[%s8455 + $0x2c] sm:$0xf]
        %v8468 = vld [vmem:[%s8455 + $0x30] sm:$0xf]
        %v8469 = vld [vmem:[%s8455 + $0x34] sm:$0xf]
        %v8470 = vld [vmem:[%s8455 + $0x38] sm:$0xf]
        %v8471 = vld [vmem:[%s8455 + $0x3c] sm:$0xf]
        %v8488 = vunpack.c.l.b16 %v8456
        %v8489 = vunpack.c.l.b16 %v8457
        %v8490 = vunpack.c.l.b16 %v8458
        %v8491 = vunpack.c.l.b16 %v8459
        %v8492 = vunpack.c.l.b16 %v8460
        %v8493 = vunpack.c.l.b16 %v8461
        %v8494 = vunpack.c.l.b16 %v8462
        %v8495 = vunpack.c.l.b16 %v8463
        %v8496 = vunpack.c.l.b16 %v8464
        %v8497 = vunpack.c.l.b16 %v8465
        %v8498 = vunpack.c.l.b16 %v8466
        %v8499 = vunpack.c.l.b16 %v8467
        %v8500 = vunpack.c.l.b16 %v8468
        %v8501 = vunpack.c.l.b16 %v8469
        %v8502 = vunpack.c.l.b16 %v8470
        %v8503 = vunpack.c.l.b16 %v8471
        %v8504 = vpack.c.b16 %v8489, %v8488
        %v8505 = vpack.c.b16 %v8491, %v8490
        %v8506 = vpack.c.b16 %v8493, %v8492
        %v8507 = vpack.c.b16 %v8495, %v8494
        %v8508 = vpack.c.b16 %v8497, %v8496
        %v8509 = vpack.c.b16 %v8499, %v8498
        %v8510 = vpack.c.b16 %v8501, %v8500
        %v8511 = vpack.c.b16 %v8503, %v8502
        %8520 = vmatprep.subr.bf16.mxu0 0
        %8521 = vmatpush1.bf16.msra.mxu0 %v8504
        %8522 = vmatprep.subr.bf16.mxu0 0
        %8523 = vmatpush1.bf16.msra.mxu0 %v8505
        %8524 = vmatprep.subr.bf16.mxu0 0
        %8525 = vmatpush1.bf16.msra.mxu0 %v8506
        %8526 = vmatprep.subr.bf16.mxu0 0
        %8527 = vmatpush1.bf16.msra.mxu0 %v8507
        %8528 = vmatprep.subr.bf16.mxu0 0
        %8529 = vmatpush1.bf16.msra.mxu0 %v8508
        %8530 = vmatprep.subr.bf16.mxu0 0
        %8531 = vmatpush1.bf16.msra.mxu0 %v8509
        %8532 = vmatprep.subr.bf16.mxu0 0
        %8533 = vmatpush1.bf16.msra.mxu0 %v8510
        %8534 = vmatprep.subr.bf16.mxu0 0
        %8535 = vmatpush1.bf16.msra.mxu0 %v8511
        %8536 = vmatprep.subr.bf16.mxu0 0
        %8537 = vmatpush1.bf16.msra.mxu0 0
        %8538 = vmatprep.subr.bf16.mxu0 0
        %8539 = vmatpush1.bf16.msra.mxu0 0
        %8540 = vmatprep.subr.bf16.mxu0 0
        %8541 = vmatpush1.bf16.msra.mxu0 0
        %8542 = vmatprep.subr.bf16.mxu0 0
        %8543 = vmatpush1.bf16.msra.mxu0 0
        %8544 = vmatprep.subr.bf16.mxu0 0
        %8545 = vmatpush1.bf16.msra.mxu0 0
        %8546 = vmatprep.subr.bf16.mxu0 0
        %8547 = vmatpush1.bf16.msra.mxu0 0
        %8548 = vmatprep.subr.bf16.mxu0 0
        %8549 = vmatpush1.bf16.msra.mxu0 0
        %8550 = vmatprep.subr.bf16.mxu0 0
        %8551 = vmatpush1.bf16.msra.mxu0 0
        %8552 = vmatprep.mubr.bf16.mxu0 0
        %8553 = vmatmul.mubr.bf16.gmra.mrb[0].mxu0 %v8237
        %v8554 = vpop.f32.mrb[0].mxu0
        %v8555 = vadd.f32 0.0, %v8554
        %v8556 = vpop.f32.mrb[0].mxu0
        %v8557 = vpop.f32.mrb[0].mxu0
        %v8558 = vadd.f32 0.0, %v8557
        %v8559 = vpop.f32.mrb[0].mxu0
        %8560 = vdwg.mxu0
        %v8561 = vadd.f32 %v8449, %v8555
        %v8562 = vadd.f32 %v8452, %v8558
        %s8563 = scalar_lea.vmem %s8, 192
        %v8564 = vld [vmem:[%s8563] sm:$0xf]
        %v8565 = vld [vmem:[%s8563 + $0x4] sm:$0xf]
        %v8566 = vld [vmem:[%s8563 + $0x8] sm:$0xf]
        %v8567 = vld [vmem:[%s8563 + $0xc] sm:$0xf]
        %v8568 = vld [vmem:[%s8563 + $0x10] sm:$0xf]
        %v8569 = vld [vmem:[%s8563 + $0x14] sm:$0xf]
        %v8570 = vld [vmem:[%s8563 + $0x18] sm:$0xf]
        %v8571 = vld [vmem:[%s8563 + $0x1c] sm:$0xf]
        %v8572 = vld [vmem:[%s8563 + $0x20] sm:$0xf]
        %v8573 = vld [vmem:[%s8563 + $0x24] sm:$0xf]
        %v8574 = vld [vmem:[%s8563 + $0x28] sm:$0xf]
        %v8575 = vld [vmem:[%s8563 + $0x2c] sm:$0xf]
        %v8576 = vld [vmem:[%s8563 + $0x30] sm:$0xf]
        %v8577 = vld [vmem:[%s8563 + $0x34] sm:$0xf]
        %v8578 = vld [vmem:[%s8563 + $0x38] sm:$0xf]
        %v8579 = vld [vmem:[%s8563 + $0x3c] sm:$0xf]
        %v8596 = vunpack.c.l.b16 %v8564
        %v8597 = vunpack.c.l.b16 %v8565
        %v8598 = vunpack.c.l.b16 %v8566
        %v8599 = vunpack.c.l.b16 %v8567
        %v8600 = vunpack.c.l.b16 %v8568
        %v8601 = vunpack.c.l.b16 %v8569
        %v8602 = vunpack.c.l.b16 %v8570
        %v8603 = vunpack.c.l.b16 %v8571
        %v8604 = vunpack.c.l.b16 %v8572
        %v8605 = vunpack.c.l.b16 %v8573
        %v8606 = vunpack.c.l.b16 %v8574
        %v8607 = vunpack.c.l.b16 %v8575
        %v8608 = vunpack.c.l.b16 %v8576
        %v8609 = vunpack.c.l.b16 %v8577
        %v8610 = vunpack.c.l.b16 %v8578
        %v8611 = vunpack.c.l.b16 %v8579
        %v8612 = vpack.c.b16 %v8597, %v8596
        %v8613 = vpack.c.b16 %v8599, %v8598
        %v8614 = vpack.c.b16 %v8601, %v8600
        %v8615 = vpack.c.b16 %v8603, %v8602
        %v8616 = vpack.c.b16 %v8605, %v8604
        %v8617 = vpack.c.b16 %v8607, %v8606
        %v8618 = vpack.c.b16 %v8609, %v8608
        %v8619 = vpack.c.b16 %v8611, %v8610
        %8628 = vmatprep.subr.bf16.mxu0 0
        %8629 = vmatpush1.bf16.msra.mxu0 %v8612
        %8630 = vmatprep.subr.bf16.mxu0 0
        %8631 = vmatpush1.bf16.msra.mxu0 %v8613
        %8632 = vmatprep.subr.bf16.mxu0 0
        %8633 = vmatpush1.bf16.msra.mxu0 %v8614
        %8634 = vmatprep.subr.bf16.mxu0 0
        %8635 = vmatpush1.bf16.msra.mxu0 %v8615
        %8636 = vmatprep.subr.bf16.mxu0 0
        %8637 = vmatpush1.bf16.msra.mxu0 %v8616
        %8638 = vmatprep.subr.bf16.mxu0 0
        %8639 = vmatpush1.bf16.msra.mxu0 %v8617
        %8640 = vmatprep.subr.bf16.mxu0 0
        %8641 = vmatpush1.bf16.msra.mxu0 %v8618
        %8642 = vmatprep.subr.bf16.mxu0 0
        %8643 = vmatpush1.bf16.msra.mxu0 %v8619
        %8644 = vmatprep.subr.bf16.mxu0 0
        %8645 = vmatpush1.bf16.msra.mxu0 0
        %8646 = vmatprep.subr.bf16.mxu0 0
        %8647 = vmatpush1.bf16.msra.mxu0 0
        %8648 = vmatprep.subr.bf16.mxu0 0
        %8649 = vmatpush1.bf16.msra.mxu0 0
        %8650 = vmatprep.subr.bf16.mxu0 0
        %8651 = vmatpush1.bf16.msra.mxu0 0
        %8652 = vmatprep.subr.bf16.mxu0 0
        %8653 = vmatpush1.bf16.msra.mxu0 0
        %8654 = vmatprep.subr.bf16.mxu0 0
        %8655 = vmatpush1.bf16.msra.mxu0 0
        %8656 = vmatprep.subr.bf16.mxu0 0
        %8657 = vmatpush1.bf16.msra.mxu0 0
        %8658 = vmatprep.subr.bf16.mxu0 0
        %8659 = vmatpush1.bf16.msra.mxu0 0
        %8660 = vmatprep.mubr.bf16.mxu0 0
        %8661 = vmatmul.mubr.bf16.gmra.mrb[0].mxu0 %v8238
        %v8662 = vpop.f32.mrb[0].mxu0
        %v8663 = vadd.f32 0.0, %v8662
        %v8664 = vpop.f32.mrb[0].mxu0
        %v8665 = vpop.f32.mrb[0].mxu0
        %v8666 = vadd.f32 0.0, %v8665
        %v8667 = vpop.f32.mrb[0].mxu0
        %8668 = vdwg.mxu0
        %v8669 = vadd.f32 %v8561, %v8663
        %v8670 = vadd.f32 %v8562, %v8666
        %s8671 = scalar_lea.vmem %s8, 256
        %v8672 = vld [vmem:[%s8671] sm:$0xf]
        %v8673 = vld [vmem:[%s8671 + $0x4] sm:$0xf]
        %v8674 = vld [vmem:[%s8671 + $0x8] sm:$0xf]
        %v8675 = vld [vmem:[%s8671 + $0xc] sm:$0xf]
        %v8676 = vld [vmem:[%s8671 + $0x10] sm:$0xf]
        %v8677 = vld [vmem:[%s8671 + $0x14] sm:$0xf]
        %v8678 = vld [vmem:[%s8671 + $0x18] sm:$0xf]
        %v8679 = vld [vmem:[%s8671 + $0x1c] sm:$0xf]
        %v8680 = vld [vmem:[%s8671 + $0x20] sm:$0xf]
        %v8681 = vld [vmem:[%s8671 + $0x24] sm:$0xf]
        %v8682 = vld [vmem:[%s8671 + $0x28] sm:$0xf]
        %v8683 = vld [vmem:[%s8671 + $0x2c] sm:$0xf]
        %v8684 = vld [vmem:[%s8671 + $0x30] sm:$0xf]
        %v8685 = vld [vmem:[%s8671 + $0x34] sm:$0xf]
        %v8686 = vld [vmem:[%s8671 + $0x38] sm:$0xf]
        %v8687 = vld [vmem:[%s8671 + $0x3c] sm:$0xf]
        %v8704 = vunpack.c.l.b16 %v8672
        %v8705 = vunpack.c.l.b16 %v8673
        %v8706 = vunpack.c.l.b16 %v8674
        %v8707 = vunpack.c.l.b16 %v8675
        %v8708 = vunpack.c.l.b16 %v8676
        %v8709 = vunpack.c.l.b16 %v8677
        %v8710 = vunpack.c.l.b16 %v8678
        %v8711 = vunpack.c.l.b16 %v8679
        %v8712 = vunpack.c.l.b16 %v8680
        %v8713 = vunpack.c.l.b16 %v8681
        %v8714 = vunpack.c.l.b16 %v8682
        %v8715 = vunpack.c.l.b16 %v8683
        %v8716 = vunpack.c.l.b16 %v8684
        %v8717 = vunpack.c.l.b16 %v8685
        %v8718 = vunpack.c.l.b16 %v8686
        %v8719 = vunpack.c.l.b16 %v8687
        %v8720 = vpack.c.b16 %v8705, %v8704
        %v8721 = vpack.c.b16 %v8707, %v8706
        %v8722 = vpack.c.b16 %v8709, %v8708
        %v8723 = vpack.c.b16 %v8711, %v8710
        %v8724 = vpack.c.b16 %v8713, %v8712
        %v8725 = vpack.c.b16 %v8715, %v8714
        %v8726 = vpack.c.b16 %v8717, %v8716
        %v8727 = vpack.c.b16 %v8719, %v8718
        %8736 = vmatprep.subr.bf16.mxu0 0
        %8737 = vmatpush1.bf16.msra.mxu0 %v8720
        %8738 = vmatprep.subr.bf16.mxu0 0
        %8739 = vmatpush1.bf16.msra.mxu0 %v8721
        %8740 = vmatprep.subr.bf16.mxu0 0
        %8741 = vmatpush1.bf16.msra.mxu0 %v8722
        %8742 = vmatprep.subr.bf16.mxu0 0
        %8743 = vmatpush1.bf16.msra.mxu0 %v8723
        %8744 = vmatprep.subr.bf16.mxu0 0
        %8745 = vmatpush1.bf16.msra.mxu0 %v8724
        %8746 = vmatprep.subr.bf16.mxu0 0
        %8747 = vmatpush1.bf16.msra.mxu0 %v8725
        %8748 = vmatprep.subr.bf16.mxu0 0
        %8749 = vmatpush1.bf16.msra.mxu0 %v8726
        %8750 = vmatprep.subr.bf16.mxu0 0
        %8751 = vmatpush1.bf16.msra.mxu0 %v8727
        %8752 = vmatprep.subr.bf16.mxu0 0
        %8753 = vmatpush1.bf16.msra.mxu0 0
        %8754 = vmatprep.subr.bf16.mxu0 0
        %8755 = vmatpush1.bf16.msra.mxu0 0
        %8756 = vmatprep.subr.bf16.mxu0 0
        %8757 = vmatpush1.bf16.msra.mxu0 0
        %8758 = vmatprep.subr.bf16.mxu0 0
        %8759 = vmatpush1.bf16.msra.mxu0 0
        %8760 = vmatprep.subr.bf16.mxu0 0
        %8761 = vmatpush1.bf16.msra.mxu0 0
        %8762 = vmatprep.subr.bf16.mxu0 0
        %8763 = vmatpush1.bf16.msra.mxu0 0
        %8764 = vmatprep.subr.bf16.mxu0 0
        %8765 = vmatpush1.bf16.msra.mxu0 0
        %8766 = vmatprep.subr.bf16.mxu0 0
        %8767 = vmatpush1.bf16.msra.mxu0 0
        %8768 = vmatprep.mubr.bf16.mxu0 0
        %8769 = vmatmul.mubr.bf16.gmra.mrb[0].mxu0 %v8239
        %v8770 = vpop.f32.mrb[0].mxu0
        %v8771 = vadd.f32 0.0, %v8770
        %v8772 = vpop.f32.mrb[0].mxu0
        %v8773 = vpop.f32.mrb[0].mxu0
        %v8774 = vadd.f32 0.0, %v8773
        %v8775 = vpop.f32.mrb[0].mxu0
        %8776 = vdwg.mxu0
        %v8777 = vadd.f32 %v8669, %v8771
        %v8778 = vadd.f32 %v8670, %v8774
        %s8779 = scalar_lea.vmem %s8, 320
        %v8780 = vld [vmem:[%s8779] sm:$0xf]
        %v8781 = vld [vmem:[%s8779 + $0x4] sm:$0xf]
        %v8782 = vld [vmem:[%s8779 + $0x8] sm:$0xf]
        %v8783 = vld [vmem:[%s8779 + $0xc] sm:$0xf]
        %v8784 = vld [vmem:[%s8779 + $0x10] sm:$0xf]
        %v8785 = vld [vmem:[%s8779 + $0x14] sm:$0xf]
        %v8786 = vld [vmem:[%s8779 + $0x18] sm:$0xf]
        %v8787 = vld [vmem:[%s8779 + $0x1c] sm:$0xf]
        %v8788 = vld [vmem:[%s8779 + $0x20] sm:$0xf]
        %v8789 = vld [vmem:[%s8779 + $0x24] sm:$0xf]
        %v8790 = vld [vmem:[%s8779 + $0x28] sm:$0xf]
        %v8791 = vld [vmem:[%s8779 + $0x2c] sm:$0xf]
        %v8792 = vld [vmem:[%s8779 + $0x30] sm:$0xf]
        %v8793 = vld [vmem:[%s8779 + $0x34] sm:$0xf]
        %v8794 = vld [vmem:[%s8779 + $0x38] sm:$0xf]
        %v8795 = vld [vmem:[%s8779 + $0x3c] sm:$0xf]
        %v8812 = vunpack.c.l.b16 %v8780
        %v8813 = vunpack.c.l.b16 %v8781
        %v8814 = vunpack.c.l.b16 %v8782
        %v8815 = vunpack.c.l.b16 %v8783
        %v8816 = vunpack.c.l.b16 %v8784
        %v8817 = vunpack.c.l.b16 %v8785
        %v8818 = vunpack.c.l.b16 %v8786
        %v8819 = vunpack.c.l.b16 %v8787
        %v8820 = vunpack.c.l.b16 %v8788
        %v8821 = vunpack.c.l.b16 %v8789
        %v8822 = vunpack.c.l.b16 %v8790
        %v8823 = vunpack.c.l.b16 %v8791
        %v8824 = vunpack.c.l.b16 %v8792
        %v8825 = vunpack.c.l.b16 %v8793
        %v8826 = vunpack.c.l.b16 %v8794
        %v8827 = vunpack.c.l.b16 %v8795
        %v8828 = vpack.c.b16 %v8813, %v8812
        %v8829 = vpack.c.b16 %v8815, %v8814
        %v8830 = vpack.c.b16 %v8817, %v8816
        %v8831 = vpack.c.b16 %v8819, %v8818
        %v8832 = vpack.c.b16 %v8821, %v8820
        %v8833 = vpack.c.b16 %v8823, %v8822
        %v8834 = vpack.c.b16 %v8825, %v8824
        %v8835 = vpack.c.b16 %v8827, %v8826
        %8844 = vmatprep.subr.bf16.mxu0 0
        %8845 = vmatpush1.bf16.msra.mxu0 %v8828
        %8846 = vmatprep.subr.bf16.mxu0 0
        %8847 = vmatpush1.bf16.msra.mxu0 %v8829
        %8848 = vmatprep.subr.bf16.mxu0 0
        %8849 = vmatpush1.bf16.msra.mxu0 %v8830
        %8850 = vmatprep.subr.bf16.mxu0 0
        %8851 = vmatpush1.bf16.msra.mxu0 %v8831
        %8852 = vmatprep.subr.bf16.mxu0 0
        %8853 = vmatpush1.bf16.msra.mxu0 %v8832
        %8854 = vmatprep.subr.bf16.mxu0 0
        %8855 = vmatpush1.bf16.msra.mxu0 %v8833
        %8856 = vmatprep.subr.bf16.mxu0 0
        %8857 = vmatpush1.bf16.msra.mxu0 %v8834
        %8858 = vmatprep.subr.bf16.mxu0 0
        %8859 = vmatpush1.bf16.msra.mxu0 %v8835
        %8860 = vmatprep.subr.bf16.mxu0 0
        %8861 = vmatpush1.bf16.msra.mxu0 0
        %8862 = vmatprep.subr.bf16.mxu0 0
        %8863 = vmatpush1.bf16.msra.mxu0 0
        %8864 = vmatprep.subr.bf16.mxu0 0
        %8865 = vmatpush1.bf16.msra.mxu0 0
        %8866 = vmatprep.subr.bf16.mxu0 0
        %8867 = vmatpush1.bf16.msra.mxu0 0
        %8868 = vmatprep.subr.bf16.mxu0 0
        %8869 = vmatpush1.bf16.msra.mxu0 0
        %8870 = vmatprep.subr.bf16.mxu0 0
        %8871 = vmatpush1.bf16.msra.mxu0 0
        %8872 = vmatprep.subr.bf16.mxu0 0
        %8873 = vmatpush1.bf16.msra.mxu0 0
        %8874 = vmatprep.subr.bf16.mxu0 0
        %8875 = vmatpush1.bf16.msra.mxu0 0
        %8876 = vmatprep.mubr.bf16.mxu0 0
        %8877 = vmatmul.mubr.bf16.gmra.mrb[0].mxu0 %v8240
        %v8878 = vpop.f32.mrb[0].mxu0
        %v8879 = vadd.f32 0.0, %v8878
        %v8880 = vpop.f32.mrb[0].mxu0
        %v8881 = vpop.f32.mrb[0].mxu0
        %v8882 = vadd.f32 0.0, %v8881
        %v8883 = vpop.f32.mrb[0].mxu0
        %8884 = vdwg.mxu0
        %v8885 = vadd.f32 %v8777, %v8879
        %v8886 = vadd.f32 %v8778, %v8882
        %s8887 = scalar_lea.vmem %s8, 384
        %v8888 = vld [vmem:[%s8887] sm:$0xf]
        %v8889 = vld [vmem:[%s8887 + $0x4] sm:$0xf]
        %v8890 = vld [vmem:[%s8887 + $0x8] sm:$0xf]
        %v8891 = vld [vmem:[%s8887 + $0xc] sm:$0xf]
        %v8892 = vld [vmem:[%s8887 + $0x10] sm:$0xf]
        %v8893 = vld [vmem:[%s8887 + $0x14] sm:$0xf]
        %v8894 = vld [vmem:[%s8887 + $0x18] sm:$0xf]
        %v8895 = vld [vmem:[%s8887 + $0x1c] sm:$0xf]
        %v8896 = vld [vmem:[%s8887 + $0x20] sm:$0xf]
        %v8897 = vld [vmem:[%s8887 + $0x24] sm:$0xf]
        %v8898 = vld [vmem:[%s8887 + $0x28] sm:$0xf]
        %v8899 = vld [vmem:[%s8887 + $0x2c] sm:$0xf]
        %v8900 = vld [vmem:[%s8887 + $0x30] sm:$0xf]
        %v8901 = vld [vmem:[%s8887 + $0x34] sm:$0xf]
        %v8902 = vld [vmem:[%s8887 + $0x38] sm:$0xf]
        %v8903 = vld [vmem:[%s8887 + $0x3c] sm:$0xf]
        %v8920 = vunpack.c.l.b16 %v8888
        %v8921 = vunpack.c.l.b16 %v8889
        %v8922 = vunpack.c.l.b16 %v8890
        %v8923 = vunpack.c.l.b16 %v8891
        %v8924 = vunpack.c.l.b16 %v8892
        %v8925 = vunpack.c.l.b16 %v8893
        %v8926 = vunpack.c.l.b16 %v8894
        %v8927 = vunpack.c.l.b16 %v8895
        %v8928 = vunpack.c.l.b16 %v8896
        %v8929 = vunpack.c.l.b16 %v8897
        %v8930 = vunpack.c.l.b16 %v8898
        %v8931 = vunpack.c.l.b16 %v8899
        %v8932 = vunpack.c.l.b16 %v8900
        %v8933 = vunpack.c.l.b16 %v8901
        %v8934 = vunpack.c.l.b16 %v8902
        %v8935 = vunpack.c.l.b16 %v8903
        %v8936 = vpack.c.b16 %v8921, %v8920
        %v8937 = vpack.c.b16 %v8923, %v8922
        %v8938 = vpack.c.b16 %v8925, %v8924
        %v8939 = vpack.c.b16 %v8927, %v8926
        %v8940 = vpack.c.b16 %v8929, %v8928
        %v8941 = vpack.c.b16 %v8931, %v8930
        %v8942 = vpack.c.b16 %v8933, %v8932
        %v8943 = vpack.c.b16 %v8935, %v8934
        %8952 = vmatprep.subr.bf16.mxu0 0
        %8953 = vmatpush1.bf16.msra.mxu0 %v8936
        %8954 = vmatprep.subr.bf16.mxu0 0
        %8955 = vmatpush1.bf16.msra.mxu0 %v8937
        %8956 = vmatprep.subr.bf16.mxu0 0
        %8957 = vmatpush1.bf16.msra.mxu0 %v8938
        %8958 = vmatprep.subr.bf16.mxu0 0
        %8959 = vmatpush1.bf16.msra.mxu0 %v8939
        %8960 = vmatprep.subr.bf16.mxu0 0
        %8961 = vmatpush1.bf16.msra.mxu0 %v8940
        %8962 = vmatprep.subr.bf16.mxu0 0
        %8963 = vmatpush1.bf16.msra.mxu0 %v8941
        %8964 = vmatprep.subr.bf16.mxu0 0
        %8965 = vmatpush1.bf16.msra.mxu0 %v8942
        %8966 = vmatprep.subr.bf16.mxu0 0
        %8967 = vmatpush1.bf16.msra.mxu0 %v8943
        %8968 = vmatprep.subr.bf16.mxu0 0
        %8969 = vmatpush1.bf16.msra.mxu0 0
        %8970 = vmatprep.subr.bf16.mxu0 0
        %8971 = vmatpush1.bf16.msra.mxu0 0
        %8972 = vmatprep.subr.bf16.mxu0 0
        %8973 = vmatpush1.bf16.msra.mxu0 0
        %8974 = vmatprep.subr.bf16.mxu0 0
        %8975 = vmatpush1.bf16.msra.mxu0 0
        %8976 = vmatprep.subr.bf16.mxu0 0
        %8977 = vmatpush1.bf16.msra.mxu0 0
        %8978 = vmatprep.subr.bf16.mxu0 0
        %8979 = vmatpush1.bf16.msra.mxu0 0
        %8980 = vmatprep.subr.bf16.mxu0 0
        %8981 = vmatpush1.bf16.msra.mxu0 0
        %8982 = vmatprep.subr.bf16.mxu0 0
        %8983 = vmatpush1.bf16.msra.mxu0 0
        %8984 = vmatprep.mubr.bf16.mxu0 0
        %8985 = vmatmul.mubr.bf16.gmra.mrb[0].mxu0 %v8241
        %v8986 = vpop.f32.mrb[0].mxu0
        %v8987 = vadd.f32 0.0, %v8986
        %v8988 = vpop.f32.mrb[0].mxu0
        %v8989 = vpop.f32.mrb[0].mxu0
        %v8990 = vadd.f32 0.0, %v8989
        %v8991 = vpop.f32.mrb[0].mxu0
        %8992 = vdwg.mxu0
        %v8993 = vadd.f32 %v8885, %v8987
        %v8994 = vadd.f32 %v8886, %v8990
        %s8995 = scalar_lea.vmem %s8, 448
        %v8996 = vld [vmem:[%s8995] sm:$0xf]
        %v8997 = vld [vmem:[%s8995 + $0x4] sm:$0xf]
        %v8998 = vld [vmem:[%s8995 + $0x8] sm:$0xf]
        %v8999 = vld [vmem:[%s8995 + $0xc] sm:$0xf]
        %v9000 = vld [vmem:[%s8995 + $0x10] sm:$0xf]
        %v9001 = vld [vmem:[%s8995 + $0x14] sm:$0xf]
        %v9002 = vld [vmem:[%s8995 + $0x18] sm:$0xf]
        %v9003 = vld [vmem:[%s8995 + $0x1c] sm:$0xf]
        %v9004 = vld [vmem:[%s8995 + $0x20] sm:$0xf]
        %v9005 = vld [vmem:[%s8995 + $0x24] sm:$0xf]
        %v9006 = vld [vmem:[%s8995 + $0x28] sm:$0xf]
        %v9007 = vld [vmem:[%s8995 + $0x2c] sm:$0xf]
        %v9008 = vld [vmem:[%s8995 + $0x30] sm:$0xf]
        %v9009 = vld [vmem:[%s8995 + $0x34] sm:$0xf]
        %v9010 = vld [vmem:[%s8995 + $0x38] sm:$0xf]
        %v9011 = vld [vmem:[%s8995 + $0x3c] sm:$0xf]
        %v9028 = vunpack.c.l.b16 %v8996
        %v9029 = vunpack.c.l.b16 %v8997
        %v9030 = vunpack.c.l.b16 %v8998
        %v9031 = vunpack.c.l.b16 %v8999
        %v9032 = vunpack.c.l.b16 %v9000
        %v9033 = vunpack.c.l.b16 %v9001
        %v9034 = vunpack.c.l.b16 %v9002
        %v9035 = vunpack.c.l.b16 %v9003
        %v9036 = vunpack.c.l.b16 %v9004
        %v9037 = vunpack.c.l.b16 %v9005
        %v9038 = vunpack.c.l.b16 %v9006
        %v9039 = vunpack.c.l.b16 %v9007
        %v9040 = vunpack.c.l.b16 %v9008
        %v9041 = vunpack.c.l.b16 %v9009
        %v9042 = vunpack.c.l.b16 %v9010
        %v9043 = vunpack.c.l.b16 %v9011
        %v9044 = vpack.c.b16 %v9029, %v9028
        %v9045 = vpack.c.b16 %v9031, %v9030
        %v9046 = vpack.c.b16 %v9033, %v9032
        %v9047 = vpack.c.b16 %v9035, %v9034
        %v9048 = vpack.c.b16 %v9037, %v9036
        %v9049 = vpack.c.b16 %v9039, %v9038
        %v9050 = vpack.c.b16 %v9041, %v9040
        %v9051 = vpack.c.b16 %v9043, %v9042
        %9060 = vmatprep.subr.bf16.mxu0 0
        %9061 = vmatpush1.bf16.msra.mxu0 %v9044
        %9062 = vmatprep.subr.bf16.mxu0 0
        %9063 = vmatpush1.bf16.msra.mxu0 %v9045
        %9064 = vmatprep.subr.bf16.mxu0 0
        %9065 = vmatpush1.bf16.msra.mxu0 %v9046
        %9066 = vmatprep.subr.bf16.mxu0 0
        %9067 = vmatpush1.bf16.msra.mxu0 %v9047
        %9068 = vmatprep.subr.bf16.mxu0 0
        %9069 = vmatpush1.bf16.msra.mxu0 %v9048
        %9070 = vmatprep.subr.bf16.mxu0 0
        %9071 = vmatpush1.bf16.msra.mxu0 %v9049
        %9072 = vmatprep.subr.bf16.mxu0 0
        %9073 = vmatpush1.bf16.msra.mxu0 %v9050
        %9074 = vmatprep.subr.bf16.mxu0 0
        %9075 = vmatpush1.bf16.msra.mxu0 %v9051
        %9076 = vmatprep.subr.bf16.mxu0 0
        %9077 = vmatpush1.bf16.msra.mxu0 0
        %9078 = vmatprep.subr.bf16.mxu0 0
        %9079 = vmatpush1.bf16.msra.mxu0 0
        %9080 = vmatprep.subr.bf16.mxu0 0
        %9081 = vmatpush1.bf16.msra.mxu0 0
        %9082 = vmatprep.subr.bf16.mxu0 0
        %9083 = vmatpush1.bf16.msra.mxu0 0
        %9084 = vmatprep.subr.bf16.mxu0 0
        %9085 = vmatpush1.bf16.msra.mxu0 0
        %9086 = vmatprep.subr.bf16.mxu0 0
        %9087 = vmatpush1.bf16.msra.mxu0 0
        %9088 = vmatprep.subr.bf16.mxu0 0
        %9089 = vmatpush1.bf16.msra.mxu0 0
        %9090 = vmatprep.subr.bf16.mxu0 0
        %9091 = vmatpush1.bf16.msra.mxu0 0
        %9092 = vmatprep.mubr.bf16.mxu0 0
        %9093 = vmatmul.mubr.bf16.gmra.mrb[0].mxu0 %v8242
        %v9094 = vpop.f32.mrb[0].mxu0
        %v9095 = vadd.f32 0.0, %v9094
        %v9096 = vpop.f32.mrb[0].mxu0
        %v9097 = vpop.f32.mrb[0].mxu0
        %v9098 = vadd.f32 0.0, %v9097
        %v9099 = vpop.f32.mrb[0].mxu0
        %9100 = vdwg.mxu0
        %v9101 = vadd.f32 %v8993, %v9095
        %v9102 = vadd.f32 %v8994, %v9098
        %s9103 = scalar_lea.vmem %s8, 512
        %v9104 = vld [vmem:[%s9103] sm:$0xf]
        %v9105 = vld [vmem:[%s9103 + $0x4] sm:$0xf]
        %v9106 = vld [vmem:[%s9103 + $0x8] sm:$0xf]
        %v9107 = vld [vmem:[%s9103 + $0xc] sm:$0xf]
        %v9108 = vld [vmem:[%s9103 + $0x10] sm:$0xf]
        %v9109 = vld [vmem:[%s9103 + $0x14] sm:$0xf]
        %v9110 = vld [vmem:[%s9103 + $0x18] sm:$0xf]
        %v9111 = vld [vmem:[%s9103 + $0x1c] sm:$0xf]
        %v9112 = vld [vmem:[%s9103 + $0x20] sm:$0xf]
        %v9113 = vld [vmem:[%s9103 + $0x24] sm:$0xf]
        %v9114 = vld [vmem:[%s9103 + $0x28] sm:$0xf]
        %v9115 = vld [vmem:[%s9103 + $0x2c] sm:$0xf]
        %v9116 = vld [vmem:[%s9103 + $0x30] sm:$0xf]
        %v9117 = vld [vmem:[%s9103 + $0x34] sm:$0xf]
        %v9118 = vld [vmem:[%s9103 + $0x38] sm:$0xf]
        %v9119 = vld [vmem:[%s9103 + $0x3c] sm:$0xf]
        %v9136 = vunpack.c.l.b16 %v9104
        %v9137 = vunpack.c.l.b16 %v9105
        %v9138 = vunpack.c.l.b16 %v9106
        %v9139 = vunpack.c.l.b16 %v9107
        %v9140 = vunpack.c.l.b16 %v9108
        %v9141 = vunpack.c.l.b16 %v9109
        %v9142 = vunpack.c.l.b16 %v9110
        %v9143 = vunpack.c.l.b16 %v9111
        %v9144 = vunpack.c.l.b16 %v9112
        %v9145 = vunpack.c.l.b16 %v9113
        %v9146 = vunpack.c.l.b16 %v9114
        %v9147 = vunpack.c.l.b16 %v9115
        %v9148 = vunpack.c.l.b16 %v9116
        %v9149 = vunpack.c.l.b16 %v9117
        %v9150 = vunpack.c.l.b16 %v9118
        %v9151 = vunpack.c.l.b16 %v9119
        %v9152 = vpack.c.b16 %v9137, %v9136
        %v9153 = vpack.c.b16 %v9139, %v9138
        %v9154 = vpack.c.b16 %v9141, %v9140
        %v9155 = vpack.c.b16 %v9143, %v9142
        %v9156 = vpack.c.b16 %v9145, %v9144
        %v9157 = vpack.c.b16 %v9147, %v9146
        %v9158 = vpack.c.b16 %v9149, %v9148
        %v9159 = vpack.c.b16 %v9151, %v9150
        %9168 = vmatprep.subr.bf16.mxu0 0
        %9169 = vmatpush1.bf16.msra.mxu0 %v9152
        %9170 = vmatprep.subr.bf16.mxu0 0
        %9171 = vmatpush1.bf16.msra.mxu0 %v9153
        %9172 = vmatprep.subr.bf16.mxu0 0
        %9173 = vmatpush1.bf16.msra.mxu0 %v9154
        %9174 = vmatprep.subr.bf16.mxu0 0
        %9175 = vmatpush1.bf16.msra.mxu0 %v9155
        %9176 = vmatprep.subr.bf16.mxu0 0
        %9177 = vmatpush1.bf16.msra.mxu0 %v9156
        %9178 = vmatprep.subr.bf16.mxu0 0
        %9179 = vmatpush1.bf16.msra.mxu0 %v9157
        %9180 = vmatprep.subr.bf16.mxu0 0
        %9181 = vmatpush1.bf16.msra.mxu0 %v9158
        %9182 = vmatprep.subr.bf16.mxu0 0
        %9183 = vmatpush1.bf16.msra.mxu0 %v9159
        %9184 = vmatprep.subr.bf16.mxu0 0
        %9185 = vmatpush1.bf16.msra.mxu0 0
        %9186 = vmatprep.subr.bf16.mxu0 0
        %9187 = vmatpush1.bf16.msra.mxu0 0
        %9188 = vmatprep.subr.bf16.mxu0 0
        %9189 = vmatpush1.bf16.msra.mxu0 0
        %9190 = vmatprep.subr.bf16.mxu0 0
        %9191 = vmatpush1.bf16.msra.mxu0 0
        %9192 = vmatprep.subr.bf16.mxu0 0
        %9193 = vmatpush1.bf16.msra.mxu0 0
        %9194 = vmatprep.subr.bf16.mxu0 0
        %9195 = vmatpush1.bf16.msra.mxu0 0
        %9196 = vmatprep.subr.bf16.mxu0 0
        %9197 = vmatpush1.bf16.msra.mxu0 0
        %9198 = vmatprep.subr.bf16.mxu0 0
        %9199 = vmatpush1.bf16.msra.mxu0 0
        %9200 = vmatprep.mubr.bf16.mxu0 0
        %9201 = vmatmul.mubr.bf16.gmra.mrb[0].mxu0 %v8243
        %v9202 = vpop.f32.mrb[0].mxu0
        %v9203 = vadd.f32 0.0, %v9202
        %v9204 = vpop.f32.mrb[0].mxu0
        %v9205 = vpop.f32.mrb[0].mxu0
        %v9206 = vadd.f32 0.0, %v9205
        %v9207 = vpop.f32.mrb[0].mxu0
        %9208 = vdwg.mxu0
        %v9209 = vadd.f32 %v9101, %v9203
        %v9210 = vadd.f32 %v9102, %v9206
        %v9211 = vld [vmem:[%s9] sm:$0x1]
        %v9213 = vlaneseq
        %v9214 = vshrl.u32 %v9213, 7
        %v9215 = vsub.s32 0, %v9214
        %v9216 = vrot.slane %v9211, %v9215
        %v9218 = vadd.f32 %v9209, %v9216
        %v9219 = vadd.f32 %v9210, %v9216
        %v9220 = vmax.f32 %v9218, 0.0
        %v9221 = vmax.f32 %v9219, 0.0
        %v9222 = vpack.c.bf16 %v9221, %v9220
        %v9223 = vld [vmem:[%s10] sm:$0xf]
        %v9224 = vld [vmem:[%s10 + $0x4] sm:$0xf]
        %v9225 = vld [vmem:[%s10 + $0x8] sm:$0xf]
        %v9226 = vld [vmem:[%s10 + $0xc] sm:$0xf]
        %v9227 = vld [vmem:[%s10 + $0x10] sm:$0xf]
        %v9228 = vld [vmem:[%s10 + $0x14] sm:$0xf]
        %v9229 = vld [vmem:[%s10 + $0x18] sm:$0xf]
        %v9230 = vld [vmem:[%s10 + $0x1c] sm:$0xf]
        %v9231 = vld [vmem:[%s10 + $0x20] sm:$0xf]
        %v9241 = vunpack.c.l.b16 %v9223
        %v9242 = vunpack.c.l.b16 %v9224
        %v9243 = vunpack.c.l.b16 %v9225
        %v9244 = vunpack.c.l.b16 %v9226
        %v9245 = vunpack.c.l.b16 %v9227
        %v9246 = vunpack.c.l.b16 %v9228
        %v9247 = vunpack.c.l.b16 %v9229
        %v9248 = vunpack.c.l.b16 %v9230
        %v9249 = vunpack.c.l.b16 %v9231
        %v9250 = vpack.c.b16 %v9242, %v9241
        %v9251 = vpack.c.b16 %v9244, %v9243
        %v9252 = vpack.c.b16 %v9246, %v9245
        %v9253 = vpack.c.b16 %v9248, %v9247
        %v9254 = vpack.c.b16 %v9249, %v9249
        %vm9255 = vcmask 130048
        %v9257 = vsel %vm9255, %v9250, 0
        %v9260 = vsel %vm9255, %v9251, 0
        %v9263 = vsel %vm9255, %v9252, 0
        %v9266 = vsel %vm9255, %v9253, 0
        %v9269 = vsel %vm9255, %v9254, 0
        %9271 = vmatprep.subr.bf16.mxu0 0
        %9272 = vmatpush1.bf16.msra.mxu0 %v9222
        %9273 = vmatprep.subr.bf16.mxu0 0
        %9274 = vmatpush1.bf16.msra.mxu0 0
        %9275 = vmatprep.subr.bf16.mxu0 0
        %9276 = vmatpush1.bf16.msra.mxu0 0
        %9277 = vmatprep.subr.bf16.mxu0 0
        %9278 = vmatpush1.bf16.msra.mxu0 0
        %9279 = vmatprep.subr.bf16.mxu0 0
        %9280 = vmatpush1.bf16.msra.mxu0 0
        %9281 = vmatprep.subr.bf16.mxu0 0
        %9282 = vmatpush1.bf16.msra.mxu0 0
        %9283 = vmatprep.subr.bf16.mxu0 0
        %9284 = vmatpush1.bf16.msra.mxu0 0
        %9285 = vmatprep.subr.bf16.mxu0 0
        %9286 = vmatpush1.bf16.msra.mxu0 0
        %9287 = vmatprep.subr.bf16.mxu0 0
        %9288 = vmatpush1.bf16.msra.mxu0 0
        %9289 = vmatprep.subr.bf16.mxu0 0
        %9290 = vmatpush1.bf16.msra.mxu0 0
        %9291 = vmatprep.subr.bf16.mxu0 0
        %9292 = vmatpush1.bf16.msra.mxu0 0
        %9293 = vmatprep.subr.bf16.mxu0 0
        %9294 = vmatpush1.bf16.msra.mxu0 0
        %9295 = vmatprep.subr.bf16.mxu0 0
        %9296 = vmatpush1.bf16.msra.mxu0 0
        %9297 = vmatprep.subr.bf16.mxu0 0
        %9298 = vmatpush1.bf16.msra.mxu0 0
        %9299 = vmatprep.subr.bf16.mxu0 0
        %9300 = vmatpush1.bf16.msra.mxu0 0
        %9301 = vmatprep.subr.bf16.mxu0 0
        %9302 = vmatpush1.bf16.msra.mxu0 0
        %9303 = vmatprep.mubr.bf16.mxu0 0
        %9304 = vmatmul.mubr.bf16.gmra.mrb[0].mxu0 %v9257
        %v9305 = vpop.f32.mrb[0].mxu0
        %v9306 = vadd.f32 0.0, %v9305
        %v9307 = vpop.f32.mrb[0].mxu0
        %v9308 = vpop.f32.mrb[0].mxu0
        %v9309 = vadd.f32 0.0, %v9308
        %v9310 = vpop.f32.mrb[0].mxu0
        %9311 = vmatprep.mubr.bf16.mxu0 0
        %9312 = vmatmul.mubr.bf16.gmra.mrb[0].mxu0 %v9260
        %v9313 = vpop.f32.mrb[0].mxu0
        %v9314 = vadd.f32 0.0, %v9313
        %v9315 = vpop.f32.mrb[0].mxu0
        %v9316 = vpop.f32.mrb[0].mxu0
        %v9317 = vadd.f32 0.0, %v9316
        %v9318 = vpop.f32.mrb[0].mxu0
        %9319 = vmatprep.mubr.bf16.mxu0 0
        %9320 = vmatmul.mubr.bf16.gmra.mrb[0].mxu0 %v9263
        %v9321 = vpop.f32.mrb[0].mxu0
        %v9322 = vadd.f32 0.0, %v9321
        %v9323 = vpop.f32.mrb[0].mxu0
        %v9324 = vpop.f32.mrb[0].mxu0
        %v9325 = vadd.f32 0.0, %v9324
        %v9326 = vpop.f32.mrb[0].mxu0
        %9327 = vmatprep.mubr.bf16.mxu0 0
        %9328 = vmatmul.mubr.bf16.gmra.mrb[0].mxu0 %v9266
        %v9329 = vpop.f32.mrb[0].mxu0
        %v9330 = vadd.f32 0.0, %v9329
        %v9331 = vpop.f32.mrb[0].mxu0
        %v9332 = vpop.f32.mrb[0].mxu0
        %v9333 = vadd.f32 0.0, %v9332
        %v9334 = vpop.f32.mrb[0].mxu0
        %9335 = vmatprep.mubr.bf16.mxu0 0
        %9336 = vmatmul.mubr.bf16.gmra.mrb[0].mxu0 %v9269
        %v9337 = vpop.f32.mrb[0].mxu0
        %v9338 = vadd.f32 0.0, %v9337
        %v9339 = vpop.f32.mrb[0].mxu0
        %v9340 = vpop.f32.mrb[0].mxu0
        %v9341 = vpop.f32.mrb[0].mxu0
        %9342 = vdwg.mxu0
        %v9343 = vpack.c.bf16 %v9309, %v9306
        %v9344 = vpack.c.bf16 %v9317, %v9314
        %v9345 = vpack.c.bf16 %v9325, %v9322
        %v9346 = vpack.c.bf16 %v9333, %v9330
        %v9347 = vpack.c.bf16 %v9338, %v9338
        %v9348 = vld [vmem:[%s11] sm:$0xf]
        %v9349 = vld [vmem:[%s11 + $0x4] sm:$0xf]
        %v9350 = vld [vmem:[%s11 + $0x8] sm:$0xf]
        %v9351 = vld [vmem:[%s11 + $0xc] sm:$0xf]
        %v9352 = vld [vmem:[%s11 + $0x10] sm:$0xf]
        %v9353 = vld [vmem:[%s11 + $0x14] sm:$0xf]
        %v9354 = vld [vmem:[%s11 + $0x18] sm:$0xf]
        %v9355 = vld [vmem:[%s11 + $0x1c] sm:$0xf]
        %v9356 = vld [vmem:[%s11 + $0x20] sm:$0xf]
        %v9357 = vld [vmem:[%s11 + $0x24] sm:$0xf]
        %v9358 = vld [vmem:[%s11 + $0x28] sm:$0xf]
        %v9359 = vld [vmem:[%s11 + $0x2c] sm:$0xf]
        %v9360 = vld [vmem:[%s11 + $0x30] sm:$0xf]
        %v9361 = vld [vmem:[%s11 + $0x34] sm:$0xf]
        %v9362 = vld [vmem:[%s11 + $0x38] sm:$0xf]
        %v9363 = vld [vmem:[%s11 + $0x3c] sm:$0xf]
        %s9364 = scalar_lea.vmem %s11, 64
        %v9365 = vld [vmem:[%s9364] sm:$0xf]
        %v9366 = vld [vmem:[%s9364 + $0x4] sm:$0xf]
        %v9367 = vld [vmem:[%s9364 + $0x8] sm:$0xf]
        %v9368 = vld [vmem:[%s9364 + $0xc] sm:$0xf]
        %v9369 = vld [vmem:[%s9364 + $0x10] sm:$0xf]
        %v9370 = vld [vmem:[%s9364 + $0x14] sm:$0xf]
        %v9371 = vld [vmem:[%s9364 + $0x18] sm:$0xf]
        %v9372 = vld [vmem:[%s9364 + $0x1c] sm:$0xf]
        %v9373 = vld [vmem:[%s9364 + $0x20] sm:$0xf]
        %v9374 = vld [vmem:[%s9364 + $0x24] sm:$0xf]
        %v9375 = vld [vmem:[%s9364 + $0x28] sm:$0xf]
        %v9376 = vld [vmem:[%s9364 + $0x2c] sm:$0xf]
        %v9377 = vld [vmem:[%s9364 + $0x30] sm:$0xf]
        %v9378 = vld [vmem:[%s9364 + $0x34] sm:$0xf]
        %v9379 = vld [vmem:[%s9364 + $0x38] sm:$0xf]
        %v9380 = vld [vmem:[%s9364 + $0x3c] sm:$0xf]
        %v9382 = vrot.slane %v9343, 4
        %v9400 = vunpack.c.l.b16 %v9365
        %v9401 = vunpack.c.l.b16 %v9366
        %v9402 = vunpack.c.l.b16 %v9367
        %v9403 = vunpack.c.l.b16 %v9368
        %v9404 = vunpack.c.l.b16 %v9369
        %v9405 = vunpack.c.l.b16 %v9370
        %v9406 = vunpack.c.l.b16 %v9371
        %v9407 = vunpack.c.l.b16 %v9372
        %v9408 = vunpack.c.l.b16 %v9373
        %v9409 = vunpack.c.l.b16 %v9374
        %v9410 = vunpack.c.l.b16 %v9375
        %v9411 = vunpack.c.l.b16 %v9376
        %v9412 = vunpack.c.l.b16 %v9377
        %v9413 = vunpack.c.l.b16 %v9378
        %v9414 = vunpack.c.l.b16 %v9379
        %v9415 = vunpack.c.l.b16 %v9380
        %v9416 = vpack.c.b16 %v9401, %v9400
        %v9417 = vpack.c.b16 %v9403, %v9402
        %v9418 = vpack.c.b16 %v9405, %v9404
        %v9419 = vpack.c.b16 %v9407, %v9406
        %v9420 = vpack.c.b16 %v9409, %v9408
        %v9421 = vpack.c.b16 %v9411, %v9410
        %v9422 = vpack.c.b16 %v9413, %v9412
        %v9423 = vpack.c.b16 %v9415, %v9414
        %9432 = vmatprep.subr.bf16.mxu0 0
        %9433 = vmatpush1.bf16.msra.mxu0 %v9416
        %9434 = vmatprep.subr.bf16.mxu0 0
        %9435 = vmatpush1.bf16.msra.mxu0 %v9417
        %9436 = vmatprep.subr.bf16.mxu0 0
        %9437 = vmatpush1.bf16.msra.mxu0 %v9418
        %9438 = vmatprep.subr.bf16.mxu0 0
        %9439 = vmatpush1.bf16.msra.mxu0 %v9419
        %9440 = vmatprep.subr.bf16.mxu0 0
        %9441 = vmatpush1.bf16.msra.mxu0 %v9420
        %9442 = vmatprep.subr.bf16.mxu0 0
        %9443 = vmatpush1.bf16.msra.mxu0 %v9421
        %9444 = vmatprep.subr.bf16.mxu0 0
        %9445 = vmatpush1.bf16.msra.mxu0 %v9422
        %9446 = vmatprep.subr.bf16.mxu0 0
        %9447 = vmatpush1.bf16.msra.mxu0 %v9423
        %9448 = vmatprep.subr.bf16.mxu0 0
        %9449 = vmatpush1.bf16.msra.mxu0 0
        %9450 = vmatprep.subr.bf16.mxu0 0
        %9451 = vmatpush1.bf16.msra.mxu0 0
        %9452 = vmatprep.subr.bf16.mxu0 0
        %9453 = vmatpush1.bf16.msra.mxu0 0
        %9454 = vmatprep.subr.bf16.mxu0 0
        %9455 = vmatpush1.bf16.msra.mxu0 0
        %9456 = vmatprep.subr.bf16.mxu0 0
        %9457 = vmatpush1.bf16.msra.mxu0 0
        %9458 = vmatprep.subr.bf16.mxu0 0
        %9459 = vmatpush1.bf16.msra.mxu0 0
        %9460 = vmatprep.subr.bf16.mxu0 0
        %9461 = vmatpush1.bf16.msra.mxu0 0
        %9462 = vmatprep.subr.bf16.mxu0 0
        %9463 = vmatpush1.bf16.msra.mxu0 0
        %9464 = vmatprep.mubr.bf16.mxu0 0
        %9465 = vmatmul.mubr.bf16.gmra.mrb[0].mxu0 %v9382
        %v9466 = vpop.f32.mrb[0].mxu0
        %v9467 = vadd.f32 0.0, %v9466
        %v9468 = vpop.f32.mrb[0].mxu0
        %v9469 = vpop.f32.mrb[0].mxu0
        %v9470 = vpop.f32.mrb[0].mxu0
        %9471 = vdwg.mxu0
        %v9488 = vunpack.c.l.b16 %v9348
        %v9489 = vunpack.c.l.b16 %v9349
        %v9490 = vunpack.c.l.b16 %v9350
        %v9491 = vunpack.c.l.b16 %v9351
        %v9492 = vunpack.c.l.b16 %v9352
        %v9493 = vunpack.c.l.b16 %v9353
        %v9494 = vunpack.c.l.b16 %v9354
        %v9495 = vunpack.c.l.b16 %v9355
        %v9496 = vunpack.c.l.b16 %v9356
        %v9497 = vunpack.c.l.b16 %v9357
        %v9498 = vunpack.c.l.b16 %v9358
        %v9499 = vunpack.c.l.b16 %v9359
        %v9500 = vunpack.c.l.b16 %v9360
        %v9501 = vunpack.c.l.b16 %v9361
        %v9502 = vunpack.c.l.b16 %v9362
        %v9503 = vunpack.c.l.b16 %v9363
        %v9504 = vpack.c.b16 %v9489, %v9488
        %v9505 = vpack.c.b16 %v9491, %v9490
        %v9506 = vpack.c.b16 %v9493, %v9492
        %v9507 = vpack.c.b16 %v9495, %v9494
        %v9508 = vpack.c.b16 %v9497, %v9496
        %v9509 = vpack.c.b16 %v9499, %v9498
        %v9510 = vpack.c.b16 %v9501, %v9500
        %v9511 = vpack.c.b16 %v9503, %v9502
        %9520 = vmatprep.subr.bf16.mxu0 0
        %9521 = vmatpush1.bf16.msra.mxu0 %v9504
        %9522 = vmatprep.subr.bf16.mxu0 0
        %9523 = vmatpush1.bf16.msra.mxu0 %v9505
        %9524 = vmatprep.subr.bf16.mxu0 0
        %9525 = vmatpush1.bf16.msra.mxu0 %v9506
        %9526 = vmatprep.subr.bf16.mxu0 0
        %9527 = vmatpush1.bf16.msra.mxu0 %v9507
        %9528 = vmatprep.subr.bf16.mxu0 0
        %9529 = vmatpush1.bf16.msra.mxu0 %v9508
        %9530 = vmatprep.subr.bf16.mxu0 0
        %9531 = vmatpush1.bf16.msra.mxu0 %v9509
        %9532 = vmatprep.subr.bf16.mxu0 0
        %9533 = vmatpush1.bf16.msra.mxu0 %v9510
        %9534 = vmatprep.subr.bf16.mxu0 0
        %9535 = vmatpush1.bf16.msra.mxu0 %v9511
        %9536 = vmatprep.subr.bf16.mxu0 0
        %9537 = vmatpush1.bf16.msra.mxu0 0
        %9538 = vmatprep.subr.bf16.mxu0 0
        %9539 = vmatpush1.bf16.msra.mxu0 0
        %9540 = vmatprep.subr.bf16.mxu0 0
        %9541 = vmatpush1.bf16.msra.mxu0 0
        %9542 = vmatprep.subr.bf16.mxu0 0
        %9543 = vmatpush1.bf16.msra.mxu0 0
        %9544 = vmatprep.subr.bf16.mxu0 0
        %9545 = vmatpush1.bf16.msra.mxu0 0
        %9546 = vmatprep.subr.bf16.mxu0 0
        %9547 = vmatpush1.bf16.msra.mxu0 0
        %9548 = vmatprep.subr.bf16.mxu0 0
        %9549 = vmatpush1.bf16.msra.mxu0 0
        %9550 = vmatprep.subr.bf16.mxu0 0
        %9551 = vmatpush1.bf16.msra.mxu0 0
        %9552 = vmatprep.mubr.bf16.mxu0 0
        %9553 = vmatmul.mubr.bf16.gmra.mrb[0].mxu0 %v9343
        %v9554 = vpop.f32.mrb[0].mxu0
        %v9555 = vadd.f32 %v9467, %v9554
        %v9556 = vpop.f32.mrb[0].mxu0
        %v9557 = vpop.f32.mrb[0].mxu0
        %v9558 = vpop.f32.mrb[0].mxu0
        %9559 = vdwg.mxu0
        %s9560 = scalar_lea.vmem %s11, 128
        %v9561 = vld [vmem:[%s9560] sm:$0xf]
        %v9562 = vld [vmem:[%s9560 + $0x4] sm:$0xf]
        %v9563 = vld [vmem:[%s9560 + $0x8] sm:$0xf]
        %v9564 = vld [vmem:[%s9560 + $0xc] sm:$0xf]
        %v9565 = vld [vmem:[%s9560 + $0x10] sm:$0xf]
        %v9566 = vld [vmem:[%s9560 + $0x14] sm:$0xf]
        %v9567 = vld [vmem:[%s9560 + $0x18] sm:$0xf]
        %v9568 = vld [vmem:[%s9560 + $0x1c] sm:$0xf]
        %v9569 = vld [vmem:[%s9560 + $0x20] sm:$0xf]
        %v9570 = vld [vmem:[%s9560 + $0x24] sm:$0xf]
        %v9571 = vld [vmem:[%s9560 + $0x28] sm:$0xf]
        %v9572 = vld [vmem:[%s9560 + $0x2c] sm:$0xf]
        %v9573 = vld [vmem:[%s9560 + $0x30] sm:$0xf]
        %v9574 = vld [vmem:[%s9560 + $0x34] sm:$0xf]
        %v9575 = vld [vmem:[%s9560 + $0x38] sm:$0xf]
        %v9576 = vld [vmem:[%s9560 + $0x3c] sm:$0xf]
        %v9593 = vunpack.c.l.b16 %v9561
        %v9594 = vunpack.c.l.b16 %v9562
        %v9595 = vunpack.c.l.b16 %v9563
        %v9596 = vunpack.c.l.b16 %v9564
        %v9597 = vunpack.c.l.b16 %v9565
        %v9598 = vunpack.c.l.b16 %v9566
        %v9599 = vunpack.c.l.b16 %v9567
        %v9600 = vunpack.c.l.b16 %v9568
        %v9601 = vunpack.c.l.b16 %v9569
        %v9602 = vunpack.c.l.b16 %v9570
        %v9603 = vunpack.c.l.b16 %v9571
        %v9604 = vunpack.c.l.b16 %v9572
        %v9605 = vunpack.c.l.b16 %v9573
        %v9606 = vunpack.c.l.b16 %v9574
        %v9607 = vunpack.c.l.b16 %v9575
        %v9608 = vunpack.c.l.b16 %v9576
        %v9609 = vpack.c.b16 %v9594, %v9593
        %v9610 = vpack.c.b16 %v9596, %v9595
        %v9611 = vpack.c.b16 %v9598, %v9597
        %v9612 = vpack.c.b16 %v9600, %v9599
        %v9613 = vpack.c.b16 %v9602, %v9601
        %v9614 = vpack.c.b16 %v9604, %v9603
        %v9615 = vpack.c.b16 %v9606, %v9605
        %v9616 = vpack.c.b16 %v9608, %v9607
        %9625 = vmatprep.subr.bf16.mxu0 0
        %9626 = vmatpush1.bf16.msra.mxu0 %v9609
        %9627 = vmatprep.subr.bf16.mxu0 0
        %9628 = vmatpush1.bf16.msra.mxu0 %v9610
        %9629 = vmatprep.subr.bf16.mxu0 0
        %9630 = vmatpush1.bf16.msra.mxu0 %v9611
        %9631 = vmatprep.subr.bf16.mxu0 0
        %9632 = vmatpush1.bf16.msra.mxu0 %v9612
        %9633 = vmatprep.subr.bf16.mxu0 0
        %9634 = vmatpush1.bf16.msra.mxu0 %v9613
        %9635 = vmatprep.subr.bf16.mxu0 0
        %9636 = vmatpush1.bf16.msra.mxu0 %v9614
        %9637 = vmatprep.subr.bf16.mxu0 0
        %9638 = vmatpush1.bf16.msra.mxu0 %v9615
        %9639 = vmatprep.subr.bf16.mxu0 0
        %9640 = vmatpush1.bf16.msra.mxu0 %v9616
        %9641 = vmatprep.subr.bf16.mxu0 0
        %9642 = vmatpush1.bf16.msra.mxu0 0
        %9643 = vmatprep.subr.bf16.mxu0 0
        %9644 = vmatpush1.bf16.msra.mxu0 0
        %9645 = vmatprep.subr.bf16.mxu0 0
        %9646 = vmatpush1.bf16.msra.mxu0 0
        %9647 = vmatprep.subr.bf16.mxu0 0
        %9648 = vmatpush1.bf16.msra.mxu0 0
        %9649 = vmatprep.subr.bf16.mxu0 0
        %9650 = vmatpush1.bf16.msra.mxu0 0
        %9651 = vmatprep.subr.bf16.mxu0 0
        %9652 = vmatpush1.bf16.msra.mxu0 0
        %9653 = vmatprep.subr.bf16.mxu0 0
        %9654 = vmatpush1.bf16.msra.mxu0 0
        %9655 = vmatprep.subr.bf16.mxu0 0
        %9656 = vmatpush1.bf16.msra.mxu0 0
        %9657 = vmatprep.mubr.bf16.mxu0 0
        %9658 = vmatmul.mubr.bf16.gmra.mrb[0].mxu0 %v9344
        %v9659 = vpop.f32.mrb[0].mxu0
        %v9660 = vadd.f32 0.0, %v9659
        %v9661 = vpop.f32.mrb[0].mxu0
        %v9662 = vpop.f32.mrb[0].mxu0
        %v9663 = vpop.f32.mrb[0].mxu0
        %9664 = vdwg.mxu0
        %v9665 = vadd.f32 %v9555, %v9660
        %s9666 = scalar_lea.vmem %s11, 192
        %v9667 = vld [vmem:[%s9666] sm:$0xf]
        %v9668 = vld [vmem:[%s9666 + $0x4] sm:$0xf]
        %v9669 = vld [vmem:[%s9666 + $0x8] sm:$0xf]
        %v9670 = vld [vmem:[%s9666 + $0xc] sm:$0xf]
        %v9671 = vld [vmem:[%s9666 + $0x10] sm:$0xf]
        %v9672 = vld [vmem:[%s9666 + $0x14] sm:$0xf]
        %v9673 = vld [vmem:[%s9666 + $0x18] sm:$0xf]
        %v9674 = vld [vmem:[%s9666 + $0x1c] sm:$0xf]
        %v9675 = vld [vmem:[%s9666 + $0x20] sm:$0xf]
        %v9676 = vld [vmem:[%s9666 + $0x24] sm:$0xf]
        %v9677 = vld [vmem:[%s9666 + $0x28] sm:$0xf]
        %v9678 = vld [vmem:[%s9666 + $0x2c] sm:$0xf]
        %v9679 = vld [vmem:[%s9666 + $0x30] sm:$0xf]
        %v9680 = vld [vmem:[%s9666 + $0x34] sm:$0xf]
        %v9681 = vld [vmem:[%s9666 + $0x38] sm:$0xf]
        %v9682 = vld [vmem:[%s9666 + $0x3c] sm:$0xf]
        %v9684 = vrot.slane %v9344, 4
        %v9702 = vunpack.c.l.b16 %v9667
        %v9703 = vunpack.c.l.b16 %v9668
        %v9704 = vunpack.c.l.b16 %v9669
        %v9705 = vunpack.c.l.b16 %v9670
        %v9706 = vunpack.c.l.b16 %v9671
        %v9707 = vunpack.c.l.b16 %v9672
        %v9708 = vunpack.c.l.b16 %v9673
        %v9709 = vunpack.c.l.b16 %v9674
        %v9710 = vunpack.c.l.b16 %v9675
        %v9711 = vunpack.c.l.b16 %v9676
        %v9712 = vunpack.c.l.b16 %v9677
        %v9713 = vunpack.c.l.b16 %v9678
        %v9714 = vunpack.c.l.b16 %v9679
        %v9715 = vunpack.c.l.b16 %v9680
        %v9716 = vunpack.c.l.b16 %v9681
        %v9717 = vunpack.c.l.b16 %v9682
        %v9718 = vpack.c.b16 %v9703, %v9702
        %v9719 = vpack.c.b16 %v9705, %v9704
        %v9720 = vpack.c.b16 %v9707, %v9706
        %v9721 = vpack.c.b16 %v9709, %v9708
        %v9722 = vpack.c.b16 %v9711, %v9710
        %v9723 = vpack.c.b16 %v9713, %v9712
        %v9724 = vpack.c.b16 %v9715, %v9714
        %v9725 = vpack.c.b16 %v9717, %v9716
        %9734 = vmatprep.subr.bf16.mxu0 0
        %9735 = vmatpush1.bf16.msra.mxu0 %v9718
        %9736 = vmatprep.subr.bf16.mxu0 0
        %9737 = vmatpush1.bf16.msra.mxu0 %v9719
        %9738 = vmatprep.subr.bf16.mxu0 0
        %9739 = vmatpush1.bf16.msra.mxu0 %v9720
        %9740 = vmatprep.subr.bf16.mxu0 0
        %9741 = vmatpush1.bf16.msra.mxu0 %v9721
        %9742 = vmatprep.subr.bf16.mxu0 0
        %9743 = vmatpush1.bf16.msra.mxu0 %v9722
        %9744 = vmatprep.subr.bf16.mxu0 0
        %9745 = vmatpush1.bf16.msra.mxu0 %v9723
        %9746 = vmatprep.subr.bf16.mxu0 0
        %9747 = vmatpush1.bf16.msra.mxu0 %v9724
        %9748 = vmatprep.subr.bf16.mxu0 0
        %9749 = vmatpush1.bf16.msra.mxu0 %v9725
        %9750 = vmatprep.subr.bf16.mxu0 0
        %9751 = vmatpush1.bf16.msra.mxu0 0
        %9752 = vmatprep.subr.bf16.mxu0 0
        %9753 = vmatpush1.bf16.msra.mxu0 0
        %9754 = vmatprep.subr.bf16.mxu0 0
        %9755 = vmatpush1.bf16.msra.mxu0 0
        %9756 = vmatprep.subr.bf16.mxu0 0
        %9757 = vmatpush1.bf16.msra.mxu0 0
        %9758 = vmatprep.subr.bf16.mxu0 0
        %9759 = vmatpush1.bf16.msra.mxu0 0
        %9760 = vmatprep.subr.bf16.mxu0 0
        %9761 = vmatpush1.bf16.msra.mxu0 0
        %9762 = vmatprep.subr.bf16.mxu0 0
        %9763 = vmatpush1.bf16.msra.mxu0 0
        %9764 = vmatprep.subr.bf16.mxu0 0
        %9765 = vmatpush1.bf16.msra.mxu0 0
        %9766 = vmatprep.mubr.bf16.mxu0 0
        %9767 = vmatmul.mubr.bf16.gmra.mrb[0].mxu0 %v9684
        %v9768 = vpop.f32.mrb[0].mxu0
        %v9769 = vadd.f32 0.0, %v9768
        %v9770 = vpop.f32.mrb[0].mxu0
        %v9771 = vpop.f32.mrb[0].mxu0
        %v9772 = vpop.f32.mrb[0].mxu0
        %9773 = vdwg.mxu0
        %v9774 = vadd.f32 %v9665, %v9769
        %s9775 = scalar_lea.vmem %s11, 256
        %v9776 = vld [vmem:[%s9775] sm:$0xf]
        %v9777 = vld [vmem:[%s9775 + $0x4] sm:$0xf]
        %v9778 = vld [vmem:[%s9775 + $0x8] sm:$0xf]
        %v9779 = vld [vmem:[%s9775 + $0xc] sm:$0xf]
        %v9780 = vld [vmem:[%s9775 + $0x10] sm:$0xf]
        %v9781 = vld [vmem:[%s9775 + $0x14] sm:$0xf]
        %v9782 = vld [vmem:[%s9775 + $0x18] sm:$0xf]
        %v9783 = vld [vmem:[%s9775 + $0x1c] sm:$0xf]
        %v9784 = vld [vmem:[%s9775 + $0x20] sm:$0xf]
        %v9785 = vld [vmem:[%s9775 + $0x24] sm:$0xf]
        %v9786 = vld [vmem:[%s9775 + $0x28] sm:$0xf]
        %v9787 = vld [vmem:[%s9775 + $0x2c] sm:$0xf]
        %v9788 = vld [vmem:[%s9775 + $0x30] sm:$0xf]
        %v9789 = vld [vmem:[%s9775 + $0x34] sm:$0xf]
        %v9790 = vld [vmem:[%s9775 + $0x38] sm:$0xf]
        %v9791 = vld [vmem:[%s9775 + $0x3c] sm:$0xf]
        %v9808 = vunpack.c.l.b16 %v9776
        %v9809 = vunpack.c.l.b16 %v9777
        %v9810 = vunpack.c.l.b16 %v9778
        %v9811 = vunpack.c.l.b16 %v9779
        %v9812 = vunpack.c.l.b16 %v9780
        %v9813 = vunpack.c.l.b16 %v9781
        %v9814 = vunpack.c.l.b16 %v9782
        %v9815 = vunpack.c.l.b16 %v9783
        %v9816 = vunpack.c.l.b16 %v9784
        %v9817 = vunpack.c.l.b16 %v9785
        %v9818 = vunpack.c.l.b16 %v9786
        %v9819 = vunpack.c.l.b16 %v9787
        %v9820 = vunpack.c.l.b16 %v9788
        %v9821 = vunpack.c.l.b16 %v9789
        %v9822 = vunpack.c.l.b16 %v9790
        %v9823 = vunpack.c.l.b16 %v9791
        %v9824 = vpack.c.b16 %v9809, %v9808
        %v9825 = vpack.c.b16 %v9811, %v9810
        %v9826 = vpack.c.b16 %v9813, %v9812
        %v9827 = vpack.c.b16 %v9815, %v9814
        %v9828 = vpack.c.b16 %v9817, %v9816
        %v9829 = vpack.c.b16 %v9819, %v9818
        %v9830 = vpack.c.b16 %v9821, %v9820
        %v9831 = vpack.c.b16 %v9823, %v9822
        %9840 = vmatprep.subr.bf16.mxu0 0
        %9841 = vmatpush1.bf16.msra.mxu0 %v9824
        %9842 = vmatprep.subr.bf16.mxu0 0
        %9843 = vmatpush1.bf16.msra.mxu0 %v9825
        %9844 = vmatprep.subr.bf16.mxu0 0
        %9845 = vmatpush1.bf16.msra.mxu0 %v9826
        %9846 = vmatprep.subr.bf16.mxu0 0
        %9847 = vmatpush1.bf16.msra.mxu0 %v9827
        %9848 = vmatprep.subr.bf16.mxu0 0
        %9849 = vmatpush1.bf16.msra.mxu0 %v9828
        %9850 = vmatprep.subr.bf16.mxu0 0
        %9851 = vmatpush1.bf16.msra.mxu0 %v9829
        %9852 = vmatprep.subr.bf16.mxu0 0
        %9853 = vmatpush1.bf16.msra.mxu0 %v9830
        %9854 = vmatprep.subr.bf16.mxu0 0
        %9855 = vmatpush1.bf16.msra.mxu0 %v9831
        %9856 = vmatprep.subr.bf16.mxu0 0
        %9857 = vmatpush1.bf16.msra.mxu0 0
        %9858 = vmatprep.subr.bf16.mxu0 0
        %9859 = vmatpush1.bf16.msra.mxu0 0
        %9860 = vmatprep.subr.bf16.mxu0 0
        %9861 = vmatpush1.bf16.msra.mxu0 0
        %9862 = vmatprep.subr.bf16.mxu0 0
        %9863 = vmatpush1.bf16.msra.mxu0 0
        %9864 = vmatprep.subr.bf16.mxu0 0
        %9865 = vmatpush1.bf16.msra.mxu0 0
        %9866 = vmatprep.subr.bf16.mxu0 0
        %9867 = vmatpush1.bf16.msra.mxu0 0
        %9868 = vmatprep.subr.bf16.mxu0 0
        %9869 = vmatpush1.bf16.msra.mxu0 0
        %9870 = vmatprep.subr.bf16.mxu0 0
        %9871 = vmatpush1.bf16.msra.mxu0 0
        %9872 = vmatprep.mubr.bf16.mxu0 0
        %9873 = vmatmul.mubr.bf16.gmra.mrb[0].mxu0 %v9345
        %v9874 = vpop.f32.mrb[0].mxu0
        %v9875 = vadd.f32 0.0, %v9874
        %v9876 = vpop.f32.mrb[0].mxu0
        %v9877 = vpop.f32.mrb[0].mxu0
        %v9878 = vpop.f32.mrb[0].mxu0
        %9879 = vdwg.mxu0
        %v9880 = vadd.f32 %v9774, %v9875
        %s9881 = scalar_lea.vmem %s11, 320
        %v9882 = vld [vmem:[%s9881] sm:$0xf]
        %v9883 = vld [vmem:[%s9881 + $0x4] sm:$0xf]
        %v9884 = vld [vmem:[%s9881 + $0x8] sm:$0xf]
        %v9885 = vld [vmem:[%s9881 + $0xc] sm:$0xf]
        %v9886 = vld [vmem:[%s9881 + $0x10] sm:$0xf]
        %v9887 = vld [vmem:[%s9881 + $0x14] sm:$0xf]
        %v9888 = vld [vmem:[%s9881 + $0x18] sm:$0xf]
        %v9889 = vld [vmem:[%s9881 + $0x1c] sm:$0xf]
        %v9890 = vld [vmem:[%s9881 + $0x20] sm:$0xf]
        %v9891 = vld [vmem:[%s9881 + $0x24] sm:$0xf]
        %v9892 = vld [vmem:[%s9881 + $0x28] sm:$0xf]
        %v9893 = vld [vmem:[%s9881 + $0x2c] sm:$0xf]
        %v9894 = vld [vmem:[%s9881 + $0x30] sm:$0xf]
        %v9895 = vld [vmem:[%s9881 + $0x34] sm:$0xf]
        %v9896 = vld [vmem:[%s9881 + $0x38] sm:$0xf]
        %v9897 = vld [vmem:[%s9881 + $0x3c] sm:$0xf]
        %v9899 = vrot.slane %v9345, 4
        %v9917 = vunpack.c.l.b16 %v9882
        %v9918 = vunpack.c.l.b16 %v9883
        %v9919 = vunpack.c.l.b16 %v9884
        %v9920 = vunpack.c.l.b16 %v9885
        %v9921 = vunpack.c.l.b16 %v9886
        %v9922 = vunpack.c.l.b16 %v9887
        %v9923 = vunpack.c.l.b16 %v9888
        %v9924 = vunpack.c.l.b16 %v9889
        %v9925 = vunpack.c.l.b16 %v9890
        %v9926 = vunpack.c.l.b16 %v9891
        %v9927 = vunpack.c.l.b16 %v9892
        %v9928 = vunpack.c.l.b16 %v9893
        %v9929 = vunpack.c.l.b16 %v9894
        %v9930 = vunpack.c.l.b16 %v9895
        %v9931 = vunpack.c.l.b16 %v9896
        %v9932 = vunpack.c.l.b16 %v9897
        %v9933 = vpack.c.b16 %v9918, %v9917
        %v9934 = vpack.c.b16 %v9920, %v9919
        %v9935 = vpack.c.b16 %v9922, %v9921
        %v9936 = vpack.c.b16 %v9924, %v9923
        %v9937 = vpack.c.b16 %v9926, %v9925
        %v9938 = vpack.c.b16 %v9928, %v9927
        %v9939 = vpack.c.b16 %v9930, %v9929
        %v9940 = vpack.c.b16 %v9932, %v9931
        %9949 = vmatprep.subr.bf16.mxu0 0
        %9950 = vmatpush1.bf16.msra.mxu0 %v9933
        %9951 = vmatprep.subr.bf16.mxu0 0
        %9952 = vmatpush1.bf16.msra.mxu0 %v9934
        %9953 = vmatprep.subr.bf16.mxu0 0
        %9954 = vmatpush1.bf16.msra.mxu0 %v9935
        %9955 = vmatprep.subr.bf16.mxu0 0
        %9956 = vmatpush1.bf16.msra.mxu0 %v9936
        %9957 = vmatprep.subr.bf16.mxu0 0
        %9958 = vmatpush1.bf16.msra.mxu0 %v9937
        %9959 = vmatprep.subr.bf16.mxu0 0
        %9960 = vmatpush1.bf16.msra.mxu0 %v9938
        %9961 = vmatprep.subr.bf16.mxu0 0
        %9962 = vmatpush1.bf16.msra.mxu0 %v9939
        %9963 = vmatprep.subr.bf16.mxu0 0
        %9964 = vmatpush1.bf16.msra.mxu0 %v9940
        %9965 = vmatprep.subr.bf16.mxu0 0
        %9966 = vmatpush1.bf16.msra.mxu0 0
        %9967 = vmatprep.subr.bf16.mxu0 0
        %9968 = vmatpush1.bf16.msra.mxu0 0
        %9969 = vmatprep.subr.bf16.mxu0 0
        %9970 = vmatpush1.bf16.msra.mxu0 0
        %9971 = vmatprep.subr.bf16.mxu0 0
        %9972 = vmatpush1.bf16.msra.mxu0 0
        %9973 = vmatprep.subr.bf16.mxu0 0
        %9974 = vmatpush1.bf16.msra.mxu0 0
        %9975 = vmatprep.subr.bf16.mxu0 0
        %9976 = vmatpush1.bf16.msra.mxu0 0
        %9977 = vmatprep.subr.bf16.mxu0 0
        %9978 = vmatpush1.bf16.msra.mxu0 0
        %9979 = vmatprep.subr.bf16.mxu0 0
        %9980 = vmatpush1.bf16.msra.mxu0 0
        %9981 = vmatprep.mubr.bf16.mxu0 0
        %9982 = vmatmul.mubr.bf16.gmra.mrb[0].mxu0 %v9899
        %v9983 = vpop.f32.mrb[0].mxu0
        %v9984 = vadd.f32 0.0, %v9983
        %v9985 = vpop.f32.mrb[0].mxu0
        %v9986 = vpop.f32.mrb[0].mxu0
        %v9987 = vpop.f32.mrb[0].mxu0
        %9988 = vdwg.mxu0
        %v9989 = vadd.f32 %v9880, %v9984
        %s9990 = scalar_lea.vmem %s11, 384
        %v9991 = vld [vmem:[%s9990] sm:$0xf]
        %v9992 = vld [vmem:[%s9990 + $0x4] sm:$0xf]
        %v9993 = vld [vmem:[%s9990 + $0x8] sm:$0xf]
        %v9994 = vld [vmem:[%s9990 + $0xc] sm:$0xf]
        %v9995 = vld [vmem:[%s9990 + $0x10] sm:$0xf]
        %v9996 = vld [vmem:[%s9990 + $0x14] sm:$0xf]
        %v9997 = vld [vmem:[%s9990 + $0x18] sm:$0xf]
        %v9998 = vld [vmem:[%s9990 + $0x1c] sm:$0xf]
        %v9999 = vld [vmem:[%s9990 + $0x20] sm:$0xf]
        %v10000 = vld [vmem:[%s9990 + $0x24] sm:$0xf]
        %v10001 = vld [vmem:[%s9990 + $0x28] sm:$0xf]
        %v10002 = vld [vmem:[%s9990 + $0x2c] sm:$0xf]
        %v10003 = vld [vmem:[%s9990 + $0x30] sm:$0xf]
        %v10004 = vld [vmem:[%s9990 + $0x34] sm:$0xf]
        %v10005 = vld [vmem:[%s9990 + $0x38] sm:$0xf]
        %v10006 = vld [vmem:[%s9990 + $0x3c] sm:$0xf]
        %v10023 = vunpack.c.l.b16 %v9991
        %v10024 = vunpack.c.l.b16 %v9992
        %v10025 = vunpack.c.l.b16 %v9993
        %v10026 = vunpack.c.l.b16 %v9994
        %v10027 = vunpack.c.l.b16 %v9995
        %v10028 = vunpack.c.l.b16 %v9996
        %v10029 = vunpack.c.l.b16 %v9997
        %v10030 = vunpack.c.l.b16 %v9998
        %v10031 = vunpack.c.l.b16 %v9999
        %v10032 = vunpack.c.l.b16 %v10000
        %v10033 = vunpack.c.l.b16 %v10001
        %v10034 = vunpack.c.l.b16 %v10002
        %v10035 = vunpack.c.l.b16 %v10003
        %v10036 = vunpack.c.l.b16 %v10004
        %v10037 = vunpack.c.l.b16 %v10005
        %v10038 = vunpack.c.l.b16 %v10006
        %v10039 = vpack.c.b16 %v10024, %v10023
        %v10040 = vpack.c.b16 %v10026, %v10025
        %v10041 = vpack.c.b16 %v10028, %v10027
        %v10042 = vpack.c.b16 %v10030, %v10029
        %v10043 = vpack.c.b16 %v10032, %v10031
        %v10044 = vpack.c.b16 %v10034, %v10033
        %v10045 = vpack.c.b16 %v10036, %v10035
        %v10046 = vpack.c.b16 %v10038, %v10037
        %10055 = vmatprep.subr.bf16.mxu0 0
        %10056 = vmatpush1.bf16.msra.mxu0 %v10039
        %10057 = vmatprep.subr.bf16.mxu0 0
        %10058 = vmatpush1.bf16.msra.mxu0 %v10040
        %10059 = vmatprep.subr.bf16.mxu0 0
        %10060 = vmatpush1.bf16.msra.mxu0 %v10041
        %10061 = vmatprep.subr.bf16.mxu0 0
        %10062 = vmatpush1.bf16.msra.mxu0 %v10042
        %10063 = vmatprep.subr.bf16.mxu0 0
        %10064 = vmatpush1.bf16.msra.mxu0 %v10043
        %10065 = vmatprep.subr.bf16.mxu0 0
        %10066 = vmatpush1.bf16.msra.mxu0 %v10044
        %10067 = vmatprep.subr.bf16.mxu0 0
        %10068 = vmatpush1.bf16.msra.mxu0 %v10045
        %10069 = vmatprep.subr.bf16.mxu0 0
        %10070 = vmatpush1.bf16.msra.mxu0 %v10046
        %10071 = vmatprep.subr.bf16.mxu0 0
        %10072 = vmatpush1.bf16.msra.mxu0 0
        %10073 = vmatprep.subr.bf16.mxu0 0
        %10074 = vmatpush1.bf16.msra.mxu0 0
        %10075 = vmatprep.subr.bf16.mxu0 0
        %10076 = vmatpush1.bf16.msra.mxu0 0
        %10077 = vmatprep.subr.bf16.mxu0 0
        %10078 = vmatpush1.bf16.msra.mxu0 0
        %10079 = vmatprep.subr.bf16.mxu0 0
        %10080 = vmatpush1.bf16.msra.mxu0 0
        %10081 = vmatprep.subr.bf16.mxu0 0
        %10082 = vmatpush1.bf16.msra.mxu0 0
        %10083 = vmatprep.subr.bf16.mxu0 0
        %10084 = vmatpush1.bf16.msra.mxu0 0
        %10085 = vmatprep.subr.bf16.mxu0 0
        %10086 = vmatpush1.bf16.msra.mxu0 0
        %10087 = vmatprep.mubr.bf16.mxu0 0
        %10088 = vmatmul.mubr.bf16.gmra.mrb[0].mxu0 %v9346
        %v10089 = vpop.f32.mrb[0].mxu0
        %v10090 = vadd.f32 0.0, %v10089
        %v10091 = vpop.f32.mrb[0].mxu0
        %v10092 = vpop.f32.mrb[0].mxu0
        %v10093 = vpop.f32.mrb[0].mxu0
        %10094 = vdwg.mxu0
        %v10095 = vadd.f32 %v9989, %v10090
        %s10096 = scalar_lea.vmem %s11, 448
        %v10097 = vld [vmem:[%s10096] sm:$0xf]
        %v10098 = vld [vmem:[%s10096 + $0x4] sm:$0xf]
        %v10099 = vld [vmem:[%s10096 + $0x8] sm:$0xf]
        %v10100 = vld [vmem:[%s10096 + $0xc] sm:$0xf]
        %v10101 = vld [vmem:[%s10096 + $0x10] sm:$0xf]
        %v10102 = vld [vmem:[%s10096 + $0x14] sm:$0xf]
        %v10103 = vld [vmem:[%s10096 + $0x18] sm:$0xf]
        %v10104 = vld [vmem:[%s10096 + $0x1c] sm:$0xf]
        %v10105 = vld [vmem:[%s10096 + $0x20] sm:$0xf]
        %v10106 = vld [vmem:[%s10096 + $0x24] sm:$0xf]
        %v10107 = vld [vmem:[%s10096 + $0x28] sm:$0xf]
        %v10108 = vld [vmem:[%s10096 + $0x2c] sm:$0xf]
        %v10109 = vld [vmem:[%s10096 + $0x30] sm:$0xf]
        %v10110 = vld [vmem:[%s10096 + $0x34] sm:$0xf]
        %v10111 = vld [vmem:[%s10096 + $0x38] sm:$0xf]
        %v10112 = vld [vmem:[%s10096 + $0x3c] sm:$0xf]
        %v10114 = vrot.slane %v9346, 4
        %v10132 = vunpack.c.l.b16 %v10097
        %v10133 = vunpack.c.l.b16 %v10098
        %v10134 = vunpack.c.l.b16 %v10099
        %v10135 = vunpack.c.l.b16 %v10100
        %v10136 = vunpack.c.l.b16 %v10101
        %v10137 = vunpack.c.l.b16 %v10102
        %v10138 = vunpack.c.l.b16 %v10103
        %v10139 = vunpack.c.l.b16 %v10104
        %v10140 = vunpack.c.l.b16 %v10105
        %v10141 = vunpack.c.l.b16 %v10106
        %v10142 = vunpack.c.l.b16 %v10107
        %v10143 = vunpack.c.l.b16 %v10108
        %v10144 = vunpack.c.l.b16 %v10109
        %v10145 = vunpack.c.l.b16 %v10110
        %v10146 = vunpack.c.l.b16 %v10111
        %v10147 = vunpack.c.l.b16 %v10112
        %v10148 = vpack.c.b16 %v10133, %v10132
        %v10149 = vpack.c.b16 %v10135, %v10134
        %v10150 = vpack.c.b16 %v10137, %v10136
        %v10151 = vpack.c.b16 %v10139, %v10138
        %v10152 = vpack.c.b16 %v10141, %v10140
        %v10153 = vpack.c.b16 %v10143, %v10142
        %v10154 = vpack.c.b16 %v10145, %v10144
        %v10155 = vpack.c.b16 %v10147, %v10146
        %10164 = vmatprep.subr.bf16.mxu0 0
        %10165 = vmatpush1.bf16.msra.mxu0 %v10148
        %10166 = vmatprep.subr.bf16.mxu0 0
        %10167 = vmatpush1.bf16.msra.mxu0 %v10149
        %10168 = vmatprep.subr.bf16.mxu0 0
        %10169 = vmatpush1.bf16.msra.mxu0 %v10150
        %10170 = vmatprep.subr.bf16.mxu0 0
        %10171 = vmatpush1.bf16.msra.mxu0 %v10151
        %10172 = vmatprep.subr.bf16.mxu0 0
        %10173 = vmatpush1.bf16.msra.mxu0 %v10152
        %10174 = vmatprep.subr.bf16.mxu0 0
        %10175 = vmatpush1.bf16.msra.mxu0 %v10153
        %10176 = vmatprep.subr.bf16.mxu0 0
        %10177 = vmatpush1.bf16.msra.mxu0 %v10154
        %10178 = vmatprep.subr.bf16.mxu0 0
        %10179 = vmatpush1.bf16.msra.mxu0 %v10155
        %10180 = vmatprep.subr.bf16.mxu0 0
        %10181 = vmatpush1.bf16.msra.mxu0 0
        %10182 = vmatprep.subr.bf16.mxu0 0
        %10183 = vmatpush1.bf16.msra.mxu0 0
        %10184 = vmatprep.subr.bf16.mxu0 0
        %10185 = vmatpush1.bf16.msra.mxu0 0
        %10186 = vmatprep.subr.bf16.mxu0 0
        %10187 = vmatpush1.bf16.msra.mxu0 0
        %10188 = vmatprep.subr.bf16.mxu0 0
        %10189 = vmatpush1.bf16.msra.mxu0 0
        %10190 = vmatprep.subr.bf16.mxu0 0
        %10191 = vmatpush1.bf16.msra.mxu0 0
        %10192 = vmatprep.subr.bf16.mxu0 0
        %10193 = vmatpush1.bf16.msra.mxu0 0
        %10194 = vmatprep.subr.bf16.mxu0 0
        %10195 = vmatpush1.bf16.msra.mxu0 0
        %10196 = vmatprep.mubr.bf16.mxu0 0
        %10197 = vmatmul.mubr.bf16.gmra.mrb[0].mxu0 %v10114
        %v10198 = vpop.f32.mrb[0].mxu0
        %v10199 = vadd.f32 0.0, %v10198
        %v10200 = vpop.f32.mrb[0].mxu0
        %v10201 = vpop.f32.mrb[0].mxu0
        %v10202 = vpop.f32.mrb[0].mxu0
        %10203 = vdwg.mxu0
        %v10204 = vadd.f32 %v10095, %v10199
        %s10205 = scalar_lea.vmem %s11, 512
        %v10206 = vld [vmem:[%s10205] sm:$0xf]
        %v10207 = vld [vmem:[%s10205 + $0x4] sm:$0xf]
        %v10208 = vld [vmem:[%s10205 + $0x8] sm:$0xf]
        %v10209 = vld [vmem:[%s10205 + $0xc] sm:$0xf]
        %v10210 = vld [vmem:[%s10205 + $0x10] sm:$0xf]
        %v10211 = vld [vmem:[%s10205 + $0x14] sm:$0xf]
        %v10212 = vld [vmem:[%s10205 + $0x18] sm:$0xf]
        %v10213 = vld [vmem:[%s10205 + $0x1c] sm:$0xf]
        %v10214 = vld [vmem:[%s10205 + $0x20] sm:$0xf]
        %v10215 = vld [vmem:[%s10205 + $0x24] sm:$0xf]
        %v10216 = vld [vmem:[%s10205 + $0x28] sm:$0xf]
        %v10217 = vld [vmem:[%s10205 + $0x2c] sm:$0xf]
        %v10218 = vld [vmem:[%s10205 + $0x30] sm:$0xf]
        %v10219 = vld [vmem:[%s10205 + $0x34] sm:$0xf]
        %v10220 = vld [vmem:[%s10205 + $0x38] sm:$0xf]
        %v10221 = vld [vmem:[%s10205 + $0x3c] sm:$0xf]
        %v10238 = vunpack.c.l.b16 %v10206
        %v10239 = vunpack.c.l.b16 %v10207
        %v10240 = vunpack.c.l.b16 %v10208
        %v10241 = vunpack.c.l.b16 %v10209
        %v10242 = vunpack.c.l.b16 %v10210
        %v10243 = vunpack.c.l.b16 %v10211
        %v10244 = vunpack.c.l.b16 %v10212
        %v10245 = vunpack.c.l.b16 %v10213
        %v10246 = vunpack.c.l.b16 %v10214
        %v10247 = vunpack.c.l.b16 %v10215
        %v10248 = vunpack.c.l.b16 %v10216
        %v10249 = vunpack.c.l.b16 %v10217
        %v10250 = vunpack.c.l.b16 %v10218
        %v10251 = vunpack.c.l.b16 %v10219
        %v10252 = vunpack.c.l.b16 %v10220
        %v10253 = vunpack.c.l.b16 %v10221
        %v10254 = vpack.c.b16 %v10239, %v10238
        %v10255 = vpack.c.b16 %v10241, %v10240
        %v10256 = vpack.c.b16 %v10243, %v10242
        %v10257 = vpack.c.b16 %v10245, %v10244
        %v10258 = vpack.c.b16 %v10247, %v10246
        %v10259 = vpack.c.b16 %v10249, %v10248
        %v10260 = vpack.c.b16 %v10251, %v10250
        %v10261 = vpack.c.b16 %v10253, %v10252
        %10270 = vmatprep.subr.bf16.mxu0 0
        %10271 = vmatpush1.bf16.msra.mxu0 %v10254
        %10272 = vmatprep.subr.bf16.mxu0 0
        %10273 = vmatpush1.bf16.msra.mxu0 %v10255
        %10274 = vmatprep.subr.bf16.mxu0 0
        %10275 = vmatpush1.bf16.msra.mxu0 %v10256
        %10276 = vmatprep.subr.bf16.mxu0 0
        %10277 = vmatpush1.bf16.msra.mxu0 %v10257
        %10278 = vmatprep.subr.bf16.mxu0 0
        %10279 = vmatpush1.bf16.msra.mxu0 %v10258
        %10280 = vmatprep.subr.bf16.mxu0 0
        %10281 = vmatpush1.bf16.msra.mxu0 %v10259
        %10282 = vmatprep.subr.bf16.mxu0 0
        %10283 = vmatpush1.bf16.msra.mxu0 %v10260
        %10284 = vmatprep.subr.bf16.mxu0 0
        %10285 = vmatpush1.bf16.msra.mxu0 %v10261
        %10286 = vmatprep.subr.bf16.mxu0 0
        %10287 = vmatpush1.bf16.msra.mxu0 0
        %10288 = vmatprep.subr.bf16.mxu0 0
        %10289 = vmatpush1.bf16.msra.mxu0 0
        %10290 = vmatprep.subr.bf16.mxu0 0
        %10291 = vmatpush1.bf16.msra.mxu0 0
        %10292 = vmatprep.subr.bf16.mxu0 0
        %10293 = vmatpush1.bf16.msra.mxu0 0
        %10294 = vmatprep.subr.bf16.mxu0 0
        %10295 = vmatpush1.bf16.msra.mxu0 0
        %10296 = vmatprep.subr.bf16.mxu0 0
        %10297 = vmatpush1.bf16.msra.mxu0 0
        %10298 = vmatprep.subr.bf16.mxu0 0
        %10299 = vmatpush1.bf16.msra.mxu0 0
        %10300 = vmatprep.subr.bf16.mxu0 0
        %10301 = vmatpush1.bf16.msra.mxu0 0
        %10302 = vmatprep.mubr.bf16.mxu0 0
        %10303 = vmatmul.mubr.bf16.gmra.mrb[0].mxu0 %v9347
        %v10304 = vpop.f32.mrb[0].mxu0
        %v10305 = vadd.f32 0.0, %v10304
        %v10306 = vpop.f32.mrb[0].mxu0
        %v10307 = vpop.f32.mrb[0].mxu0
        %v10308 = vpop.f32.mrb[0].mxu0
        %10309 = vdwg.mxu0
        %v10310 = vadd.f32 %v10204, %v10305
        %v10311 = vld [vmem:[%s12] sm:$0x1]
        %v10313 = vlaneseq
        %v10314 = vshrl.u32 %v10313, 7
        %v10315 = vsub.s32 0, %v10314
        %v10316 = vrot.slane %v10311, %v10315
        %v10318 = vadd.f32 %v10310, %v10316
        %v10319 = vmax.f32 %v10318, 0.0
        %v10320 = vpack.c.bf16 %v10319, %v10319
        %v10321 = vld [vmem:[%s13] sm:$0xf]
        %v10322 = vld [vmem:[%s13 + $0x4] sm:$0xf]
        %v10323 = vld [vmem:[%s13 + $0x8] sm:$0xf]
        %v10324 = vld [vmem:[%s13 + $0xc] sm:$0xf]
        %v10325 = vld [vmem:[%s13 + $0x10] sm:$0xf]
        %v10326 = vld [vmem:[%s13 + $0x14] sm:$0xf]
        %v10327 = vld [vmem:[%s13 + $0x18] sm:$0xf]
        %v10328 = vld [vmem:[%s13 + $0x1c] sm:$0xf]
        %v10329 = vld [vmem:[%s13 + $0x20] sm:$0xf]
        %v10339 = vunpack.c.l.b16 %v10321
        %v10340 = vunpack.c.l.b16 %v10322
        %v10341 = vunpack.c.l.b16 %v10323
        %v10342 = vunpack.c.l.b16 %v10324
        %v10343 = vunpack.c.l.b16 %v10325
        %v10344 = vunpack.c.l.b16 %v10326
        %v10345 = vunpack.c.l.b16 %v10327
        %v10346 = vunpack.c.l.b16 %v10328
        %v10347 = vunpack.c.l.b16 %v10329
        %v10348 = vpack.c.b16 %v10340, %v10339
        %v10349 = vpack.c.b16 %v10342, %v10341
        %v10350 = vpack.c.b16 %v10344, %v10343
        %v10351 = vpack.c.b16 %v10346, %v10345
        %v10352 = vpack.c.b16 %v10347, %v10347
        %v10354 = vsel %vm3763, %v10348, 0
        %v10357 = vsel %vm3763, %v10349, 0
        %v10360 = vsel %vm3763, %v10350, 0
        %v10363 = vsel %vm3763, %v10351, 0
        %v10366 = vsel %vm3763, %v10352, 0
        %v10369 = vsel %vm3812, %v10320, 0
        %10371 = vmatprep.subr.bf16.mxu0 0
        %10372 = vmatpush1.bf16.msra.mxu0 %v10369
        %10373 = vmatprep.subr.bf16.mxu0 0
        %10374 = vmatpush1.bf16.msra.mxu0 0
        %10375 = vmatprep.subr.bf16.mxu0 0
        %10376 = vmatpush1.bf16.msra.mxu0 0
        %10377 = vmatprep.subr.bf16.mxu0 0
        %10378 = vmatpush1.bf16.msra.mxu0 0
        %10379 = vmatprep.subr.bf16.mxu0 0
        %10380 = vmatpush1.bf16.msra.mxu0 0
        %10381 = vmatprep.subr.bf16.mxu0 0
        %10382 = vmatpush1.bf16.msra.mxu0 0
        %10383 = vmatprep.subr.bf16.mxu0 0
        %10384 = vmatpush1.bf16.msra.mxu0 0
        %10385 = vmatprep.subr.bf16.mxu0 0
        %10386 = vmatpush1.bf16.msra.mxu0 0
        %10387 = vmatprep.subr.bf16.mxu0 0
        %10388 = vmatpush1.bf16.msra.mxu0 0
        %10389 = vmatprep.subr.bf16.mxu0 0
        %10390 = vmatpush1.bf16.msra.mxu0 0
        %10391 = vmatprep.subr.bf16.mxu0 0
        %10392 = vmatpush1.bf16.msra.mxu0 0
        %10393 = vmatprep.subr.bf16.mxu0 0
        %10394 = vmatpush1.bf16.msra.mxu0 0
        %10395 = vmatprep.subr.bf16.mxu0 0
        %10396 = vmatpush1.bf16.msra.mxu0 0
        %10397 = vmatprep.subr.bf16.mxu0 0
        %10398 = vmatpush1.bf16.msra.mxu0 0
        %10399 = vmatprep.subr.bf16.mxu0 0
        %10400 = vmatpush1.bf16.msra.mxu0 0
        %10401 = vmatprep.subr.bf16.mxu0 0
        %10402 = vmatpush1.bf16.msra.mxu0 0
        %10403 = vmatprep.mubr.bf16.mxu0 0
        %10404 = vmatmul.mubr.bf16.gmra.mrb[0].mxu0 %v10354
        %v10405 = vpop.f32.mrb[0].mxu0
        %v10406 = vadd.f32 0.0, %v10405
        %v10407 = vpop.f32.mrb[0].mxu0
        %v10408 = vpop.f32.mrb[0].mxu0
        %v10409 = vadd.f32 0.0, %v10408
        %v10410 = vpop.f32.mrb[0].mxu0
        %10411 = vmatprep.mubr.bf16.mxu0 0
        %10412 = vmatmul.mubr.bf16.gmra.mrb[0].mxu0 %v10357
        %v10413 = vpop.f32.mrb[0].mxu0
        %v10414 = vadd.f32 0.0, %v10413
        %v10415 = vpop.f32.mrb[0].mxu0
        %v10416 = vpop.f32.mrb[0].mxu0
        %v10417 = vadd.f32 0.0, %v10416
        %v10418 = vpop.f32.mrb[0].mxu0
        %10419 = vmatprep.mubr.bf16.mxu0 0
        %10420 = vmatmul.mubr.bf16.gmra.mrb[0].mxu0 %v10360
        %v10421 = vpop.f32.mrb[0].mxu0
        %v10422 = vadd.f32 0.0, %v10421
        %v10423 = vpop.f32.mrb[0].mxu0
        %v10424 = vpop.f32.mrb[0].mxu0
        %v10425 = vadd.f32 0.0, %v10424
        %v10426 = vpop.f32.mrb[0].mxu0
        %10427 = vmatprep.mubr.bf16.mxu0 0
        %10428 = vmatmul.mubr.bf16.gmra.mrb[0].mxu0 %v10363
        %v10429 = vpop.f32.mrb[0].mxu0
        %v10430 = vadd.f32 0.0, %v10429
        %v10431 = vpop.f32.mrb[0].mxu0
        %v10432 = vpop.f32.mrb[0].mxu0
        %v10433 = vadd.f32 0.0, %v10432
        %v10434 = vpop.f32.mrb[0].mxu0
        %10435 = vmatprep.mubr.bf16.mxu0 0
        %10436 = vmatmul.mubr.bf16.gmra.mrb[0].mxu0 %v10366
        %v10437 = vpop.f32.mrb[0].mxu0
        %v10438 = vadd.f32 0.0, %v10437
        %v10439 = vpop.f32.mrb[0].mxu0
        %v10440 = vpop.f32.mrb[0].mxu0
        %v10441 = vpop.f32.mrb[0].mxu0
        %10442 = vdwg.mxu0
        %v10443 = vpack.c.bf16 %v10409, %v10406
        %v10444 = vpack.c.bf16 %v10417, %v10414
        %v10445 = vpack.c.bf16 %v10425, %v10422
        %v10446 = vpack.c.bf16 %v10433, %v10430
        %v10447 = vpack.c.bf16 %v10438, %v10438
        %v10448 = vld [vmem:[%s14] sm:$0xff]
        %v10449 = vld [vmem:[%s14 + $0x8] sm:$0xff]
        %v10450 = vld [vmem:[%s14 + $0x10] sm:$0xff]
        %v10451 = vld [vmem:[%s14 + $0x18] sm:$0xff]
        %v10452 = vld [vmem:[%s14 + $0x20] sm:$0xff]
        %v10453 = vld [vmem:[%s14 + $0x28] sm:$0xff]
        %v10454 = vld [vmem:[%s14 + $0x30] sm:$0xff]
        %v10455 = vld [vmem:[%s14 + $0x38] sm:$0xff]
        %v10456 = vld [vmem:[%s14 + $0x40] sm:$0xff]
        %v10457 = vld [vmem:[%s14 + $0x48] sm:$0xff]
        %v10458 = vld [vmem:[%s14 + $0x50] sm:$0xff]
        %v10459 = vld [vmem:[%s14 + $0x58] sm:$0xff]
        %v10460 = vld [vmem:[%s14 + $0x60] sm:$0xff]
        %v10461 = vld [vmem:[%s14 + $0x68] sm:$0xff]
        %v10462 = vld [vmem:[%s14 + $0x70] sm:$0xff]
        %v10463 = vld [vmem:[%s14 + $0x78] sm:$0xff]
        %s10464 = scalar_lea.vmem %s14, 128
        %v10465 = vld [vmem:[%s10464] sm:$0xff]
        %v10466 = vld [vmem:[%s10464 + $0x8] sm:$0xff]
        %v10467 = vld [vmem:[%s10464 + $0x10] sm:$0xff]
        %v10468 = vld [vmem:[%s10464 + $0x18] sm:$0xff]
        %v10469 = vld [vmem:[%s10464 + $0x20] sm:$0xff]
        %v10470 = vld [vmem:[%s10464 + $0x28] sm:$0xff]
        %v10471 = vld [vmem:[%s10464 + $0x30] sm:$0xff]
        %v10472 = vld [vmem:[%s10464 + $0x38] sm:$0xff]
        %v10473 = vld [vmem:[%s10464 + $0x40] sm:$0xff]
        %v10474 = vld [vmem:[%s10464 + $0x48] sm:$0xff]
        %v10475 = vld [vmem:[%s10464 + $0x50] sm:$0xff]
        %v10476 = vld [vmem:[%s10464 + $0x58] sm:$0xff]
        %v10477 = vld [vmem:[%s10464 + $0x60] sm:$0xff]
        %v10478 = vld [vmem:[%s10464 + $0x68] sm:$0xff]
        %v10479 = vld [vmem:[%s10464 + $0x70] sm:$0xff]
        %v10480 = vld [vmem:[%s10464 + $0x78] sm:$0xff]
        %v10482 = vrot.slane %v10443, 4
        %v10500 = vunpack.c.l.b16 %v10465
        %v10501 = vunpack.c.h.b16 %v10465
        %v10502 = vunpack.c.l.b16 %v10466
        %v10503 = vunpack.c.h.b16 %v10466
        %v10504 = vunpack.c.l.b16 %v10467
        %v10505 = vunpack.c.h.b16 %v10467
        %v10506 = vunpack.c.l.b16 %v10468
        %v10507 = vunpack.c.h.b16 %v10468
        %v10508 = vunpack.c.l.b16 %v10469
        %v10509 = vunpack.c.h.b16 %v10469
        %v10510 = vunpack.c.l.b16 %v10470
        %v10511 = vunpack.c.h.b16 %v10470
        %v10512 = vunpack.c.l.b16 %v10471
        %v10513 = vunpack.c.h.b16 %v10471
        %v10514 = vunpack.c.l.b16 %v10472
        %v10515 = vunpack.c.h.b16 %v10472
        %v10516 = vunpack.c.l.b16 %v10473
        %v10517 = vunpack.c.h.b16 %v10473
        %v10518 = vunpack.c.l.b16 %v10474
        %v10519 = vunpack.c.h.b16 %v10474
        %v10520 = vunpack.c.l.b16 %v10475
        %v10521 = vunpack.c.h.b16 %v10475
        %v10522 = vunpack.c.l.b16 %v10476
        %v10523 = vunpack.c.h.b16 %v10476
        %v10524 = vunpack.c.l.b16 %v10477
        %v10525 = vunpack.c.h.b16 %v10477
        %v10526 = vunpack.c.l.b16 %v10478
        %v10527 = vunpack.c.h.b16 %v10478
        %v10528 = vunpack.c.l.b16 %v10479
        %v10529 = vunpack.c.h.b16 %v10479
        %v10530 = vunpack.c.l.b16 %v10480
        %v10531 = vunpack.c.h.b16 %v10480
        %v10532 = vpack.c.b16 %v10502, %v10500
        %v10533 = vpack.c.b16 %v10503, %v10501
        %v10534 = vpack.c.b16 %v10506, %v10504
        %v10535 = vpack.c.b16 %v10507, %v10505
        %v10536 = vpack.c.b16 %v10510, %v10508
        %v10537 = vpack.c.b16 %v10511, %v10509
        %v10538 = vpack.c.b16 %v10514, %v10512
        %v10539 = vpack.c.b16 %v10515, %v10513
        %v10540 = vpack.c.b16 %v10518, %v10516
        %v10541 = vpack.c.b16 %v10519, %v10517
        %v10542 = vpack.c.b16 %v10522, %v10520
        %v10543 = vpack.c.b16 %v10523, %v10521
        %v10544 = vpack.c.b16 %v10526, %v10524
        %v10545 = vpack.c.b16 %v10527, %v10525
        %v10546 = vpack.c.b16 %v10530, %v10528
        %v10547 = vpack.c.b16 %v10531, %v10529
        %10564 = vmatprep.subr.bf16.mxu0 %v10533
        %10565 = vmatpush1.bf16.msra.mxu0 %v10532
        %10566 = vmatprep.subr.bf16.mxu0 %v10535
        %10567 = vmatpush1.bf16.msra.mxu0 %v10534
        %10568 = vmatprep.subr.bf16.mxu0 %v10537
        %10569 = vmatpush1.bf16.msra.mxu0 %v10536
        %10570 = vmatprep.subr.bf16.mxu0 %v10539
        %10571 = vmatpush1.bf16.msra.mxu0 %v10538
        %10572 = vmatprep.subr.bf16.mxu0 %v10541
        %10573 = vmatpush1.bf16.msra.mxu0 %v10540
        %10574 = vmatprep.subr.bf16.mxu0 %v10543
        %10575 = vmatpush1.bf16.msra.mxu0 %v10542
        %10576 = vmatprep.subr.bf16.mxu0 %v10545
        %10577 = vmatpush1.bf16.msra.mxu0 %v10544
        %10578 = vmatprep.subr.bf16.mxu0 %v10547
        %10579 = vmatpush1.bf16.msra.mxu0 %v10546
        %10580 = vmatprep.subr.bf16.mxu0 0
        %10581 = vmatpush1.bf16.msra.mxu0 0
        %10582 = vmatprep.subr.bf16.mxu0 0
        %10583 = vmatpush1.bf16.msra.mxu0 0
        %10584 = vmatprep.subr.bf16.mxu0 0
        %10585 = vmatpush1.bf16.msra.mxu0 0
        %10586 = vmatprep.subr.bf16.mxu0 0
        %10587 = vmatpush1.bf16.msra.mxu0 0
        %10588 = vmatprep.subr.bf16.mxu0 0
        %10589 = vmatpush1.bf16.msra.mxu0 0
        %10590 = vmatprep.subr.bf16.mxu0 0
        %10591 = vmatpush1.bf16.msra.mxu0 0
        %10592 = vmatprep.subr.bf16.mxu0 0
        %10593 = vmatpush1.bf16.msra.mxu0 0
        %10594 = vmatprep.subr.bf16.mxu0 0
        %10595 = vmatpush1.bf16.msra.mxu0 0
        %10596 = vmatprep.mubr.bf16.mxu0 0
        %10597 = vmatmul.mubr.bf16.gmra.mrb[0].mxu0 %v10482
        %v10598 = vpop.f32.mrb[0].mxu0
        %v10599 = vadd.f32 0.0, %v10598
        %v10600 = vpop.f32.mrb[0].mxu0
        %v10601 = vadd.f32 0.0, %v10600
        %v10602 = vpop.f32.mrb[0].mxu0
        %v10603 = vpop.f32.mrb[0].mxu0
        %10604 = vdwg.mxu0
        %v10621 = vunpack.c.l.b16 %v10448
        %v10622 = vunpack.c.h.b16 %v10448
        %v10623 = vunpack.c.l.b16 %v10449
        %v10624 = vunpack.c.h.b16 %v10449
        %v10625 = vunpack.c.l.b16 %v10450
        %v10626 = vunpack.c.h.b16 %v10450
        %v10627 = vunpack.c.l.b16 %v10451
        %v10628 = vunpack.c.h.b16 %v10451
        %v10629 = vunpack.c.l.b16 %v10452
        %v10630 = vunpack.c.h.b16 %v10452
        %v10631 = vunpack.c.l.b16 %v10453
        %v10632 = vunpack.c.h.b16 %v10453
        %v10633 = vunpack.c.l.b16 %v10454
        %v10634 = vunpack.c.h.b16 %v10454
        %v10635 = vunpack.c.l.b16 %v10455
        %v10636 = vunpack.c.h.b16 %v10455
        %v10637 = vunpack.c.l.b16 %v10456
        %v10638 = vunpack.c.h.b16 %v10456
        %v10639 = vunpack.c.l.b16 %v10457
        %v10640 = vunpack.c.h.b16 %v10457
        %v10641 = vunpack.c.l.b16 %v10458
        %v10642 = vunpack.c.h.b16 %v10458
        %v10643 = vunpack.c.l.b16 %v10459
        %v10644 = vunpack.c.h.b16 %v10459
        %v10645 = vunpack.c.l.b16 %v10460
        %v10646 = vunpack.c.h.b16 %v10460
        %v10647 = vunpack.c.l.b16 %v10461
        %v10648 = vunpack.c.h.b16 %v10461
        %v10649 = vunpack.c.l.b16 %v10462
        %v10650 = vunpack.c.h.b16 %v10462
        %v10651 = vunpack.c.l.b16 %v10463
        %v10652 = vunpack.c.h.b16 %v10463
        %v10653 = vpack.c.b16 %v10623, %v10621
        %v10654 = vpack.c.b16 %v10624, %v10622
        %v10655 = vpack.c.b16 %v10627, %v10625
        %v10656 = vpack.c.b16 %v10628, %v10626
        %v10657 = vpack.c.b16 %v10631, %v10629
        %v10658 = vpack.c.b16 %v10632, %v10630
        %v10659 = vpack.c.b16 %v10635, %v10633
        %v10660 = vpack.c.b16 %v10636, %v10634
        %v10661 = vpack.c.b16 %v10639, %v10637
        %v10662 = vpack.c.b16 %v10640, %v10638
        %v10663 = vpack.c.b16 %v10643, %v10641
        %v10664 = vpack.c.b16 %v10644, %v10642
        %v10665 = vpack.c.b16 %v10647, %v10645
        %v10666 = vpack.c.b16 %v10648, %v10646
        %v10667 = vpack.c.b16 %v10651, %v10649
        %v10668 = vpack.c.b16 %v10652, %v10650
        %10685 = vmatprep.subr.bf16.mxu0 %v10654
        %10686 = vmatpush1.bf16.msra.mxu0 %v10653
        %10687 = vmatprep.subr.bf16.mxu0 %v10656
        %10688 = vmatpush1.bf16.msra.mxu0 %v10655
        %10689 = vmatprep.subr.bf16.mxu0 %v10658
        %10690 = vmatpush1.bf16.msra.mxu0 %v10657
        %10691 = vmatprep.subr.bf16.mxu0 %v10660
        %10692 = vmatpush1.bf16.msra.mxu0 %v10659
        %10693 = vmatprep.subr.bf16.mxu0 %v10662
        %10694 = vmatpush1.bf16.msra.mxu0 %v10661
        %10695 = vmatprep.subr.bf16.mxu0 %v10664
        %10696 = vmatpush1.bf16.msra.mxu0 %v10663
        %10697 = vmatprep.subr.bf16.mxu0 %v10666
        %10698 = vmatpush1.bf16.msra.mxu0 %v10665
        %10699 = vmatprep.subr.bf16.mxu0 %v10668
        %10700 = vmatpush1.bf16.msra.mxu0 %v10667
        %10701 = vmatprep.subr.bf16.mxu0 0
        %10702 = vmatpush1.bf16.msra.mxu0 0
        %10703 = vmatprep.subr.bf16.mxu0 0
        %10704 = vmatpush1.bf16.msra.mxu0 0
        %10705 = vmatprep.subr.bf16.mxu0 0
        %10706 = vmatpush1.bf16.msra.mxu0 0
        %10707 = vmatprep.subr.bf16.mxu0 0
        %10708 = vmatpush1.bf16.msra.mxu0 0
        %10709 = vmatprep.subr.bf16.mxu0 0
        %10710 = vmatpush1.bf16.msra.mxu0 0
        %10711 = vmatprep.subr.bf16.mxu0 0
        %10712 = vmatpush1.bf16.msra.mxu0 0
        %10713 = vmatprep.subr.bf16.mxu0 0
        %10714 = vmatpush1.bf16.msra.mxu0 0
        %10715 = vmatprep.subr.bf16.mxu0 0
        %10716 = vmatpush1.bf16.msra.mxu0 0
        %10717 = vmatprep.mubr.bf16.mxu0 0
        %10718 = vmatmul.mubr.bf16.gmra.mrb[0].mxu0 %v10443
        %v10719 = vpop.f32.mrb[0].mxu0
        %v10720 = vadd.f32 %v10599, %v10719
        %v10721 = vpop.f32.mrb[0].mxu0
        %v10722 = vadd.f32 %v10601, %v10721
        %v10723 = vpop.f32.mrb[0].mxu0
        %v10724 = vpop.f32.mrb[0].mxu0
        %10725 = vdwg.mxu0
        %s10726 = scalar_lea.vmem %s14, 256
        %v10727 = vld [vmem:[%s10726] sm:$0xff]
        %v10728 = vld [vmem:[%s10726 + $0x8] sm:$0xff]
        %v10729 = vld [vmem:[%s10726 + $0x10] sm:$0xff]
        %v10730 = vld [vmem:[%s10726 + $0x18] sm:$0xff]
        %v10731 = vld [vmem:[%s10726 + $0x20] sm:$0xff]
        %v10732 = vld [vmem:[%s10726 + $0x28] sm:$0xff]
        %v10733 = vld [vmem:[%s10726 + $0x30] sm:$0xff]
        %v10734 = vld [vmem:[%s10726 + $0x38] sm:$0xff]
        %v10735 = vld [vmem:[%s10726 + $0x40] sm:$0xff]
        %v10736 = vld [vmem:[%s10726 + $0x48] sm:$0xff]
        %v10737 = vld [vmem:[%s10726 + $0x50] sm:$0xff]
        %v10738 = vld [vmem:[%s10726 + $0x58] sm:$0xff]
        %v10739 = vld [vmem:[%s10726 + $0x60] sm:$0xff]
        %v10740 = vld [vmem:[%s10726 + $0x68] sm:$0xff]
        %v10741 = vld [vmem:[%s10726 + $0x70] sm:$0xff]
        %v10742 = vld [vmem:[%s10726 + $0x78] sm:$0xff]
        %v10759 = vunpack.c.l.b16 %v10727
        %v10760 = vunpack.c.h.b16 %v10727
        %v10761 = vunpack.c.l.b16 %v10728
        %v10762 = vunpack.c.h.b16 %v10728
        %v10763 = vunpack.c.l.b16 %v10729
        %v10764 = vunpack.c.h.b16 %v10729
        %v10765 = vunpack.c.l.b16 %v10730
        %v10766 = vunpack.c.h.b16 %v10730
        %v10767 = vunpack.c.l.b16 %v10731
        %v10768 = vunpack.c.h.b16 %v10731
        %v10769 = vunpack.c.l.b16 %v10732
        %v10770 = vunpack.c.h.b16 %v10732
        %v10771 = vunpack.c.l.b16 %v10733
        %v10772 = vunpack.c.h.b16 %v10733
        %v10773 = vunpack.c.l.b16 %v10734
        %v10774 = vunpack.c.h.b16 %v10734
        %v10775 = vunpack.c.l.b16 %v10735
        %v10776 = vunpack.c.h.b16 %v10735
        %v10777 = vunpack.c.l.b16 %v10736
        %v10778 = vunpack.c.h.b16 %v10736
        %v10779 = vunpack.c.l.b16 %v10737
        %v10780 = vunpack.c.h.b16 %v10737
        %v10781 = vunpack.c.l.b16 %v10738
        %v10782 = vunpack.c.h.b16 %v10738
        %v10783 = vunpack.c.l.b16 %v10739
        %v10784 = vunpack.c.h.b16 %v10739
        %v10785 = vunpack.c.l.b16 %v10740
        %v10786 = vunpack.c.h.b16 %v10740
        %v10787 = vunpack.c.l.b16 %v10741
        %v10788 = vunpack.c.h.b16 %v10741
        %v10789 = vunpack.c.l.b16 %v10742
        %v10790 = vunpack.c.h.b16 %v10742
        %v10791 = vpack.c.b16 %v10761, %v10759
        %v10792 = vpack.c.b16 %v10762, %v10760
        %v10793 = vpack.c.b16 %v10765, %v10763
        %v10794 = vpack.c.b16 %v10766, %v10764
        %v10795 = vpack.c.b16 %v10769, %v10767
        %v10796 = vpack.c.b16 %v10770, %v10768
        %v10797 = vpack.c.b16 %v10773, %v10771
        %v10798 = vpack.c.b16 %v10774, %v10772
        %v10799 = vpack.c.b16 %v10777, %v10775
        %v10800 = vpack.c.b16 %v10778, %v10776
        %v10801 = vpack.c.b16 %v10781, %v10779
        %v10802 = vpack.c.b16 %v10782, %v10780
        %v10803 = vpack.c.b16 %v10785, %v10783
        %v10804 = vpack.c.b16 %v10786, %v10784
        %v10805 = vpack.c.b16 %v10789, %v10787
        %v10806 = vpack.c.b16 %v10790, %v10788
        %10823 = vmatprep.subr.bf16.mxu0 %v10792
        %10824 = vmatpush1.bf16.msra.mxu0 %v10791
        %10825 = vmatprep.subr.bf16.mxu0 %v10794
        %10826 = vmatpush1.bf16.msra.mxu0 %v10793
        %10827 = vmatprep.subr.bf16.mxu0 %v10796
        %10828 = vmatpush1.bf16.msra.mxu0 %v10795
        %10829 = vmatprep.subr.bf16.mxu0 %v10798
        %10830 = vmatpush1.bf16.msra.mxu0 %v10797
        %10831 = vmatprep.subr.bf16.mxu0 %v10800
        %10832 = vmatpush1.bf16.msra.mxu0 %v10799
        %10833 = vmatprep.subr.bf16.mxu0 %v10802
        %10834 = vmatpush1.bf16.msra.mxu0 %v10801
        %10835 = vmatprep.subr.bf16.mxu0 %v10804
        %10836 = vmatpush1.bf16.msra.mxu0 %v10803
        %10837 = vmatprep.subr.bf16.mxu0 %v10806
        %10838 = vmatpush1.bf16.msra.mxu0 %v10805
        %10839 = vmatprep.subr.bf16.mxu0 0
        %10840 = vmatpush1.bf16.msra.mxu0 0
        %10841 = vmatprep.subr.bf16.mxu0 0
        %10842 = vmatpush1.bf16.msra.mxu0 0
        %10843 = vmatprep.subr.bf16.mxu0 0
        %10844 = vmatpush1.bf16.msra.mxu0 0
        %10845 = vmatprep.subr.bf16.mxu0 0
        %10846 = vmatpush1.bf16.msra.mxu0 0
        %10847 = vmatprep.subr.bf16.mxu0 0
        %10848 = vmatpush1.bf16.msra.mxu0 0
        %10849 = vmatprep.subr.bf16.mxu0 0
        %10850 = vmatpush1.bf16.msra.mxu0 0
        %10851 = vmatprep.subr.bf16.mxu0 0
        %10852 = vmatpush1.bf16.msra.mxu0 0
        %10853 = vmatprep.subr.bf16.mxu0 0
        %10854 = vmatpush1.bf16.msra.mxu0 0
        %10855 = vmatprep.mubr.bf16.mxu0 0
        %10856 = vmatmul.mubr.bf16.gmra.mrb[0].mxu0 %v10444
        %v10857 = vpop.f32.mrb[0].mxu0
        %v10858 = vadd.f32 0.0, %v10857
        %v10859 = vpop.f32.mrb[0].mxu0
        %v10860 = vadd.f32 0.0, %v10859
        %v10861 = vpop.f32.mrb[0].mxu0
        %v10862 = vpop.f32.mrb[0].mxu0
        %10863 = vdwg.mxu0
        %v10864 = vadd.f32 %v10720, %v10858
        %v10865 = vadd.f32 %v10722, %v10860
        %s10866 = scalar_lea.vmem %s14, 384
        %v10867 = vld [vmem:[%s10866] sm:$0xff]
        %v10868 = vld [vmem:[%s10866 + $0x8] sm:$0xff]
        %v10869 = vld [vmem:[%s10866 + $0x10] sm:$0xff]
        %v10870 = vld [vmem:[%s10866 + $0x18] sm:$0xff]
        %v10871 = vld [vmem:[%s10866 + $0x20] sm:$0xff]
        %v10872 = vld [vmem:[%s10866 + $0x28] sm:$0xff]
        %v10873 = vld [vmem:[%s10866 + $0x30] sm:$0xff]
        %v10874 = vld [vmem:[%s10866 + $0x38] sm:$0xff]
        %v10875 = vld [vmem:[%s10866 + $0x40] sm:$0xff]
        %v10876 = vld [vmem:[%s10866 + $0x48] sm:$0xff]
        %v10877 = vld [vmem:[%s10866 + $0x50] sm:$0xff]
        %v10878 = vld [vmem:[%s10866 + $0x58] sm:$0xff]
        %v10879 = vld [vmem:[%s10866 + $0x60] sm:$0xff]
        %v10880 = vld [vmem:[%s10866 + $0x68] sm:$0xff]
        %v10881 = vld [vmem:[%s10866 + $0x70] sm:$0xff]
        %v10882 = vld [vmem:[%s10866 + $0x78] sm:$0xff]
        %v10884 = vrot.slane %v10444, 4
        %v10902 = vunpack.c.l.b16 %v10867
        %v10903 = vunpack.c.h.b16 %v10867
        %v10904 = vunpack.c.l.b16 %v10868
        %v10905 = vunpack.c.h.b16 %v10868
        %v10906 = vunpack.c.l.b16 %v10869
        %v10907 = vunpack.c.h.b16 %v10869
        %v10908 = vunpack.c.l.b16 %v10870
        %v10909 = vunpack.c.h.b16 %v10870
        %v10910 = vunpack.c.l.b16 %v10871
        %v10911 = vunpack.c.h.b16 %v10871
        %v10912 = vunpack.c.l.b16 %v10872
        %v10913 = vunpack.c.h.b16 %v10872
        %v10914 = vunpack.c.l.b16 %v10873
        %v10915 = vunpack.c.h.b16 %v10873
        %v10916 = vunpack.c.l.b16 %v10874
        %v10917 = vunpack.c.h.b16 %v10874
        %v10918 = vunpack.c.l.b16 %v10875
        %v10919 = vunpack.c.h.b16 %v10875
        %v10920 = vunpack.c.l.b16 %v10876
        %v10921 = vunpack.c.h.b16 %v10876
        %v10922 = vunpack.c.l.b16 %v10877
        %v10923 = vunpack.c.h.b16 %v10877
        %v10924 = vunpack.c.l.b16 %v10878
        %v10925 = vunpack.c.h.b16 %v10878
        %v10926 = vunpack.c.l.b16 %v10879
        %v10927 = vunpack.c.h.b16 %v10879
        %v10928 = vunpack.c.l.b16 %v10880
        %v10929 = vunpack.c.h.b16 %v10880
        %v10930 = vunpack.c.l.b16 %v10881
        %v10931 = vunpack.c.h.b16 %v10881
        %v10932 = vunpack.c.l.b16 %v10882
        %v10933 = vunpack.c.h.b16 %v10882
        %v10934 = vpack.c.b16 %v10904, %v10902
        %v10935 = vpack.c.b16 %v10905, %v10903
        %v10936 = vpack.c.b16 %v10908, %v10906
        %v10937 = vpack.c.b16 %v10909, %v10907
        %v10938 = vpack.c.b16 %v10912, %v10910
        %v10939 = vpack.c.b16 %v10913, %v10911
        %v10940 = vpack.c.b16 %v10916, %v10914
        %v10941 = vpack.c.b16 %v10917, %v10915
        %v10942 = vpack.c.b16 %v10920, %v10918
        %v10943 = vpack.c.b16 %v10921, %v10919
        %v10944 = vpack.c.b16 %v10924, %v10922
        %v10945 = vpack.c.b16 %v10925, %v10923
        %v10946 = vpack.c.b16 %v10928, %v10926
        %v10947 = vpack.c.b16 %v10929, %v10927
        %v10948 = vpack.c.b16 %v10932, %v10930
        %v10949 = vpack.c.b16 %v10933, %v10931
        %10966 = vmatprep.subr.bf16.mxu0 %v10935
        %10967 = vmatpush1.bf16.msra.mxu0 %v10934
        %10968 = vmatprep.subr.bf16.mxu0 %v10937
        %10969 = vmatpush1.bf16.msra.mxu0 %v10936
        %10970 = vmatprep.subr.bf16.mxu0 %v10939
        %10971 = vmatpush1.bf16.msra.mxu0 %v10938
        %10972 = vmatprep.subr.bf16.mxu0 %v10941
        %10973 = vmatpush1.bf16.msra.mxu0 %v10940
        %10974 = vmatprep.subr.bf16.mxu0 %v10943
        %10975 = vmatpush1.bf16.msra.mxu0 %v10942
        %10976 = vmatprep.subr.bf16.mxu0 %v10945
        %10977 = vmatpush1.bf16.msra.mxu0 %v10944
        %10978 = vmatprep.subr.bf16.mxu0 %v10947
        %10979 = vmatpush1.bf16.msra.mxu0 %v10946
        %10980 = vmatprep.subr.bf16.mxu0 %v10949
        %10981 = vmatpush1.bf16.msra.mxu0 %v10948
        %10982 = vmatprep.subr.bf16.mxu0 0
        %10983 = vmatpush1.bf16.msra.mxu0 0
        %10984 = vmatprep.subr.bf16.mxu0 0
        %10985 = vmatpush1.bf16.msra.mxu0 0
        %10986 = vmatprep.subr.bf16.mxu0 0
        %10987 = vmatpush1.bf16.msra.mxu0 0
        %10988 = vmatprep.subr.bf16.mxu0 0
        %10989 = vmatpush1.bf16.msra.mxu0 0
        %10990 = vmatprep.subr.bf16.mxu0 0
        %10991 = vmatpush1.bf16.msra.mxu0 0
        %10992 = vmatprep.subr.bf16.mxu0 0
        %10993 = vmatpush1.bf16.msra.mxu0 0
        %10994 = vmatprep.subr.bf16.mxu0 0
        %10995 = vmatpush1.bf16.msra.mxu0 0
        %10996 = vmatprep.subr.bf16.mxu0 0
        %10997 = vmatpush1.bf16.msra.mxu0 0
        %10998 = vmatprep.mubr.bf16.mxu0 0
        %10999 = vmatmul.mubr.bf16.gmra.mrb[0].mxu0 %v10884
        %v11000 = vpop.f32.mrb[0].mxu0
        %v11001 = vadd.f32 0.0, %v11000
        %v11002 = vpop.f32.mrb[0].mxu0
        %v11003 = vadd.f32 0.0, %v11002
        %v11004 = vpop.f32.mrb[0].mxu0
        %v11005 = vpop.f32.mrb[0].mxu0
        %11006 = vdwg.mxu0
        %v11007 = vadd.f32 %v10864, %v11001
        %v11008 = vadd.f32 %v10865, %v11003
        %s11009 = scalar_lea.vmem %s14, 512
        %v11010 = vld [vmem:[%s11009] sm:$0xff]
        %v11011 = vld [vmem:[%s11009 + $0x8] sm:$0xff]
        %v11012 = vld [vmem:[%s11009 + $0x10] sm:$0xff]
        %v11013 = vld [vmem:[%s11009 + $0x18] sm:$0xff]
        %v11014 = vld [vmem:[%s11009 + $0x20] sm:$0xff]
        %v11015 = vld [vmem:[%s11009 + $0x28] sm:$0xff]
        %v11016 = vld [vmem:[%s11009 + $0x30] sm:$0xff]
        %v11017 = vld [vmem:[%s11009 + $0x38] sm:$0xff]
        %v11018 = vld [vmem:[%s11009 + $0x40] sm:$0xff]
        %v11019 = vld [vmem:[%s11009 + $0x48] sm:$0xff]
        %v11020 = vld [vmem:[%s11009 + $0x50] sm:$0xff]
        %v11021 = vld [vmem:[%s11009 + $0x58] sm:$0xff]
        %v11022 = vld [vmem:[%s11009 + $0x60] sm:$0xff]
        %v11023 = vld [vmem:[%s11009 + $0x68] sm:$0xff]
        %v11024 = vld [vmem:[%s11009 + $0x70] sm:$0xff]
        %v11025 = vld [vmem:[%s11009 + $0x78] sm:$0xff]
        %v11042 = vunpack.c.l.b16 %v11010
        %v11043 = vunpack.c.h.b16 %v11010
        %v11044 = vunpack.c.l.b16 %v11011
        %v11045 = vunpack.c.h.b16 %v11011
        %v11046 = vunpack.c.l.b16 %v11012
        %v11047 = vunpack.c.h.b16 %v11012
        %v11048 = vunpack.c.l.b16 %v11013
        %v11049 = vunpack.c.h.b16 %v11013
        %v11050 = vunpack.c.l.b16 %v11014
        %v11051 = vunpack.c.h.b16 %v11014
        %v11052 = vunpack.c.l.b16 %v11015
        %v11053 = vunpack.c.h.b16 %v11015
        %v11054 = vunpack.c.l.b16 %v11016
        %v11055 = vunpack.c.h.b16 %v11016
        %v11056 = vunpack.c.l.b16 %v11017
        %v11057 = vunpack.c.h.b16 %v11017
        %v11058 = vunpack.c.l.b16 %v11018
        %v11059 = vunpack.c.h.b16 %v11018
        %v11060 = vunpack.c.l.b16 %v11019
        %v11061 = vunpack.c.h.b16 %v11019
        %v11062 = vunpack.c.l.b16 %v11020
        %v11063 = vunpack.c.h.b16 %v11020
        %v11064 = vunpack.c.l.b16 %v11021
        %v11065 = vunpack.c.h.b16 %v11021
        %v11066 = vunpack.c.l.b16 %v11022
        %v11067 = vunpack.c.h.b16 %v11022
        %v11068 = vunpack.c.l.b16 %v11023
        %v11069 = vunpack.c.h.b16 %v11023
        %v11070 = vunpack.c.l.b16 %v11024
        %v11071 = vunpack.c.h.b16 %v11024
        %v11072 = vunpack.c.l.b16 %v11025
        %v11073 = vunpack.c.h.b16 %v11025
        %v11074 = vpack.c.b16 %v11044, %v11042
        %v11075 = vpack.c.b16 %v11045, %v11043
        %v11076 = vpack.c.b16 %v11048, %v11046
        %v11077 = vpack.c.b16 %v11049, %v11047
        %v11078 = vpack.c.b16 %v11052, %v11050
        %v11079 = vpack.c.b16 %v11053, %v11051
        %v11080 = vpack.c.b16 %v11056, %v11054
        %v11081 = vpack.c.b16 %v11057, %v11055
        %v11082 = vpack.c.b16 %v11060, %v11058
        %v11083 = vpack.c.b16 %v11061, %v11059
        %v11084 = vpack.c.b16 %v11064, %v11062
        %v11085 = vpack.c.b16 %v11065, %v11063
        %v11086 = vpack.c.b16 %v11068, %v11066
        %v11087 = vpack.c.b16 %v11069, %v11067
        %v11088 = vpack.c.b16 %v11072, %v11070
        %v11089 = vpack.c.b16 %v11073, %v11071
        %11106 = vmatprep.subr.bf16.mxu0 %v11075
        %11107 = vmatpush1.bf16.msra.mxu0 %v11074
        %11108 = vmatprep.subr.bf16.mxu0 %v11077
        %11109 = vmatpush1.bf16.msra.mxu0 %v11076
        %11110 = vmatprep.subr.bf16.mxu0 %v11079
        %11111 = vmatpush1.bf16.msra.mxu0 %v11078
        %11112 = vmatprep.subr.bf16.mxu0 %v11081
        %11113 = vmatpush1.bf16.msra.mxu0 %v11080
        %11114 = vmatprep.subr.bf16.mxu0 %v11083
        %11115 = vmatpush1.bf16.msra.mxu0 %v11082
        %11116 = vmatprep.subr.bf16.mxu0 %v11085
        %11117 = vmatpush1.bf16.msra.mxu0 %v11084
        %11118 = vmatprep.subr.bf16.mxu0 %v11087
        %11119 = vmatpush1.bf16.msra.mxu0 %v11086
        %11120 = vmatprep.subr.bf16.mxu0 %v11089
        %11121 = vmatpush1.bf16.msra.mxu0 %v11088
        %11122 = vmatprep.subr.bf16.mxu0 0
        %11123 = vmatpush1.bf16.msra.mxu0 0
        %11124 = vmatprep.subr.bf16.mxu0 0
        %11125 = vmatpush1.bf16.msra.mxu0 0
        %11126 = vmatprep.subr.bf16.mxu0 0
        %11127 = vmatpush1.bf16.msra.mxu0 0
        %11128 = vmatprep.subr.bf16.mxu0 0
        %11129 = vmatpush1.bf16.msra.mxu0 0
        %11130 = vmatprep.subr.bf16.mxu0 0
        %11131 = vmatpush1.bf16.msra.mxu0 0
        %11132 = vmatprep.subr.bf16.mxu0 0
        %11133 = vmatpush1.bf16.msra.mxu0 0
        %11134 = vmatprep.subr.bf16.mxu0 0
        %11135 = vmatpush1.bf16.msra.mxu0 0
        %11136 = vmatprep.subr.bf16.mxu0 0
        %11137 = vmatpush1.bf16.msra.mxu0 0
        %11138 = vmatprep.mubr.bf16.mxu0 0
        %11139 = vmatmul.mubr.bf16.gmra.mrb[0].mxu0 %v10445
        %v11140 = vpop.f32.mrb[0].mxu0
        %v11141 = vadd.f32 0.0, %v11140
        %v11142 = vpop.f32.mrb[0].mxu0
        %v11143 = vadd.f32 0.0, %v11142
        %v11144 = vpop.f32.mrb[0].mxu0
        %v11145 = vpop.f32.mrb[0].mxu0
        %11146 = vdwg.mxu0
        %v11147 = vadd.f32 %v11007, %v11141
        %v11148 = vadd.f32 %v11008, %v11143
        %s11149 = scalar_lea.vmem %s14, 640
        %v11150 = vld [vmem:[%s11149] sm:$0xff]
        %v11151 = vld [vmem:[%s11149 + $0x8] sm:$0xff]
        %v11152 = vld [vmem:[%s11149 + $0x10] sm:$0xff]
        %v11153 = vld [vmem:[%s11149 + $0x18] sm:$0xff]
        %v11154 = vld [vmem:[%s11149 + $0x20] sm:$0xff]
        %v11155 = vld [vmem:[%s11149 + $0x28] sm:$0xff]
        %v11156 = vld [vmem:[%s11149 + $0x30] sm:$0xff]
        %v11157 = vld [vmem:[%s11149 + $0x38] sm:$0xff]
        %v11158 = vld [vmem:[%s11149 + $0x40] sm:$0xff]
        %v11159 = vld [vmem:[%s11149 + $0x48] sm:$0xff]
        %v11160 = vld [vmem:[%s11149 + $0x50] sm:$0xff]
        %v11161 = vld [vmem:[%s11149 + $0x58] sm:$0xff]
        %v11162 = vld [vmem:[%s11149 + $0x60] sm:$0xff]
        %v11163 = vld [vmem:[%s11149 + $0x68] sm:$0xff]
        %v11164 = vld [vmem:[%s11149 + $0x70] sm:$0xff]
        %v11165 = vld [vmem:[%s11149 + $0x78] sm:$0xff]
        %v11167 = vrot.slane %v10445, 4
        %v11185 = vunpack.c.l.b16 %v11150
        %v11186 = vunpack.c.h.b16 %v11150
        %v11187 = vunpack.c.l.b16 %v11151
        %v11188 = vunpack.c.h.b16 %v11151
        %v11189 = vunpack.c.l.b16 %v11152
        %v11190 = vunpack.c.h.b16 %v11152
        %v11191 = vunpack.c.l.b16 %v11153
        %v11192 = vunpack.c.h.b16 %v11153
        %v11193 = vunpack.c.l.b16 %v11154
        %v11194 = vunpack.c.h.b16 %v11154
        %v11195 = vunpack.c.l.b16 %v11155
        %v11196 = vunpack.c.h.b16 %v11155
        %v11197 = vunpack.c.l.b16 %v11156
        %v11198 = vunpack.c.h.b16 %v11156
        %v11199 = vunpack.c.l.b16 %v11157
        %v11200 = vunpack.c.h.b16 %v11157
        %v11201 = vunpack.c.l.b16 %v11158
        %v11202 = vunpack.c.h.b16 %v11158
        %v11203 = vunpack.c.l.b16 %v11159
        %v11204 = vunpack.c.h.b16 %v11159
        %v11205 = vunpack.c.l.b16 %v11160
        %v11206 = vunpack.c.h.b16 %v11160
        %v11207 = vunpack.c.l.b16 %v11161
        %v11208 = vunpack.c.h.b16 %v11161
        %v11209 = vunpack.c.l.b16 %v11162
        %v11210 = vunpack.c.h.b16 %v11162
        %v11211 = vunpack.c.l.b16 %v11163
        %v11212 = vunpack.c.h.b16 %v11163
        %v11213 = vunpack.c.l.b16 %v11164
        %v11214 = vunpack.c.h.b16 %v11164
        %v11215 = vunpack.c.l.b16 %v11165
        %v11216 = vunpack.c.h.b16 %v11165
        %v11217 = vpack.c.b16 %v11187, %v11185
        %v11218 = vpack.c.b16 %v11188, %v11186
        %v11219 = vpack.c.b16 %v11191, %v11189
        %v11220 = vpack.c.b16 %v11192, %v11190
        %v11221 = vpack.c.b16 %v11195, %v11193
        %v11222 = vpack.c.b16 %v11196, %v11194
        %v11223 = vpack.c.b16 %v11199, %v11197
        %v11224 = vpack.c.b16 %v11200, %v11198
        %v11225 = vpack.c.b16 %v11203, %v11201
        %v11226 = vpack.c.b16 %v11204, %v11202
        %v11227 = vpack.c.b16 %v11207, %v11205
        %v11228 = vpack.c.b16 %v11208, %v11206
        %v11229 = vpack.c.b16 %v11211, %v11209
        %v11230 = vpack.c.b16 %v11212, %v11210
        %v11231 = vpack.c.b16 %v11215, %v11213
        %v11232 = vpack.c.b16 %v11216, %v11214
        %11249 = vmatprep.subr.bf16.mxu0 %v11218
        %11250 = vmatpush1.bf16.msra.mxu0 %v11217
        %11251 = vmatprep.subr.bf16.mxu0 %v11220
        %11252 = vmatpush1.bf16.msra.mxu0 %v11219
        %11253 = vmatprep.subr.bf16.mxu0 %v11222
        %11254 = vmatpush1.bf16.msra.mxu0 %v11221
        %11255 = vmatprep.subr.bf16.mxu0 %v11224
        %11256 = vmatpush1.bf16.msra.mxu0 %v11223
        %11257 = vmatprep.subr.bf16.mxu0 %v11226
        %11258 = vmatpush1.bf16.msra.mxu0 %v11225
        %11259 = vmatprep.subr.bf16.mxu0 %v11228
        %11260 = vmatpush1.bf16.msra.mxu0 %v11227
        %11261 = vmatprep.subr.bf16.mxu0 %v11230
        %11262 = vmatpush1.bf16.msra.mxu0 %v11229
        %11263 = vmatprep.subr.bf16.mxu0 %v11232
        %11264 = vmatpush1.bf16.msra.mxu0 %v11231
        %11265 = vmatprep.subr.bf16.mxu0 0
        %11266 = vmatpush1.bf16.msra.mxu0 0
        %11267 = vmatprep.subr.bf16.mxu0 0
        %11268 = vmatpush1.bf16.msra.mxu0 0
        %11269 = vmatprep.subr.bf16.mxu0 0
        %11270 = vmatpush1.bf16.msra.mxu0 0
        %11271 = vmatprep.subr.bf16.mxu0 0
        %11272 = vmatpush1.bf16.msra.mxu0 0
        %11273 = vmatprep.subr.bf16.mxu0 0
        %11274 = vmatpush1.bf16.msra.mxu0 0
        %11275 = vmatprep.subr.bf16.mxu0 0
        %11276 = vmatpush1.bf16.msra.mxu0 0
        %11277 = vmatprep.subr.bf16.mxu0 0
        %11278 = vmatpush1.bf16.msra.mxu0 0
        %11279 = vmatprep.subr.bf16.mxu0 0
        %11280 = vmatpush1.bf16.msra.mxu0 0
        %11281 = vmatprep.mubr.bf16.mxu0 0
        %11282 = vmatmul.mubr.bf16.gmra.mrb[0].mxu0 %v11167
        %v11283 = vpop.f32.mrb[0].mxu0
        %v11284 = vadd.f32 0.0, %v11283
        %v11285 = vpop.f32.mrb[0].mxu0
        %v11286 = vadd.f32 0.0, %v11285
        %v11287 = vpop.f32.mrb[0].mxu0
        %v11288 = vpop.f32.mrb[0].mxu0
        %11289 = vdwg.mxu0
        %v11290 = vadd.f32 %v11147, %v11284
        %v11291 = vadd.f32 %v11148, %v11286
        %s11292 = scalar_lea.vmem %s14, 768
        %v11293 = vld [vmem:[%s11292] sm:$0xff]
        %v11294 = vld [vmem:[%s11292 + $0x8] sm:$0xff]
        %v11295 = vld [vmem:[%s11292 + $0x10] sm:$0xff]
        %v11296 = vld [vmem:[%s11292 + $0x18] sm:$0xff]
        %v11297 = vld [vmem:[%s11292 + $0x20] sm:$0xff]
        %v11298 = vld [vmem:[%s11292 + $0x28] sm:$0xff]
        %v11299 = vld [vmem:[%s11292 + $0x30] sm:$0xff]
        %v11300 = vld [vmem:[%s11292 + $0x38] sm:$0xff]
        %v11301 = vld [vmem:[%s11292 + $0x40] sm:$0xff]
        %v11302 = vld [vmem:[%s11292 + $0x48] sm:$0xff]
        %v11303 = vld [vmem:[%s11292 + $0x50] sm:$0xff]
        %v11304 = vld [vmem:[%s11292 + $0x58] sm:$0xff]
        %v11305 = vld [vmem:[%s11292 + $0x60] sm:$0xff]
        %v11306 = vld [vmem:[%s11292 + $0x68] sm:$0xff]
        %v11307 = vld [vmem:[%s11292 + $0x70] sm:$0xff]
        %v11308 = vld [vmem:[%s11292 + $0x78] sm:$0xff]
        %v11325 = vunpack.c.l.b16 %v11293
        %v11326 = vunpack.c.h.b16 %v11293
        %v11327 = vunpack.c.l.b16 %v11294
        %v11328 = vunpack.c.h.b16 %v11294
        %v11329 = vunpack.c.l.b16 %v11295
        %v11330 = vunpack.c.h.b16 %v11295
        %v11331 = vunpack.c.l.b16 %v11296
        %v11332 = vunpack.c.h.b16 %v11296
        %v11333 = vunpack.c.l.b16 %v11297
        %v11334 = vunpack.c.h.b16 %v11297
        %v11335 = vunpack.c.l.b16 %v11298
        %v11336 = vunpack.c.h.b16 %v11298
        %v11337 = vunpack.c.l.b16 %v11299
        %v11338 = vunpack.c.h.b16 %v11299
        %v11339 = vunpack.c.l.b16 %v11300
        %v11340 = vunpack.c.h.b16 %v11300
        %v11341 = vunpack.c.l.b16 %v11301
        %v11342 = vunpack.c.h.b16 %v11301
        %v11343 = vunpack.c.l.b16 %v11302
        %v11344 = vunpack.c.h.b16 %v11302
        %v11345 = vunpack.c.l.b16 %v11303
        %v11346 = vunpack.c.h.b16 %v11303
        %v11347 = vunpack.c.l.b16 %v11304
        %v11348 = vunpack.c.h.b16 %v11304
        %v11349 = vunpack.c.l.b16 %v11305
        %v11350 = vunpack.c.h.b16 %v11305
        %v11351 = vunpack.c.l.b16 %v11306
        %v11352 = vunpack.c.h.b16 %v11306
        %v11353 = vunpack.c.l.b16 %v11307
        %v11354 = vunpack.c.h.b16 %v11307
        %v11355 = vunpack.c.l.b16 %v11308
        %v11356 = vunpack.c.h.b16 %v11308
        %v11357 = vpack.c.b16 %v11327, %v11325
        %v11358 = vpack.c.b16 %v11328, %v11326
        %v11359 = vpack.c.b16 %v11331, %v11329
        %v11360 = vpack.c.b16 %v11332, %v11330
        %v11361 = vpack.c.b16 %v11335, %v11333
        %v11362 = vpack.c.b16 %v11336, %v11334
        %v11363 = vpack.c.b16 %v11339, %v11337
        %v11364 = vpack.c.b16 %v11340, %v11338
        %v11365 = vpack.c.b16 %v11343, %v11341
        %v11366 = vpack.c.b16 %v11344, %v11342
        %v11367 = vpack.c.b16 %v11347, %v11345
        %v11368 = vpack.c.b16 %v11348, %v11346
        %v11369 = vpack.c.b16 %v11351, %v11349
        %v11370 = vpack.c.b16 %v11352, %v11350
        %v11371 = vpack.c.b16 %v11355, %v11353
        %v11372 = vpack.c.b16 %v11356, %v11354
        %11389 = vmatprep.subr.bf16.mxu0 %v11358
        %11390 = vmatpush1.bf16.msra.mxu0 %v11357
        %11391 = vmatprep.subr.bf16.mxu0 %v11360
        %11392 = vmatpush1.bf16.msra.mxu0 %v11359
        %11393 = vmatprep.subr.bf16.mxu0 %v11362
        %11394 = vmatpush1.bf16.msra.mxu0 %v11361
        %11395 = vmatprep.subr.bf16.mxu0 %v11364
        %11396 = vmatpush1.bf16.msra.mxu0 %v11363
        %11397 = vmatprep.subr.bf16.mxu0 %v11366
        %11398 = vmatpush1.bf16.msra.mxu0 %v11365
        %11399 = vmatprep.subr.bf16.mxu0 %v11368
        %11400 = vmatpush1.bf16.msra.mxu0 %v11367
        %11401 = vmatprep.subr.bf16.mxu0 %v11370
        %11402 = vmatpush1.bf16.msra.mxu0 %v11369
        %11403 = vmatprep.subr.bf16.mxu0 %v11372
        %11404 = vmatpush1.bf16.msra.mxu0 %v11371
        %11405 = vmatprep.subr.bf16.mxu0 0
        %11406 = vmatpush1.bf16.msra.mxu0 0
        %11407 = vmatprep.subr.bf16.mxu0 0
        %11408 = vmatpush1.bf16.msra.mxu0 0
        %11409 = vmatprep.subr.bf16.mxu0 0
        %11410 = vmatpush1.bf16.msra.mxu0 0
        %11411 = vmatprep.subr.bf16.mxu0 0
        %11412 = vmatpush1.bf16.msra.mxu0 0
        %11413 = vmatprep.subr.bf16.mxu0 0
        %11414 = vmatpush1.bf16.msra.mxu0 0
        %11415 = vmatprep.subr.bf16.mxu0 0
        %11416 = vmatpush1.bf16.msra.mxu0 0
        %11417 = vmatprep.subr.bf16.mxu0 0
        %11418 = vmatpush1.bf16.msra.mxu0 0
        %11419 = vmatprep.subr.bf16.mxu0 0
        %11420 = vmatpush1.bf16.msra.mxu0 0
        %11421 = vmatprep.mubr.bf16.mxu0 0
        %11422 = vmatmul.mubr.bf16.gmra.mrb[0].mxu0 %v10446
        %v11423 = vpop.f32.mrb[0].mxu0
        %v11424 = vadd.f32 0.0, %v11423
        %v11425 = vpop.f32.mrb[0].mxu0
        %v11426 = vadd.f32 0.0, %v11425
        %v11427 = vpop.f32.mrb[0].mxu0
        %v11428 = vpop.f32.mrb[0].mxu0
        %11429 = vdwg.mxu0
        %v11430 = vadd.f32 %v11290, %v11424
        %v11431 = vadd.f32 %v11291, %v11426
        %s11432 = scalar_lea.vmem %s14, 896
        %v11433 = vld [vmem:[%s11432] sm:$0xff]
        %v11434 = vld [vmem:[%s11432 + $0x8] sm:$0xff]
        %v11435 = vld [vmem:[%s11432 + $0x10] sm:$0xff]
        %v11436 = vld [vmem:[%s11432 + $0x18] sm:$0xff]
        %v11437 = vld [vmem:[%s11432 + $0x20] sm:$0xff]
        %v11438 = vld [vmem:[%s11432 + $0x28] sm:$0xff]
        %v11439 = vld [vmem:[%s11432 + $0x30] sm:$0xff]
        %v11440 = vld [vmem:[%s11432 + $0x38] sm:$0xff]
        %v11441 = vld [vmem:[%s11432 + $0x40] sm:$0xff]
        %v11442 = vld [vmem:[%s11432 + $0x48] sm:$0xff]
        %v11443 = vld [vmem:[%s11432 + $0x50] sm:$0xff]
        %v11444 = vld [vmem:[%s11432 + $0x58] sm:$0xff]
        %v11445 = vld [vmem:[%s11432 + $0x60] sm:$0xff]
        %v11446 = vld [vmem:[%s11432 + $0x68] sm:$0xff]
        %v11447 = vld [vmem:[%s11432 + $0x70] sm:$0xff]
        %v11448 = vld [vmem:[%s11432 + $0x78] sm:$0xff]
        %v11450 = vrot.slane %v10446, 4
        %v11468 = vunpack.c.l.b16 %v11433
        %v11469 = vunpack.c.h.b16 %v11433
        %v11470 = vunpack.c.l.b16 %v11434
        %v11471 = vunpack.c.h.b16 %v11434
        %v11472 = vunpack.c.l.b16 %v11435
        %v11473 = vunpack.c.h.b16 %v11435
        %v11474 = vunpack.c.l.b16 %v11436
        %v11475 = vunpack.c.h.b16 %v11436
        %v11476 = vunpack.c.l.b16 %v11437
        %v11477 = vunpack.c.h.b16 %v11437
        %v11478 = vunpack.c.l.b16 %v11438
        %v11479 = vunpack.c.h.b16 %v11438
        %v11480 = vunpack.c.l.b16 %v11439
        %v11481 = vunpack.c.h.b16 %v11439
        %v11482 = vunpack.c.l.b16 %v11440
        %v11483 = vunpack.c.h.b16 %v11440
        %v11484 = vunpack.c.l.b16 %v11441
        %v11485 = vunpack.c.h.b16 %v11441
        %v11486 = vunpack.c.l.b16 %v11442
        %v11487 = vunpack.c.h.b16 %v11442
        %v11488 = vunpack.c.l.b16 %v11443
        %v11489 = vunpack.c.h.b16 %v11443
        %v11490 = vunpack.c.l.b16 %v11444
        %v11491 = vunpack.c.h.b16 %v11444
        %v11492 = vunpack.c.l.b16 %v11445
        %v11493 = vunpack.c.h.b16 %v11445
        %v11494 = vunpack.c.l.b16 %v11446
        %v11495 = vunpack.c.h.b16 %v11446
        %v11496 = vunpack.c.l.b16 %v11447
        %v11497 = vunpack.c.h.b16 %v11447
        %v11498 = vunpack.c.l.b16 %v11448
        %v11499 = vunpack.c.h.b16 %v11448
        %v11500 = vpack.c.b16 %v11470, %v11468
        %v11501 = vpack.c.b16 %v11471, %v11469
        %v11502 = vpack.c.b16 %v11474, %v11472
        %v11503 = vpack.c.b16 %v11475, %v11473
        %v11504 = vpack.c.b16 %v11478, %v11476
        %v11505 = vpack.c.b16 %v11479, %v11477
        %v11506 = vpack.c.b16 %v11482, %v11480
        %v11507 = vpack.c.b16 %v11483, %v11481
        %v11508 = vpack.c.b16 %v11486, %v11484
        %v11509 = vpack.c.b16 %v11487, %v11485
        %v11510 = vpack.c.b16 %v11490, %v11488
        %v11511 = vpack.c.b16 %v11491, %v11489
        %v11512 = vpack.c.b16 %v11494, %v11492
        %v11513 = vpack.c.b16 %v11495, %v11493
        %v11514 = vpack.c.b16 %v11498, %v11496
        %v11515 = vpack.c.b16 %v11499, %v11497
        %11532 = vmatprep.subr.bf16.mxu0 %v11501
        %11533 = vmatpush1.bf16.msra.mxu0 %v11500
        %11534 = vmatprep.subr.bf16.mxu0 %v11503
        %11535 = vmatpush1.bf16.msra.mxu0 %v11502
        %11536 = vmatprep.subr.bf16.mxu0 %v11505
        %11537 = vmatpush1.bf16.msra.mxu0 %v11504
        %11538 = vmatprep.subr.bf16.mxu0 %v11507
        %11539 = vmatpush1.bf16.msra.mxu0 %v11506
        %11540 = vmatprep.subr.bf16.mxu0 %v11509
        %11541 = vmatpush1.bf16.msra.mxu0 %v11508
        %11542 = vmatprep.subr.bf16.mxu0 %v11511
        %11543 = vmatpush1.bf16.msra.mxu0 %v11510
        %11544 = vmatprep.subr.bf16.mxu0 %v11513
        %11545 = vmatpush1.bf16.msra.mxu0 %v11512
        %11546 = vmatprep.subr.bf16.mxu0 %v11515
        %11547 = vmatpush1.bf16.msra.mxu0 %v11514
        %11548 = vmatprep.subr.bf16.mxu0 0
        %11549 = vmatpush1.bf16.msra.mxu0 0
        %11550 = vmatprep.subr.bf16.mxu0 0
        %11551 = vmatpush1.bf16.msra.mxu0 0
        %11552 = vmatprep.subr.bf16.mxu0 0
        %11553 = vmatpush1.bf16.msra.mxu0 0
        %11554 = vmatprep.subr.bf16.mxu0 0
        %11555 = vmatpush1.bf16.msra.mxu0 0
        %11556 = vmatprep.subr.bf16.mxu0 0
        %11557 = vmatpush1.bf16.msra.mxu0 0
        %11558 = vmatprep.subr.bf16.mxu0 0
        %11559 = vmatpush1.bf16.msra.mxu0 0
        %11560 = vmatprep.subr.bf16.mxu0 0
        %11561 = vmatpush1.bf16.msra.mxu0 0
        %11562 = vmatprep.subr.bf16.mxu0 0
        %11563 = vmatpush1.bf16.msra.mxu0 0
        %11564 = vmatprep.mubr.bf16.mxu0 0
        %11565 = vmatmul.mubr.bf16.gmra.mrb[0].mxu0 %v11450
        %v11566 = vpop.f32.mrb[0].mxu0
        %v11567 = vadd.f32 0.0, %v11566
        %v11568 = vpop.f32.mrb[0].mxu0
        %v11569 = vadd.f32 0.0, %v11568
        %v11570 = vpop.f32.mrb[0].mxu0
        %v11571 = vpop.f32.mrb[0].mxu0
        %11572 = vdwg.mxu0
        %v11573 = vadd.f32 %v11430, %v11567
        %v11574 = vadd.f32 %v11431, %v11569
        %s11575 = scalar_lea.vmem %s14, 1024
        %v11576 = vld [vmem:[%s11575] sm:$0xff]
        %v11577 = vld [vmem:[%s11575 + $0x8] sm:$0xff]
        %v11578 = vld [vmem:[%s11575 + $0x10] sm:$0xff]
        %v11579 = vld [vmem:[%s11575 + $0x18] sm:$0xff]
        %v11580 = vld [vmem:[%s11575 + $0x20] sm:$0xff]
        %v11581 = vld [vmem:[%s11575 + $0x28] sm:$0xff]
        %v11582 = vld [vmem:[%s11575 + $0x30] sm:$0xff]
        %v11583 = vld [vmem:[%s11575 + $0x38] sm:$0xff]
        %v11584 = vld [vmem:[%s11575 + $0x40] sm:$0xff]
        %v11585 = vld [vmem:[%s11575 + $0x48] sm:$0xff]
        %v11586 = vld [vmem:[%s11575 + $0x50] sm:$0xff]
        %v11587 = vld [vmem:[%s11575 + $0x58] sm:$0xff]
        %v11588 = vld [vmem:[%s11575 + $0x60] sm:$0xff]
        %v11589 = vld [vmem:[%s11575 + $0x68] sm:$0xff]
        %v11590 = vld [vmem:[%s11575 + $0x70] sm:$0xff]
        %v11591 = vld [vmem:[%s11575 + $0x78] sm:$0xff]
        %v11608 = vunpack.c.l.b16 %v11576
        %v11609 = vunpack.c.h.b16 %v11576
        %v11610 = vunpack.c.l.b16 %v11577
        %v11611 = vunpack.c.h.b16 %v11577
        %v11612 = vunpack.c.l.b16 %v11578
        %v11613 = vunpack.c.h.b16 %v11578
        %v11614 = vunpack.c.l.b16 %v11579
        %v11615 = vunpack.c.h.b16 %v11579
        %v11616 = vunpack.c.l.b16 %v11580
        %v11617 = vunpack.c.h.b16 %v11580
        %v11618 = vunpack.c.l.b16 %v11581
        %v11619 = vunpack.c.h.b16 %v11581
        %v11620 = vunpack.c.l.b16 %v11582
        %v11621 = vunpack.c.h.b16 %v11582
        %v11622 = vunpack.c.l.b16 %v11583
        %v11623 = vunpack.c.h.b16 %v11583
        %v11624 = vunpack.c.l.b16 %v11584
        %v11625 = vunpack.c.h.b16 %v11584
        %v11626 = vunpack.c.l.b16 %v11585
        %v11627 = vunpack.c.h.b16 %v11585
        %v11628 = vunpack.c.l.b16 %v11586
        %v11629 = vunpack.c.h.b16 %v11586
        %v11630 = vunpack.c.l.b16 %v11587
        %v11631 = vunpack.c.h.b16 %v11587
        %v11632 = vunpack.c.l.b16 %v11588
        %v11633 = vunpack.c.h.b16 %v11588
        %v11634 = vunpack.c.l.b16 %v11589
        %v11635 = vunpack.c.h.b16 %v11589
        %v11636 = vunpack.c.l.b16 %v11590
        %v11637 = vunpack.c.h.b16 %v11590
        %v11638 = vunpack.c.l.b16 %v11591
        %v11639 = vunpack.c.h.b16 %v11591
        %v11640 = vpack.c.b16 %v11610, %v11608
        %v11641 = vpack.c.b16 %v11611, %v11609
        %v11642 = vpack.c.b16 %v11614, %v11612
        %v11643 = vpack.c.b16 %v11615, %v11613
        %v11644 = vpack.c.b16 %v11618, %v11616
        %v11645 = vpack.c.b16 %v11619, %v11617
        %v11646 = vpack.c.b16 %v11622, %v11620
        %v11647 = vpack.c.b16 %v11623, %v11621
        %v11648 = vpack.c.b16 %v11626, %v11624
        %v11649 = vpack.c.b16 %v11627, %v11625
        %v11650 = vpack.c.b16 %v11630, %v11628
        %v11651 = vpack.c.b16 %v11631, %v11629
        %v11652 = vpack.c.b16 %v11634, %v11632
        %v11653 = vpack.c.b16 %v11635, %v11633
        %v11654 = vpack.c.b16 %v11638, %v11636
        %v11655 = vpack.c.b16 %v11639, %v11637
        %11672 = vmatprep.subr.bf16.mxu0 %v11641
        %11673 = vmatpush1.bf16.msra.mxu0 %v11640
        %11674 = vmatprep.subr.bf16.mxu0 %v11643
        %11675 = vmatpush1.bf16.msra.mxu0 %v11642
        %11676 = vmatprep.subr.bf16.mxu0 %v11645
        %11677 = vmatpush1.bf16.msra.mxu0 %v11644
        %11678 = vmatprep.subr.bf16.mxu0 %v11647
        %11679 = vmatpush1.bf16.msra.mxu0 %v11646
        %11680 = vmatprep.subr.bf16.mxu0 %v11649
        %11681 = vmatpush1.bf16.msra.mxu0 %v11648
        %11682 = vmatprep.subr.bf16.mxu0 %v11651
        %11683 = vmatpush1.bf16.msra.mxu0 %v11650
        %11684 = vmatprep.subr.bf16.mxu0 %v11653
        %11685 = vmatpush1.bf16.msra.mxu0 %v11652
        %11686 = vmatprep.subr.bf16.mxu0 %v11655
        %11687 = vmatpush1.bf16.msra.mxu0 %v11654
        %11688 = vmatprep.subr.bf16.mxu0 0
        %11689 = vmatpush1.bf16.msra.mxu0 0
        %11690 = vmatprep.subr.bf16.mxu0 0
        %11691 = vmatpush1.bf16.msra.mxu0 0
        %11692 = vmatprep.subr.bf16.mxu0 0
        %11693 = vmatpush1.bf16.msra.mxu0 0
        %11694 = vmatprep.subr.bf16.mxu0 0
        %11695 = vmatpush1.bf16.msra.mxu0 0
        %11696 = vmatprep.subr.bf16.mxu0 0
        %11697 = vmatpush1.bf16.msra.mxu0 0
        %11698 = vmatprep.subr.bf16.mxu0 0
        %11699 = vmatpush1.bf16.msra.mxu0 0
        %11700 = vmatprep.subr.bf16.mxu0 0
        %11701 = vmatpush1.bf16.msra.mxu0 0
        %11702 = vmatprep.subr.bf16.mxu0 0
        %11703 = vmatpush1.bf16.msra.mxu0 0
        %11704 = vmatprep.mubr.bf16.mxu0 0
        %11705 = vmatmul.mubr.bf16.gmra.mrb[0].mxu0 %v10447
        %v11706 = vpop.f32.mrb[0].mxu0
        %v11707 = vadd.f32 0.0, %v11706
        %v11708 = vpop.f32.mrb[0].mxu0
        %v11709 = vadd.f32 0.0, %v11708
        %v11710 = vpop.f32.mrb[0].mxu0
        %v11711 = vpop.f32.mrb[0].mxu0
        %11712 = vdwg.mxu0
        %v11713 = vadd.f32 %v11573, %v11707
        %v11714 = vadd.f32 %v11574, %v11709
        %v11715 = vld [vmem:[%s15] sm:$0x3]
        %v11717 = vlaneseq
        %v11718 = vshrl.u32 %v11717, 7
        %v11719 = vsub.s32 0, %v11718
        %v11720 = vrot.slane %v11715, %v11719
        %v11721 = vlaneseq
        %v11722 = vshrl.u32 %v11721, 7
        %v11723 = vsub.s32 1, %v11722
        %v11724 = vrot.slane %v11715, %v11723
        %v11727 = vadd.f32 %v11713, %v11720
        %v11728 = vadd.f32 %v11714, %v11724
        %v11729 = vmax.f32 %v11727, 0.0
        %v11730 = vmax.f32 %v11728, 0.0
        %v11731 = vpack.c.bf16 %v11729, %v11729
        %v11732 = vpack.c.bf16 %v11730, %v11730
        %v11733 = vld [vmem:[%s16] sm:$0xff]
        %v11734 = vld [vmem:[%s16 + $0x8] sm:$0xff]
        %v11735 = vld [vmem:[%s16 + $0x10] sm:$0xff]
        %v11736 = vld [vmem:[%s16 + $0x18] sm:$0xff]
        %v11737 = vld [vmem:[%s16 + $0x20] sm:$0xff]
        %v11738 = vld [vmem:[%s16 + $0x28] sm:$0xff]
        %v11739 = vld [vmem:[%s16 + $0x30] sm:$0xff]
        %v11740 = vld [vmem:[%s16 + $0x38] sm:$0xff]
        %v11741 = vld [vmem:[%s16 + $0x40] sm:$0xff]
        %v11742 = vld [vmem:[%s16 + $0x48] sm:$0xff]
        %v11743 = vld [vmem:[%s16 + $0x50] sm:$0xff]
        %v11744 = vld [vmem:[%s16 + $0x58] sm:$0xff]
        %v11745 = vld [vmem:[%s16 + $0x60] sm:$0xff]
        %v11746 = vld [vmem:[%s16 + $0x68] sm:$0xff]
        %v11747 = vld [vmem:[%s16 + $0x70] sm:$0xff]
        %v11748 = vld [vmem:[%s16 + $0x78] sm:$0xff]
        %v11749 = vld [vmem:[%s16 + $0x80] sm:$0xff]
        %v11750 = vld [vmem:[%s16 + $0x88] sm:$0xff]
        %v11751 = vld [vmem:[%s16 + $0x90] sm:$0xff]
        %v11752 = vld [vmem:[%s16 + $0x98] sm:$0xff]
        %v11753 = vld [vmem:[%s16 + $0xa0] sm:$0xff]
        %v11754 = vld [vmem:[%s16 + $0xa8] sm:$0xff]
        %v11755 = vld [vmem:[%s16 + $0xb0] sm:$0xff]
        %v11756 = vld [vmem:[%s16 + $0xb8] sm:$0xff]
        %v11757 = vld [vmem:[%s16 + $0xc0] sm:$0xff]
        %v11758 = vld [vmem:[%s16 + $0xc8] sm:$0xff]
        %v11759 = vld [vmem:[%s16 + $0xd0] sm:$0xff]
        %v11760 = vld [vmem:[%s16 + $0xd8] sm:$0xff]
        %v11761 = vld [vmem:[%s16 + $0xe0] sm:$0xff]
        %v11762 = vld [vmem:[%s16 + $0xe8] sm:$0xff]
        %v11763 = vld [vmem:[%s16 + $0xf0] sm:$0xff]
        %v11764 = vld [vmem:[%s16 + $0xf8] sm:$0xff]
        %v11765 = vld [vmem:[%s17] sm:$0x3]
        %v11798 = vunpack.c.l.b16 %v11733
        %v11799 = vunpack.c.h.b16 %v11733
        %v11800 = vunpack.c.l.b16 %v11734
        %v11801 = vunpack.c.h.b16 %v11734
        %v11802 = vunpack.c.l.b16 %v11735
        %v11803 = vunpack.c.h.b16 %v11735
        %v11804 = vunpack.c.l.b16 %v11736
        %v11805 = vunpack.c.h.b16 %v11736
        %v11806 = vunpack.c.l.b16 %v11737
        %v11807 = vunpack.c.h.b16 %v11737
        %v11808 = vunpack.c.l.b16 %v11738
        %v11809 = vunpack.c.h.b16 %v11738
        %v11810 = vunpack.c.l.b16 %v11739
        %v11811 = vunpack.c.h.b16 %v11739
        %v11812 = vunpack.c.l.b16 %v11740
        %v11813 = vunpack.c.h.b16 %v11740
        %v11814 = vunpack.c.l.b16 %v11741
        %v11815 = vunpack.c.h.b16 %v11741
        %v11816 = vunpack.c.l.b16 %v11742
        %v11817 = vunpack.c.h.b16 %v11742
        %v11818 = vunpack.c.l.b16 %v11743
        %v11819 = vunpack.c.h.b16 %v11743
        %v11820 = vunpack.c.l.b16 %v11744
        %v11821 = vunpack.c.h.b16 %v11744
        %v11822 = vunpack.c.l.b16 %v11745
        %v11823 = vunpack.c.h.b16 %v11745
        %v11824 = vunpack.c.l.b16 %v11746
        %v11825 = vunpack.c.h.b16 %v11746
        %v11826 = vunpack.c.l.b16 %v11747
        %v11827 = vunpack.c.h.b16 %v11747
        %v11828 = vunpack.c.l.b16 %v11748
        %v11829 = vunpack.c.h.b16 %v11748
        %v11830 = vunpack.c.l.b16 %v11749
        %v11831 = vunpack.c.h.b16 %v11749
        %v11832 = vunpack.c.l.b16 %v11750
        %v11833 = vunpack.c.h.b16 %v11750
        %v11834 = vunpack.c.l.b16 %v11751
        %v11835 = vunpack.c.h.b16 %v11751
        %v11836 = vunpack.c.l.b16 %v11752
        %v11837 = vunpack.c.h.b16 %v11752
        %v11838 = vunpack.c.l.b16 %v11753
        %v11839 = vunpack.c.h.b16 %v11753
        %v11840 = vunpack.c.l.b16 %v11754
        %v11841 = vunpack.c.h.b16 %v11754
        %v11842 = vunpack.c.l.b16 %v11755
        %v11843 = vunpack.c.h.b16 %v11755
        %v11844 = vunpack.c.l.b16 %v11756
        %v11845 = vunpack.c.h.b16 %v11756
        %v11846 = vunpack.c.l.b16 %v11757
        %v11847 = vunpack.c.h.b16 %v11757
        %v11848 = vunpack.c.l.b16 %v11758
        %v11849 = vunpack.c.h.b16 %v11758
        %v11850 = vunpack.c.l.b16 %v11759
        %v11851 = vunpack.c.h.b16 %v11759
        %v11852 = vunpack.c.l.b16 %v11760
        %v11853 = vunpack.c.h.b16 %v11760
        %v11854 = vunpack.c.l.b16 %v11761
        %v11855 = vunpack.c.h.b16 %v11761
        %v11856 = vunpack.c.l.b16 %v11762
        %v11857 = vunpack.c.h.b16 %v11762
        %v11858 = vunpack.c.l.b16 %v11763
        %v11859 = vunpack.c.h.b16 %v11763
        %v11860 = vunpack.c.l.b16 %v11764
        %v11861 = vunpack.c.h.b16 %v11764
        %v11862 = vpack.c.b16 %v11800, %v11798
        %v11863 = vpack.c.b16 %v11801, %v11799
        %v11864 = vpack.c.b16 %v11804, %v11802
        %v11865 = vpack.c.b16 %v11805, %v11803
        %v11866 = vpack.c.b16 %v11808, %v11806
        %v11867 = vpack.c.b16 %v11809, %v11807
        %v11868 = vpack.c.b16 %v11812, %v11810
        %v11869 = vpack.c.b16 %v11813, %v11811
        %v11870 = vpack.c.b16 %v11816, %v11814
        %v11871 = vpack.c.b16 %v11817, %v11815
        %v11872 = vpack.c.b16 %v11820, %v11818
        %v11873 = vpack.c.b16 %v11821, %v11819
        %v11874 = vpack.c.b16 %v11824, %v11822
        %v11875 = vpack.c.b16 %v11825, %v11823
        %v11876 = vpack.c.b16 %v11828, %v11826
        %v11877 = vpack.c.b16 %v11829, %v11827
        %v11878 = vpack.c.b16 %v11832, %v11830
        %v11879 = vpack.c.b16 %v11833, %v11831
        %v11880 = vpack.c.b16 %v11836, %v11834
        %v11881 = vpack.c.b16 %v11837, %v11835
        %v11882 = vpack.c.b16 %v11840, %v11838
        %v11883 = vpack.c.b16 %v11841, %v11839
        %v11884 = vpack.c.b16 %v11844, %v11842
        %v11885 = vpack.c.b16 %v11845, %v11843
        %v11886 = vpack.c.b16 %v11848, %v11846
        %v11887 = vpack.c.b16 %v11849, %v11847
        %v11888 = vpack.c.b16 %v11852, %v11850
        %v11889 = vpack.c.b16 %v11853, %v11851
        %v11890 = vpack.c.b16 %v11856, %v11854
        %v11891 = vpack.c.b16 %v11857, %v11855
        %v11892 = vpack.c.b16 %v11860, %v11858
        %v11893 = vpack.c.b16 %v11861, %v11859
        %v11927 = vlaneseq
        %v11928 = vshrl.u32 %v11927, 7
        %v11929 = vsub.s32 0, %v11928
        %v11930 = vrot.slane %v11765, %v11929
        %v11931 = vlaneseq
        %v11932 = vshrl.u32 %v11931, 7
        %v11933 = vsub.s32 1, %v11932
        %v11934 = vrot.slane %v11765, %v11933
        %11937 = vmatprep.subr.bf16.mxu0 %v11863
        %11938 = vmatpush1.bf16.msra.mxu0 %v11862
        %11939 = vmatprep.subr.bf16.mxu0 %v11865
        %11940 = vmatpush1.bf16.msra.mxu0 %v11864
        %11941 = vmatprep.subr.bf16.mxu0 %v11867
        %11942 = vmatpush1.bf16.msra.mxu0 %v11866
        %11943 = vmatprep.subr.bf16.mxu0 %v11869
        %11944 = vmatpush1.bf16.msra.mxu0 %v11868
        %11945 = vmatprep.subr.bf16.mxu0 %v11871
        %11946 = vmatpush1.bf16.msra.mxu0 %v11870
        %11947 = vmatprep.subr.bf16.mxu0 %v11873
        %11948 = vmatpush1.bf16.msra.mxu0 %v11872
        %11949 = vmatprep.subr.bf16.mxu0 %v11875
        %11950 = vmatpush1.bf16.msra.mxu0 %v11874
        %11951 = vmatprep.subr.bf16.mxu0 %v11877
        %11952 = vmatpush1.bf16.msra.mxu0 %v11876
        %11953 = vmatprep.subr.bf16.mxu0 %v11879
        %11954 = vmatpush1.bf16.msra.mxu0 %v11878
        %11955 = vmatprep.subr.bf16.mxu0 %v11881
        %11956 = vmatpush1.bf16.msra.mxu0 %v11880
        %11957 = vmatprep.subr.bf16.mxu0 %v11883
        %11958 = vmatpush1.bf16.msra.mxu0 %v11882
        %11959 = vmatprep.subr.bf16.mxu0 %v11885
        %11960 = vmatpush1.bf16.msra.mxu0 %v11884
        %11961 = vmatprep.subr.bf16.mxu0 %v11887
        %11962 = vmatpush1.bf16.msra.mxu0 %v11886
        %11963 = vmatprep.subr.bf16.mxu0 %v11889
        %11964 = vmatpush1.bf16.msra.mxu0 %v11888
        %11965 = vmatprep.subr.bf16.mxu0 %v11891
        %11966 = vmatpush1.bf16.msra.mxu0 %v11890
        %11967 = vmatprep.subr.bf16.mxu0 %v11893
        %11968 = vmatpush1.bf16.msra.mxu0 %v11892
        %11969 = vmatprep.mubr.bf16.mxu0 %v11732
        %11970 = vmatmul.mubr.bf16.gmra.mrb[0].mxu0 %v11731
        %v11971 = vpop.f32.mrb[0].mxu0
        %v11972 = vadd.f32 %v11930, %v11971
        %v11973 = vpop.f32.mrb[0].mxu0
        %v11974 = vadd.f32 %v11934, %v11973
        %v11975 = vpop.f32.mrb[0].mxu0
        %v11976 = vpop.f32.mrb[0].mxu0
        %11977 = vdwg.mxu0
        %v11978 = vmax.f32 %v11972, 0.0
        %v11979 = vmax.f32 %v11974, 0.0
        %v11982 = vcombine.low %v11978, %v11979
        %v11984 = vunpack.c.l.s4 1966171168
        %v11985 = vunpack.c.0.s8 %v11984
        %v11986 = vlaneseq
        %v11987 = vshrl.u32 %v11986, 7
        %v11988 = vsub.s32 %v11985, %v11987
        %v11989 = vrot.slane %v11982, %v11988
        %v11991 = vunpack.c.l.s4 1966171168
        %v11992 = vunpack.c.0.s8 %v11991
        %v11993 = vlaneseq
        %v11994 = vshrl.u32 %v11993, 7
        %v11995 = vsub.s32 %v11992, %v11994
        %v11996 = vrot.slane %v11989, %v11995
        %v11998 = vlaneseq
        %vm11999 = vcmp.ge.s32.totalorder %v11998, 0
        %vm12000 = vcmp.lt.s32.totalorder %v11998, 256
        %vm12001 = vmand %vm11999, %vm12000
        %12002 = vst.msk [vmem:[%s568] sm:$0x3] %vm12001, %v11996
        %s12003 = sand.u32 %s423, 1
        %s12004 = scalar_lea.sflag [#allocation3], %s12003
        %s12005 = sand.u32 %s423, 1
        %s12006 = smul.addr %s12005, 2
        %s12007 = scalar_lea.vmem [#allocation2], %s12006
        // Predicated region
        $region93: #{coordinate_extractor_forward.1} parent=91 // pred_check
          %p12008 = pneg %p433
        $region94: #{coordinate_extractor_forward.1} parent=91 // pred_check_branch
          %12010 = sbr.rel (%p12008) target = $region96
        $region95: #{coordinate_extractor_forward.1} parent=91 // pred_region
          %s12012 = ssub.s32 32, 32
          %12013 = vsyncadd %s12004, %s12012
          %s12014 = smul.addr %s32, 2
          %s12015 = smul.addr %s12014, 16
          %s12016 = scalar_lea.hbm %s18, %s12015
          %s12018 = sshll.u32 %s12007, 4
          %s12019 = int_to_ptr.vmem [resolvable:$true] %s12018
          %12021 = dma.vmem_to_hbm [thread:$0]  %s12019, 32, %s12016, %s12004
        $region96: #{coordinate_extractor_forward.1} parent=91 // pred_fallthru
          _
      $region92: #{coordinate_extractor_forward.1} parent=5 // pred_fallthru
        _
      %p12022 = scmp.le.s32.totalorder 2, %s27
      // Predicated region
      $region97: #{coordinate_extractor_forward.1} parent=5 // pred_check
        %p12023 = pneg %p12022
      $region98: #{coordinate_extractor_forward.1} parent=5 // pred_check_branch
        %12025 = sbr.rel (%p12023) target = $region100
      $region99: #{coordinate_extractor_forward.1} parent=5 // pred_region
        %s12026 = ssub.s32 %s27, 2
        // Predicated region
        $region101: #{coordinate_extractor_forward.1} parent=99 // pred_check
          %p12027 = pneg %p439
        $region102: #{coordinate_extractor_forward.1} parent=99 // pred_check_branch
          %12029 = sbr.rel (%p12027) target = $region104
        $region103: #{coordinate_extractor_forward.1} parent=99 // pred_region
          %s12030 = sand.u32 %s424, 1
          %s12031 = scalar_lea.sflag [#allocation3], %s12030
          %s12032 = sand.u32 %s424, 1
          %s12033 = smul.addr %s12032, 2
          %s12034 = scalar_lea.vmem [#allocation2], %s12033
          %12035 = dma.done %s12031, 32
        $region104: #{coordinate_extractor_forward.1} parent=99 // pred_fallthru
          _
      $region100: #{coordinate_extractor_forward.1} parent=5 // pred_fallthru
        _
    $region6: #{coordinate_extractor_forward.1} parent=1 // loop_footer
      %s31 = sadd.s32 1, %s27
    $region7: #{coordinate_extractor_forward.1} parent=1 // loop_footer_branch
      %26 = sbr.rel target = $region3
    $region8: #{coordinate_extractor_forward.1} parent=1 // loop_exit
      _
    %12036 = vsyncpa [#allocation3], 1
    %s12037 = scalar_lea.sflag [#allocation3], 1
    %12038 = vsyncpa %s12037, 1

</llo_original>
